<compile_context>
chip_gen: v6e
topology: v6e:2x2x1
jax: 0.10.0
libtpu: 0.0.40
codegen_flags: <defaults>
</compile_context>

<pallas_src>
import jax
import jax.numpy as jnp
from jax.experimental import pallas as pl
from jax.experimental.pallas import tpu as pltpu  # noqa: F401  (single invocation, no grid/scratch needed)

# ----------------------------- configuration --------------------------------
PATCH = 4          # patch size ("ViT-?/4" synthetic)
IN_CH = 3
IMG = 16           # input image is 16x16
GRID = IMG // PATCH            # 4
NPATCH = GRID * GRID           # 16
S = NPATCH + 1                 # 17 tokens (class token + patches)
SP = 24                        # token count padded to a multiple of 8 sublanes
D = 32                         # embed dim
HEADS = 4
HD = D // HEADS                # 8
HS = HEADS * SP                # 96: heads stacked along sublanes
LAYERS = 3                     # transformer depth (2 regular + 1 "last" block)
MLP = 4 * D                    # 128
PROJ = 16                      # visual projection dim == text feature dim
N_FG = 3
N_BG = 2
N_TEXT = N_FG + N_BG + 1       # fg + bg + mean(fg)
LOGIT_SCALE = 100.0
EPS = 1e-5
CPP = IN_CH * PATCH * PATCH    # 48 (flattened patch)
NEG = -1e30
LANES = 128

# ------------------- weight-slab row layout (8-row aligned blocks) ----------
CONV_OFF = 0                       # (CPP, D)       cols 0:D
PROJ_OFF = CONV_OFF + CPP          # 48, (D, PROJ)  cols 0:PROJ
GVEC_OFF = PROJ_OFF + D            # 80: row 0 = ln_pre_g|ln_pre_b|ln_post_g|ln_post_b
LAYER0_OFF = GVEC_OFF + 8          # 88
L_IPW = 0                          # (D, 3D)   cols 0:3D
L_OPW = D                          # (D, D)    cols 0:D
L_FCW = 2 * D                      # (D, MLP)  cols 0:MLP
L_PJW = 3 * D                      # (MLP, D)  cols 0:D
L_VEC = 3 * D + MLP                # 224: r0 ln1_g|ln1_b|ln2_g|ln2_b, r1 ipb, r2 opb|pjb, r3 fcb
LAYER_STRIDE = L_VEC + 8           # 232
W_ROWS = LAYER0_OFF + LAYERS * LAYER_STRIDE   # 784

# --------------------- dynamic (per-call) slab column layout ----------------
DYN_TOK_COL = CPP                  # 48: class+pos token rows
DYN_TEXT_COL = CPP + D             # 80: text features (N_TEXT rows)

# ---------------------------- output slab column layout ---------------------
OUT_FEAT_COL = 0                   # LAYERS*PROJ = 48 cols of projected features
OUT_ATTN_COL = LAYERS * PROJ       # 48: mean attention map (SP cols)
OUT_SEG_COL = OUT_ATTN_COL + SP    # 72: seg softmax/seg result (N_TEXT cols)
OUT_USED = OUT_SEG_COL + N_TEXT    # 78


# ------------------------- in-kernel helper functions ------------------------
def _ln(x, g, b):
    """torch.nn.LayerNorm over the last dim (biased variance, eps=1e-5)."""
    mu = jnp.mean(x, axis=-1, keepdims=True)
    xc = x - mu
    var = jnp.mean(xc * xc, axis=-1, keepdims=True)
    return xc * jax.lax.rsqrt(var + EPS) * g + b


def _safe_div(num, den):
    """Exact VPU division with a guard for all-zero (padded) rows/cols."""
    return num / jnp.where(den == 0.0, 1.0, den)


# --------------------------- the fused CLIPer kernel --------------------------
def _cliper_kernel(dyn_ref, w_ref, out_ref):
    f32 = jnp.float32
    scale = HD ** -0.5

    # ---- constant masks (iota-derived; no extra inputs) ----
    kcol = jax.lax.broadcasted_iota(jnp.int32, (1, SP), 1)
    key_bias = jnp.where(kcol < S, 0.0, NEG).astype(f32)           # mask padded keys
    rtok = jax.lax.broadcasted_iota(jnp.int32, (SP, 1), 0)
    patch_mask = ((rtok >= 1) & (rtok < S)).astype(f32)            # patch tokens only

    rstk = jax.lax.broadcasted_iota(jnp.int32, (HS, 1), 0)

    def head_of(i):                                                # floor(i / SP) without int div
        return ((i >= SP).astype(jnp.int32) + (i >= 2 * SP).astype(jnp.int32)
                + (i >= 3 * SP).astype(jnp.int32))

    qrow_mask = ((rstk - head_of(rstk) * SP) < S).astype(f32)      # (HS,1): zero padded queries

    cd = jax.lax.broadcasted_iota(jnp.int32, (1, D), 1)
    hm = [((cd >= h * HD) & (cd < (h + 1) * HD)).astype(f32) for h in range(HEADS)]

    r2 = jax.lax.broadcasted_iota(jnp.int32, (HS, HS), 0)
    c2 = jax.lax.broadcasted_iota(jnp.int32, (HS, HS), 1)
    blkdiag = (head_of(r2) == head_of(c2)).astype(f32)             # (HS,HS) per-head ones blocks

    def head_colsum(m):
        # per-head column sums broadcast back to every row of that head (one MXU matmul)
        return jnp.dot(blkdiag, m, preferred_element_type=f32)

    def qkv_attn_weights(qkv):
        # stacked-head scores -> one batched softmax chain for all HEADS
        q = qkv[:, 0:D] * scale
        k = qkv[:, D:2 * D]
        qs = jnp.concatenate([q * hm[h] for h in range(HEADS)], axis=0)   # (HS, D) head-block-diag
        s = jax.lax.dot_general(qs, k, (((1,), (1,)), ((), ())),
                                preferred_element_type=f32) + key_bias    # (HS, SP)
        mx = jnp.max(s, axis=-1, keepdims=True)
        e = jnp.exp(s - mx)
        p = e * pl.reciprocal(jnp.sum(e, axis=-1, keepdims=True), approx=True)
        return p * qrow_mask                                              # padded query rows -> 0

    def fold_heads(ov):
        # (HS, D) stacked per-head outputs -> (SP, D) lane-concatenated head outputs
        return sum(ov[h * SP:(h + 1) * SP, :] * hm[h] for h in range(HEADS))

    def per_head_transpose(a):
        return jnp.concatenate([a[h * SP:(h + 1) * SP, :].T for h in range(HEADS)], axis=0)

    def lrow(base, r, lo, width):
        return w_ref[base + r:base + r + 1, lo:lo + width]

    # ---- embedding: conv1 (stride == kernel) as a patch matmul + class/pos ----
    patches = dyn_ref[:, 0:CPP]
    tok0 = dyn_ref[:, DYN_TOK_COL:DYN_TOK_COL + D]
    convw = w_ref[CONV_OFF:CONV_OFF + CPP, 0:D]
    x = jnp.dot(patches, convw, preferred_element_type=f32) + tok0
    x = _ln(x, w_ref[GVEC_OFF:GVEC_OFF + 1, 0:D], w_ref[GVEC_OFF:GVEC_OFF + 1, D:2 * D])
    # NOTE: padded token rows (>= S) carry bias-derived garbage through the residual
    # stream; key_bias / qrow_mask keep them from contaminating valid tokens and the
    # wrapper slices them away from every output.

    A_stack = jnp.zeros((HS, SP), f32)     # per-head attention maps, heads stacked on sublanes
    img_features = []

    # ---- regular transformer blocks (all but the last) ----
    for li in range(LAYERS - 1):
        b = LAYER0_OFF + li * LAYER_STRIDE
        ln1_g = lrow(b, L_VEC, 0, D); ln1_b = lrow(b, L_VEC, D, D)
        ln2_g = lrow(b, L_VEC, 2 * D, D); ln2_b = lrow(b, L_VEC, 3 * D, D)
        ipw = w_ref[b + L_IPW:b + L_IPW + D, 0:3 * D]
        ipb = lrow(b, L_VEC + 1, 0, 3 * D)
        opw = w_ref[b + L_OPW:b + L_OPW + D, 0:D]
        opb = lrow(b, L_VEC + 2, 0, D)
        fcw = w_ref[b + L_FCW:b + L_FCW + D, 0:MLP]
        fcb = lrow(b, L_VEC + 3, 0, MLP)
        pjw = w_ref[b + L_PJW:b + L_PJW + MLP, 0:D]
        pjb = lrow(b, L_VEC + 2, D, D)

        ln_x = _ln(x, ln1_g, ln1_b)
        img_features.append(ln_x)                                   # fuse_feature=True
        qkv = jnp.dot(ln_x, ipw, preferred_element_type=f32) + ipb  # (SP, 3D)
        p = qkv_attn_weights(qkv)                                   # (HS, SP)
        A_stack = A_stack + p
        ov = jnp.dot(p, qkv[:, 2 * D:3 * D], preferred_element_type=f32)   # (HS, D)
        x = x + jnp.dot(fold_heads(ov), opw, preferred_element_type=f32) + opb
        ln2 = _ln(x, ln2_g, ln2_b)
        h1 = jnp.dot(ln2, fcw, preferred_element_type=f32) + fcb
        h1 = h1 * jax.nn.sigmoid(1.702 * h1)                        # CLIP QuickGELU
        x = x + jnp.dot(h1, pjw, preferred_element_type=f32) + pjb

    img_features.append(x)

    # ---- last block: 'fused-attn' custom attention on every stored feature ----
    bl = LAYER0_OFF + (LAYERS - 1) * LAYER_STRIDE
    ln1_g = lrow(bl, L_VEC, 0, D); ln1_b = lrow(bl, L_VEC, D, D)
    ipw_l = w_ref[bl + L_IPW:bl + L_IPW + D, 0:3 * D]
    ipb_l = lrow(bl, L_VEC + 1, 0, 3 * D)
    opw_l = w_ref[bl + L_OPW:bl + L_OPW + D, 0:D]
    opb_l = lrow(bl, L_VEC + 2, 0, D)
    lnpost_g = w_ref[GVEC_OFF:GVEC_OFF + 1, 2 * D:3 * D]
    lnpost_b = w_ref[GVEC_OFF:GVEC_OFF + 1, 3 * D:4 * D]
    vproj = w_ref[PROJ_OFF:PROJ_OFF + D, 0:PROJ]

    text = dyn_ref[0:N_TEXT, DYN_TEXT_COL:DYN_TEXT_COL + PROJ]      # (N_TEXT, PROJ)
    tnorm = text * jax.lax.rsqrt(jnp.sum(text * text, axis=-1, keepdims=True))

    feats = []
    seg_probs = []
    attn_mean = None
    for k, xk in enumerate(img_features):
        ln_x = _ln(xk, ln1_g, ln1_b)
        qkv = jnp.dot(ln_x, ipw_l, preferred_element_type=f32) + ipb_l
        v = qkv[:, 2 * D:3 * D]

        # torch in-place '/=': these two renormalisations persist to the next k
        A_stack = _safe_div(A_stack, head_colsum(A_stack))                       # /= col sums
        A_stack = _safe_div(A_stack, jnp.sum(A_stack, axis=-1, keepdims=True))   # /= row sums
        m = (A_stack + per_head_transpose(A_stack)) * 0.5
        m = m - head_colsum(m) * (1.0 / S)        # mean over the S real tokens (pads are 0)
        m = jnp.maximum(m, 0.0)
        m = _safe_div(m, jnp.sum(m, axis=-1, keepdims=True))

        ov = jnp.dot(m, v, preferred_element_type=f32)                           # (HS, D)
        out = jnp.dot(fold_heads(ov), opw_l, preferred_element_type=f32) + opb_l

        # ln_post + visual projection
        f = jnp.dot(_ln(out, lnpost_g, lnpost_b), vproj,
                    preferred_element_type=f32)                                  # (SP, PROJ)
        feats.append(f)

        # classify: cosine sim vs text features, softmax over classes
        xn = f * jax.lax.rsqrt(jnp.sum(f * f, axis=-1, keepdims=True))
        logits = LOGIT_SCALE * jax.lax.dot_general(
            xn, tnorm, (((1,), (1,)), ((), ())), preferred_element_type=f32)     # (SP, N_TEXT)
        lm = jnp.max(logits, axis=-1, keepdims=True)
        le = jnp.exp(logits - lm)
        seg_probs.append(le * pl.reciprocal(jnp.sum(le, axis=-1, keepdims=True), approx=True))

        if k == LAYERS - 1:
            attn_mean = sum(m[h * SP:(h + 1) * SP, :] for h in range(HEADS)) * (1.0 / HEADS)

    # ---- segmentation head (token-index space; wrapper slices patch rows / fg cols) ----
    seg_last = seg_probs[-1]
    thr = jnp.max(seg_last * patch_mask, axis=0, keepdims=True) * 0.2
    seg_last = jnp.where(seg_last < thr, 0.0, seg_last) * patch_mask  # only real patch rows
    seg_rest = sum(seg_probs[:-1]) * (1.0 / (LAYERS - 1))
    seg_full = jnp.dot(attn_mean, seg_last, preferred_element_type=f32) + seg_rest

    # ---- single lane-dense (SP, 128) output slab ----
    for kk, f in enumerate(feats):
        out_ref[:, OUT_FEAT_COL + kk * PROJ:OUT_FEAT_COL + (kk + 1) * PROJ] = f
    out_ref[:, OUT_ATTN_COL:OUT_ATTN_COL + SP] = attn_mean
    out_ref[:, OUT_SEG_COL:OUT_SEG_COL + N_TEXT] = seg_full
    out_ref[:, OUT_USED:LANES] = jnp.zeros((SP, LANES - OUT_USED), f32)


# ------------------------------ parameters -----------------------------------
def init_params(key):
    """Synthetic CLIP-visual parameters, pre-transposed from torch layout and
    packed into one lane-dense (W_ROWS, 128) f32 slab (single input DMA)."""
    def nrm(k, shape, sc=0.02):
        return sc * jax.random.normal(k, shape, jnp.float32)

    ks = iter(jax.random.split(key, 64))
    conv_w = nrm(next(ks), (D, IN_CH, PATCH, PATCH), 0.05)          # torch Conv2d layout
    class_emb = nrm(next(ks), (D,), 0.05)
    pos_emb = nrm(next(ks), (S, D), 0.05)
    ln_pre_g = 1.0 + nrm(next(ks), (D,)); ln_pre_b = nrm(next(ks), (D,))
    ln_post_g = 1.0 + nrm(next(ks), (D,)); ln_post_b = nrm(next(ks), (D,))
    proj = nrm(next(ks), (D, PROJ), 0.05)

    w = jnp.zeros((W_ROWS, LANES), jnp.float32)
    w = w.at[CONV_OFF:CONV_OFF + CPP, :D].set(conv_w.reshape(D, CPP).T)
    w = w.at[PROJ_OFF:PROJ_OFF + D, :PROJ].set(proj)
    w = w.at[GVEC_OFF, 0:D].set(ln_pre_g)
    w = w.at[GVEC_OFF, D:2 * D].set(ln_pre_b)
    w = w.at[GVEC_OFF, 2 * D:3 * D].set(ln_post_g)
    w = w.at[GVEC_OFF, 3 * D:4 * D].set(ln_post_b)

    for li in range(LAYERS):
        kk = iter(jax.random.split(next(ks), 16))
        b = LAYER0_OFF + li * LAYER_STRIDE
        ln1_g = 1.0 + nrm(next(kk), (D,)); ln1_b = nrm(next(kk), (D,))
        ipw = nrm(next(kk), (3 * D, D), 0.05).T                     # torch (out,in) -> (in,out)
        ipb = nrm(next(kk), (3 * D,))
        opw = nrm(next(kk), (D, D), 0.05).T
        opb = nrm(next(kk), (D,))
        ln2_g = 1.0 + nrm(next(kk), (D,)); ln2_b = nrm(next(kk), (D,))
        fcw = nrm(next(kk), (MLP, D), 0.05).T
        fcb = nrm(next(kk), (MLP,))
        pjw = nrm(next(kk), (D, MLP), 0.05).T
        pjb = nrm(next(kk), (D,))
        w = w.at[b + L_IPW:b + L_IPW + D, :3 * D].set(ipw)
        w = w.at[b + L_OPW:b + L_OPW + D, :D].set(opw)
        w = w.at[b + L_FCW:b + L_FCW + D, :MLP].set(fcw)
        w = w.at[b + L_PJW:b + L_PJW + MLP, :D].set(pjw)
        w = w.at[b + L_VEC, 0:D].set(ln1_g)
        w = w.at[b + L_VEC, D:2 * D].set(ln1_b)
        w = w.at[b + L_VEC, 2 * D:3 * D].set(ln2_g)
        w = w.at[b + L_VEC, 3 * D:4 * D].set(ln2_b)
        w = w.at[b + L_VEC + 1, 0:3 * D].set(ipb)
        w = w.at[b + L_VEC + 2, 0:D].set(opb)
        w = w.at[b + L_VEC + 2, D:2 * D].set(pjb)
        w = w.at[b + L_VEC + 3, 0:MLP].set(fcb)

    return {"w_slab": w, "pos_emb": pos_emb, "class_emb": class_emb}


# ------------------------------ JAX-side glue ---------------------------------
def upsample_pos_emb(emb, new_size):
    # Mirrors CLIPer.upsample_pos_emb (bilinear resize of the grid part).
    # TODO(synk): jax.image.resize bilinear != torch F.interpolate exactly;
    # the reference's .half() cast is kept in fp32 here.
    first, rest = emb[:1], emb[1:]
    n, d = rest.shape
    size = int(round(n ** 0.5))
    grid = rest.reshape(size, size, d)
    grid = jax.image.resize(grid, (new_size[0], new_size[1], d), method="bilinear")
    return jnp.concatenate([first, grid.reshape(-1, d)], axis=0)


def cliper_forward(img, fg_text, bg_text, p):
    B, C, Hh, Ww = img.shape          # NCHW, B must be 1 (reference .squeeze())
    gh, gw = Hh // PATCH, Ww // PATCH

    # patchify (layout only; the conv matmul runs inside the kernel)
    patches = img.reshape(B, C, gh, PATCH, gw, PATCH)
    patches = patches.transpose(0, 2, 4, 1, 3, 5).reshape(gh * gw, C * PATCH * PATCH)

    pos = upsample_pos_emb(p["pos_emb"], (gh, gw))                  # (S, D)
    tok0 = (jnp.zeros((SP, D), jnp.float32)
            .at[0].set(p["class_emb"])
            .at[:S].add(pos))
    text = jnp.concatenate(
        [fg_text, bg_text, jnp.mean(fg_text, axis=0, keepdims=True)], axis=0)

    # one lane-dense per-call input slab: patches | class+pos tokens | text
    dyn = jnp.zeros((SP, LANES), jnp.float32)
    dyn = dyn.at[1:S, 0:CPP].set(patches)
    dyn = dyn.at[:, DYN_TOK_COL:DYN_TOK_COL + D].set(tok0)
    dyn = dyn.at[:N_TEXT, DYN_TEXT_COL:DYN_TEXT_COL + PROJ].set(text)

    out = pl.pallas_call(
        _cliper_kernel,
        out_shape=jax.ShapeDtypeStruct((SP, LANES), jnp.float32),
    )(dyn, p["w_slab"])

    # unpack the single output slab (padded token rows are dropped here)
    feats = out[:, OUT_FEAT_COL:OUT_FEAT_COL + LAYERS * PROJ]
    img_feature = feats.reshape(SP, LAYERS, PROJ).transpose(1, 0, 2)[:, :S, :]
    attn_map = out[1:S, OUT_ATTN_COL + 1:OUT_ATTN_COL + S]
    seg = out[1:S, OUT_SEG_COL:OUT_SEG_COL + N_FG]
    return {
        "seg": seg,
        "img_part_features": img_feature,
        "mid_feature": None,
        "attn_map": attn_map,
    }


# ---------------------------------- main --------------------------------------
if __name__ == "__main__":
    key = jax.random.PRNGKey(0)
    k_img, k_fg, k_bg, k_par = jax.random.split(key, 4)
    params = init_params(k_par)
    img = jax.random.normal(k_img, (1, IN_CH, IMG, IMG), jnp.float32)  # NCHW
    fg_text = jax.random.normal(k_fg, (N_FG, PROJ), jnp.float32)
    bg_text = jax.random.normal(k_bg, (N_BG, PROJ), jnp.float32)

    out = jax.jit(cliper_forward)(img, fg_text, bg_text, params)
    jax.block_until_ready(out["seg"])
    jax.block_until_ready(out["img_part_features"])
    jax.block_until_ready(out["attn_map"])
    print("KERNEL_OK")
</pallas_src>

<mosaic_0001>
module attributes {stable_mosaic.version = 11 : i64} {
  func.func @_cliper_kernel(%arg0: memref<24x128xf32, #tpu.memory_space<vmem>>, %arg1: memref<784x128xf32, #tpu.memory_space<vmem>>, %arg2: memref<24x128xf32, #tpu.memory_space<vmem>>) attributes {dimension_semantics = [], scalar_prefetch = 0 : i64, scratch_operands = 0 : i64, tpu.core_type = #tpu.core_type<tc>} {
    %0 = tpu.iota {dimensions = array<i32: 1>} : vector<1x24xi32>
    %c17_i32 = arith.constant 17 : i32
    %1 = vector.broadcast %c17_i32 : i32 to vector<1x24xi32>
    %2 = arith.cmpi slt, %0, %1 : vector<1x24xi32>
    %cst = arith.constant 0.000000e+00 : f32
    %cst_0 = arith.constant -1.000000e+30 : f32
    %3 = vector.broadcast %cst : f32 to vector<1x24xf32>
    %4 = vector.broadcast %cst_0 : f32 to vector<1x24xf32>
    %5 = arith.select %2, %3, %4 : vector<1x24xi1>, vector<1x24xf32>
    %6 = tpu.iota {dimensions = array<i32: 0>} : vector<24x1xi32>
    %c1_i32 = arith.constant 1 : i32
    %7 = vector.broadcast %c1_i32 : i32 to vector<24x1xi32>
    %8 = arith.cmpi sge, %6, %7 : vector<24x1xi32>
    %c17_i32_1 = arith.constant 17 : i32
    %9 = vector.broadcast %c17_i32_1 : i32 to vector<24x1xi32>
    %10 = arith.cmpi slt, %6, %9 : vector<24x1xi32>
    %11 = arith.andi %8, %10 : vector<24x1xi1>
    %12 = arith.extui %11 : vector<24x1xi1> to vector<24x1xi32>
    %13 = arith.sitofp %12 : vector<24x1xi32> to vector<24x1xf32>
    %14 = tpu.iota {dimensions = array<i32: 0>} : vector<96x1xi32>
    %c24_i32 = arith.constant 24 : i32
    %15 = vector.broadcast %c24_i32 : i32 to vector<96x1xi32>
    %16 = arith.cmpi sge, %14, %15 : vector<96x1xi32>
    %17 = arith.extui %16 : vector<96x1xi1> to vector<96x1xi32>
    %c48_i32 = arith.constant 48 : i32
    %18 = vector.broadcast %c48_i32 : i32 to vector<96x1xi32>
    %19 = arith.cmpi sge, %14, %18 : vector<96x1xi32>
    %20 = arith.extui %19 : vector<96x1xi1> to vector<96x1xi32>
    %21 = arith.addi %17, %20 : vector<96x1xi32>
    %c72_i32 = arith.constant 72 : i32
    %22 = vector.broadcast %c72_i32 : i32 to vector<96x1xi32>
    %23 = arith.cmpi sge, %14, %22 : vector<96x1xi32>
    %24 = arith.extui %23 : vector<96x1xi1> to vector<96x1xi32>
    %25 = arith.addi %21, %24 : vector<96x1xi32>
    %c24_i32_2 = arith.constant 24 : i32
    %26 = vector.broadcast %c24_i32_2 : i32 to vector<96x1xi32>
    %27 = arith.muli %25, %26 : vector<96x1xi32>
    %28 = arith.subi %14, %27 : vector<96x1xi32>
    %c17_i32_3 = arith.constant 17 : i32
    %29 = vector.broadcast %c17_i32_3 : i32 to vector<96x1xi32>
    %30 = arith.cmpi slt, %28, %29 : vector<96x1xi32>
    %31 = arith.extui %30 : vector<96x1xi1> to vector<96x1xi32>
    %32 = arith.sitofp %31 : vector<96x1xi32> to vector<96x1xf32>
    %33 = tpu.iota {dimensions = array<i32: 1>} : vector<1x32xi32>
    %c0_i32 = arith.constant 0 : i32
    %34 = vector.broadcast %c0_i32 : i32 to vector<1x32xi32>
    %35 = arith.cmpi sge, %33, %34 : vector<1x32xi32>
    %c8_i32 = arith.constant 8 : i32
    %36 = vector.broadcast %c8_i32 : i32 to vector<1x32xi32>
    %37 = arith.cmpi slt, %33, %36 : vector<1x32xi32>
    %38 = arith.andi %35, %37 : vector<1x32xi1>
    %39 = arith.extui %38 : vector<1x32xi1> to vector<1x32xi32>
    %40 = arith.sitofp %39 : vector<1x32xi32> to vector<1x32xf32>
    %c8_i32_4 = arith.constant 8 : i32
    %41 = vector.broadcast %c8_i32_4 : i32 to vector<1x32xi32>
    %42 = arith.cmpi sge, %33, %41 : vector<1x32xi32>
    %c16_i32 = arith.constant 16 : i32
    %43 = vector.broadcast %c16_i32 : i32 to vector<1x32xi32>
    %44 = arith.cmpi slt, %33, %43 : vector<1x32xi32>
    %45 = arith.andi %42, %44 : vector<1x32xi1>
    %46 = arith.extui %45 : vector<1x32xi1> to vector<1x32xi32>
    %47 = arith.sitofp %46 : vector<1x32xi32> to vector<1x32xf32>
    %c16_i32_5 = arith.constant 16 : i32
    %48 = vector.broadcast %c16_i32_5 : i32 to vector<1x32xi32>
    %49 = arith.cmpi sge, %33, %48 : vector<1x32xi32>
    %c24_i32_6 = arith.constant 24 : i32
    %50 = vector.broadcast %c24_i32_6 : i32 to vector<1x32xi32>
    %51 = arith.cmpi slt, %33, %50 : vector<1x32xi32>
    %52 = arith.andi %49, %51 : vector<1x32xi1>
    %53 = arith.extui %52 : vector<1x32xi1> to vector<1x32xi32>
    %54 = arith.sitofp %53 : vector<1x32xi32> to vector<1x32xf32>
    %c24_i32_7 = arith.constant 24 : i32
    %55 = vector.broadcast %c24_i32_7 : i32 to vector<1x32xi32>
    %56 = arith.cmpi sge, %33, %55 : vector<1x32xi32>
    %c32_i32 = arith.constant 32 : i32
    %57 = vector.broadcast %c32_i32 : i32 to vector<1x32xi32>
    %58 = arith.cmpi slt, %33, %57 : vector<1x32xi32>
    %59 = arith.andi %56, %58 : vector<1x32xi1>
    %60 = arith.extui %59 : vector<1x32xi1> to vector<1x32xi32>
    %61 = arith.sitofp %60 : vector<1x32xi32> to vector<1x32xf32>
    %62 = tpu.iota {dimensions = array<i32: 0>} : vector<96x96xi32>
    %63 = tpu.iota {dimensions = array<i32: 1>} : vector<96x96xi32>
    %c24_i32_8 = arith.constant 24 : i32
    %64 = vector.broadcast %c24_i32_8 : i32 to vector<96x96xi32>
    %65 = arith.cmpi sge, %62, %64 : vector<96x96xi32>
    %66 = arith.extui %65 : vector<96x96xi1> to vector<96x96xi32>
    %c48_i32_9 = arith.constant 48 : i32
    %67 = vector.broadcast %c48_i32_9 : i32 to vector<96x96xi32>
    %68 = arith.cmpi sge, %62, %67 : vector<96x96xi32>
    %69 = arith.extui %68 : vector<96x96xi1> to vector<96x96xi32>
    %70 = arith.addi %66, %69 : vector<96x96xi32>
    %c72_i32_10 = arith.constant 72 : i32
    %71 = vector.broadcast %c72_i32_10 : i32 to vector<96x96xi32>
    %72 = arith.cmpi sge, %62, %71 : vector<96x96xi32>
    %73 = arith.extui %72 : vector<96x96xi1> to vector<96x96xi32>
    %74 = arith.addi %70, %73 : vector<96x96xi32>
    %c24_i32_11 = arith.constant 24 : i32
    %75 = vector.broadcast %c24_i32_11 : i32 to vector<96x96xi32>
    %76 = arith.cmpi sge, %63, %75 : vector<96x96xi32>
    %77 = arith.extui %76 : vector<96x96xi1> to vector<96x96xi32>
    %c48_i32_12 = arith.constant 48 : i32
    %78 = vector.broadcast %c48_i32_12 : i32 to vector<96x96xi32>
    %79 = arith.cmpi sge, %63, %78 : vector<96x96xi32>
    %80 = arith.extui %79 : vector<96x96xi1> to vector<96x96xi32>
    %81 = arith.addi %77, %80 : vector<96x96xi32>
    %c72_i32_13 = arith.constant 72 : i32
    %82 = vector.broadcast %c72_i32_13 : i32 to vector<96x96xi32>
    %83 = arith.cmpi sge, %63, %82 : vector<96x96xi32>
    %84 = arith.extui %83 : vector<96x96xi1> to vector<96x96xi32>
    %85 = arith.addi %81, %84 : vector<96x96xi32>
    %86 = arith.cmpi eq, %74, %85 : vector<96x96xi32>
    %87 = arith.extui %86 : vector<96x96xi1> to vector<96x96xi32>
    %88 = arith.sitofp %87 : vector<96x96xi32> to vector<96x96xf32>
    %c0 = arith.constant 0 : index
    %c0_14 = arith.constant 0 : index
    %89 = vector.load %arg0[%c0, %c0_14] : memref<24x128xf32, #tpu.memory_space<vmem>>, vector<24x48xf32>
    %c0_15 = arith.constant 0 : index
    %c48 = arith.constant 48 : index
    %90 = vector.load %arg0[%c0_15, %c48] : memref<24x128xf32, #tpu.memory_space<vmem>>, vector<24x32xf32>
    %c0_16 = arith.constant 0 : index
    %c0_17 = arith.constant 0 : index
    %91 = vector.load %arg1[%c0_16, %c0_17] : memref<784x128xf32, #tpu.memory_space<vmem>>, vector<48x32xf32>
    %cst_18 = arith.constant dense<0.000000e+00> : vector<24x32xf32>
    %92 = tpu.matmul %89, %91, %cst_18 {dimension_numbers = #tpu.dot_dimension_numbers<[1], [0], [0], [1], [0, 0, 1, 1], [], []>} : vector<24x48xf32>, vector<48x32xf32>, vector<24x32xf32> -> vector<24x32xf32>
    %93 = arith.addf %92, %90 : vector<24x32xf32>
    %c80 = arith.constant 80 : index
    %c0_19 = arith.constant 0 : index
    %94 = vector.load %arg1[%c80, %c0_19] : memref<784x128xf32, #tpu.memory_space<vmem>>, vector<1x32xf32>
    %c80_20 = arith.constant 80 : index
    %c32 = arith.constant 32 : index
    %95 = vector.load %arg1[%c80_20, %c32] : memref<784x128xf32, #tpu.memory_space<vmem>>, vector<1x32xf32>
    %cst_21 = arith.constant dense<0.000000e+00> : vector<24xf32>
    %96 = vector.multi_reduction <add>, %93, %cst_21 [1] : vector<24x32xf32> to vector<24xf32>
    %97 = vector.shape_cast %96 : vector<24xf32> to vector<24x1xf32>
    %cst_22 = arith.constant 3.200000e+01 : f32
    %98 = vector.broadcast %cst_22 : f32 to vector<24x1xf32>
    %99 = arith.divf %97, %98 : vector<24x1xf32>
    %100 = vector.broadcast %99 : vector<24x1xf32> to vector<24x32xf32>
    %101 = arith.subf %93, %100 : vector<24x32xf32>
    %102 = arith.mulf %101, %101 : vector<24x32xf32>
    %cst_23 = arith.constant dense<0.000000e+00> : vector<24xf32>
    %103 = vector.multi_reduction <add>, %102, %cst_23 [1] : vector<24x32xf32> to vector<24xf32>
    %104 = vector.shape_cast %103 : vector<24xf32> to vector<24x1xf32>
    %cst_24 = arith.constant 3.200000e+01 : f32
    %105 = vector.broadcast %cst_24 : f32 to vector<24x1xf32>
    %106 = arith.divf %104, %105 : vector<24x1xf32>
    %cst_25 = arith.constant 9.99999974E-6 : f32
    %107 = vector.broadcast %cst_25 : f32 to vector<24x1xf32>
    %108 = arith.addf %106, %107 : vector<24x1xf32>
    %109 = math.rsqrt %108 : vector<24x1xf32>
    %110 = vector.broadcast %109 : vector<24x1xf32> to vector<24x32xf32>
    %111 = arith.mulf %101, %110 : vector<24x32xf32>
    %112 = vector.broadcast %94 : vector<1x32xf32> to vector<24x32xf32>
    %113 = arith.mulf %111, %112 : vector<24x32xf32>
    %114 = vector.broadcast %95 : vector<1x32xf32> to vector<24x32xf32>
    %115 = arith.addf %113, %114 : vector<24x32xf32>
    %cst_26 = arith.constant 0.000000e+00 : f32
    %116 = vector.broadcast %cst_26 : f32 to vector<96x24xf32>
    %c312 = arith.constant 312 : index
    %c0_27 = arith.constant 0 : index
    %117 = vector.load %arg1[%c312, %c0_27] : memref<784x128xf32, #tpu.memory_space<vmem>>, vector<1x32xf32>
    %c312_28 = arith.constant 312 : index
    %c32_29 = arith.constant 32 : index
    %118 = vector.load %arg1[%c312_28, %c32_29] : memref<784x128xf32, #tpu.memory_space<vmem>>, vector<1x32xf32>
    %c312_30 = arith.constant 312 : index
    %c64 = arith.constant 64 : index
    %119 = vector.load %arg1[%c312_30, %c64] : memref<784x128xf32, #tpu.memory_space<vmem>>, vector<1x32xf32>
    %c312_31 = arith.constant 312 : index
    %c96 = arith.constant 96 : index
    %120 = vector.load %arg1[%c312_31, %c96] : memref<784x128xf32, #tpu.memory_space<vmem>>, vector<1x32xf32>
    %c88 = arith.constant 88 : index
    %c0_32 = arith.constant 0 : index
    %121 = vector.load %arg1[%c88, %c0_32] : memref<784x128xf32, #tpu.memory_space<vmem>>, vector<32x96xf32>
    %c313 = arith.constant 313 : index
    %c0_33 = arith.constant 0 : index
    %122 = vector.load %arg1[%c313, %c0_33] : memref<784x128xf32, #tpu.memory_space<vmem>>, vector<1x96xf32>
    %c120 = arith.constant 120 : index
    %c0_34 = arith.constant 0 : index
    %123 = vector.load %arg1[%c120, %c0_34] : memref<784x128xf32, #tpu.memory_space<vmem>>, vector<32x32xf32>
    %c314 = arith.constant 314 : index
    %c0_35 = arith.constant 0 : index
    %124 = vector.load %arg1[%c314, %c0_35] : memref<784x128xf32, #tpu.memory_space<vmem>>, vector<1x32xf32>
    %c152 = arith.constant 152 : index
    %c0_36 = arith.constant 0 : index
    %125 = vector.load %arg1[%c152, %c0_36] : memref<784x128xf32, #tpu.memory_space<vmem>>, vector<32x128xf32>
    %c315 = arith.constant 315 : index
    %c0_37 = arith.constant 0 : index
    %126 = vector.load %arg1[%c315, %c0_37] : memref<784x128xf32, #tpu.memory_space<vmem>>, vector<1x128xf32>
    %c184 = arith.constant 184 : index
    %c0_38 = arith.constant 0 : index
    %127 = vector.load %arg1[%c184, %c0_38] : memref<784x128xf32, #tpu.memory_space<vmem>>, vector<128x32xf32>
    %c314_39 = arith.constant 314 : index
    %c32_40 = arith.constant 32 : index
    %128 = vector.load %arg1[%c314_39, %c32_40] : memref<784x128xf32, #tpu.memory_space<vmem>>, vector<1x32xf32>
    %cst_41 = arith.constant dense<0.000000e+00> : vector<24xf32>
    %129 = vector.multi_reduction <add>, %115, %cst_41 [1] : vector<24x32xf32> to vector<24xf32>
    %130 = vector.shape_cast %129 : vector<24xf32> to vector<24x1xf32>
    %cst_42 = arith.constant 3.200000e+01 : f32
    %131 = vector.broadcast %cst_42 : f32 to vector<24x1xf32>
    %132 = arith.divf %130, %131 : vector<24x1xf32>
    %133 = vector.broadcast %132 : vector<24x1xf32> to vector<24x32xf32>
    %134 = arith.subf %115, %133 : vector<24x32xf32>
    %135 = arith.mulf %134, %134 : vector<24x32xf32>
    %cst_43 = arith.constant dense<0.000000e+00> : vector<24xf32>
    %136 = vector.multi_reduction <add>, %135, %cst_43 [1] : vector<24x32xf32> to vector<24xf32>
    %137 = vector.shape_cast %136 : vector<24xf32> to vector<24x1xf32>
    %cst_44 = arith.constant 3.200000e+01 : f32
    %138 = vector.broadcast %cst_44 : f32 to vector<24x1xf32>
    %139 = arith.divf %137, %138 : vector<24x1xf32>
    %cst_45 = arith.constant 9.99999974E-6 : f32
    %140 = vector.broadcast %cst_45 : f32 to vector<24x1xf32>
    %141 = arith.addf %139, %140 : vector<24x1xf32>
    %142 = math.rsqrt %141 : vector<24x1xf32>
    %143 = vector.broadcast %142 : vector<24x1xf32> to vector<24x32xf32>
    %144 = arith.mulf %134, %143 : vector<24x32xf32>
    %145 = vector.broadcast %117 : vector<1x32xf32> to vector<24x32xf32>
    %146 = arith.mulf %144, %145 : vector<24x32xf32>
    %147 = vector.broadcast %118 : vector<1x32xf32> to vector<24x32xf32>
    %148 = arith.addf %146, %147 : vector<24x32xf32>
    %cst_46 = arith.constant dense<0.000000e+00> : vector<24x96xf32>
    %149 = tpu.matmul %148, %121, %cst_46 {dimension_numbers = #tpu.dot_dimension_numbers<[1], [0], [0], [1], [0, 0, 1, 1], [], []>} : vector<24x32xf32>, vector<32x96xf32>, vector<24x96xf32> -> vector<24x96xf32>
    %150 = vector.broadcast %122 : vector<1x96xf32> to vector<24x96xf32>
    %151 = arith.addf %149, %150 : vector<24x96xf32>
    %152 = vector.extract_strided_slice %151 {offsets = [0, 0], sizes = [24, 32], strides = [1, 1]} : vector<24x96xf32> to vector<24x32xf32>
    %cst_47 = arith.constant 0.353553385 : f32
    %153 = vector.broadcast %cst_47 : f32 to vector<24x32xf32>
    %154 = arith.mulf %152, %153 : vector<24x32xf32>
    %155 = vector.extract_strided_slice %151 {offsets = [0, 32], sizes = [24, 32], strides = [1, 1]} : vector<24x96xf32> to vector<24x32xf32>
    %156 = vector.broadcast %40 : vector<1x32xf32> to vector<24x32xf32>
    %157 = arith.mulf %154, %156 : vector<24x32xf32>
    %158 = vector.broadcast %47 : vector<1x32xf32> to vector<24x32xf32>
    %159 = arith.mulf %154, %158 : vector<24x32xf32>
    %160 = vector.broadcast %54 : vector<1x32xf32> to vector<24x32xf32>
    %161 = arith.mulf %154, %160 : vector<24x32xf32>
    %162 = vector.broadcast %61 : vector<1x32xf32> to vector<24x32xf32>
    %163 = arith.mulf %154, %162 : vector<24x32xf32>
    %164 = tpu.concatenate %157, %159, %161, %163 in 0 : vector<24x32xf32>, vector<24x32xf32>, vector<24x32xf32>, vector<24x32xf32> -> vector<96x32xf32>
    %cst_48 = arith.constant dense<0.000000e+00> : vector<96x24xf32>
    %165 = tpu.matmul %164, %155, %cst_48 {dimension_numbers = #tpu.dot_dimension_numbers<[1], [1], [0], [0], [0, 0, 1, 0], [], []>} : vector<96x32xf32>, vector<24x32xf32>, vector<96x24xf32> -> vector<96x24xf32>
    %166 = vector.broadcast %5 : vector<1x24xf32> to vector<96x24xf32>
    %167 = arith.addf %165, %166 : vector<96x24xf32>
    %cst_49 = arith.constant dense<0xFF800000> : vector<96xf32>
    %168 = vector.multi_reduction <maximumf>, %167, %cst_49 [1] : vector<96x24xf32> to vector<96xf32>
    %169 = vector.shape_cast %168 : vector<96xf32> to vector<96x1xf32>
    %170 = vector.broadcast %169 : vector<96x1xf32> to vector<96x24xf32>
    %171 = arith.subf %167, %170 : vector<96x24xf32>
    %172 = math.exp %171 : vector<96x24xf32>
    %cst_50 = arith.constant dense<0.000000e+00> : vector<96xf32>
    %173 = vector.multi_reduction <add>, %172, %cst_50 [1] : vector<96x24xf32> to vector<96xf32>
    %174 = vector.shape_cast %173 : vector<96xf32> to vector<96x1xf32>
    %175 = tpu.reciprocal %174 {approx = true} : vector<96x1xf32> -> vector<96x1xf32>
    %176 = vector.broadcast %175 : vector<96x1xf32> to vector<96x24xf32>
    %177 = arith.mulf %172, %176 : vector<96x24xf32>
    %178 = vector.broadcast %32 : vector<96x1xf32> to vector<96x24xf32>
    %179 = arith.mulf %177, %178 : vector<96x24xf32>
    %180 = arith.addf %116, %179 : vector<96x24xf32>
    %181 = vector.extract_strided_slice %151 {offsets = [0, 64], sizes = [24, 32], strides = [1, 1]} : vector<24x96xf32> to vector<24x32xf32>
    %cst_51 = arith.constant dense<0.000000e+00> : vector<96x32xf32>
    %182 = tpu.matmul %179, %181, %cst_51 {dimension_numbers = #tpu.dot_dimension_numbers<[1], [0], [0], [1], [0, 0, 1, 1], [], []>} : vector<96x24xf32>, vector<24x32xf32>, vector<96x32xf32> -> vector<96x32xf32>
    %183 = vector.extract_strided_slice %182 {offsets = [0, 0], sizes = [24, 32], strides = [1, 1]} : vector<96x32xf32> to vector<24x32xf32>
    %184 = vector.broadcast %40 : vector<1x32xf32> to vector<24x32xf32>
    %185 = arith.mulf %183, %184 : vector<24x32xf32>
    %cst_52 = arith.constant 0.000000e+00 : f32
    %186 = vector.broadcast %cst_52 : f32 to vector<24x32xf32>
    %187 = arith.addf %186, %185 : vector<24x32xf32>
    %188 = vector.extract_strided_slice %182 {offsets = [24, 0], sizes = [24, 32], strides = [1, 1]} : vector<96x32xf32> to vector<24x32xf32>
    %189 = vector.broadcast %47 : vector<1x32xf32> to vector<24x32xf32>
    %190 = arith.mulf %188, %189 : vector<24x32xf32>
    %191 = arith.addf %187, %190 : vector<24x32xf32>
    %192 = vector.extract_strided_slice %182 {offsets = [48, 0], sizes = [24, 32], strides = [1, 1]} : vector<96x32xf32> to vector<24x32xf32>
    %193 = vector.broadcast %54 : vector<1x32xf32> to vector<24x32xf32>
    %194 = arith.mulf %192, %193 : vector<24x32xf32>
    %195 = arith.addf %191, %194 : vector<24x32xf32>
    %196 = vector.extract_strided_slice %182 {offsets = [72, 0], sizes = [24, 32], strides = [1, 1]} : vector<96x32xf32> to vector<24x32xf32>
    %197 = vector.broadcast %61 : vector<1x32xf32> to vector<24x32xf32>
    %198 = arith.mulf %196, %197 : vector<24x32xf32>
    %199 = arith.addf %195, %198 : vector<24x32xf32>
    %cst_53 = arith.constant dense<0.000000e+00> : vector<24x32xf32>
    %200 = tpu.matmul %199, %123, %cst_53 {dimension_numbers = #tpu.dot_dimension_numbers<[1], [0], [0], [1], [0, 0, 1, 1], [], []>} : vector<24x32xf32>, vector<32x32xf32>, vector<24x32xf32> -> vector<24x32xf32>
    %201 = arith.addf %115, %200 : vector<24x32xf32>
    %202 = vector.broadcast %124 : vector<1x32xf32> to vector<24x32xf32>
    %203 = arith.addf %201, %202 : vector<24x32xf32>
    %cst_54 = arith.constant dense<0.000000e+00> : vector<24xf32>
    %204 = vector.multi_reduction <add>, %203, %cst_54 [1] : vector<24x32xf32> to vector<24xf32>
    %205 = vector.shape_cast %204 : vector<24xf32> to vector<24x1xf32>
    %cst_55 = arith.constant 3.200000e+01 : f32
    %206 = vector.broadcast %cst_55 : f32 to vector<24x1xf32>
    %207 = arith.divf %205, %206 : vector<24x1xf32>
    %208 = vector.broadcast %207 : vector<24x1xf32> to vector<24x32xf32>
    %209 = arith.subf %203, %208 : vector<24x32xf32>
    %210 = arith.mulf %209, %209 : vector<24x32xf32>
    %cst_56 = arith.constant dense<0.000000e+00> : vector<24xf32>
    %211 = vector.multi_reduction <add>, %210, %cst_56 [1] : vector<24x32xf32> to vector<24xf32>
    %212 = vector.shape_cast %211 : vector<24xf32> to vector<24x1xf32>
    %cst_57 = arith.constant 3.200000e+01 : f32
    %213 = vector.broadcast %cst_57 : f32 to vector<24x1xf32>
    %214 = arith.divf %212, %213 : vector<24x1xf32>
    %cst_58 = arith.constant 9.99999974E-6 : f32
    %215 = vector.broadcast %cst_58 : f32 to vector<24x1xf32>
    %216 = arith.addf %214, %215 : vector<24x1xf32>
    %217 = math.rsqrt %216 : vector<24x1xf32>
    %218 = vector.broadcast %217 : vector<24x1xf32> to vector<24x32xf32>
    %219 = arith.mulf %209, %218 : vector<24x32xf32>
    %220 = vector.broadcast %119 : vector<1x32xf32> to vector<24x32xf32>
    %221 = arith.mulf %219, %220 : vector<24x32xf32>
    %222 = vector.broadcast %120 : vector<1x32xf32> to vector<24x32xf32>
    %223 = arith.addf %221, %222 : vector<24x32xf32>
    %cst_59 = arith.constant dense<0.000000e+00> : vector<24x128xf32>
    %224 = tpu.matmul %223, %125, %cst_59 {dimension_numbers = #tpu.dot_dimension_numbers<[1], [0], [0], [1], [0, 0, 1, 1], [], []>} : vector<24x32xf32>, vector<32x128xf32>, vector<24x128xf32> -> vector<24x128xf32>
    %225 = vector.broadcast %126 : vector<1x128xf32> to vector<24x128xf32>
    %226 = arith.addf %224, %225 : vector<24x128xf32>
    %cst_60 = arith.constant 1.702000e+00 : f32
    %227 = vector.broadcast %cst_60 : f32 to vector<24x128xf32>
    %228 = arith.mulf %227, %226 : vector<24x128xf32>
    %229 = arith.negf %228 : vector<24x128xf32>
    %230 = math.exp %229 : vector<24x128xf32>
    %cst_61 = arith.constant 1.000000e+00 : f32
    %231 = vector.broadcast %cst_61 : f32 to vector<24x128xf32>
    %232 = arith.addf %231, %230 : vector<24x128xf32>
    %233 = arith.divf %231, %232 : vector<24x128xf32>
    %234 = arith.mulf %226, %233 : vector<24x128xf32>
    %cst_62 = arith.constant dense<0.000000e+00> : vector<24x32xf32>
    %235 = tpu.matmul %234, %127, %cst_62 {dimension_numbers = #tpu.dot_dimension_numbers<[1], [0], [0], [1], [0, 0, 1, 1], [], []>} : vector<24x128xf32>, vector<128x32xf32>, vector<24x32xf32> -> vector<24x32xf32>
    %236 = arith.addf %203, %235 : vector<24x32xf32>
    %237 = vector.broadcast %128 : vector<1x32xf32> to vector<24x32xf32>
    %238 = arith.addf %236, %237 : vector<24x32xf32>
    %c544 = arith.constant 544 : index
    %c0_63 = arith.constant 0 : index
    %239 = vector.load %arg1[%c544, %c0_63] : memref<784x128xf32, #tpu.memory_space<vmem>>, vector<1x32xf32>
    %c544_64 = arith.constant 544 : index
    %c32_65 = arith.constant 32 : index
    %240 = vector.load %arg1[%c544_64, %c32_65] : memref<784x128xf32, #tpu.memory_space<vmem>>, vector<1x32xf32>
    %c544_66 = arith.constant 544 : index
    %c64_67 = arith.constant 64 : index
    %241 = vector.load %arg1[%c544_66, %c64_67] : memref<784x128xf32, #tpu.memory_space<vmem>>, vector<1x32xf32>
    %c544_68 = arith.constant 544 : index
    %c96_69 = arith.constant 96 : index
    %242 = vector.load %arg1[%c544_68, %c96_69] : memref<784x128xf32, #tpu.memory_space<vmem>>, vector<1x32xf32>
    %c320 = arith.constant 320 : index
    %c0_70 = arith.constant 0 : index
    %243 = vector.load %arg1[%c320, %c0_70] : memref<784x128xf32, #tpu.memory_space<vmem>>, vector<32x96xf32>
    %c545 = arith.constant 545 : index
    %c0_71 = arith.constant 0 : index
    %244 = vector.load %arg1[%c545, %c0_71] : memref<784x128xf32, #tpu.memory_space<vmem>>, vector<1x96xf32>
    %c352 = arith.constant 352 : index
    %c0_72 = arith.constant 0 : index
    %245 = vector.load %arg1[%c352, %c0_72] : memref<784x128xf32, #tpu.memory_space<vmem>>, vector<32x32xf32>
    %c546 = arith.constant 546 : index
    %c0_73 = arith.constant 0 : index
    %246 = vector.load %arg1[%c546, %c0_73] : memref<784x128xf32, #tpu.memory_space<vmem>>, vector<1x32xf32>
    %c384 = arith.constant 384 : index
    %c0_74 = arith.constant 0 : index
    %247 = vector.load %arg1[%c384, %c0_74] : memref<784x128xf32, #tpu.memory_space<vmem>>, vector<32x128xf32>
    %c547 = arith.constant 547 : index
    %c0_75 = arith.constant 0 : index
    %248 = vector.load %arg1[%c547, %c0_75] : memref<784x128xf32, #tpu.memory_space<vmem>>, vector<1x128xf32>
    %c416 = arith.constant 416 : index
    %c0_76 = arith.constant 0 : index
    %249 = vector.load %arg1[%c416, %c0_76] : memref<784x128xf32, #tpu.memory_space<vmem>>, vector<128x32xf32>
    %c546_77 = arith.constant 546 : index
    %c32_78 = arith.constant 32 : index
    %250 = vector.load %arg1[%c546_77, %c32_78] : memref<784x128xf32, #tpu.memory_space<vmem>>, vector<1x32xf32>
    %cst_79 = arith.constant dense<0.000000e+00> : vector<24xf32>
    %251 = vector.multi_reduction <add>, %238, %cst_79 [1] : vector<24x32xf32> to vector<24xf32>
    %252 = vector.shape_cast %251 : vector<24xf32> to vector<24x1xf32>
    %cst_80 = arith.constant 3.200000e+01 : f32
    %253 = vector.broadcast %cst_80 : f32 to vector<24x1xf32>
    %254 = arith.divf %252, %253 : vector<24x1xf32>
    %255 = vector.broadcast %254 : vector<24x1xf32> to vector<24x32xf32>
    %256 = arith.subf %238, %255 : vector<24x32xf32>
    %257 = arith.mulf %256, %256 : vector<24x32xf32>
    %cst_81 = arith.constant dense<0.000000e+00> : vector<24xf32>
    %258 = vector.multi_reduction <add>, %257, %cst_81 [1] : vector<24x32xf32> to vector<24xf32>
    %259 = vector.shape_cast %258 : vector<24xf32> to vector<24x1xf32>
    %cst_82 = arith.constant 3.200000e+01 : f32
    %260 = vector.broadcast %cst_82 : f32 to vector<24x1xf32>
    %261 = arith.divf %259, %260 : vector<24x1xf32>
    %cst_83 = arith.constant 9.99999974E-6 : f32
    %262 = vector.broadcast %cst_83 : f32 to vector<24x1xf32>
    %263 = arith.addf %261, %262 : vector<24x1xf32>
    %264 = math.rsqrt %263 : vector<24x1xf32>
    %265 = vector.broadcast %264 : vector<24x1xf32> to vector<24x32xf32>
    %266 = arith.mulf %256, %265 : vector<24x32xf32>
    %267 = vector.broadcast %239 : vector<1x32xf32> to vector<24x32xf32>
    %268 = arith.mulf %266, %267 : vector<24x32xf32>
    %269 = vector.broadcast %240 : vector<1x32xf32> to vector<24x32xf32>
    %270 = arith.addf %268, %269 : vector<24x32xf32>
    %cst_84 = arith.constant dense<0.000000e+00> : vector<24x96xf32>
    %271 = tpu.matmul %270, %243, %cst_84 {dimension_numbers = #tpu.dot_dimension_numbers<[1], [0], [0], [1], [0, 0, 1, 1], [], []>} : vector<24x32xf32>, vector<32x96xf32>, vector<24x96xf32> -> vector<24x96xf32>
    %272 = vector.broadcast %244 : vector<1x96xf32> to vector<24x96xf32>
    %273 = arith.addf %271, %272 : vector<24x96xf32>
    %274 = vector.extract_strided_slice %273 {offsets = [0, 0], sizes = [24, 32], strides = [1, 1]} : vector<24x96xf32> to vector<24x32xf32>
    %cst_85 = arith.constant 0.353553385 : f32
    %275 = vector.broadcast %cst_85 : f32 to vector<24x32xf32>
    %276 = arith.mulf %274, %275 : vector<24x32xf32>
    %277 = vector.extract_strided_slice %273 {offsets = [0, 32], sizes = [24, 32], strides = [1, 1]} : vector<24x96xf32> to vector<24x32xf32>
    %278 = vector.broadcast %40 : vector<1x32xf32> to vector<24x32xf32>
    %279 = arith.mulf %276, %278 : vector<24x32xf32>
    %280 = vector.broadcast %47 : vector<1x32xf32> to vector<24x32xf32>
    %281 = arith.mulf %276, %280 : vector<24x32xf32>
    %282 = vector.broadcast %54 : vector<1x32xf32> to vector<24x32xf32>
    %283 = arith.mulf %276, %282 : vector<24x32xf32>
    %284 = vector.broadcast %61 : vector<1x32xf32> to vector<24x32xf32>
    %285 = arith.mulf %276, %284 : vector<24x32xf32>
    %286 = tpu.concatenate %279, %281, %283, %285 in 0 : vector<24x32xf32>, vector<24x32xf32>, vector<24x32xf32>, vector<24x32xf32> -> vector<96x32xf32>
    %cst_86 = arith.constant dense<0.000000e+00> : vector<96x24xf32>
    %287 = tpu.matmul %286, %277, %cst_86 {dimension_numbers = #tpu.dot_dimension_numbers<[1], [1], [0], [0], [0, 0, 1, 0], [], []>} : vector<96x32xf32>, vector<24x32xf32>, vector<96x24xf32> -> vector<96x24xf32>
    %288 = vector.broadcast %5 : vector<1x24xf32> to vector<96x24xf32>
    %289 = arith.addf %287, %288 : vector<96x24xf32>
    %cst_87 = arith.constant dense<0xFF800000> : vector<96xf32>
    %290 = vector.multi_reduction <maximumf>, %289, %cst_87 [1] : vector<96x24xf32> to vector<96xf32>
    %291 = vector.shape_cast %290 : vector<96xf32> to vector<96x1xf32>
    %292 = vector.broadcast %291 : vector<96x1xf32> to vector<96x24xf32>
    %293 = arith.subf %289, %292 : vector<96x24xf32>
    %294 = math.exp %293 : vector<96x24xf32>
    %cst_88 = arith.constant dense<0.000000e+00> : vector<96xf32>
    %295 = vector.multi_reduction <add>, %294, %cst_88 [1] : vector<96x24xf32> to vector<96xf32>
    %296 = vector.shape_cast %295 : vector<96xf32> to vector<96x1xf32>
    %297 = tpu.reciprocal %296 {approx = true} : vector<96x1xf32> -> vector<96x1xf32>
    %298 = vector.broadcast %297 : vector<96x1xf32> to vector<96x24xf32>
    %299 = arith.mulf %294, %298 : vector<96x24xf32>
    %300 = vector.broadcast %32 : vector<96x1xf32> to vector<96x24xf32>
    %301 = arith.mulf %299, %300 : vector<96x24xf32>
    %302 = arith.addf %180, %301 : vector<96x24xf32>
    %303 = vector.extract_strided_slice %273 {offsets = [0, 64], sizes = [24, 32], strides = [1, 1]} : vector<24x96xf32> to vector<24x32xf32>
    %cst_89 = arith.constant dense<0.000000e+00> : vector<96x32xf32>
    %304 = tpu.matmul %301, %303, %cst_89 {dimension_numbers = #tpu.dot_dimension_numbers<[1], [0], [0], [1], [0, 0, 1, 1], [], []>} : vector<96x24xf32>, vector<24x32xf32>, vector<96x32xf32> -> vector<96x32xf32>
    %305 = vector.extract_strided_slice %304 {offsets = [0, 0], sizes = [24, 32], strides = [1, 1]} : vector<96x32xf32> to vector<24x32xf32>
    %306 = vector.broadcast %40 : vector<1x32xf32> to vector<24x32xf32>
    %307 = arith.mulf %305, %306 : vector<24x32xf32>
    %cst_90 = arith.constant 0.000000e+00 : f32
    %308 = vector.broadcast %cst_90 : f32 to vector<24x32xf32>
    %309 = arith.addf %308, %307 : vector<24x32xf32>
    %310 = vector.extract_strided_slice %304 {offsets = [24, 0], sizes = [24, 32], strides = [1, 1]} : vector<96x32xf32> to vector<24x32xf32>
    %311 = vector.broadcast %47 : vector<1x32xf32> to vector<24x32xf32>
    %312 = arith.mulf %310, %311 : vector<24x32xf32>
    %313 = arith.addf %309, %312 : vector<24x32xf32>
    %314 = vector.extract_strided_slice %304 {offsets = [48, 0], sizes = [24, 32], strides = [1, 1]} : vector<96x32xf32> to vector<24x32xf32>
    %315 = vector.broadcast %54 : vector<1x32xf32> to vector<24x32xf32>
    %316 = arith.mulf %314, %315 : vector<24x32xf32>
    %317 = arith.addf %313, %316 : vector<24x32xf32>
    %318 = vector.extract_strided_slice %304 {offsets = [72, 0], sizes = [24, 32], strides = [1, 1]} : vector<96x32xf32> to vector<24x32xf32>
    %319 = vector.broadcast %61 : vector<1x32xf32> to vector<24x32xf32>
    %320 = arith.mulf %318, %319 : vector<24x32xf32>
    %321 = arith.addf %317, %320 : vector<24x32xf32>
    %cst_91 = arith.constant dense<0.000000e+00> : vector<24x32xf32>
    %322 = tpu.matmul %321, %245, %cst_91 {dimension_numbers = #tpu.dot_dimension_numbers<[1], [0], [0], [1], [0, 0, 1, 1], [], []>} : vector<24x32xf32>, vector<32x32xf32>, vector<24x32xf32> -> vector<24x32xf32>
    %323 = arith.addf %238, %322 : vector<24x32xf32>
    %324 = vector.broadcast %246 : vector<1x32xf32> to vector<24x32xf32>
    %325 = arith.addf %323, %324 : vector<24x32xf32>
    %cst_92 = arith.constant dense<0.000000e+00> : vector<24xf32>
    %326 = vector.multi_reduction <add>, %325, %cst_92 [1] : vector<24x32xf32> to vector<24xf32>
    %327 = vector.shape_cast %326 : vector<24xf32> to vector<24x1xf32>
    %cst_93 = arith.constant 3.200000e+01 : f32
    %328 = vector.broadcast %cst_93 : f32 to vector<24x1xf32>
    %329 = arith.divf %327, %328 : vector<24x1xf32>
    %330 = vector.broadcast %329 : vector<24x1xf32> to vector<24x32xf32>
    %331 = arith.subf %325, %330 : vector<24x32xf32>
    %332 = arith.mulf %331, %331 : vector<24x32xf32>
    %cst_94 = arith.constant dense<0.000000e+00> : vector<24xf32>
    %333 = vector.multi_reduction <add>, %332, %cst_94 [1] : vector<24x32xf32> to vector<24xf32>
    %334 = vector.shape_cast %333 : vector<24xf32> to vector<24x1xf32>
    %cst_95 = arith.constant 3.200000e+01 : f32
    %335 = vector.broadcast %cst_95 : f32 to vector<24x1xf32>
    %336 = arith.divf %334, %335 : vector<24x1xf32>
    %cst_96 = arith.constant 9.99999974E-6 : f32
    %337 = vector.broadcast %cst_96 : f32 to vector<24x1xf32>
    %338 = arith.addf %336, %337 : vector<24x1xf32>
    %339 = math.rsqrt %338 : vector<24x1xf32>
    %340 = vector.broadcast %339 : vector<24x1xf32> to vector<24x32xf32>
    %341 = arith.mulf %331, %340 : vector<24x32xf32>
    %342 = vector.broadcast %241 : vector<1x32xf32> to vector<24x32xf32>
    %343 = arith.mulf %341, %342 : vector<24x32xf32>
    %344 = vector.broadcast %242 : vector<1x32xf32> to vector<24x32xf32>
    %345 = arith.addf %343, %344 : vector<24x32xf32>
    %cst_97 = arith.constant dense<0.000000e+00> : vector<24x128xf32>
    %346 = tpu.matmul %345, %247, %cst_97 {dimension_numbers = #tpu.dot_dimension_numbers<[1], [0], [0], [1], [0, 0, 1, 1], [], []>} : vector<24x32xf32>, vector<32x128xf32>, vector<24x128xf32> -> vector<24x128xf32>
    %347 = vector.broadcast %248 : vector<1x128xf32> to vector<24x128xf32>
    %348 = arith.addf %346, %347 : vector<24x128xf32>
    %cst_98 = arith.constant 1.702000e+00 : f32
    %349 = vector.broadcast %cst_98 : f32 to vector<24x128xf32>
    %350 = arith.mulf %349, %348 : vector<24x128xf32>
    %351 = arith.negf %350 : vector<24x128xf32>
    %352 = math.exp %351 : vector<24x128xf32>
    %cst_99 = arith.constant 1.000000e+00 : f32
    %353 = vector.broadcast %cst_99 : f32 to vector<24x128xf32>
    %354 = arith.addf %353, %352 : vector<24x128xf32>
    %355 = arith.divf %353, %354 : vector<24x128xf32>
    %356 = arith.mulf %348, %355 : vector<24x128xf32>
    %cst_100 = arith.constant dense<0.000000e+00> : vector<24x32xf32>
    %357 = tpu.matmul %356, %249, %cst_100 {dimension_numbers = #tpu.dot_dimension_numbers<[1], [0], [0], [1], [0, 0, 1, 1], [], []>} : vector<24x128xf32>, vector<128x32xf32>, vector<24x32xf32> -> vector<24x32xf32>
    %358 = arith.addf %325, %357 : vector<24x32xf32>
    %359 = vector.broadcast %250 : vector<1x32xf32> to vector<24x32xf32>
    %360 = arith.addf %358, %359 : vector<24x32xf32>
    %c776 = arith.constant 776 : index
    %c0_101 = arith.constant 0 : index
    %361 = vector.load %arg1[%c776, %c0_101] : memref<784x128xf32, #tpu.memory_space<vmem>>, vector<1x32xf32>
    %c776_102 = arith.constant 776 : index
    %c32_103 = arith.constant 32 : index
    %362 = vector.load %arg1[%c776_102, %c32_103] : memref<784x128xf32, #tpu.memory_space<vmem>>, vector<1x32xf32>
    %c552 = arith.constant 552 : index
    %c0_104 = arith.constant 0 : index
    %363 = vector.load %arg1[%c552, %c0_104] : memref<784x128xf32, #tpu.memory_space<vmem>>, vector<32x96xf32>
    %c777 = arith.constant 777 : index
    %c0_105 = arith.constant 0 : index
    %364 = vector.load %arg1[%c777, %c0_105] : memref<784x128xf32, #tpu.memory_space<vmem>>, vector<1x96xf32>
    %c584 = arith.constant 584 : index
    %c0_106 = arith.constant 0 : index
    %365 = vector.load %arg1[%c584, %c0_106] : memref<784x128xf32, #tpu.memory_space<vmem>>, vector<32x32xf32>
    %c778 = arith.constant 778 : index
    %c0_107 = arith.constant 0 : index
    %366 = vector.load %arg1[%c778, %c0_107] : memref<784x128xf32, #tpu.memory_space<vmem>>, vector<1x32xf32>
    %c80_108 = arith.constant 80 : index
    %c64_109 = arith.constant 64 : index
    %367 = vector.load %arg1[%c80_108, %c64_109] : memref<784x128xf32, #tpu.memory_space<vmem>>, vector<1x32xf32>
    %c80_110 = arith.constant 80 : index
    %c96_111 = arith.constant 96 : index
    %368 = vector.load %arg1[%c80_110, %c96_111] : memref<784x128xf32, #tpu.memory_space<vmem>>, vector<1x32xf32>
    %c48_112 = arith.constant 48 : index
    %c0_113 = arith.constant 0 : index
    %369 = vector.load %arg1[%c48_112, %c0_113] : memref<784x128xf32, #tpu.memory_space<vmem>>, vector<32x16xf32>
    %c0_114 = arith.constant 0 : index
    %c80_115 = arith.constant 80 : index
    %370 = vector.load %arg0[%c0_114, %c80_115] : memref<24x128xf32, #tpu.memory_space<vmem>>, vector<6x16xf32>
    %371 = arith.mulf %370, %370 : vector<6x16xf32>
    %cst_116 = arith.constant dense<0.000000e+00> : vector<6xf32>
    %372 = vector.multi_reduction <add>, %371, %cst_116 [1] : vector<6x16xf32> to vector<6xf32>
    %373 = vector.shape_cast %372 : vector<6xf32> to vector<6x1xf32>
    %374 = math.rsqrt %373 : vector<6x1xf32>
    %375 = vector.broadcast %374 : vector<6x1xf32> to vector<6x16xf32>
    %376 = arith.mulf %370, %375 : vector<6x16xf32>
    %cst_117 = arith.constant dense<0.000000e+00> : vector<24xf32>
    %377 = vector.multi_reduction <add>, %148, %cst_117 [1] : vector<24x32xf32> to vector<24xf32>
    %378 = vector.shape_cast %377 : vector<24xf32> to vector<24x1xf32>
    %cst_118 = arith.constant 3.200000e+01 : f32
    %379 = vector.broadcast %cst_118 : f32 to vector<24x1xf32>
    %380 = arith.divf %378, %379 : vector<24x1xf32>
    %381 = vector.broadcast %380 : vector<24x1xf32> to vector<24x32xf32>
    %382 = arith.subf %148, %381 : vector<24x32xf32>
    %383 = arith.mulf %382, %382 : vector<24x32xf32>
    %cst_119 = arith.constant dense<0.000000e+00> : vector<24xf32>
    %384 = vector.multi_reduction <add>, %383, %cst_119 [1] : vector<24x32xf32> to vector<24xf32>
    %385 = vector.shape_cast %384 : vector<24xf32> to vector<24x1xf32>
    %cst_120 = arith.constant 3.200000e+01 : f32
    %386 = vector.broadcast %cst_120 : f32 to vector<24x1xf32>
    %387 = arith.divf %385, %386 : vector<24x1xf32>
    %cst_121 = arith.constant 9.99999974E-6 : f32
    %388 = vector.broadcast %cst_121 : f32 to vector<24x1xf32>
    %389 = arith.addf %387, %388 : vector<24x1xf32>
    %390 = math.rsqrt %389 : vector<24x1xf32>
    %391 = vector.broadcast %390 : vector<24x1xf32> to vector<24x32xf32>
    %392 = arith.mulf %382, %391 : vector<24x32xf32>
    %393 = vector.broadcast %361 : vector<1x32xf32> to vector<24x32xf32>
    %394 = arith.mulf %392, %393 : vector<24x32xf32>
    %395 = vector.broadcast %362 : vector<1x32xf32> to vector<24x32xf32>
    %396 = arith.addf %394, %395 : vector<24x32xf32>
    %cst_122 = arith.constant dense<0.000000e+00> : vector<24x96xf32>
    %397 = tpu.matmul %396, %363, %cst_122 {dimension_numbers = #tpu.dot_dimension_numbers<[1], [0], [0], [1], [0, 0, 1, 1], [], []>} : vector<24x32xf32>, vector<32x96xf32>, vector<24x96xf32> -> vector<24x96xf32>
    %398 = vector.broadcast %364 : vector<1x96xf32> to vector<24x96xf32>
    %399 = arith.addf %397, %398 : vector<24x96xf32>
    %400 = vector.extract_strided_slice %399 {offsets = [0, 64], sizes = [24, 32], strides = [1, 1]} : vector<24x96xf32> to vector<24x32xf32>
    %cst_123 = arith.constant dense<0.000000e+00> : vector<96x24xf32>
    %401 = tpu.matmul %88, %302, %cst_123 {dimension_numbers = #tpu.dot_dimension_numbers<[1], [0], [0], [1], [0, 0, 1, 1], [], []>} : vector<96x96xf32>, vector<96x24xf32>, vector<96x24xf32> -> vector<96x24xf32>
    %cst_124 = arith.constant 0.000000e+00 : f32
    %402 = vector.broadcast %cst_124 : f32 to vector<96x24xf32>
    %403 = arith.cmpf oeq, %401, %402 : vector<96x24xf32>
    %cst_125 = arith.constant 1.000000e+00 : f32
    %404 = vector.broadcast %cst_125 : f32 to vector<96x24xf32>
    %405 = arith.select %403, %404, %401 : vector<96x24xi1>, vector<96x24xf32>
    %406 = arith.divf %302, %405 : vector<96x24xf32>
    %cst_126 = arith.constant dense<0.000000e+00> : vector<96xf32>
    %407 = vector.multi_reduction <add>, %406, %cst_126 [1] : vector<96x24xf32> to vector<96xf32>
    %408 = vector.shape_cast %407 : vector<96xf32> to vector<96x1xf32>
    %cst_127 = arith.constant 0.000000e+00 : f32
    %409 = vector.broadcast %cst_127 : f32 to vector<96x1xf32>
    %410 = arith.cmpf oeq, %408, %409 : vector<96x1xf32>
    %cst_128 = arith.constant 1.000000e+00 : f32
    %411 = vector.broadcast %cst_128 : f32 to vector<96x1xf32>
    %412 = arith.select %410, %411, %408 : vector<96x1xi1>, vector<96x1xf32>
    %413 = vector.broadcast %412 : vector<96x1xf32> to vector<96x24xf32>
    %414 = arith.divf %406, %413 : vector<96x24xf32>
    %415 = vector.extract_strided_slice %414 {offsets = [0, 0], sizes = [24, 24], strides = [1, 1]} : vector<96x24xf32> to vector<24x24xf32>
    %416 = tpu.transpose %415, [1, 0] : vector<24x24xf32> -> vector<24x24xf32>
    %417 = vector.extract_strided_slice %414 {offsets = [24, 0], sizes = [24, 24], strides = [1, 1]} : vector<96x24xf32> to vector<24x24xf32>
    %418 = tpu.transpose %417, [1, 0] : vector<24x24xf32> -> vector<24x24xf32>
    %419 = vector.extract_strided_slice %414 {offsets = [48, 0], sizes = [24, 24], strides = [1, 1]} : vector<96x24xf32> to vector<24x24xf32>
    %420 = tpu.transpose %419, [1, 0] : vector<24x24xf32> -> vector<24x24xf32>
    %421 = vector.extract_strided_slice %414 {offsets = [72, 0], sizes = [24, 24], strides = [1, 1]} : vector<96x24xf32> to vector<24x24xf32>
    %422 = tpu.transpose %421, [1, 0] : vector<24x24xf32> -> vector<24x24xf32>
    %423 = tpu.concatenate %416, %418, %420, %422 in 0 : vector<24x24xf32>, vector<24x24xf32>, vector<24x24xf32>, vector<24x24xf32> -> vector<96x24xf32>
    %424 = arith.addf %414, %423 : vector<96x24xf32>
    %cst_129 = arith.constant 5.000000e-01 : f32
    %425 = vector.broadcast %cst_129 : f32 to vector<96x24xf32>
    %426 = arith.mulf %424, %425 : vector<96x24xf32>
    %cst_130 = arith.constant dense<0.000000e+00> : vector<96x24xf32>
    %427 = tpu.matmul %88, %426, %cst_130 {dimension_numbers = #tpu.dot_dimension_numbers<[1], [0], [0], [1], [0, 0, 1, 1], [], []>} : vector<96x96xf32>, vector<96x24xf32>, vector<96x24xf32> -> vector<96x24xf32>
    %cst_131 = arith.constant 0.0588235296 : f32
    %428 = vector.broadcast %cst_131 : f32 to vector<96x24xf32>
    %429 = arith.mulf %427, %428 : vector<96x24xf32>
    %430 = arith.subf %426, %429 : vector<96x24xf32>
    %cst_132 = arith.constant 0.000000e+00 : f32
    %431 = vector.broadcast %cst_132 : f32 to vector<96x24xf32>
    %432 = arith.maximumf %430, %431 : vector<96x24xf32>
    %cst_133 = arith.constant dense<0.000000e+00> : vector<96xf32>
    %433 = vector.multi_reduction <add>, %432, %cst_133 [1] : vector<96x24xf32> to vector<96xf32>
    %434 = vector.shape_cast %433 : vector<96xf32> to vector<96x1xf32>
    %cst_134 = arith.constant 0.000000e+00 : f32
    %435 = vector.broadcast %cst_134 : f32 to vector<96x1xf32>
    %436 = arith.cmpf oeq, %434, %435 : vector<96x1xf32>
    %cst_135 = arith.constant 1.000000e+00 : f32
    %437 = vector.broadcast %cst_135 : f32 to vector<96x1xf32>
    %438 = arith.select %436, %437, %434 : vector<96x1xi1>, vector<96x1xf32>
    %439 = vector.broadcast %438 : vector<96x1xf32> to vector<96x24xf32>
    %440 = arith.divf %432, %439 : vector<96x24xf32>
    %cst_136 = arith.constant dense<0.000000e+00> : vector<96x32xf32>
    %441 = tpu.matmul %440, %400, %cst_136 {dimension_numbers = #tpu.dot_dimension_numbers<[1], [0], [0], [1], [0, 0, 1, 1], [], []>} : vector<96x24xf32>, vector<24x32xf32>, vector<96x32xf32> -> vector<96x32xf32>
    %442 = vector.extract_strided_slice %441 {offsets = [0, 0], sizes = [24, 32], strides = [1, 1]} : vector<96x32xf32> to vector<24x32xf32>
    %443 = vector.broadcast %40 : vector<1x32xf32> to vector<24x32xf32>
    %444 = arith.mulf %442, %443 : vector<24x32xf32>
    %cst_137 = arith.constant 0.000000e+00 : f32
    %445 = vector.broadcast %cst_137 : f32 to vector<24x32xf32>
    %446 = arith.addf %445, %444 : vector<24x32xf32>
    %447 = vector.extract_strided_slice %441 {offsets = [24, 0], sizes = [24, 32], strides = [1, 1]} : vector<96x32xf32> to vector<24x32xf32>
    %448 = vector.broadcast %47 : vector<1x32xf32> to vector<24x32xf32>
    %449 = arith.mulf %447, %448 : vector<24x32xf32>
    %450 = arith.addf %446, %449 : vector<24x32xf32>
    %451 = vector.extract_strided_slice %441 {offsets = [48, 0], sizes = [24, 32], strides = [1, 1]} : vector<96x32xf32> to vector<24x32xf32>
    %452 = vector.broadcast %54 : vector<1x32xf32> to vector<24x32xf32>
    %453 = arith.mulf %451, %452 : vector<24x32xf32>
    %454 = arith.addf %450, %453 : vector<24x32xf32>
    %455 = vector.extract_strided_slice %441 {offsets = [72, 0], sizes = [24, 32], strides = [1, 1]} : vector<96x32xf32> to vector<24x32xf32>
    %456 = vector.broadcast %61 : vector<1x32xf32> to vector<24x32xf32>
    %457 = arith.mulf %455, %456 : vector<24x32xf32>
    %458 = arith.addf %454, %457 : vector<24x32xf32>
    %cst_138 = arith.constant dense<0.000000e+00> : vector<24x32xf32>
    %459 = tpu.matmul %458, %365, %cst_138 {dimension_numbers = #tpu.dot_dimension_numbers<[1], [0], [0], [1], [0, 0, 1, 1], [], []>} : vector<24x32xf32>, vector<32x32xf32>, vector<24x32xf32> -> vector<24x32xf32>
    %460 = vector.broadcast %366 : vector<1x32xf32> to vector<24x32xf32>
    %461 = arith.addf %459, %460 : vector<24x32xf32>
    %cst_139 = arith.constant dense<0.000000e+00> : vector<24xf32>
    %462 = vector.multi_reduction <add>, %461, %cst_139 [1] : vector<24x32xf32> to vector<24xf32>
    %463 = vector.shape_cast %462 : vector<24xf32> to vector<24x1xf32>
    %cst_140 = arith.constant 3.200000e+01 : f32
    %464 = vector.broadcast %cst_140 : f32 to vector<24x1xf32>
    %465 = arith.divf %463, %464 : vector<24x1xf32>
    %466 = vector.broadcast %465 : vector<24x1xf32> to vector<24x32xf32>
    %467 = arith.subf %461, %466 : vector<24x32xf32>
    %468 = arith.mulf %467, %467 : vector<24x32xf32>
    %cst_141 = arith.constant dense<0.000000e+00> : vector<24xf32>
    %469 = vector.multi_reduction <add>, %468, %cst_141 [1] : vector<24x32xf32> to vector<24xf32>
    %470 = vector.shape_cast %469 : vector<24xf32> to vector<24x1xf32>
    %cst_142 = arith.constant 3.200000e+01 : f32
    %471 = vector.broadcast %cst_142 : f32 to vector<24x1xf32>
    %472 = arith.divf %470, %471 : vector<24x1xf32>
    %cst_143 = arith.constant 9.99999974E-6 : f32
    %473 = vector.broadcast %cst_143 : f32 to vector<24x1xf32>
    %474 = arith.addf %472, %473 : vector<24x1xf32>
    %475 = math.rsqrt %474 : vector<24x1xf32>
    %476 = vector.broadcast %475 : vector<24x1xf32> to vector<24x32xf32>
    %477 = arith.mulf %467, %476 : vector<24x32xf32>
    %478 = vector.broadcast %367 : vector<1x32xf32> to vector<24x32xf32>
    %479 = arith.mulf %477, %478 : vector<24x32xf32>
    %480 = vector.broadcast %368 : vector<1x32xf32> to vector<24x32xf32>
    %481 = arith.addf %479, %480 : vector<24x32xf32>
    %cst_144 = arith.constant dense<0.000000e+00> : vector<24x16xf32>
    %482 = tpu.matmul %481, %369, %cst_144 {dimension_numbers = #tpu.dot_dimension_numbers<[1], [0], [0], [1], [0, 0, 1, 1], [], []>} : vector<24x32xf32>, vector<32x16xf32>, vector<24x16xf32> -> vector<24x16xf32>
    %483 = arith.mulf %482, %482 : vector<24x16xf32>
    %cst_145 = arith.constant dense<0.000000e+00> : vector<24xf32>
    %484 = vector.multi_reduction <add>, %483, %cst_145 [1] : vector<24x16xf32> to vector<24xf32>
    %485 = vector.shape_cast %484 : vector<24xf32> to vector<24x1xf32>
    %486 = math.rsqrt %485 : vector<24x1xf32>
    %487 = vector.broadcast %486 : vector<24x1xf32> to vector<24x16xf32>
    %488 = arith.mulf %482, %487 : vector<24x16xf32>
    %cst_146 = arith.constant dense<0.000000e+00> : vector<24x6xf32>
    %489 = tpu.matmul %488, %376, %cst_146 {dimension_numbers = #tpu.dot_dimension_numbers<[1], [1], [0], [0], [0, 0, 1, 0], [], []>} : vector<24x16xf32>, vector<6x16xf32>, vector<24x6xf32> -> vector<24x6xf32>
    %cst_147 = arith.constant 1.000000e+02 : f32
    %490 = vector.broadcast %cst_147 : f32 to vector<24x6xf32>
    %491 = arith.mulf %490, %489 : vector<24x6xf32>
    %cst_148 = arith.constant dense<0xFF800000> : vector<24xf32>
    %492 = vector.multi_reduction <maximumf>, %491, %cst_148 [1] : vector<24x6xf32> to vector<24xf32>
    %493 = vector.shape_cast %492 : vector<24xf32> to vector<24x1xf32>
    %494 = vector.broadcast %493 : vector<24x1xf32> to vector<24x6xf32>
    %495 = arith.subf %491, %494 : vector<24x6xf32>
    %496 = math.exp %495 : vector<24x6xf32>
    %cst_149 = arith.constant dense<0.000000e+00> : vector<24xf32>
    %497 = vector.multi_reduction <add>, %496, %cst_149 [1] : vector<24x6xf32> to vector<24xf32>
    %498 = vector.shape_cast %497 : vector<24xf32> to vector<24x1xf32>
    %499 = tpu.reciprocal %498 {approx = true} : vector<24x1xf32> -> vector<24x1xf32>
    %500 = vector.broadcast %499 : vector<24x1xf32> to vector<24x6xf32>
    %501 = arith.mulf %496, %500 : vector<24x6xf32>
    %cst_150 = arith.constant dense<0.000000e+00> : vector<24xf32>
    %502 = vector.multi_reduction <add>, %270, %cst_150 [1] : vector<24x32xf32> to vector<24xf32>
    %503 = vector.shape_cast %502 : vector<24xf32> to vector<24x1xf32>
    %cst_151 = arith.constant 3.200000e+01 : f32
    %504 = vector.broadcast %cst_151 : f32 to vector<24x1xf32>
    %505 = arith.divf %503, %504 : vector<24x1xf32>
    %506 = vector.broadcast %505 : vector<24x1xf32> to vector<24x32xf32>
    %507 = arith.subf %270, %506 : vector<24x32xf32>
    %508 = arith.mulf %507, %507 : vector<24x32xf32>
    %cst_152 = arith.constant dense<0.000000e+00> : vector<24xf32>
    %509 = vector.multi_reduction <add>, %508, %cst_152 [1] : vector<24x32xf32> to vector<24xf32>
    %510 = vector.shape_cast %509 : vector<24xf32> to vector<24x1xf32>
    %cst_153 = arith.constant 3.200000e+01 : f32
    %511 = vector.broadcast %cst_153 : f32 to vector<24x1xf32>
    %512 = arith.divf %510, %511 : vector<24x1xf32>
    %cst_154 = arith.constant 9.99999974E-6 : f32
    %513 = vector.broadcast %cst_154 : f32 to vector<24x1xf32>
    %514 = arith.addf %512, %513 : vector<24x1xf32>
    %515 = math.rsqrt %514 : vector<24x1xf32>
    %516 = vector.broadcast %515 : vector<24x1xf32> to vector<24x32xf32>
    %517 = arith.mulf %507, %516 : vector<24x32xf32>
    %518 = vector.broadcast %361 : vector<1x32xf32> to vector<24x32xf32>
    %519 = arith.mulf %517, %518 : vector<24x32xf32>
    %520 = vector.broadcast %362 : vector<1x32xf32> to vector<24x32xf32>
    %521 = arith.addf %519, %520 : vector<24x32xf32>
    %cst_155 = arith.constant dense<0.000000e+00> : vector<24x96xf32>
    %522 = tpu.matmul %521, %363, %cst_155 {dimension_numbers = #tpu.dot_dimension_numbers<[1], [0], [0], [1], [0, 0, 1, 1], [], []>} : vector<24x32xf32>, vector<32x96xf32>, vector<24x96xf32> -> vector<24x96xf32>
    %523 = vector.broadcast %364 : vector<1x96xf32> to vector<24x96xf32>
    %524 = arith.addf %522, %523 : vector<24x96xf32>
    %525 = vector.extract_strided_slice %524 {offsets = [0, 64], sizes = [24, 32], strides = [1, 1]} : vector<24x96xf32> to vector<24x32xf32>
    %cst_156 = arith.constant dense<0.000000e+00> : vector<96x24xf32>
    %526 = tpu.matmul %88, %414, %cst_156 {dimension_numbers = #tpu.dot_dimension_numbers<[1], [0], [0], [1], [0, 0, 1, 1], [], []>} : vector<96x96xf32>, vector<96x24xf32>, vector<96x24xf32> -> vector<96x24xf32>
    %cst_157 = arith.constant 0.000000e+00 : f32
    %527 = vector.broadcast %cst_157 : f32 to vector<96x24xf32>
    %528 = arith.cmpf oeq, %526, %527 : vector<96x24xf32>
    %cst_158 = arith.constant 1.000000e+00 : f32
    %529 = vector.broadcast %cst_158 : f32 to vector<96x24xf32>
    %530 = arith.select %528, %529, %526 : vector<96x24xi1>, vector<96x24xf32>
    %531 = arith.divf %414, %530 : vector<96x24xf32>
    %cst_159 = arith.constant dense<0.000000e+00> : vector<96xf32>
    %532 = vector.multi_reduction <add>, %531, %cst_159 [1] : vector<96x24xf32> to vector<96xf32>
    %533 = vector.shape_cast %532 : vector<96xf32> to vector<96x1xf32>
    %cst_160 = arith.constant 0.000000e+00 : f32
    %534 = vector.broadcast %cst_160 : f32 to vector<96x1xf32>
    %535 = arith.cmpf oeq, %533, %534 : vector<96x1xf32>
    %cst_161 = arith.constant 1.000000e+00 : f32
    %536 = vector.broadcast %cst_161 : f32 to vector<96x1xf32>
    %537 = arith.select %535, %536, %533 : vector<96x1xi1>, vector<96x1xf32>
    %538 = vector.broadcast %537 : vector<96x1xf32> to vector<96x24xf32>
    %539 = arith.divf %531, %538 : vector<96x24xf32>
    %540 = vector.extract_strided_slice %539 {offsets = [0, 0], sizes = [24, 24], strides = [1, 1]} : vector<96x24xf32> to vector<24x24xf32>
    %541 = tpu.transpose %540, [1, 0] : vector<24x24xf32> -> vector<24x24xf32>
    %542 = vector.extract_strided_slice %539 {offsets = [24, 0], sizes = [24, 24], strides = [1, 1]} : vector<96x24xf32> to vector<24x24xf32>
    %543 = tpu.transpose %542, [1, 0] : vector<24x24xf32> -> vector<24x24xf32>
    %544 = vector.extract_strided_slice %539 {offsets = [48, 0], sizes = [24, 24], strides = [1, 1]} : vector<96x24xf32> to vector<24x24xf32>
    %545 = tpu.transpose %544, [1, 0] : vector<24x24xf32> -> vector<24x24xf32>
    %546 = vector.extract_strided_slice %539 {offsets = [72, 0], sizes = [24, 24], strides = [1, 1]} : vector<96x24xf32> to vector<24x24xf32>
    %547 = tpu.transpose %546, [1, 0] : vector<24x24xf32> -> vector<24x24xf32>
    %548 = tpu.concatenate %541, %543, %545, %547 in 0 : vector<24x24xf32>, vector<24x24xf32>, vector<24x24xf32>, vector<24x24xf32> -> vector<96x24xf32>
    %549 = arith.addf %539, %548 : vector<96x24xf32>
    %cst_162 = arith.constant 5.000000e-01 : f32
    %550 = vector.broadcast %cst_162 : f32 to vector<96x24xf32>
    %551 = arith.mulf %549, %550 : vector<96x24xf32>
    %cst_163 = arith.constant dense<0.000000e+00> : vector<96x24xf32>
    %552 = tpu.matmul %88, %551, %cst_163 {dimension_numbers = #tpu.dot_dimension_numbers<[1], [0], [0], [1], [0, 0, 1, 1], [], []>} : vector<96x96xf32>, vector<96x24xf32>, vector<96x24xf32> -> vector<96x24xf32>
    %cst_164 = arith.constant 0.0588235296 : f32
    %553 = vector.broadcast %cst_164 : f32 to vector<96x24xf32>
    %554 = arith.mulf %552, %553 : vector<96x24xf32>
    %555 = arith.subf %551, %554 : vector<96x24xf32>
    %cst_165 = arith.constant 0.000000e+00 : f32
    %556 = vector.broadcast %cst_165 : f32 to vector<96x24xf32>
    %557 = arith.maximumf %555, %556 : vector<96x24xf32>
    %cst_166 = arith.constant dense<0.000000e+00> : vector<96xf32>
    %558 = vector.multi_reduction <add>, %557, %cst_166 [1] : vector<96x24xf32> to vector<96xf32>
    %559 = vector.shape_cast %558 : vector<96xf32> to vector<96x1xf32>
    %cst_167 = arith.constant 0.000000e+00 : f32
    %560 = vector.broadcast %cst_167 : f32 to vector<96x1xf32>
    %561 = arith.cmpf oeq, %559, %560 : vector<96x1xf32>
    %cst_168 = arith.constant 1.000000e+00 : f32
    %562 = vector.broadcast %cst_168 : f32 to vector<96x1xf32>
    %563 = arith.select %561, %562, %559 : vector<96x1xi1>, vector<96x1xf32>
    %564 = vector.broadcast %563 : vector<96x1xf32> to vector<96x24xf32>
    %565 = arith.divf %557, %564 : vector<96x24xf32>
    %cst_169 = arith.constant dense<0.000000e+00> : vector<96x32xf32>
    %566 = tpu.matmul %565, %525, %cst_169 {dimension_numbers = #tpu.dot_dimension_numbers<[1], [0], [0], [1], [0, 0, 1, 1], [], []>} : vector<96x24xf32>, vector<24x32xf32>, vector<96x32xf32> -> vector<96x32xf32>
    %567 = vector.extract_strided_slice %566 {offsets = [0, 0], sizes = [24, 32], strides = [1, 1]} : vector<96x32xf32> to vector<24x32xf32>
    %568 = vector.broadcast %40 : vector<1x32xf32> to vector<24x32xf32>
    %569 = arith.mulf %567, %568 : vector<24x32xf32>
    %cst_170 = arith.constant 0.000000e+00 : f32
    %570 = vector.broadcast %cst_170 : f32 to vector<24x32xf32>
    %571 = arith.addf %570, %569 : vector<24x32xf32>
    %572 = vector.extract_strided_slice %566 {offsets = [24, 0], sizes = [24, 32], strides = [1, 1]} : vector<96x32xf32> to vector<24x32xf32>
    %573 = vector.broadcast %47 : vector<1x32xf32> to vector<24x32xf32>
    %574 = arith.mulf %572, %573 : vector<24x32xf32>
    %575 = arith.addf %571, %574 : vector<24x32xf32>
    %576 = vector.extract_strided_slice %566 {offsets = [48, 0], sizes = [24, 32], strides = [1, 1]} : vector<96x32xf32> to vector<24x32xf32>
    %577 = vector.broadcast %54 : vector<1x32xf32> to vector<24x32xf32>
    %578 = arith.mulf %576, %577 : vector<24x32xf32>
    %579 = arith.addf %575, %578 : vector<24x32xf32>
    %580 = vector.extract_strided_slice %566 {offsets = [72, 0], sizes = [24, 32], strides = [1, 1]} : vector<96x32xf32> to vector<24x32xf32>
    %581 = vector.broadcast %61 : vector<1x32xf32> to vector<24x32xf32>
    %582 = arith.mulf %580, %581 : vector<24x32xf32>
    %583 = arith.addf %579, %582 : vector<24x32xf32>
    %cst_171 = arith.constant dense<0.000000e+00> : vector<24x32xf32>
    %584 = tpu.matmul %583, %365, %cst_171 {dimension_numbers = #tpu.dot_dimension_numbers<[1], [0], [0], [1], [0, 0, 1, 1], [], []>} : vector<24x32xf32>, vector<32x32xf32>, vector<24x32xf32> -> vector<24x32xf32>
    %585 = vector.broadcast %366 : vector<1x32xf32> to vector<24x32xf32>
    %586 = arith.addf %584, %585 : vector<24x32xf32>
    %cst_172 = arith.constant dense<0.000000e+00> : vector<24xf32>
    %587 = vector.multi_reduction <add>, %586, %cst_172 [1] : vector<24x32xf32> to vector<24xf32>
    %588 = vector.shape_cast %587 : vector<24xf32> to vector<24x1xf32>
    %cst_173 = arith.constant 3.200000e+01 : f32
    %589 = vector.broadcast %cst_173 : f32 to vector<24x1xf32>
    %590 = arith.divf %588, %589 : vector<24x1xf32>
    %591 = vector.broadcast %590 : vector<24x1xf32> to vector<24x32xf32>
    %592 = arith.subf %586, %591 : vector<24x32xf32>
    %593 = arith.mulf %592, %592 : vector<24x32xf32>
    %cst_174 = arith.constant dense<0.000000e+00> : vector<24xf32>
    %594 = vector.multi_reduction <add>, %593, %cst_174 [1] : vector<24x32xf32> to vector<24xf32>
    %595 = vector.shape_cast %594 : vector<24xf32> to vector<24x1xf32>
    %cst_175 = arith.constant 3.200000e+01 : f32
    %596 = vector.broadcast %cst_175 : f32 to vector<24x1xf32>
    %597 = arith.divf %595, %596 : vector<24x1xf32>
    %cst_176 = arith.constant 9.99999974E-6 : f32
    %598 = vector.broadcast %cst_176 : f32 to vector<24x1xf32>
    %599 = arith.addf %597, %598 : vector<24x1xf32>
    %600 = math.rsqrt %599 : vector<24x1xf32>
    %601 = vector.broadcast %600 : vector<24x1xf32> to vector<24x32xf32>
    %602 = arith.mulf %592, %601 : vector<24x32xf32>
    %603 = vector.broadcast %367 : vector<1x32xf32> to vector<24x32xf32>
    %604 = arith.mulf %602, %603 : vector<24x32xf32>
    %605 = vector.broadcast %368 : vector<1x32xf32> to vector<24x32xf32>
    %606 = arith.addf %604, %605 : vector<24x32xf32>
    %cst_177 = arith.constant dense<0.000000e+00> : vector<24x16xf32>
    %607 = tpu.matmul %606, %369, %cst_177 {dimension_numbers = #tpu.dot_dimension_numbers<[1], [0], [0], [1], [0, 0, 1, 1], [], []>} : vector<24x32xf32>, vector<32x16xf32>, vector<24x16xf32> -> vector<24x16xf32>
    %608 = arith.mulf %607, %607 : vector<24x16xf32>
    %cst_178 = arith.constant dense<0.000000e+00> : vector<24xf32>
    %609 = vector.multi_reduction <add>, %608, %cst_178 [1] : vector<24x16xf32> to vector<24xf32>
    %610 = vector.shape_cast %609 : vector<24xf32> to vector<24x1xf32>
    %611 = math.rsqrt %610 : vector<24x1xf32>
    %612 = vector.broadcast %611 : vector<24x1xf32> to vector<24x16xf32>
    %613 = arith.mulf %607, %612 : vector<24x16xf32>
    %cst_179 = arith.constant dense<0.000000e+00> : vector<24x6xf32>
    %614 = tpu.matmul %613, %376, %cst_179 {dimension_numbers = #tpu.dot_dimension_numbers<[1], [1], [0], [0], [0, 0, 1, 0], [], []>} : vector<24x16xf32>, vector<6x16xf32>, vector<24x6xf32> -> vector<24x6xf32>
    %cst_180 = arith.constant 1.000000e+02 : f32
    %615 = vector.broadcast %cst_180 : f32 to vector<24x6xf32>
    %616 = arith.mulf %615, %614 : vector<24x6xf32>
    %cst_181 = arith.constant dense<0xFF800000> : vector<24xf32>
    %617 = vector.multi_reduction <maximumf>, %616, %cst_181 [1] : vector<24x6xf32> to vector<24xf32>
    %618 = vector.shape_cast %617 : vector<24xf32> to vector<24x1xf32>
    %619 = vector.broadcast %618 : vector<24x1xf32> to vector<24x6xf32>
    %620 = arith.subf %616, %619 : vector<24x6xf32>
    %621 = math.exp %620 : vector<24x6xf32>
    %cst_182 = arith.constant dense<0.000000e+00> : vector<24xf32>
    %622 = vector.multi_reduction <add>, %621, %cst_182 [1] : vector<24x6xf32> to vector<24xf32>
    %623 = vector.shape_cast %622 : vector<24xf32> to vector<24x1xf32>
    %624 = tpu.reciprocal %623 {approx = true} : vector<24x1xf32> -> vector<24x1xf32>
    %625 = vector.broadcast %624 : vector<24x1xf32> to vector<24x6xf32>
    %626 = arith.mulf %621, %625 : vector<24x6xf32>
    %cst_183 = arith.constant dense<0.000000e+00> : vector<24xf32>
    %627 = vector.multi_reduction <add>, %360, %cst_183 [1] : vector<24x32xf32> to vector<24xf32>
    %628 = vector.shape_cast %627 : vector<24xf32> to vector<24x1xf32>
    %cst_184 = arith.constant 3.200000e+01 : f32
    %629 = vector.broadcast %cst_184 : f32 to vector<24x1xf32>
    %630 = arith.divf %628, %629 : vector<24x1xf32>
    %631 = vector.broadcast %630 : vector<24x1xf32> to vector<24x32xf32>
    %632 = arith.subf %360, %631 : vector<24x32xf32>
    %633 = arith.mulf %632, %632 : vector<24x32xf32>
    %cst_185 = arith.constant dense<0.000000e+00> : vector<24xf32>
    %634 = vector.multi_reduction <add>, %633, %cst_185 [1] : vector<24x32xf32> to vector<24xf32>
    %635 = vector.shape_cast %634 : vector<24xf32> to vector<24x1xf32>
    %cst_186 = arith.constant 3.200000e+01 : f32
    %636 = vector.broadcast %cst_186 : f32 to vector<24x1xf32>
    %637 = arith.divf %635, %636 : vector<24x1xf32>
    %cst_187 = arith.constant 9.99999974E-6 : f32
    %638 = vector.broadcast %cst_187 : f32 to vector<24x1xf32>
    %639 = arith.addf %637, %638 : vector<24x1xf32>
    %640 = math.rsqrt %639 : vector<24x1xf32>
    %641 = vector.broadcast %640 : vector<24x1xf32> to vector<24x32xf32>
    %642 = arith.mulf %632, %641 : vector<24x32xf32>
    %643 = vector.broadcast %361 : vector<1x32xf32> to vector<24x32xf32>
    %644 = arith.mulf %642, %643 : vector<24x32xf32>
    %645 = vector.broadcast %362 : vector<1x32xf32> to vector<24x32xf32>
    %646 = arith.addf %644, %645 : vector<24x32xf32>
    %cst_188 = arith.constant dense<0.000000e+00> : vector<24x96xf32>
    %647 = tpu.matmul %646, %363, %cst_188 {dimension_numbers = #tpu.dot_dimension_numbers<[1], [0], [0], [1], [0, 0, 1, 1], [], []>} : vector<24x32xf32>, vector<32x96xf32>, vector<24x96xf32> -> vector<24x96xf32>
    %648 = vector.broadcast %364 : vector<1x96xf32> to vector<24x96xf32>
    %649 = arith.addf %647, %648 : vector<24x96xf32>
    %650 = vector.extract_strided_slice %649 {offsets = [0, 64], sizes = [24, 32], strides = [1, 1]} : vector<24x96xf32> to vector<24x32xf32>
    %cst_189 = arith.constant dense<0.000000e+00> : vector<96x24xf32>
    %651 = tpu.matmul %88, %539, %cst_189 {dimension_numbers = #tpu.dot_dimension_numbers<[1], [0], [0], [1], [0, 0, 1, 1], [], []>} : vector<96x96xf32>, vector<96x24xf32>, vector<96x24xf32> -> vector<96x24xf32>
    %cst_190 = arith.constant 0.000000e+00 : f32
    %652 = vector.broadcast %cst_190 : f32 to vector<96x24xf32>
    %653 = arith.cmpf oeq, %651, %652 : vector<96x24xf32>
    %cst_191 = arith.constant 1.000000e+00 : f32
    %654 = vector.broadcast %cst_191 : f32 to vector<96x24xf32>
    %655 = arith.select %653, %654, %651 : vector<96x24xi1>, vector<96x24xf32>
    %656 = arith.divf %539, %655 : vector<96x24xf32>
    %cst_192 = arith.constant dense<0.000000e+00> : vector<96xf32>
    %657 = vector.multi_reduction <add>, %656, %cst_192 [1] : vector<96x24xf32> to vector<96xf32>
    %658 = vector.shape_cast %657 : vector<96xf32> to vector<96x1xf32>
    %cst_193 = arith.constant 0.000000e+00 : f32
    %659 = vector.broadcast %cst_193 : f32 to vector<96x1xf32>
    %660 = arith.cmpf oeq, %658, %659 : vector<96x1xf32>
    %cst_194 = arith.constant 1.000000e+00 : f32
    %661 = vector.broadcast %cst_194 : f32 to vector<96x1xf32>
    %662 = arith.select %660, %661, %658 : vector<96x1xi1>, vector<96x1xf32>
    %663 = vector.broadcast %662 : vector<96x1xf32> to vector<96x24xf32>
    %664 = arith.divf %656, %663 : vector<96x24xf32>
    %665 = vector.extract_strided_slice %664 {offsets = [0, 0], sizes = [24, 24], strides = [1, 1]} : vector<96x24xf32> to vector<24x24xf32>
    %666 = tpu.transpose %665, [1, 0] : vector<24x24xf32> -> vector<24x24xf32>
    %667 = vector.extract_strided_slice %664 {offsets = [24, 0], sizes = [24, 24], strides = [1, 1]} : vector<96x24xf32> to vector<24x24xf32>
    %668 = tpu.transpose %667, [1, 0] : vector<24x24xf32> -> vector<24x24xf32>
    %669 = vector.extract_strided_slice %664 {offsets = [48, 0], sizes = [24, 24], strides = [1, 1]} : vector<96x24xf32> to vector<24x24xf32>
    %670 = tpu.transpose %669, [1, 0] : vector<24x24xf32> -> vector<24x24xf32>
    %671 = vector.extract_strided_slice %664 {offsets = [72, 0], sizes = [24, 24], strides = [1, 1]} : vector<96x24xf32> to vector<24x24xf32>
    %672 = tpu.transpose %671, [1, 0] : vector<24x24xf32> -> vector<24x24xf32>
    %673 = tpu.concatenate %666, %668, %670, %672 in 0 : vector<24x24xf32>, vector<24x24xf32>, vector<24x24xf32>, vector<24x24xf32> -> vector<96x24xf32>
    %674 = arith.addf %664, %673 : vector<96x24xf32>
    %cst_195 = arith.constant 5.000000e-01 : f32
    %675 = vector.broadcast %cst_195 : f32 to vector<96x24xf32>
    %676 = arith.mulf %674, %675 : vector<96x24xf32>
    %cst_196 = arith.constant dense<0.000000e+00> : vector<96x24xf32>
    %677 = tpu.matmul %88, %676, %cst_196 {dimension_numbers = #tpu.dot_dimension_numbers<[1], [0], [0], [1], [0, 0, 1, 1], [], []>} : vector<96x96xf32>, vector<96x24xf32>, vector<96x24xf32> -> vector<96x24xf32>
    %cst_197 = arith.constant 0.0588235296 : f32
    %678 = vector.broadcast %cst_197 : f32 to vector<96x24xf32>
    %679 = arith.mulf %677, %678 : vector<96x24xf32>
    %680 = arith.subf %676, %679 : vector<96x24xf32>
    %cst_198 = arith.constant 0.000000e+00 : f32
    %681 = vector.broadcast %cst_198 : f32 to vector<96x24xf32>
    %682 = arith.maximumf %680, %681 : vector<96x24xf32>
    %cst_199 = arith.constant dense<0.000000e+00> : vector<96xf32>
    %683 = vector.multi_reduction <add>, %682, %cst_199 [1] : vector<96x24xf32> to vector<96xf32>
    %684 = vector.shape_cast %683 : vector<96xf32> to vector<96x1xf32>
    %cst_200 = arith.constant 0.000000e+00 : f32
    %685 = vector.broadcast %cst_200 : f32 to vector<96x1xf32>
    %686 = arith.cmpf oeq, %684, %685 : vector<96x1xf32>
    %cst_201 = arith.constant 1.000000e+00 : f32
    %687 = vector.broadcast %cst_201 : f32 to vector<96x1xf32>
    %688 = arith.select %686, %687, %684 : vector<96x1xi1>, vector<96x1xf32>
    %689 = vector.broadcast %688 : vector<96x1xf32> to vector<96x24xf32>
    %690 = arith.divf %682, %689 : vector<96x24xf32>
    %cst_202 = arith.constant dense<0.000000e+00> : vector<96x32xf32>
    %691 = tpu.matmul %690, %650, %cst_202 {dimension_numbers = #tpu.dot_dimension_numbers<[1], [0], [0], [1], [0, 0, 1, 1], [], []>} : vector<96x24xf32>, vector<24x32xf32>, vector<96x32xf32> -> vector<96x32xf32>
    %692 = vector.extract_strided_slice %691 {offsets = [0, 0], sizes = [24, 32], strides = [1, 1]} : vector<96x32xf32> to vector<24x32xf32>
    %693 = vector.broadcast %40 : vector<1x32xf32> to vector<24x32xf32>
    %694 = arith.mulf %692, %693 : vector<24x32xf32>
    %cst_203 = arith.constant 0.000000e+00 : f32
    %695 = vector.broadcast %cst_203 : f32 to vector<24x32xf32>
    %696 = arith.addf %695, %694 : vector<24x32xf32>
    %697 = vector.extract_strided_slice %691 {offsets = [24, 0], sizes = [24, 32], strides = [1, 1]} : vector<96x32xf32> to vector<24x32xf32>
    %698 = vector.broadcast %47 : vector<1x32xf32> to vector<24x32xf32>
    %699 = arith.mulf %697, %698 : vector<24x32xf32>
    %700 = arith.addf %696, %699 : vector<24x32xf32>
    %701 = vector.extract_strided_slice %691 {offsets = [48, 0], sizes = [24, 32], strides = [1, 1]} : vector<96x32xf32> to vector<24x32xf32>
    %702 = vector.broadcast %54 : vector<1x32xf32> to vector<24x32xf32>
    %703 = arith.mulf %701, %702 : vector<24x32xf32>
    %704 = arith.addf %700, %703 : vector<24x32xf32>
    %705 = vector.extract_strided_slice %691 {offsets = [72, 0], sizes = [24, 32], strides = [1, 1]} : vector<96x32xf32> to vector<24x32xf32>
    %706 = vector.broadcast %61 : vector<1x32xf32> to vector<24x32xf32>
    %707 = arith.mulf %705, %706 : vector<24x32xf32>
    %708 = arith.addf %704, %707 : vector<24x32xf32>
    %cst_204 = arith.constant dense<0.000000e+00> : vector<24x32xf32>
    %709 = tpu.matmul %708, %365, %cst_204 {dimension_numbers = #tpu.dot_dimension_numbers<[1], [0], [0], [1], [0, 0, 1, 1], [], []>} : vector<24x32xf32>, vector<32x32xf32>, vector<24x32xf32> -> vector<24x32xf32>
    %710 = vector.broadcast %366 : vector<1x32xf32> to vector<24x32xf32>
    %711 = arith.addf %709, %710 : vector<24x32xf32>
    %cst_205 = arith.constant dense<0.000000e+00> : vector<24xf32>
    %712 = vector.multi_reduction <add>, %711, %cst_205 [1] : vector<24x32xf32> to vector<24xf32>
    %713 = vector.shape_cast %712 : vector<24xf32> to vector<24x1xf32>
    %cst_206 = arith.constant 3.200000e+01 : f32
    %714 = vector.broadcast %cst_206 : f32 to vector<24x1xf32>
    %715 = arith.divf %713, %714 : vector<24x1xf32>
    %716 = vector.broadcast %715 : vector<24x1xf32> to vector<24x32xf32>
    %717 = arith.subf %711, %716 : vector<24x32xf32>
    %718 = arith.mulf %717, %717 : vector<24x32xf32>
    %cst_207 = arith.constant dense<0.000000e+00> : vector<24xf32>
    %719 = vector.multi_reduction <add>, %718, %cst_207 [1] : vector<24x32xf32> to vector<24xf32>
    %720 = vector.shape_cast %719 : vector<24xf32> to vector<24x1xf32>
    %cst_208 = arith.constant 3.200000e+01 : f32
    %721 = vector.broadcast %cst_208 : f32 to vector<24x1xf32>
    %722 = arith.divf %720, %721 : vector<24x1xf32>
    %cst_209 = arith.constant 9.99999974E-6 : f32
    %723 = vector.broadcast %cst_209 : f32 to vector<24x1xf32>
    %724 = arith.addf %722, %723 : vector<24x1xf32>
    %725 = math.rsqrt %724 : vector<24x1xf32>
    %726 = vector.broadcast %725 : vector<24x1xf32> to vector<24x32xf32>
    %727 = arith.mulf %717, %726 : vector<24x32xf32>
    %728 = vector.broadcast %367 : vector<1x32xf32> to vector<24x32xf32>
    %729 = arith.mulf %727, %728 : vector<24x32xf32>
    %730 = vector.broadcast %368 : vector<1x32xf32> to vector<24x32xf32>
    %731 = arith.addf %729, %730 : vector<24x32xf32>
    %cst_210 = arith.constant dense<0.000000e+00> : vector<24x16xf32>
    %732 = tpu.matmul %731, %369, %cst_210 {dimension_numbers = #tpu.dot_dimension_numbers<[1], [0], [0], [1], [0, 0, 1, 1], [], []>} : vector<24x32xf32>, vector<32x16xf32>, vector<24x16xf32> -> vector<24x16xf32>
    %733 = arith.mulf %732, %732 : vector<24x16xf32>
    %cst_211 = arith.constant dense<0.000000e+00> : vector<24xf32>
    %734 = vector.multi_reduction <add>, %733, %cst_211 [1] : vector<24x16xf32> to vector<24xf32>
    %735 = vector.shape_cast %734 : vector<24xf32> to vector<24x1xf32>
    %736 = math.rsqrt %735 : vector<24x1xf32>
    %737 = vector.broadcast %736 : vector<24x1xf32> to vector<24x16xf32>
    %738 = arith.mulf %732, %737 : vector<24x16xf32>
    %cst_212 = arith.constant dense<0.000000e+00> : vector<24x6xf32>
    %739 = tpu.matmul %738, %376, %cst_212 {dimension_numbers = #tpu.dot_dimension_numbers<[1], [1], [0], [0], [0, 0, 1, 0], [], []>} : vector<24x16xf32>, vector<6x16xf32>, vector<24x6xf32> -> vector<24x6xf32>
    %cst_213 = arith.constant 1.000000e+02 : f32
    %740 = vector.broadcast %cst_213 : f32 to vector<24x6xf32>
    %741 = arith.mulf %740, %739 : vector<24x6xf32>
    %cst_214 = arith.constant dense<0xFF800000> : vector<24xf32>
    %742 = vector.multi_reduction <maximumf>, %741, %cst_214 [1] : vector<24x6xf32> to vector<24xf32>
    %743 = vector.shape_cast %742 : vector<24xf32> to vector<24x1xf32>
    %744 = vector.broadcast %743 : vector<24x1xf32> to vector<24x6xf32>
    %745 = arith.subf %741, %744 : vector<24x6xf32>
    %746 = math.exp %745 : vector<24x6xf32>
    %cst_215 = arith.constant dense<0.000000e+00> : vector<24xf32>
    %747 = vector.multi_reduction <add>, %746, %cst_215 [1] : vector<24x6xf32> to vector<24xf32>
    %748 = vector.shape_cast %747 : vector<24xf32> to vector<24x1xf32>
    %749 = tpu.reciprocal %748 {approx = true} : vector<24x1xf32> -> vector<24x1xf32>
    %750 = vector.broadcast %749 : vector<24x1xf32> to vector<24x6xf32>
    %751 = arith.mulf %746, %750 : vector<24x6xf32>
    %752 = vector.extract_strided_slice %690 {offsets = [0, 0], sizes = [24, 24], strides = [1, 1]} : vector<96x24xf32> to vector<24x24xf32>
    %cst_216 = arith.constant 0.000000e+00 : f32
    %753 = vector.broadcast %cst_216 : f32 to vector<24x24xf32>
    %754 = arith.addf %753, %752 : vector<24x24xf32>
    %755 = vector.extract_strided_slice %690 {offsets = [24, 0], sizes = [24, 24], strides = [1, 1]} : vector<96x24xf32> to vector<24x24xf32>
    %756 = arith.addf %754, %755 : vector<24x24xf32>
    %757 = vector.extract_strided_slice %690 {offsets = [48, 0], sizes = [24, 24], strides = [1, 1]} : vector<96x24xf32> to vector<24x24xf32>
    %758 = arith.addf %756, %757 : vector<24x24xf32>
    %759 = vector.extract_strided_slice %690 {offsets = [72, 0], sizes = [24, 24], strides = [1, 1]} : vector<96x24xf32> to vector<24x24xf32>
    %760 = arith.addf %758, %759 : vector<24x24xf32>
    %cst_217 = arith.constant 2.500000e-01 : f32
    %761 = vector.broadcast %cst_217 : f32 to vector<24x24xf32>
    %762 = arith.mulf %760, %761 : vector<24x24xf32>
    %763 = vector.broadcast %13 : vector<24x1xf32> to vector<24x6xf32>
    %764 = arith.mulf %751, %763 : vector<24x6xf32>
    %cst_218 = arith.constant dense<0xFF800000> : vector<6xf32>
    %765 = vector.multi_reduction <maximumf>, %764, %cst_218 [0] : vector<24x6xf32> to vector<6xf32>
    %766 = vector.shape_cast %765 : vector<6xf32> to vector<1x6xf32>
    %cst_219 = arith.constant 2.000000e-01 : f32
    %767 = vector.broadcast %cst_219 : f32 to vector<1x6xf32>
    %768 = arith.mulf %766, %767 : vector<1x6xf32>
    %769 = vector.broadcast %768 : vector<1x6xf32> to vector<24x6xf32>
    %770 = arith.cmpf olt, %751, %769 : vector<24x6xf32>
    %cst_220 = arith.constant 0.000000e+00 : f32
    %771 = vector.broadcast %cst_220 : f32 to vector<24x6xf32>
    %772 = arith.select %770, %771, %751 : vector<24x6xi1>, vector<24x6xf32>
    %773 = vector.broadcast %13 : vector<24x1xf32> to vector<24x6xf32>
    %774 = arith.mulf %772, %773 : vector<24x6xf32>
    %cst_221 = arith.constant 0.000000e+00 : f32
    %775 = vector.broadcast %cst_221 : f32 to vector<24x6xf32>
    %776 = arith.addf %775, %501 : vector<24x6xf32>
    %777 = arith.addf %776, %626 : vector<24x6xf32>
    %cst_222 = arith.constant 5.000000e-01 : f32
    %778 = vector.broadcast %cst_222 : f32 to vector<24x6xf32>
    %779 = arith.mulf %777, %778 : vector<24x6xf32>
    %cst_223 = arith.constant dense<0.000000e+00> : vector<24x6xf32>
    %780 = tpu.matmul %762, %774, %cst_223 {dimension_numbers = #tpu.dot_dimension_numbers<[1], [0], [0], [1], [0, 0, 1, 1], [], []>} : vector<24x24xf32>, vector<24x6xf32>, vector<24x6xf32> -> vector<24x6xf32>
    %781 = arith.addf %780, %779 : vector<24x6xf32>
    %c0_224 = arith.constant 0 : index
    %c0_225 = arith.constant 0 : index
    %782 = vector.load %arg2[%c0_224, %c0_225] : memref<24x128xf32, #tpu.memory_space<vmem>>, vector<24x16xf32>
    tpu.vector_store %arg2[%c0_224, %c0_225], %482 {strides = array<i32>} : memref<24x128xf32, #tpu.memory_space<vmem>>, vector<24x16xf32>,
    %c0_226 = arith.constant 0 : index
    %c16 = arith.constant 16 : index
    %783 = vector.load %arg2[%c0_226, %c16] : memref<24x128xf32, #tpu.memory_space<vmem>>, vector<24x16xf32>
    tpu.vector_store %arg2[%c0_226, %c16], %607 {strides = array<i32>} : memref<24x128xf32, #tpu.memory_space<vmem>>, vector<24x16xf32>,
    %c0_227 = arith.constant 0 : index
    %c32_228 = arith.constant 32 : index
    %784 = vector.load %arg2[%c0_227, %c32_228] : memref<24x128xf32, #tpu.memory_space<vmem>>, vector<24x16xf32>
    tpu.vector_store %arg2[%c0_227, %c32_228], %732 {strides = array<i32>} : memref<24x128xf32, #tpu.memory_space<vmem>>, vector<24x16xf32>,
    %c0_229 = arith.constant 0 : index
    %c48_230 = arith.constant 48 : index
    %785 = vector.load %arg2[%c0_229, %c48_230] : memref<24x128xf32, #tpu.memory_space<vmem>>, vector<24x24xf32>
    tpu.vector_store %arg2[%c0_229, %c48_230], %762 {strides = array<i32>} : memref<24x128xf32, #tpu.memory_space<vmem>>, vector<24x24xf32>,
    %c0_231 = arith.constant 0 : index
    %c72 = arith.constant 72 : index
    %786 = vector.load %arg2[%c0_231, %c72] : memref<24x128xf32, #tpu.memory_space<vmem>>, vector<24x6xf32>
    tpu.vector_store %arg2[%c0_231, %c72], %781 {strides = array<i32>} : memref<24x128xf32, #tpu.memory_space<vmem>>, vector<24x6xf32>,
    %cst_232 = arith.constant 0.000000e+00 : f32
    %787 = vector.broadcast %cst_232 : f32 to vector<24x50xf32>
    %c0_233 = arith.constant 0 : index
    %c78 = arith.constant 78 : index
    %788 = vector.load %arg2[%c0_233, %c78] : memref<24x128xf32, #tpu.memory_space<vmem>>, vector<24x50xf32>
    tpu.vector_store %arg2[%c0_233, %c78], %787 {strides = array<i32>} : memref<24x128xf32, #tpu.memory_space<vmem>>, vector<24x50xf32>,
    return
  }
}

</mosaic_0001>

<llo_original>
// kernel: cliper_forward.1
$region0: #{cliper_forward.1}
  #allocation0 [shape = 'u32[]', space=smem, size = 0x4, offset = 0x4, fixed_abs, tag = 'smem constant byte address 0x4 - core index']
  #allocation1 [shape = 'u32[144,128]{1,0:T(1,128)}', space=vmem, size = 0x12000, scoped, tag = 'internal scratch']
  %s0 = inlined_call_operand.vmem [shape: f32[24,128], index: 0, kind: input, shape index: {}]
  %s1 = inlined_call_operand.vmem [shape: f32[784,128], index: 1, kind: input, shape index: {}]
  %s2 = inlined_call_operand.vmem [shape: f32[24,128], index: 2, kind: output, shape index: {}]
  %s3 = sld [smem:[#allocation0]]
  $region18: #{cliper_forward.1} parent=0
    _
  %s5 = ssub.s32 1, %s3
  %s6 = scalar_select 0, %s5, %s3
  // Predicated region
  $region2: #{cliper_forward.1} parent=0 // pred_check
    _
  $region3: #{cliper_forward.1} parent=0 // pred_check_branch
    %8 = sbr.rel (0) target = $region5
  $region4: #{cliper_forward.1} parent=0 // pred_region
    _
  $region5: #{cliper_forward.1} parent=0 // pred_fallthru
    _
  // Predicated region
  $region6: #{cliper_forward.1} parent=0 // pred_check
    _
  $region7: #{cliper_forward.1} parent=0 // pred_check_branch
    %10 = sbr.rel (0) target = $region9
  $region8: #{cliper_forward.1} parent=0 // pred_region
    _
  $region9: #{cliper_forward.1} parent=0 // pred_fallthru
    _
  %v11 = vlaneseq
  %v12 = vand.u32 %v11, 127
  %vm13 = vcmp.lt.s32.totalorder %v12, 17
  %v14 = vsel %vm13, 0.0, -1e+30
  %v15 = vlaneseq
  %v16 = vshrl.u32 %v15, 7
  %v17 = vadd.s32 %v16, 8
  %v18 = vadd.s32 %v16, 16
  %vm19 = vcmp.ge.s32.totalorder %v16, 1
  %vm20 = vcmp.ge.s32.totalorder %v17, 1
  %vm21 = vcmp.ge.s32.totalorder %v18, 1
  %vm22 = vcmp.lt.s32.totalorder %v16, 17
  %vm23 = vcmp.lt.s32.totalorder %v17, 17
  %vm24 = vcmp.lt.s32.totalorder %v18, 17
  %vm25 = vmand %vm19, %vm22
  %vm26 = vmand %vm20, %vm23
  %vm27 = vmand %vm21, %vm24
  %v28 = vsel %vm25, 1, 0
  %v29 = vsel %vm26, 1, 0
  %v30 = vsel %vm27, 1, 0
  %v31 = vcvt.s32.f32 %v28
  %v32 = vcvt.s32.f32 %v29
  %v33 = vcvt.s32.f32 %v30
  %v34 = vadd.s32 %v16, 24
  %v35 = vadd.s32 %v16, 32
  %v36 = vadd.s32 %v16, 40
  %v37 = vadd.s32 %v16, 48
  %v38 = vadd.s32 %v16, 56
  %v39 = vadd.s32 %v16, 64
  %v40 = vadd.s32 %v16, 72
  %v41 = vadd.s32 %v16, 80
  %v42 = vadd.s32 %v16, 88
  %vm43 = vcmp.ge.s32.totalorder %v16, 24
  %vm44 = vcmp.ge.s32.totalorder %v17, 24
  %vm45 = vcmp.ge.s32.totalorder %v18, 24
  %vm46 = vcmp.ge.s32.totalorder %v34, 24
  %vm47 = vcmp.ge.s32.totalorder %v35, 24
  %vm48 = vcmp.ge.s32.totalorder %v36, 24
  %vm49 = vcmp.ge.s32.totalorder %v37, 24
  %vm50 = vcmp.ge.s32.totalorder %v38, 24
  %vm51 = vcmp.ge.s32.totalorder %v39, 24
  %vm52 = vcmp.ge.s32.totalorder %v40, 24
  %vm53 = vcmp.ge.s32.totalorder %v41, 24
  %vm54 = vcmp.ge.s32.totalorder %v42, 24
  %v55 = vsel %vm43, 1, 0
  %v56 = vsel %vm44, 1, 0
  %v57 = vsel %vm45, 1, 0
  %v58 = vsel %vm46, 1, 0
  %v59 = vsel %vm47, 1, 0
  %v60 = vsel %vm48, 1, 0
  %v61 = vsel %vm49, 1, 0
  %v62 = vsel %vm50, 1, 0
  %v63 = vsel %vm51, 1, 0
  %v64 = vsel %vm52, 1, 0
  %v65 = vsel %vm53, 1, 0
  %v66 = vsel %vm54, 1, 0
  %vm67 = vcmp.ge.s32.totalorder %v16, 48
  %vm68 = vcmp.ge.s32.totalorder %v17, 48
  %vm69 = vcmp.ge.s32.totalorder %v18, 48
  %vm70 = vcmp.ge.s32.totalorder %v34, 48
  %vm71 = vcmp.ge.s32.totalorder %v35, 48
  %vm72 = vcmp.ge.s32.totalorder %v36, 48
  %vm73 = vcmp.ge.s32.totalorder %v37, 48
  %vm74 = vcmp.ge.s32.totalorder %v38, 48
  %vm75 = vcmp.ge.s32.totalorder %v39, 48
  %vm76 = vcmp.ge.s32.totalorder %v40, 48
  %vm77 = vcmp.ge.s32.totalorder %v41, 48
  %vm78 = vcmp.ge.s32.totalorder %v42, 48
  %v79 = vsel %vm67, 1, 0
  %v80 = vsel %vm68, 1, 0
  %v81 = vsel %vm69, 1, 0
  %v82 = vsel %vm70, 1, 0
  %v83 = vsel %vm71, 1, 0
  %v84 = vsel %vm72, 1, 0
  %v85 = vsel %vm73, 1, 0
  %v86 = vsel %vm74, 1, 0
  %v87 = vsel %vm75, 1, 0
  %v88 = vsel %vm76, 1, 0
  %v89 = vsel %vm77, 1, 0
  %v90 = vsel %vm78, 1, 0
  %v91 = vadd.s32 %v55, %v79
  %v92 = vadd.s32 %v56, %v80
  %v93 = vadd.s32 %v57, %v81
  %v94 = vadd.s32 %v58, %v82
  %v95 = vadd.s32 %v59, %v83
  %v96 = vadd.s32 %v60, %v84
  %v97 = vadd.s32 %v61, %v85
  %v98 = vadd.s32 %v62, %v86
  %v99 = vadd.s32 %v63, %v87
  %v100 = vadd.s32 %v64, %v88
  %v101 = vadd.s32 %v65, %v89
  %v102 = vadd.s32 %v66, %v90
  %vm103 = vcmp.ge.s32.totalorder %v16, 72
  %vm104 = vcmp.ge.s32.totalorder %v17, 72
  %vm105 = vcmp.ge.s32.totalorder %v18, 72
  %vm106 = vcmp.ge.s32.totalorder %v34, 72
  %vm107 = vcmp.ge.s32.totalorder %v35, 72
  %vm108 = vcmp.ge.s32.totalorder %v36, 72
  %vm109 = vcmp.ge.s32.totalorder %v37, 72
  %vm110 = vcmp.ge.s32.totalorder %v38, 72
  %vm111 = vcmp.ge.s32.totalorder %v39, 72
  %vm112 = vcmp.ge.s32.totalorder %v40, 72
  %vm113 = vcmp.ge.s32.totalorder %v41, 72
  %vm114 = vcmp.ge.s32.totalorder %v42, 72
  %v115 = vsel %vm103, 1, 0
  %v116 = vsel %vm104, 1, 0
  %v117 = vsel %vm105, 1, 0
  %v118 = vsel %vm106, 1, 0
  %v119 = vsel %vm107, 1, 0
  %v120 = vsel %vm108, 1, 0
  %v121 = vsel %vm109, 1, 0
  %v122 = vsel %vm110, 1, 0
  %v123 = vsel %vm111, 1, 0
  %v124 = vsel %vm112, 1, 0
  %v125 = vsel %vm113, 1, 0
  %v126 = vsel %vm114, 1, 0
  %v127 = vadd.s32 %v91, %v115
  %v128 = vadd.s32 %v92, %v116
  %v129 = vadd.s32 %v93, %v117
  %v130 = vadd.s32 %v94, %v118
  %v131 = vadd.s32 %v95, %v119
  %v132 = vadd.s32 %v96, %v120
  %v133 = vadd.s32 %v97, %v121
  %v134 = vadd.s32 %v98, %v122
  %v135 = vadd.s32 %v99, %v123
  %v136 = vadd.s32 %v100, %v124
  %v137 = vadd.s32 %v101, %v125
  %v138 = vadd.s32 %v102, %v126
  %v139 = vmul.u32 %v127, 24
  %v140 = vmul.u32 %v128, 24
  %v141 = vmul.u32 %v129, 24
  %v142 = vmul.u32 %v130, 24
  %v143 = vmul.u32 %v131, 24
  %v144 = vmul.u32 %v132, 24
  %v145 = vmul.u32 %v133, 24
  %v146 = vmul.u32 %v134, 24
  %v147 = vmul.u32 %v135, 24
  %v148 = vmul.u32 %v136, 24
  %v149 = vmul.u32 %v137, 24
  %v150 = vmul.u32 %v138, 24
  %v151 = vsub.s32 %v16, %v139
  %v152 = vsub.s32 %v17, %v140
  %v153 = vsub.s32 %v18, %v141
  %v154 = vsub.s32 %v34, %v142
  %v155 = vsub.s32 %v35, %v143
  %v156 = vsub.s32 %v36, %v144
  %v157 = vsub.s32 %v37, %v145
  %v158 = vsub.s32 %v38, %v146
  %v159 = vsub.s32 %v39, %v147
  %v160 = vsub.s32 %v40, %v148
  %v161 = vsub.s32 %v41, %v149
  %v162 = vsub.s32 %v42, %v150
  %vm163 = vcmp.lt.s32.totalorder %v151, 17
  %vm164 = vcmp.lt.s32.totalorder %v152, 17
  %vm165 = vcmp.lt.s32.totalorder %v153, 17
  %vm166 = vcmp.lt.s32.totalorder %v154, 17
  %vm167 = vcmp.lt.s32.totalorder %v155, 17
  %vm168 = vcmp.lt.s32.totalorder %v156, 17
  %vm169 = vcmp.lt.s32.totalorder %v157, 17
  %vm170 = vcmp.lt.s32.totalorder %v158, 17
  %vm171 = vcmp.lt.s32.totalorder %v159, 17
  %vm172 = vcmp.lt.s32.totalorder %v160, 17
  %vm173 = vcmp.lt.s32.totalorder %v161, 17
  %vm174 = vcmp.lt.s32.totalorder %v162, 17
  %v175 = vsel %vm163, 1, 0
  %v176 = vsel %vm164, 1, 0
  %v177 = vsel %vm165, 1, 0
  %v178 = vsel %vm166, 1, 0
  %v179 = vsel %vm167, 1, 0
  %v180 = vsel %vm168, 1, 0
  %v181 = vsel %vm169, 1, 0
  %v182 = vsel %vm170, 1, 0
  %v183 = vsel %vm171, 1, 0
  %v184 = vsel %vm172, 1, 0
  %v185 = vsel %vm173, 1, 0
  %v186 = vsel %vm174, 1, 0
  %v187 = vcvt.s32.f32 %v175
  %v188 = vcvt.s32.f32 %v176
  %v189 = vcvt.s32.f32 %v177
  %v190 = vcvt.s32.f32 %v178
  %v191 = vcvt.s32.f32 %v179
  %v192 = vcvt.s32.f32 %v180
  %v193 = vcvt.s32.f32 %v181
  %v194 = vcvt.s32.f32 %v182
  %v195 = vcvt.s32.f32 %v183
  %v196 = vcvt.s32.f32 %v184
  %v197 = vcvt.s32.f32 %v185
  %v198 = vcvt.s32.f32 %v186
  %vm199 = vcmp.ge.s32.totalorder %v12, 0
  %vm200 = vcmp.lt.s32.totalorder %v12, 8
  %vm201 = vmand %vm199, %vm200
  %v202 = vsel %vm201, 1, 0
  %v203 = vcvt.s32.f32 %v202
  %vm204 = vcmp.ge.s32.totalorder %v12, 8
  %vm205 = vcmp.lt.s32.totalorder %v12, 16
  %vm206 = vmand %vm204, %vm205
  %v207 = vsel %vm206, 1, 0
  %v208 = vcvt.s32.f32 %v207
  %vm209 = vcmp.ge.s32.totalorder %v12, 16
  %vm210 = vcmp.lt.s32.totalorder %v12, 24
  %vm211 = vmand %vm209, %vm210
  %v212 = vsel %vm211, 1, 0
  %v213 = vcvt.s32.f32 %v212
  %vm214 = vcmp.ge.s32.totalorder %v12, 24
  %vm215 = vcmp.lt.s32.totalorder %v12, 32
  %vm216 = vmand %vm214, %vm215
  %v217 = vsel %vm216, 1, 0
  %v218 = vcvt.s32.f32 %v217
  %v219 = vsel %vm214, 1, 0
  %vm220 = vcmp.ge.s32.totalorder %v12, 48
  %v221 = vsel %vm220, 1, 0
  %v222 = vadd.s32 %v219, %v221
  %vm223 = vcmp.ge.s32.totalorder %v12, 72
  %v224 = vsel %vm223, 1, 0
  %v225 = vadd.s32 %v222, %v224
  %vm226 = vcmp.eq.s32.totalorder %v127, %v225
  %vm227 = vcmp.eq.s32.totalorder %v128, %v225
  %vm228 = vcmp.eq.s32.totalorder %v129, %v225
  %vm229 = vcmp.eq.s32.totalorder %v130, %v225
  %vm230 = vcmp.eq.s32.totalorder %v131, %v225
  %vm231 = vcmp.eq.s32.totalorder %v132, %v225
  %vm232 = vcmp.eq.s32.totalorder %v133, %v225
  %vm233 = vcmp.eq.s32.totalorder %v134, %v225
  %vm234 = vcmp.eq.s32.totalorder %v135, %v225
  %vm235 = vcmp.eq.s32.totalorder %v136, %v225
  %vm236 = vcmp.eq.s32.totalorder %v137, %v225
  %vm237 = vcmp.eq.s32.totalorder %v138, %v225
  %v238 = vsel %vm226, 1, 0
  %v239 = vsel %vm227, 1, 0
  %v240 = vsel %vm228, 1, 0
  %v241 = vsel %vm229, 1, 0
  %v242 = vsel %vm230, 1, 0
  %v243 = vsel %vm231, 1, 0
  %v244 = vsel %vm232, 1, 0
  %v245 = vsel %vm233, 1, 0
  %v246 = vsel %vm234, 1, 0
  %v247 = vsel %vm235, 1, 0
  %v248 = vsel %vm236, 1, 0
  %v249 = vsel %vm237, 1, 0
  %v250 = vcvt.s32.f32 %v238
  %v251 = vcvt.s32.f32 %v239
  %v252 = vcvt.s32.f32 %v240
  %v253 = vcvt.s32.f32 %v241
  %v254 = vcvt.s32.f32 %v242
  %v255 = vcvt.s32.f32 %v243
  %v256 = vcvt.s32.f32 %v244
  %v257 = vcvt.s32.f32 %v245
  %v258 = vcvt.s32.f32 %v246
  %v259 = vcvt.s32.f32 %v247
  %v260 = vcvt.s32.f32 %v248
  %v261 = vcvt.s32.f32 %v249
  %v262 = vld [vmem:[%s0] sm:$0xff]
  %v263 = vld [vmem:[%s0 + $0x8] sm:$0xff]
  %v264 = vld [vmem:[%s0 + $0x10] sm:$0xff]
  %v265 = vld [vmem:[%s1] sm:$0xff]
  %v266 = vld [vmem:[%s1 + $0x8] sm:$0xff]
  %v267 = vld [vmem:[%s1 + $0x10] sm:$0xff]
  %v268 = vld [vmem:[%s1 + $0x18] sm:$0xff]
  %v269 = vld [vmem:[%s1 + $0x20] sm:$0xff]
  %v270 = vld [vmem:[%s1 + $0x28] sm:$0xff]
  %274 = vrot.lane.b32.xlu0 %v262, 80
  %v275 = vpop.permute.xlu0 %274
  %276 = vrot.lane.b32.xlu0 %v263, 80
  %v277 = vpop.permute.xlu0 %276
  %278 = vrot.lane.b32.xlu0 %v264, 80
  %v279 = vpop.permute.xlu0 %278
  %vm283 = vcmask 392192
  %v284 = vsel %vm283, %v262, 0
  %v286 = vsel %vm283, %v263, 0
  %v288 = vsel %vm283, %v264, 0
  %290 = vmatprep.subr.mxu0 0.0
  %291 = vmatpush1.msra.mxu0 0.0
  %292 = vmatprep.subr.mxu0 0.0
  %293 = vmatpush1.msra.mxu0 0.0
  %294 = vmatprep.subr.mxu0 0.0
  %295 = vmatpush1.msra.mxu0 0.0
  %296 = vmatprep.subr.mxu0 0.0
  %297 = vmatpush1.msra.mxu0 0.0
  %298 = vmatprep.subr.mxu0 0.0
  %299 = vmatpush1.msra.mxu0 0.0
  %300 = vmatprep.subr.mxu0 0.0
  %301 = vmatpush1.msra.mxu0 0.0
  %302 = vmatprep.subr.mxu0 0.0
  %303 = vmatpush1.msra.mxu0 0.0
  %304 = vmatprep.subr.mxu0 0.0
  %305 = vmatpush1.msra.mxu0 0.0
  %306 = vmatprep.subr.mxu0 0.0
  %307 = vmatpush1.msra.mxu0 0.0
  %308 = vmatprep.subr.mxu0 0.0
  %309 = vmatpush1.msra.mxu0 0.0
  %310 = vmatprep.subr.mxu0 0.0
  %311 = vmatpush1.msra.mxu0 %v270
  %312 = vmatprep.subr.mxu0 0.0
  %313 = vmatpush1.msra.mxu0 %v269
  %314 = vmatprep.subr.mxu0 0.0
  %315 = vmatpush1.msra.mxu0 %v268
  %316 = vmatprep.subr.mxu0 0.0
  %317 = vmatpush1.msra.mxu0 %v267
  %318 = vmatprep.subr.mxu0 0.0
  %319 = vmatpush1.msra.mxu0 %v266
  %320 = vmatprep.subr.mxu0 0.0
  %321 = vmatpush1.msra.mxu0 %v265
  %322 = vmatprep.subr.mxu0 0.0
  %323 = vmatpush2.msra.mxu0 0.0
  %324 = vmatprep.subr.mxu0 0.0
  %325 = vmatpush2.msra.mxu0 0.0
  %326 = vmatprep.subr.mxu0 0.0
  %327 = vmatpush2.msra.mxu0 0.0
  %328 = vmatprep.subr.mxu0 0.0
  %329 = vmatpush2.msra.mxu0 0.0
  %330 = vmatprep.subr.mxu0 0.0
  %331 = vmatpush2.msra.mxu0 0.0
  %332 = vmatprep.subr.mxu0 0.0
  %333 = vmatpush2.msra.mxu0 0.0
  %334 = vmatprep.subr.mxu0 0.0
  %335 = vmatpush2.msra.mxu0 0.0
  %336 = vmatprep.subr.mxu0 0.0
  %337 = vmatpush2.msra.mxu0 0.0
  %338 = vmatprep.subr.mxu0 0.0
  %339 = vmatpush2.msra.mxu0 0.0
  %340 = vmatprep.subr.mxu0 0.0
  %341 = vmatpush2.msra.mxu0 0.0
  %342 = vmatprep.subr.mxu0 0.0
  %343 = vmatpush2.msra.mxu0 0.0
  %344 = vmatprep.subr.mxu0 0.0
  %345 = vmatpush2.msra.mxu0 0.0
  %346 = vmatprep.subr.mxu0 0.0
  %347 = vmatpush2.msra.mxu0 0.0
  %348 = vmatprep.subr.mxu0 0.0
  %349 = vmatpush2.msra.mxu0 0.0
  %350 = vmatprep.subr.mxu0 0.0
  %351 = vmatpush2.msra.mxu0 0.0
  %352 = vmatprep.subr.mxu0 0.0
  %353 = vmatpush2.msra.mxu0 0.0
  %354 = vmatprep.mubr.f32.mxu0 0.0
  %355 = vmatmul.mubr.f32.gmra.mxu0 %v284
  %v356 = vpop.f32.mrf.mxu0
  %v357 = vadd.f32 %v275, %v356
  %v358 = vpop.f32.mrf.mxu0
  %359 = vmatprep.mubr.f32.mxu0 0.0
  %360 = vmatmul.mubr.f32.gmra.mxu0 %v286
  %v361 = vpop.f32.mrf.mxu0
  %v362 = vadd.f32 %v277, %v361
  %v363 = vpop.f32.mrf.mxu0
  %364 = vmatprep.mubr.f32.mxu0 0.0
  %365 = vmatmul.mubr.f32.gmra.mxu0 %v288
  %v366 = vpop.f32.mrf.mxu0
  %v367 = vadd.f32 %v279, %v366
  %v368 = vpop.f32.mrf.mxu0
  %369 = vdwg.mxu0
  %v370 = vld [vmem:[%s1 + $0x50] sm:$0x1]
  %vm371 = vcmask 261120
  %v372 = vsel %vm371, %v357, 0.0
  %373 = vadd.xlane.f32.xlu0 %v372
  %v374 = vpop.xlane.xlu0 %373
  %v375 = vsel %vm371, %v362, 0.0
  %376 = vadd.xlane.f32.xlu0 %v375
  %v377 = vpop.xlane.xlu0 %376
  %v378 = vsel %vm371, %v367, 0.0
  %379 = vadd.xlane.f32.xlu0 %v378
  %v380 = vpop.xlane.xlu0 %379
  %v381 = vrcp.pop 32.0
  %v382 = vmul.f32 %v374, %v381
  %v383 = vmul.f32 %v377, %v381
  %v384 = vmul.f32 %v380, %v381
  %v385 = vsub.f32 %v357, %v382
  %v386 = vsub.f32 %v362, %v383
  %v387 = vsub.f32 %v367, %v384
  %v388 = vmul.f32 %v385, %v385
  %v389 = vmul.f32 %v386, %v386
  %v390 = vmul.f32 %v387, %v387
  %v391 = vsel %vm371, %v388, 0.0
  %392 = vadd.xlane.f32.xlu0 %v391
  %v393 = vpop.xlane.xlu0 %392
  %v394 = vsel %vm371, %v389, 0.0
  %395 = vadd.xlane.f32.xlu0 %v394
  %v396 = vpop.xlane.xlu0 %395
  %v397 = vsel %vm371, %v390, 0.0
  %398 = vadd.xlane.f32.xlu0 %v397
  %v399 = vpop.xlane.xlu0 %398
  %v400 = vmul.f32 %v393, %v381
  %v401 = vmul.f32 %v396, %v381
  %v402 = vmul.f32 %v399, %v381
  %v403 = vadd.f32 %v400, 1e-05
  %v404 = vadd.f32 %v401, 1e-05
  %v405 = vadd.f32 %v402, 1e-05
  %v406 = vrsqrt.pop %v403
  %v407 = vrsqrt.pop %v404
  %v408 = vrsqrt.pop %v405
  %v409 = vmul.f32 %v385, %v406
  %v410 = vmul.f32 %v386, %v407
  %v411 = vmul.f32 %v387, %v408
  %v412 = vlaneseq
  %v413 = vshrl.u32 %v412, 7
  %v414 = vsub.s32 0, %v413
  %v415 = vrot.slane %v370, %v414
  %v416 = vmul.f32 %v409, %v415
  %v417 = vmul.f32 %v410, %v415
  %v418 = vmul.f32 %v411, %v415
  %420 = vrot.lane.b32.xlu0 %v415, 96
  %v421 = vpop.permute.xlu0 %420
  %v423 = vadd.f32 %v416, %v421
  %v424 = vadd.f32 %v417, %v421
  %v425 = vadd.f32 %v418, %v421
  %v426 = vld [vmem:[%s1 + $0x138] sm:$0x1]
  %v427 = vld [vmem:[%s1 + $0x58] sm:$0xff]
  %v428 = vld [vmem:[%s1 + $0x60] sm:$0xff]
  %v429 = vld [vmem:[%s1 + $0x68] sm:$0xff]
  %v430 = vld [vmem:[%s1 + $0x70] sm:$0xff]
  %v431 = vld [vmem:[%s1 + $0x139] sm:$0x1]
  %v432 = vld [vmem:[%s1 + $0x78] sm:$0xff]
  %v433 = vld [vmem:[%s1 + $0x80] sm:$0xff]
  %v434 = vld [vmem:[%s1 + $0x88] sm:$0xff]
  %v435 = vld [vmem:[%s1 + $0x90] sm:$0xff]
  %v436 = vld [vmem:[%s1 + $0x13a] sm:$0x1]
  %v437 = vld [vmem:[%s1 + $0x98] sm:$0xff]
  %v438 = vld [vmem:[%s1 + $0xa0] sm:$0xff]
  %v439 = vld [vmem:[%s1 + $0xa8] sm:$0xff]
  %v440 = vld [vmem:[%s1 + $0xb0] sm:$0xff]
  %v441 = vld [vmem:[%s1 + $0x13b] sm:$0x1]
  %v442 = vld [vmem:[%s1 + $0xb8] sm:$0xff]
  %v443 = vld [vmem:[%s1 + $0xc0] sm:$0xff]
  %v444 = vld [vmem:[%s1 + $0xc8] sm:$0xff]
  %v445 = vld [vmem:[%s1 + $0xd0] sm:$0xff]
  %v446 = vld [vmem:[%s1 + $0xd8] sm:$0xff]
  %v447 = vld [vmem:[%s1 + $0xe0] sm:$0xff]
  %v448 = vld [vmem:[%s1 + $0xe8] sm:$0xff]
  %v449 = vld [vmem:[%s1 + $0xf0] sm:$0xff]
  %v450 = vld [vmem:[%s1 + $0xf8] sm:$0xff]
  %v451 = vld [vmem:[%s1 + $0x100] sm:$0xff]
  %v452 = vld [vmem:[%s1 + $0x108] sm:$0xff]
  %v453 = vld [vmem:[%s1 + $0x110] sm:$0xff]
  %v454 = vld [vmem:[%s1 + $0x118] sm:$0xff]
  %v455 = vld [vmem:[%s1 + $0x120] sm:$0xff]
  %v456 = vld [vmem:[%s1 + $0x128] sm:$0xff]
  %v457 = vld [vmem:[%s1 + $0x130] sm:$0xff]
  %v458 = vsel %vm371, %v423, 0.0
  %459 = vadd.xlane.f32.xlu0 %v458
  %v460 = vpop.xlane.xlu0 %459
  %v461 = vsel %vm371, %v424, 0.0
  %462 = vadd.xlane.f32.xlu0 %v461
  %v463 = vpop.xlane.xlu0 %462
  %v464 = vsel %vm371, %v425, 0.0
  %465 = vadd.xlane.f32.xlu0 %v464
  %v466 = vpop.xlane.xlu0 %465
  %v467 = vmul.f32 %v460, %v381
  %v468 = vmul.f32 %v463, %v381
  %v469 = vmul.f32 %v466, %v381
  %v470 = vsub.f32 %v423, %v467
  %v471 = vsub.f32 %v424, %v468
  %v472 = vsub.f32 %v425, %v469
  %v473 = vmul.f32 %v470, %v470
  %v474 = vmul.f32 %v471, %v471
  %v475 = vmul.f32 %v472, %v472
  %v476 = vsel %vm371, %v473, 0.0
  %477 = vadd.xlane.f32.xlu0 %v476
  %v478 = vpop.xlane.xlu0 %477
  %v479 = vsel %vm371, %v474, 0.0
  %480 = vadd.xlane.f32.xlu0 %v479
  %v481 = vpop.xlane.xlu0 %480
  %v482 = vsel %vm371, %v475, 0.0
  %483 = vadd.xlane.f32.xlu0 %v482
  %v484 = vpop.xlane.xlu0 %483
  %v485 = vmul.f32 %v478, %v381
  %v486 = vmul.f32 %v481, %v381
  %v487 = vmul.f32 %v484, %v381
  %v488 = vadd.f32 %v485, 1e-05
  %v489 = vadd.f32 %v486, 1e-05
  %v490 = vadd.f32 %v487, 1e-05
  %v491 = vrsqrt.pop %v488
  %v492 = vrsqrt.pop %v489
  %v493 = vrsqrt.pop %v490
  %v494 = vmul.f32 %v470, %v491
  %v495 = vmul.f32 %v471, %v492
  %v496 = vmul.f32 %v472, %v493
  %v497 = vlaneseq
  %v498 = vshrl.u32 %v497, 7
  %v499 = vsub.s32 0, %v498
  %v500 = vrot.slane %v426, %v499
  %v501 = vmul.f32 %v494, %v500
  %v502 = vmul.f32 %v495, %v500
  %v503 = vmul.f32 %v496, %v500
  %505 = vrot.lane.b32.xlu0 %v500, 96
  %v506 = vpop.permute.xlu0 %505
  %v508 = vadd.f32 %v501, %v506
  %v509 = vadd.f32 %v502, %v506
  %v510 = vadd.f32 %v503, %v506
  %v511 = vlaneseq
  %v512 = vshrl.u32 %v511, 7
  %v513 = vsub.s32 0, %v512
  %v514 = vrot.slane %v431, %v513
  %v516 = vsel %vm371, %v508, 0
  %v519 = vsel %vm371, %v509, 0
  %v522 = vsel %vm371, %v510, 0
  %524 = vmatprep.subr.mxu0 0.0
  %525 = vmatpush1.msra.mxu0 0.0
  %526 = vmatprep.subr.mxu0 0.0
  %527 = vmatpush1.msra.mxu0 0.0
  %528 = vmatprep.subr.mxu0 0.0
  %529 = vmatpush1.msra.mxu0 0.0
  %530 = vmatprep.subr.mxu0 0.0
  %531 = vmatpush1.msra.mxu0 0.0
  %532 = vmatprep.subr.mxu0 0.0
  %533 = vmatpush1.msra.mxu0 0.0
  %534 = vmatprep.subr.mxu0 0.0
  %535 = vmatpush1.msra.mxu0 0.0
  %536 = vmatprep.subr.mxu0 0.0
  %537 = vmatpush1.msra.mxu0 0.0
  %538 = vmatprep.subr.mxu0 0.0
  %539 = vmatpush1.msra.mxu0 0.0
  %540 = vmatprep.subr.mxu0 0.0
  %541 = vmatpush1.msra.mxu0 0.0
  %542 = vmatprep.subr.mxu0 0.0
  %543 = vmatpush1.msra.mxu0 0.0
  %544 = vmatprep.subr.mxu0 0.0
  %545 = vmatpush1.msra.mxu0 0.0
  %546 = vmatprep.subr.mxu0 0.0
  %547 = vmatpush1.msra.mxu0 0.0
  %548 = vmatprep.subr.mxu0 0.0
  %549 = vmatpush1.msra.mxu0 %v430
  %550 = vmatprep.subr.mxu0 0.0
  %551 = vmatpush1.msra.mxu0 %v429
  %552 = vmatprep.subr.mxu0 0.0
  %553 = vmatpush1.msra.mxu0 %v428
  %554 = vmatprep.subr.mxu0 0.0
  %555 = vmatpush1.msra.mxu0 %v427
  %556 = vmatprep.subr.mxu0 0.0
  %557 = vmatpush2.msra.mxu0 0.0
  %558 = vmatprep.subr.mxu0 0.0
  %559 = vmatpush2.msra.mxu0 0.0
  %560 = vmatprep.subr.mxu0 0.0
  %561 = vmatpush2.msra.mxu0 0.0
  %562 = vmatprep.subr.mxu0 0.0
  %563 = vmatpush2.msra.mxu0 0.0
  %564 = vmatprep.subr.mxu0 0.0
  %565 = vmatpush2.msra.mxu0 0.0
  %566 = vmatprep.subr.mxu0 0.0
  %567 = vmatpush2.msra.mxu0 0.0
  %568 = vmatprep.subr.mxu0 0.0
  %569 = vmatpush2.msra.mxu0 0.0
  %570 = vmatprep.subr.mxu0 0.0
  %571 = vmatpush2.msra.mxu0 0.0
  %572 = vmatprep.subr.mxu0 0.0
  %573 = vmatpush2.msra.mxu0 0.0
  %574 = vmatprep.subr.mxu0 0.0
  %575 = vmatpush2.msra.mxu0 0.0
  %576 = vmatprep.subr.mxu0 0.0
  %577 = vmatpush2.msra.mxu0 0.0
  %578 = vmatprep.subr.mxu0 0.0
  %579 = vmatpush2.msra.mxu0 0.0
  %580 = vmatprep.subr.mxu0 0.0
  %581 = vmatpush2.msra.mxu0 0.0
  %582 = vmatprep.subr.mxu0 0.0
  %583 = vmatpush2.msra.mxu0 0.0
  %584 = vmatprep.subr.mxu0 0.0
  %585 = vmatpush2.msra.mxu0 0.0
  %586 = vmatprep.subr.mxu0 0.0
  %587 = vmatpush2.msra.mxu0 0.0
  %588 = vmatprep.mubr.f32.mxu0 0.0
  %589 = vmatmul.mubr.f32.gmra.mxu0 %v516
  %v590 = vpop.f32.mrf.mxu0
  %v591 = vadd.f32 %v514, %v590
  %v592 = vpop.f32.mrf.mxu0
  %593 = vmatprep.mubr.f32.mxu0 0.0
  %594 = vmatmul.mubr.f32.gmra.mxu0 %v519
  %v595 = vpop.f32.mrf.mxu0
  %v596 = vadd.f32 %v514, %v595
  %v597 = vpop.f32.mrf.mxu0
  %598 = vmatprep.mubr.f32.mxu0 0.0
  %599 = vmatmul.mubr.f32.gmra.mxu0 %v522
  %v600 = vpop.f32.mrf.mxu0
  %v601 = vadd.f32 %v514, %v600
  %v602 = vpop.f32.mrf.mxu0
  %603 = vdwg.mxu0
  %v604 = vmul.f32 %v591, 0.35355338
  %v605 = vmul.f32 %v596, 0.35355338
  %v606 = vmul.f32 %v601, 0.35355338
  %v607 = vmul.f32 %v604, %v203
  %v608 = vmul.f32 %v605, %v203
  %v609 = vmul.f32 %v606, %v203
  %v610 = vmul.f32 %v604, %v208
  %v611 = vmul.f32 %v605, %v208
  %v612 = vmul.f32 %v606, %v208
  %v613 = vmul.f32 %v604, %v213
  %v614 = vmul.f32 %v605, %v213
  %v615 = vmul.f32 %v606, %v213
  %v616 = vmul.f32 %v604, %v218
  %v617 = vmul.f32 %v605, %v218
  %v618 = vmul.f32 %v606, %v218
  %622 = vrot.lane.b32.xlu0 %v591, 96
  %v623 = vpop.permute.xlu0 %622
  %624 = vrot.lane.b32.xlu0 %v596, 96
  %v625 = vpop.permute.xlu0 %624
  %626 = vrot.lane.b32.xlu0 %v601, 96
  %v627 = vpop.permute.xlu0 %626
  %v629 = vsel %vm371, %v607, 0
  %v632 = vsel %vm371, %v608, 0
  %v635 = vsel %vm371, %v609, 0
  %v638 = vsel %vm371, %v610, 0
  %v641 = vsel %vm371, %v611, 0
  %v644 = vsel %vm371, %v612, 0
  %v647 = vsel %vm371, %v613, 0
  %v650 = vsel %vm371, %v614, 0
  %v653 = vsel %vm371, %v615, 0
  %v656 = vsel %vm371, %v616, 0
  %v659 = vsel %vm371, %v617, 0
  %v662 = vsel %vm371, %v618, 0
  %v664 = vsel %vm371, %v623, 0
  %v666 = vsel %vm371, %v625, 0
  %v668 = vsel %vm371, %v627, 0
  %670 = vmatprep.subr.mxu0 0.0
  %671 = vmatpush1.xpose.msra.mxu0 0.0
  %672 = vmatprep.subr.mxu0 0.0
  %673 = vmatpush1.xpose.msra.mxu0 0.0
  %674 = vmatprep.subr.mxu0 0.0
  %675 = vmatpush1.xpose.msra.mxu0 0.0
  %676 = vmatprep.subr.mxu0 0.0
  %677 = vmatpush1.xpose.msra.mxu0 0.0
  %678 = vmatprep.subr.mxu0 0.0
  %679 = vmatpush1.xpose.msra.mxu0 0.0
  %680 = vmatprep.subr.mxu0 0.0
  %681 = vmatpush1.xpose.msra.mxu0 0.0
  %682 = vmatprep.subr.mxu0 0.0
  %683 = vmatpush1.xpose.msra.mxu0 0.0
  %684 = vmatprep.subr.mxu0 0.0
  %685 = vmatpush1.xpose.msra.mxu0 0.0
  %686 = vmatprep.subr.mxu0 0.0
  %687 = vmatpush1.xpose.msra.mxu0 0.0
  %688 = vmatprep.subr.mxu0 0.0
  %689 = vmatpush1.xpose.msra.mxu0 0.0
  %690 = vmatprep.subr.mxu0 0.0
  %691 = vmatpush1.xpose.msra.mxu0 0.0
  %692 = vmatprep.subr.mxu0 0.0
  %693 = vmatpush1.xpose.msra.mxu0 0.0
  %694 = vmatprep.subr.mxu0 0.0
  %695 = vmatpush1.xpose.msra.mxu0 0.0
  %696 = vmatprep.subr.mxu0 0.0
  %697 = vmatpush1.xpose.msra.mxu0 %v668
  %698 = vmatprep.subr.mxu0 0.0
  %699 = vmatpush1.xpose.msra.mxu0 %v666
  %700 = vmatprep.subr.mxu0 0.0
  %701 = vmatpush1.xpose.msra.mxu0 %v664
  %702 = vmatprep.subr.mxu0 0.0
  %703 = vmatpush2.xpose.msra.mxu0 0.0
  %704 = vmatprep.subr.mxu0 0.0
  %705 = vmatpush2.xpose.msra.mxu0 0.0
  %706 = vmatprep.subr.mxu0 0.0
  %707 = vmatpush2.xpose.msra.mxu0 0.0
  %708 = vmatprep.subr.mxu0 0.0
  %709 = vmatpush2.xpose.msra.mxu0 0.0
  %710 = vmatprep.subr.mxu0 0.0
  %711 = vmatpush2.xpose.msra.mxu0 0.0
  %712 = vmatprep.subr.mxu0 0.0
  %713 = vmatpush2.xpose.msra.mxu0 0.0
  %714 = vmatprep.subr.mxu0 0.0
  %715 = vmatpush2.xpose.msra.mxu0 0.0
  %716 = vmatprep.subr.mxu0 0.0
  %717 = vmatpush2.xpose.msra.mxu0 0.0
  %718 = vmatprep.subr.mxu0 0.0
  %719 = vmatpush2.xpose.msra.mxu0 0.0
  %720 = vmatprep.subr.mxu0 0.0
  %721 = vmatpush2.xpose.msra.mxu0 0.0
  %722 = vmatprep.subr.mxu0 0.0
  %723 = vmatpush2.xpose.msra.mxu0 0.0
  %724 = vmatprep.subr.mxu0 0.0
  %725 = vmatpush2.xpose.msra.mxu0 0.0
  %726 = vmatprep.subr.mxu0 0.0
  %727 = vmatpush2.xpose.msra.mxu0 0.0
  %728 = vmatprep.subr.mxu0 0.0
  %729 = vmatpush2.xpose.msra.mxu0 0.0
  %730 = vmatprep.subr.mxu0 0.0
  %731 = vmatpush2.xpose.msra.mxu0 0.0
  %732 = vmatprep.subr.mxu0 0.0
  %733 = vmatpush2.xpose.msra.mxu0 0.0
  %734 = vmatprep.mubr.f32.mxu0 0.0
  %735 = vmatmul.mubr.f32.gmra.mxu0 %v629
  %v736 = vpop.f32.mrf.mxu0
  %v737 = vadd.f32 %v14, %v736
  %v738 = vpop.f32.mrf.mxu0
  %739 = vmatprep.mubr.f32.mxu0 0.0
  %740 = vmatmul.mubr.f32.gmra.mxu0 %v632
  %v741 = vpop.f32.mrf.mxu0
  %v742 = vadd.f32 %v14, %v741
  %v743 = vpop.f32.mrf.mxu0
  %744 = vmatprep.mubr.f32.mxu0 0.0
  %745 = vmatmul.mubr.f32.gmra.mxu0 %v635
  %v746 = vpop.f32.mrf.mxu0
  %v747 = vadd.f32 %v14, %v746
  %v748 = vpop.f32.mrf.mxu0
  %749 = vmatprep.mubr.f32.mxu0 0.0
  %750 = vmatmul.mubr.f32.gmra.mxu0 %v638
  %v751 = vpop.f32.mrf.mxu0
  %v752 = vadd.f32 %v14, %v751
  %v753 = vpop.f32.mrf.mxu0
  %754 = vmatprep.mubr.f32.mxu0 0.0
  %755 = vmatmul.mubr.f32.gmra.mxu0 %v641
  %v756 = vpop.f32.mrf.mxu0
  %v757 = vadd.f32 %v14, %v756
  %v758 = vpop.f32.mrf.mxu0
  %759 = vmatprep.mubr.f32.mxu0 0.0
  %760 = vmatmul.mubr.f32.gmra.mxu0 %v644
  %v761 = vpop.f32.mrf.mxu0
  %v762 = vadd.f32 %v14, %v761
  %v763 = vpop.f32.mrf.mxu0
  %764 = vmatprep.mubr.f32.mxu0 0.0
  %765 = vmatmul.mubr.f32.gmra.mxu0 %v647
  %v766 = vpop.f32.mrf.mxu0
  %v767 = vadd.f32 %v14, %v766
  %v768 = vpop.f32.mrf.mxu0
  %769 = vmatprep.mubr.f32.mxu0 0.0
  %770 = vmatmul.mubr.f32.gmra.mxu0 %v650
  %v771 = vpop.f32.mrf.mxu0
  %v772 = vadd.f32 %v14, %v771
  %v773 = vpop.f32.mrf.mxu0
  %774 = vmatprep.mubr.f32.mxu0 0.0
  %775 = vmatmul.mubr.f32.gmra.mxu0 %v653
  %v776 = vpop.f32.mrf.mxu0
  %v777 = vadd.f32 %v14, %v776
  %v778 = vpop.f32.mrf.mxu0
  %779 = vmatprep.mubr.f32.mxu0 0.0
  %780 = vmatmul.mubr.f32.gmra.mxu0 %v656
  %v781 = vpop.f32.mrf.mxu0
  %v782 = vadd.f32 %v14, %v781
  %v783 = vpop.f32.mrf.mxu0
  %784 = vmatprep.mubr.f32.mxu0 0.0
  %785 = vmatmul.mubr.f32.gmra.mxu0 %v659
  %v786 = vpop.f32.mrf.mxu0
  %v787 = vadd.f32 %v14, %v786
  %v788 = vpop.f32.mrf.mxu0
  %789 = vmatprep.mubr.f32.mxu0 0.0
  %790 = vmatmul.mubr.f32.gmra.mxu0 %v662
  %v791 = vpop.f32.mrf.mxu0
  %v792 = vadd.f32 %v14, %v791
  %v793 = vpop.f32.mrf.mxu0
  %794 = vdwg.mxu0
  %vm795 = vcmask 195584
  %v796 = vsel %vm795, %v737, -inf
  %797 = vmax.xlane.f32.xlu0 %v796
  %v798 = vpop.xlane.xlu0 %797
  %v799 = vsel %vm795, %v742, -inf
  %800 = vmax.xlane.f32.xlu0 %v799
  %v801 = vpop.xlane.xlu0 %800
  %v802 = vsel %vm795, %v747, -inf
  %803 = vmax.xlane.f32.xlu0 %v802
  %v804 = vpop.xlane.xlu0 %803
  %v805 = vsel %vm795, %v752, -inf
  %806 = vmax.xlane.f32.xlu0 %v805
  %v807 = vpop.xlane.xlu0 %806
  %v808 = vsel %vm795, %v757, -inf
  %809 = vmax.xlane.f32.xlu0 %v808
  %v810 = vpop.xlane.xlu0 %809
  %v811 = vsel %vm795, %v762, -inf
  %812 = vmax.xlane.f32.xlu0 %v811
  %v813 = vpop.xlane.xlu0 %812
  %v814 = vsel %vm795, %v767, -inf
  %815 = vmax.xlane.f32.xlu0 %v814
  %v816 = vpop.xlane.xlu0 %815
  %v817 = vsel %vm795, %v772, -inf
  %818 = vmax.xlane.f32.xlu0 %v817
  %v819 = vpop.xlane.xlu0 %818
  %v820 = vsel %vm795, %v777, -inf
  %821 = vmax.xlane.f32.xlu0 %v820
  %v822 = vpop.xlane.xlu0 %821
  %v823 = vsel %vm795, %v782, -inf
  %824 = vmax.xlane.f32.xlu0 %v823
  %v825 = vpop.xlane.xlu0 %824
  %v826 = vsel %vm795, %v787, -inf
  %827 = vmax.xlane.f32.xlu0 %v826
  %v828 = vpop.xlane.xlu0 %827
  %v829 = vsel %vm795, %v792, -inf
  %830 = vmax.xlane.f32.xlu0 %v829
  %v831 = vpop.xlane.xlu0 %830
  %v832 = vsub.f32 %v737, %v798
  %v833 = vsub.f32 %v742, %v801
  %v834 = vsub.f32 %v747, %v804
  %v835 = vsub.f32 %v752, %v807
  %v836 = vsub.f32 %v757, %v810
  %v837 = vsub.f32 %v762, %v813
  %v838 = vsub.f32 %v767, %v816
  %v839 = vsub.f32 %v772, %v819
  %v840 = vsub.f32 %v777, %v822
  %v841 = vsub.f32 %v782, %v825
  %v842 = vsub.f32 %v787, %v828
  %v843 = vsub.f32 %v792, %v831
  %v844 = vmul.f32 %v832, 1.442695
  %v845 = vpow.pop %v844
  %v846 = vmul.f32 %v833, 1.442695
  %v847 = vpow.pop %v846
  %v848 = vmul.f32 %v834, 1.442695
  %v849 = vpow.pop %v848
  %v850 = vmul.f32 %v835, 1.442695
  %v851 = vpow.pop %v850
  %v852 = vmul.f32 %v836, 1.442695
  %v853 = vpow.pop %v852
  %v854 = vmul.f32 %v837, 1.442695
  %v855 = vpow.pop %v854
  %v856 = vmul.f32 %v838, 1.442695
  %v857 = vpow.pop %v856
  %v858 = vmul.f32 %v839, 1.442695
  %v859 = vpow.pop %v858
  %v860 = vmul.f32 %v840, 1.442695
  %v861 = vpow.pop %v860
  %v862 = vmul.f32 %v841, 1.442695
  %v863 = vpow.pop %v862
  %v864 = vmul.f32 %v842, 1.442695
  %v865 = vpow.pop %v864
  %v866 = vmul.f32 %v843, 1.442695
  %v867 = vpow.pop %v866
  %v868 = vsel %vm795, %v845, 0.0
  %869 = vadd.xlane.f32.xlu0 %v868
  %v870 = vpop.xlane.xlu0 %869
  %v871 = vsel %vm795, %v847, 0.0
  %872 = vadd.xlane.f32.xlu0 %v871
  %v873 = vpop.xlane.xlu0 %872
  %v874 = vsel %vm795, %v849, 0.0
  %875 = vadd.xlane.f32.xlu0 %v874
  %v876 = vpop.xlane.xlu0 %875
  %v877 = vsel %vm795, %v851, 0.0
  %878 = vadd.xlane.f32.xlu0 %v877
  %v879 = vpop.xlane.xlu0 %878
  %v880 = vsel %vm795, %v853, 0.0
  %881 = vadd.xlane.f32.xlu0 %v880
  %v882 = vpop.xlane.xlu0 %881
  %v883 = vsel %vm795, %v855, 0.0
  %884 = vadd.xlane.f32.xlu0 %v883
  %v885 = vpop.xlane.xlu0 %884
  %v886 = vsel %vm795, %v857, 0.0
  %887 = vadd.xlane.f32.xlu0 %v886
  %v888 = vpop.xlane.xlu0 %887
  %v889 = vsel %vm795, %v859, 0.0
  %890 = vadd.xlane.f32.xlu0 %v889
  %v891 = vpop.xlane.xlu0 %890
  %v892 = vsel %vm795, %v861, 0.0
  %893 = vadd.xlane.f32.xlu0 %v892
  %v894 = vpop.xlane.xlu0 %893
  %v895 = vsel %vm795, %v863, 0.0
  %896 = vadd.xlane.f32.xlu0 %v895
  %v897 = vpop.xlane.xlu0 %896
  %v898 = vsel %vm795, %v865, 0.0
  %899 = vadd.xlane.f32.xlu0 %v898
  %v900 = vpop.xlane.xlu0 %899
  %v901 = vsel %vm795, %v867, 0.0
  %902 = vadd.xlane.f32.xlu0 %v901
  %v903 = vpop.xlane.xlu0 %902
  %v904 = vrcp.pop %v870
  %v905 = vrcp.pop %v873
  %v906 = vrcp.pop %v876
  %v907 = vrcp.pop %v879
  %v908 = vrcp.pop %v882
  %v909 = vrcp.pop %v885
  %v910 = vrcp.pop %v888
  %v911 = vrcp.pop %v891
  %v912 = vrcp.pop %v894
  %v913 = vrcp.pop %v897
  %v914 = vrcp.pop %v900
  %v915 = vrcp.pop %v903
  %v916 = vmul.f32 %v845, %v904
  %v917 = vmul.f32 %v847, %v905
  %v918 = vmul.f32 %v849, %v906
  %v919 = vmul.f32 %v851, %v907
  %v920 = vmul.f32 %v853, %v908
  %v921 = vmul.f32 %v855, %v909
  %v922 = vmul.f32 %v857, %v910
  %v923 = vmul.f32 %v859, %v911
  %v924 = vmul.f32 %v861, %v912
  %v925 = vmul.f32 %v863, %v913
  %v926 = vmul.f32 %v865, %v914
  %v927 = vmul.f32 %v867, %v915
  %v928 = vmul.f32 %v916, %v187
  %v929 = vmul.f32 %v917, %v188
  %v930 = vmul.f32 %v918, %v189
  %v931 = vmul.f32 %v919, %v190
  %v932 = vmul.f32 %v920, %v191
  %v933 = vmul.f32 %v921, %v192
  %v934 = vmul.f32 %v922, %v193
  %v935 = vmul.f32 %v923, %v194
  %v936 = vmul.f32 %v924, %v195
  %v937 = vmul.f32 %v925, %v196
  %v938 = vmul.f32 %v926, %v197
  %v939 = vmul.f32 %v927, %v198
  %v940 = vadd.f32 %v928, 0.0
  %v941 = vadd.f32 %v929, 0.0
  %v942 = vadd.f32 %v930, 0.0
  %v943 = vadd.f32 %v931, 0.0
  %v944 = vadd.f32 %v932, 0.0
  %v945 = vadd.f32 %v933, 0.0
  %v946 = vadd.f32 %v934, 0.0
  %v947 = vadd.f32 %v935, 0.0
  %v948 = vadd.f32 %v936, 0.0
  %v949 = vadd.f32 %v937, 0.0
  %v950 = vadd.f32 %v938, 0.0
  %v951 = vadd.f32 %v939, 0.0
  %952 = vrot.lane.b32.xlu0 %v591, 64
  %v953 = vpop.permute.xlu0 %952
  %954 = vrot.lane.b32.xlu0 %v596, 64
  %v955 = vpop.permute.xlu0 %954
  %956 = vrot.lane.b32.xlu0 %v601, 64
  %v957 = vpop.permute.xlu0 %956
  %v962 = vsel %vm795, %v928, 0
  %v965 = vsel %vm795, %v929, 0
  %v968 = vsel %vm795, %v930, 0
  %v971 = vsel %vm795, %v931, 0
  %v974 = vsel %vm795, %v932, 0
  %v977 = vsel %vm795, %v933, 0
  %v980 = vsel %vm795, %v934, 0
  %v983 = vsel %vm795, %v935, 0
  %v986 = vsel %vm795, %v936, 0
  %v989 = vsel %vm795, %v937, 0
  %v992 = vsel %vm795, %v938, 0
  %v995 = vsel %vm795, %v939, 0
  %997 = vmatprep.subr.mxu0 0.0
  %998 = vmatpush1.msra.mxu0 0.0
  %999 = vmatprep.subr.mxu0 0.0
  %1000 = vmatpush1.msra.mxu0 0.0
  %1001 = vmatprep.subr.mxu0 0.0
  %1002 = vmatpush1.msra.mxu0 0.0
  %1003 = vmatprep.subr.mxu0 0.0
  %1004 = vmatpush1.msra.mxu0 0.0
  %1005 = vmatprep.subr.mxu0 0.0
  %1006 = vmatpush1.msra.mxu0 0.0
  %1007 = vmatprep.subr.mxu0 0.0
  %1008 = vmatpush1.msra.mxu0 0.0
  %1009 = vmatprep.subr.mxu0 0.0
  %1010 = vmatpush1.msra.mxu0 0.0
  %1011 = vmatprep.subr.mxu0 0.0
  %1012 = vmatpush1.msra.mxu0 0.0
  %1013 = vmatprep.subr.mxu0 0.0
  %1014 = vmatpush1.msra.mxu0 0.0
  %1015 = vmatprep.subr.mxu0 0.0
  %1016 = vmatpush1.msra.mxu0 0.0
  %1017 = vmatprep.subr.mxu0 0.0
  %1018 = vmatpush1.msra.mxu0 0.0
  %1019 = vmatprep.subr.mxu0 0.0
  %1020 = vmatpush1.msra.mxu0 0.0
  %1021 = vmatprep.subr.mxu0 0.0
  %1022 = vmatpush1.msra.mxu0 0.0
  %1023 = vmatprep.subr.mxu0 0.0
  %1024 = vmatpush1.msra.mxu0 %v957
  %1025 = vmatprep.subr.mxu0 0.0
  %1026 = vmatpush1.msra.mxu0 %v955
  %1027 = vmatprep.subr.mxu0 0.0
  %1028 = vmatpush1.msra.mxu0 %v953
  %1029 = vmatprep.subr.mxu0 0.0
  %1030 = vmatpush2.msra.mxu0 0.0
  %1031 = vmatprep.subr.mxu0 0.0
  %1032 = vmatpush2.msra.mxu0 0.0
  %1033 = vmatprep.subr.mxu0 0.0
  %1034 = vmatpush2.msra.mxu0 0.0
  %1035 = vmatprep.subr.mxu0 0.0
  %1036 = vmatpush2.msra.mxu0 0.0
  %1037 = vmatprep.subr.mxu0 0.0
  %1038 = vmatpush2.msra.mxu0 0.0
  %1039 = vmatprep.subr.mxu0 0.0
  %1040 = vmatpush2.msra.mxu0 0.0
  %1041 = vmatprep.subr.mxu0 0.0
  %1042 = vmatpush2.msra.mxu0 0.0
  %1043 = vmatprep.subr.mxu0 0.0
  %1044 = vmatpush2.msra.mxu0 0.0
  %1045 = vmatprep.subr.mxu0 0.0
  %1046 = vmatpush2.msra.mxu0 0.0
  %1047 = vmatprep.subr.mxu0 0.0
  %1048 = vmatpush2.msra.mxu0 0.0
  %1049 = vmatprep.subr.mxu0 0.0
  %1050 = vmatpush2.msra.mxu0 0.0
  %1051 = vmatprep.subr.mxu0 0.0
  %1052 = vmatpush2.msra.mxu0 0.0
  %1053 = vmatprep.subr.mxu0 0.0
  %1054 = vmatpush2.msra.mxu0 0.0
  %1055 = vmatprep.subr.mxu0 0.0
  %1056 = vmatpush2.msra.mxu0 0.0
  %1057 = vmatprep.subr.mxu0 0.0
  %1058 = vmatpush2.msra.mxu0 0.0
  %1059 = vmatprep.subr.mxu0 0.0
  %1060 = vmatpush2.msra.mxu0 0.0
  %1061 = vmatprep.mubr.f32.mxu0 0.0
  %1062 = vmatmul.mubr.f32.gmra.mxu0 %v962
  %v1063 = vpop.f32.mrf.mxu0
  %v1064 = vadd.f32 0.0, %v1063
  %v1065 = vpop.f32.mrf.mxu0
  %1066 = vmatprep.mubr.f32.mxu0 0.0
  %1067 = vmatmul.mubr.f32.gmra.mxu0 %v965
  %v1068 = vpop.f32.mrf.mxu0
  %v1069 = vadd.f32 0.0, %v1068
  %v1070 = vpop.f32.mrf.mxu0
  %1071 = vmatprep.mubr.f32.mxu0 0.0
  %1072 = vmatmul.mubr.f32.gmra.mxu0 %v968
  %v1073 = vpop.f32.mrf.mxu0
  %v1074 = vadd.f32 0.0, %v1073
  %v1075 = vpop.f32.mrf.mxu0
  %1076 = vmatprep.mubr.f32.mxu0 0.0
  %1077 = vmatmul.mubr.f32.gmra.mxu0 %v971
  %v1078 = vpop.f32.mrf.mxu0
  %v1079 = vadd.f32 0.0, %v1078
  %v1080 = vpop.f32.mrf.mxu0
  %1081 = vmatprep.mubr.f32.mxu0 0.0
  %1082 = vmatmul.mubr.f32.gmra.mxu0 %v974
  %v1083 = vpop.f32.mrf.mxu0
  %v1084 = vadd.f32 0.0, %v1083
  %v1085 = vpop.f32.mrf.mxu0
  %1086 = vmatprep.mubr.f32.mxu0 0.0
  %1087 = vmatmul.mubr.f32.gmra.mxu0 %v977
  %v1088 = vpop.f32.mrf.mxu0
  %v1089 = vadd.f32 0.0, %v1088
  %v1090 = vpop.f32.mrf.mxu0
  %1091 = vmatprep.mubr.f32.mxu0 0.0
  %1092 = vmatmul.mubr.f32.gmra.mxu0 %v980
  %v1093 = vpop.f32.mrf.mxu0
  %v1094 = vadd.f32 0.0, %v1093
  %v1095 = vpop.f32.mrf.mxu0
  %1096 = vmatprep.mubr.f32.mxu0 0.0
  %1097 = vmatmul.mubr.f32.gmra.mxu0 %v983
  %v1098 = vpop.f32.mrf.mxu0
  %v1099 = vadd.f32 0.0, %v1098
  %v1100 = vpop.f32.mrf.mxu0
  %1101 = vmatprep.mubr.f32.mxu0 0.0
  %1102 = vmatmul.mubr.f32.gmra.mxu0 %v986
  %v1103 = vpop.f32.mrf.mxu0
  %v1104 = vadd.f32 0.0, %v1103
  %v1105 = vpop.f32.mrf.mxu0
  %1106 = vmatprep.mubr.f32.mxu0 0.0
  %1107 = vmatmul.mubr.f32.gmra.mxu0 %v989
  %v1108 = vpop.f32.mrf.mxu0
  %v1109 = vadd.f32 0.0, %v1108
  %v1110 = vpop.f32.mrf.mxu0
  %1111 = vmatprep.mubr.f32.mxu0 0.0
  %1112 = vmatmul.mubr.f32.gmra.mxu0 %v992
  %v1113 = vpop.f32.mrf.mxu0
  %v1114 = vadd.f32 0.0, %v1113
  %v1115 = vpop.f32.mrf.mxu0
  %1116 = vmatprep.mubr.f32.mxu0 0.0
  %1117 = vmatmul.mubr.f32.gmra.mxu0 %v995
  %v1118 = vpop.f32.mrf.mxu0
  %v1119 = vadd.f32 0.0, %v1118
  %v1120 = vpop.f32.mrf.mxu0
  %1121 = vdwg.mxu0
  %v1122 = vmul.f32 %v1064, %v203
  %v1123 = vmul.f32 %v1069, %v203
  %v1124 = vmul.f32 %v1074, %v203
  %v1125 = vadd.f32 %v1122, 0.0
  %v1126 = vadd.f32 %v1123, 0.0
  %v1127 = vadd.f32 %v1124, 0.0
  %v1128 = vmul.f32 %v1079, %v208
  %v1129 = vmul.f32 %v1084, %v208
  %v1130 = vmul.f32 %v1089, %v208
  %v1131 = vadd.f32 %v1125, %v1128
  %v1132 = vadd.f32 %v1126, %v1129
  %v1133 = vadd.f32 %v1127, %v1130
  %v1134 = vmul.f32 %v1094, %v213
  %v1135 = vmul.f32 %v1099, %v213
  %v1136 = vmul.f32 %v1104, %v213
  %v1137 = vadd.f32 %v1131, %v1134
  %v1138 = vadd.f32 %v1132, %v1135
  %v1139 = vadd.f32 %v1133, %v1136
  %v1140 = vmul.f32 %v1109, %v218
  %v1141 = vmul.f32 %v1114, %v218
  %v1142 = vmul.f32 %v1119, %v218
  %v1143 = vadd.f32 %v1137, %v1140
  %v1144 = vadd.f32 %v1138, %v1141
  %v1145 = vadd.f32 %v1139, %v1142
  %v1147 = vsel %vm371, %v1143, 0
  %v1150 = vsel %vm371, %v1144, 0
  %v1153 = vsel %vm371, %v1145, 0
  %1155 = vmatprep.subr.mxu0 0.0
  %1156 = vmatpush1.msra.mxu0 0.0
  %1157 = vmatprep.subr.mxu0 0.0
  %1158 = vmatpush1.msra.mxu0 0.0
  %1159 = vmatprep.subr.mxu0 0.0
  %1160 = vmatpush1.msra.mxu0 0.0
  %1161 = vmatprep.subr.mxu0 0.0
  %1162 = vmatpush1.msra.mxu0 0.0
  %1163 = vmatprep.subr.mxu0 0.0
  %1164 = vmatpush1.msra.mxu0 0.0
  %1165 = vmatprep.subr.mxu0 0.0
  %1166 = vmatpush1.msra.mxu0 0.0
  %1167 = vmatprep.subr.mxu0 0.0
  %1168 = vmatpush1.msra.mxu0 0.0
  %1169 = vmatprep.subr.mxu0 0.0
  %1170 = vmatpush1.msra.mxu0 0.0
  %1171 = vmatprep.subr.mxu0 0.0
  %1172 = vmatpush1.msra.mxu0 0.0
  %1173 = vmatprep.subr.mxu0 0.0
  %1174 = vmatpush1.msra.mxu0 0.0
  %1175 = vmatprep.subr.mxu0 0.0
  %1176 = vmatpush1.msra.mxu0 0.0
  %1177 = vmatprep.subr.mxu0 0.0
  %1178 = vmatpush1.msra.mxu0 0.0
  %1179 = vmatprep.subr.mxu0 0.0
  %1180 = vmatpush1.msra.mxu0 %v435
  %1181 = vmatprep.subr.mxu0 0.0
  %1182 = vmatpush1.msra.mxu0 %v434
  %1183 = vmatprep.subr.mxu0 0.0
  %1184 = vmatpush1.msra.mxu0 %v433
  %1185 = vmatprep.subr.mxu0 0.0
  %1186 = vmatpush1.msra.mxu0 %v432
  %1187 = vmatprep.subr.mxu0 0.0
  %1188 = vmatpush2.msra.mxu0 0.0
  %1189 = vmatprep.subr.mxu0 0.0
  %1190 = vmatpush2.msra.mxu0 0.0
  %1191 = vmatprep.subr.mxu0 0.0
  %1192 = vmatpush2.msra.mxu0 0.0
  %1193 = vmatprep.subr.mxu0 0.0
  %1194 = vmatpush2.msra.mxu0 0.0
  %1195 = vmatprep.subr.mxu0 0.0
  %1196 = vmatpush2.msra.mxu0 0.0
  %1197 = vmatprep.subr.mxu0 0.0
  %1198 = vmatpush2.msra.mxu0 0.0
  %1199 = vmatprep.subr.mxu0 0.0
  %1200 = vmatpush2.msra.mxu0 0.0
  %1201 = vmatprep.subr.mxu0 0.0
  %1202 = vmatpush2.msra.mxu0 0.0
  %1203 = vmatprep.subr.mxu0 0.0
  %1204 = vmatpush2.msra.mxu0 0.0
  %1205 = vmatprep.subr.mxu0 0.0
  %1206 = vmatpush2.msra.mxu0 0.0
  %1207 = vmatprep.subr.mxu0 0.0
  %1208 = vmatpush2.msra.mxu0 0.0
  %1209 = vmatprep.subr.mxu0 0.0
  %1210 = vmatpush2.msra.mxu0 0.0
  %1211 = vmatprep.subr.mxu0 0.0
  %1212 = vmatpush2.msra.mxu0 0.0
  %1213 = vmatprep.subr.mxu0 0.0
  %1214 = vmatpush2.msra.mxu0 0.0
  %1215 = vmatprep.subr.mxu0 0.0
  %1216 = vmatpush2.msra.mxu0 0.0
  %1217 = vmatprep.subr.mxu0 0.0
  %1218 = vmatpush2.msra.mxu0 0.0
  %1219 = vmatprep.mubr.f32.mxu0 0.0
  %1220 = vmatmul.mubr.f32.gmra.mxu0 %v1147
  %v1221 = vpop.f32.mrf.mxu0
  %v1222 = vadd.f32 0.0, %v1221
  %v1223 = vpop.f32.mrf.mxu0
  %1224 = vmatprep.mubr.f32.mxu0 0.0
  %1225 = vmatmul.mubr.f32.gmra.mxu0 %v1150
  %v1226 = vpop.f32.mrf.mxu0
  %v1227 = vadd.f32 0.0, %v1226
  %v1228 = vpop.f32.mrf.mxu0
  %1229 = vmatprep.mubr.f32.mxu0 0.0
  %1230 = vmatmul.mubr.f32.gmra.mxu0 %v1153
  %v1231 = vpop.f32.mrf.mxu0
  %v1232 = vadd.f32 0.0, %v1231
  %v1233 = vpop.f32.mrf.mxu0
  %1234 = vdwg.mxu0
  %v1235 = vadd.f32 %v423, %v1222
  %v1236 = vadd.f32 %v424, %v1227
  %v1237 = vadd.f32 %v425, %v1232
  %v1238 = vlaneseq
  %v1239 = vshrl.u32 %v1238, 7
  %v1240 = vsub.s32 0, %v1239
  %v1241 = vrot.slane %v436, %v1240
  %v1242 = vadd.f32 %v1235, %v1241
  %v1243 = vadd.f32 %v1236, %v1241
  %v1244 = vadd.f32 %v1237, %v1241
  %v1245 = vsel %vm371, %v1242, 0.0
  %1246 = vadd.xlane.f32.xlu0 %v1245
  %v1247 = vpop.xlane.xlu0 %1246
  %v1248 = vsel %vm371, %v1243, 0.0
  %1249 = vadd.xlane.f32.xlu0 %v1248
  %v1250 = vpop.xlane.xlu0 %1249
  %v1251 = vsel %vm371, %v1244, 0.0
  %1252 = vadd.xlane.f32.xlu0 %v1251
  %v1253 = vpop.xlane.xlu0 %1252
  %v1254 = vmul.f32 %v1247, %v381
  %v1255 = vmul.f32 %v1250, %v381
  %v1256 = vmul.f32 %v1253, %v381
  %v1257 = vsub.f32 %v1242, %v1254
  %v1258 = vsub.f32 %v1243, %v1255
  %v1259 = vsub.f32 %v1244, %v1256
  %v1260 = vmul.f32 %v1257, %v1257
  %v1261 = vmul.f32 %v1258, %v1258
  %v1262 = vmul.f32 %v1259, %v1259
  %v1263 = vsel %vm371, %v1260, 0.0
  %1264 = vadd.xlane.f32.xlu0 %v1263
  %v1265 = vpop.xlane.xlu0 %1264
  %v1266 = vsel %vm371, %v1261, 0.0
  %1267 = vadd.xlane.f32.xlu0 %v1266
  %v1268 = vpop.xlane.xlu0 %1267
  %v1269 = vsel %vm371, %v1262, 0.0
  %1270 = vadd.xlane.f32.xlu0 %v1269
  %v1271 = vpop.xlane.xlu0 %1270
  %v1272 = vmul.f32 %v1265, %v381
  %v1273 = vmul.f32 %v1268, %v381
  %v1274 = vmul.f32 %v1271, %v381
  %v1275 = vadd.f32 %v1272, 1e-05
  %v1276 = vadd.f32 %v1273, 1e-05
  %v1277 = vadd.f32 %v1274, 1e-05
  %v1278 = vrsqrt.pop %v1275
  %v1279 = vrsqrt.pop %v1276
  %v1280 = vrsqrt.pop %v1277
  %v1281 = vmul.f32 %v1257, %v1278
  %v1282 = vmul.f32 %v1258, %v1279
  %v1283 = vmul.f32 %v1259, %v1280
  %1284 = vrot.lane.b32.xlu0 %v500, 64
  %v1285 = vpop.permute.xlu0 %1284
  %v1287 = vmul.f32 %v1281, %v1285
  %v1288 = vmul.f32 %v1282, %v1285
  %v1289 = vmul.f32 %v1283, %v1285
  %1290 = vrot.lane.b32.xlu0 %v500, 32
  %v1291 = vpop.permute.xlu0 %1290
  %v1293 = vadd.f32 %v1287, %v1291
  %v1294 = vadd.f32 %v1288, %v1291
  %v1295 = vadd.f32 %v1289, %v1291
  %v1296 = vlaneseq
  %v1297 = vshrl.u32 %v1296, 7
  %v1298 = vsub.s32 0, %v1297
  %v1299 = vrot.slane %v441, %v1298
  %v1301 = vsel %vm371, %v1293, 0
  %v1304 = vsel %vm371, %v1294, 0
  %v1307 = vsel %vm371, %v1295, 0
  %1309 = vmatprep.subr.mxu0 0.0
  %1310 = vmatpush1.msra.mxu0 0.0
  %1311 = vmatprep.subr.mxu0 0.0
  %1312 = vmatpush1.msra.mxu0 0.0
  %1313 = vmatprep.subr.mxu0 0.0
  %1314 = vmatpush1.msra.mxu0 0.0
  %1315 = vmatprep.subr.mxu0 0.0
  %1316 = vmatpush1.msra.mxu0 0.0
  %1317 = vmatprep.subr.mxu0 0.0
  %1318 = vmatpush1.msra.mxu0 0.0
  %1319 = vmatprep.subr.mxu0 0.0
  %1320 = vmatpush1.msra.mxu0 0.0
  %1321 = vmatprep.subr.mxu0 0.0
  %1322 = vmatpush1.msra.mxu0 0.0
  %1323 = vmatprep.subr.mxu0 0.0
  %1324 = vmatpush1.msra.mxu0 0.0
  %1325 = vmatprep.subr.mxu0 0.0
  %1326 = vmatpush1.msra.mxu0 0.0
  %1327 = vmatprep.subr.mxu0 0.0
  %1328 = vmatpush1.msra.mxu0 0.0
  %1329 = vmatprep.subr.mxu0 0.0
  %1330 = vmatpush1.msra.mxu0 0.0
  %1331 = vmatprep.subr.mxu0 0.0
  %1332 = vmatpush1.msra.mxu0 0.0
  %1333 = vmatprep.subr.mxu0 0.0
  %1334 = vmatpush1.msra.mxu0 %v440
  %1335 = vmatprep.subr.mxu0 0.0
  %1336 = vmatpush1.msra.mxu0 %v439
  %1337 = vmatprep.subr.mxu0 0.0
  %1338 = vmatpush1.msra.mxu0 %v438
  %1339 = vmatprep.subr.mxu0 0.0
  %1340 = vmatpush1.msra.mxu0 %v437
  %1341 = vmatprep.subr.mxu0 0.0
  %1342 = vmatpush2.msra.mxu0 0.0
  %1343 = vmatprep.subr.mxu0 0.0
  %1344 = vmatpush2.msra.mxu0 0.0
  %1345 = vmatprep.subr.mxu0 0.0
  %1346 = vmatpush2.msra.mxu0 0.0
  %1347 = vmatprep.subr.mxu0 0.0
  %1348 = vmatpush2.msra.mxu0 0.0
  %1349 = vmatprep.subr.mxu0 0.0
  %1350 = vmatpush2.msra.mxu0 0.0
  %1351 = vmatprep.subr.mxu0 0.0
  %1352 = vmatpush2.msra.mxu0 0.0
  %1353 = vmatprep.subr.mxu0 0.0
  %1354 = vmatpush2.msra.mxu0 0.0
  %1355 = vmatprep.subr.mxu0 0.0
  %1356 = vmatpush2.msra.mxu0 0.0
  %1357 = vmatprep.subr.mxu0 0.0
  %1358 = vmatpush2.msra.mxu0 0.0
  %1359 = vmatprep.subr.mxu0 0.0
  %1360 = vmatpush2.msra.mxu0 0.0
  %1361 = vmatprep.subr.mxu0 0.0
  %1362 = vmatpush2.msra.mxu0 0.0
  %1363 = vmatprep.subr.mxu0 0.0
  %1364 = vmatpush2.msra.mxu0 0.0
  %1365 = vmatprep.subr.mxu0 0.0
  %1366 = vmatpush2.msra.mxu0 0.0
  %1367 = vmatprep.subr.mxu0 0.0
  %1368 = vmatpush2.msra.mxu0 0.0
  %1369 = vmatprep.subr.mxu0 0.0
  %1370 = vmatpush2.msra.mxu0 0.0
  %1371 = vmatprep.subr.mxu0 0.0
  %1372 = vmatpush2.msra.mxu0 0.0
  %1373 = vmatprep.mubr.f32.mxu0 0.0
  %1374 = vmatmul.mubr.f32.gmra.mxu0 %v1301
  %v1375 = vpop.f32.mrf.mxu0
  %v1376 = vadd.f32 %v1299, %v1375
  %v1377 = vpop.f32.mrf.mxu0
  %1378 = vmatprep.mubr.f32.mxu0 0.0
  %1379 = vmatmul.mubr.f32.gmra.mxu0 %v1304
  %v1380 = vpop.f32.mrf.mxu0
  %v1381 = vadd.f32 %v1299, %v1380
  %v1382 = vpop.f32.mrf.mxu0
  %1383 = vmatprep.mubr.f32.mxu0 0.0
  %1384 = vmatmul.mubr.f32.gmra.mxu0 %v1307
  %v1385 = vpop.f32.mrf.mxu0
  %v1386 = vadd.f32 %v1299, %v1385
  %v1387 = vpop.f32.mrf.mxu0
  %1388 = vdwg.mxu0
  %v1389 = vmul.f32 %v1376, 1.702
  %v1390 = vmul.f32 %v1381, 1.702
  %v1391 = vmul.f32 %v1386, 1.702
  %v1392 = vxor.u32 %v1389, 2147483648
  %v1393 = vxor.u32 %v1390, 2147483648
  %v1394 = vxor.u32 %v1391, 2147483648
  %v1395 = vmul.f32 %v1392, 1.442695
  %v1396 = vpow.pop %v1395
  %v1397 = vmul.f32 %v1393, 1.442695
  %v1398 = vpow.pop %v1397
  %v1399 = vmul.f32 %v1394, 1.442695
  %v1400 = vpow.pop %v1399
  %v1401 = vadd.f32 %v1396, 1.0
  %v1402 = vadd.f32 %v1398, 1.0
  %v1403 = vadd.f32 %v1400, 1.0
  %v1404 = vrcp.pop %v1401
  %v1405 = vmul.f32 1.0, %v1404
  %v1406 = vrcp.pop %v1402
  %v1407 = vmul.f32 1.0, %v1406
  %v1408 = vrcp.pop %v1403
  %v1409 = vmul.f32 1.0, %v1408
  %v1410 = vmul.f32 %v1376, %v1405
  %v1411 = vmul.f32 %v1381, %v1407
  %v1412 = vmul.f32 %v1386, %v1409
  %1413 = vmatprep.subr.mxu0 0.0
  %1414 = vmatpush1.msra.mxu0 %v457
  %1415 = vmatprep.subr.mxu0 0.0
  %1416 = vmatpush1.msra.mxu0 %v456
  %1417 = vmatprep.subr.mxu0 0.0
  %1418 = vmatpush1.msra.mxu0 %v455
  %1419 = vmatprep.subr.mxu0 0.0
  %1420 = vmatpush1.msra.mxu0 %v454
  %1421 = vmatprep.subr.mxu0 0.0
  %1422 = vmatpush1.msra.mxu0 %v453
  %1423 = vmatprep.subr.mxu0 0.0
  %1424 = vmatpush1.msra.mxu0 %v452
  %1425 = vmatprep.subr.mxu0 0.0
  %1426 = vmatpush1.msra.mxu0 %v451
  %1427 = vmatprep.subr.mxu0 0.0
  %1428 = vmatpush1.msra.mxu0 %v450
  %1429 = vmatprep.subr.mxu0 0.0
  %1430 = vmatpush1.msra.mxu0 %v449
  %1431 = vmatprep.subr.mxu0 0.0
  %1432 = vmatpush1.msra.mxu0 %v448
  %1433 = vmatprep.subr.mxu0 0.0
  %1434 = vmatpush1.msra.mxu0 %v447
  %1435 = vmatprep.subr.mxu0 0.0
  %1436 = vmatpush1.msra.mxu0 %v446
  %1437 = vmatprep.subr.mxu0 0.0
  %1438 = vmatpush1.msra.mxu0 %v445
  %1439 = vmatprep.subr.mxu0 0.0
  %1440 = vmatpush1.msra.mxu0 %v444
  %1441 = vmatprep.subr.mxu0 0.0
  %1442 = vmatpush1.msra.mxu0 %v443
  %1443 = vmatprep.subr.mxu0 0.0
  %1444 = vmatpush1.msra.mxu0 %v442
  %1445 = vmatprep.subr.mxu0 0.0
  %1446 = vmatpush2.msra.mxu0 0.0
  %1447 = vmatprep.subr.mxu0 0.0
  %1448 = vmatpush2.msra.mxu0 0.0
  %1449 = vmatprep.subr.mxu0 0.0
  %1450 = vmatpush2.msra.mxu0 0.0
  %1451 = vmatprep.subr.mxu0 0.0
  %1452 = vmatpush2.msra.mxu0 0.0
  %1453 = vmatprep.subr.mxu0 0.0
  %1454 = vmatpush2.msra.mxu0 0.0
  %1455 = vmatprep.subr.mxu0 0.0
  %1456 = vmatpush2.msra.mxu0 0.0
  %1457 = vmatprep.subr.mxu0 0.0
  %1458 = vmatpush2.msra.mxu0 0.0
  %1459 = vmatprep.subr.mxu0 0.0
  %1460 = vmatpush2.msra.mxu0 0.0
  %1461 = vmatprep.subr.mxu0 0.0
  %1462 = vmatpush2.msra.mxu0 0.0
  %1463 = vmatprep.subr.mxu0 0.0
  %1464 = vmatpush2.msra.mxu0 0.0
  %1465 = vmatprep.subr.mxu0 0.0
  %1466 = vmatpush2.msra.mxu0 0.0
  %1467 = vmatprep.subr.mxu0 0.0
  %1468 = vmatpush2.msra.mxu0 0.0
  %1469 = vmatprep.subr.mxu0 0.0
  %1470 = vmatpush2.msra.mxu0 0.0
  %1471 = vmatprep.subr.mxu0 0.0
  %1472 = vmatpush2.msra.mxu0 0.0
  %1473 = vmatprep.subr.mxu0 0.0
  %1474 = vmatpush2.msra.mxu0 0.0
  %1475 = vmatprep.subr.mxu0 0.0
  %1476 = vmatpush2.msra.mxu0 0.0
  %1477 = vmatprep.mubr.f32.mxu0 0.0
  %1478 = vmatmul.mubr.f32.gmra.mxu0 %v1410
  %v1479 = vpop.f32.mrf.mxu0
  %v1480 = vadd.f32 0.0, %v1479
  %v1481 = vpop.f32.mrf.mxu0
  %1482 = vmatprep.mubr.f32.mxu0 0.0
  %1483 = vmatmul.mubr.f32.gmra.mxu0 %v1411
  %v1484 = vpop.f32.mrf.mxu0
  %v1485 = vadd.f32 0.0, %v1484
  %v1486 = vpop.f32.mrf.mxu0
  %1487 = vmatprep.mubr.f32.mxu0 0.0
  %1488 = vmatmul.mubr.f32.gmra.mxu0 %v1412
  %v1489 = vpop.f32.mrf.mxu0
  %v1490 = vadd.f32 0.0, %v1489
  %v1491 = vpop.f32.mrf.mxu0
  %1492 = vdwg.mxu0
  %v1493 = vadd.f32 %v1242, %v1480
  %v1494 = vadd.f32 %v1243, %v1485
  %v1495 = vadd.f32 %v1244, %v1490
  %1497 = vrot.lane.b32.xlu0 %v1241, 96
  %v1498 = vpop.permute.xlu0 %1497
  %v1500 = vadd.f32 %v1493, %v1498
  %v1501 = vadd.f32 %v1494, %v1498
  %v1502 = vadd.f32 %v1495, %v1498
  %v1503 = vld [vmem:[%s1 + $0x220] sm:$0x1]
  %v1504 = vld [vmem:[%s1 + $0x140] sm:$0xff]
  %v1505 = vld [vmem:[%s1 + $0x148] sm:$0xff]
  %v1506 = vld [vmem:[%s1 + $0x150] sm:$0xff]
  %v1507 = vld [vmem:[%s1 + $0x158] sm:$0xff]
  %v1508 = vld [vmem:[%s1 + $0x221] sm:$0x1]
  %v1509 = vld [vmem:[%s1 + $0x160] sm:$0xff]
  %v1510 = vld [vmem:[%s1 + $0x168] sm:$0xff]
  %v1511 = vld [vmem:[%s1 + $0x170] sm:$0xff]
  %v1512 = vld [vmem:[%s1 + $0x178] sm:$0xff]
  %v1513 = vld [vmem:[%s1 + $0x222] sm:$0x1]
  %v1514 = vld [vmem:[%s1 + $0x180] sm:$0xff]
  %v1515 = vld [vmem:[%s1 + $0x188] sm:$0xff]
  %v1516 = vld [vmem:[%s1 + $0x190] sm:$0xff]
  %v1517 = vld [vmem:[%s1 + $0x198] sm:$0xff]
  %v1518 = vld [vmem:[%s1 + $0x223] sm:$0x1]
  %v1519 = vld [vmem:[%s1 + $0x1a0] sm:$0xff]
  %v1520 = vld [vmem:[%s1 + $0x1a8] sm:$0xff]
  %v1521 = vld [vmem:[%s1 + $0x1b0] sm:$0xff]
  %v1522 = vld [vmem:[%s1 + $0x1b8] sm:$0xff]
  %v1523 = vld [vmem:[%s1 + $0x1c0] sm:$0xff]
  %v1524 = vld [vmem:[%s1 + $0x1c8] sm:$0xff]
  %v1525 = vld [vmem:[%s1 + $0x1d0] sm:$0xff]
  %v1526 = vld [vmem:[%s1 + $0x1d8] sm:$0xff]
  %v1527 = vld [vmem:[%s1 + $0x1e0] sm:$0xff]
  %v1528 = vld [vmem:[%s1 + $0x1e8] sm:$0xff]
  %v1529 = vld [vmem:[%s1 + $0x1f0] sm:$0xff]
  %v1530 = vld [vmem:[%s1 + $0x1f8] sm:$0xff]
  %v1531 = vld [vmem:[%s1 + $0x200] sm:$0xff]
  %v1532 = vld [vmem:[%s1 + $0x208] sm:$0xff]
  %v1533 = vld [vmem:[%s1 + $0x210] sm:$0xff]
  %v1534 = vld [vmem:[%s1 + $0x218] sm:$0xff]
  %v1535 = vsel %vm371, %v1500, 0.0
  %1536 = vadd.xlane.f32.xlu0 %v1535
  %v1537 = vpop.xlane.xlu0 %1536
  %v1538 = vsel %vm371, %v1501, 0.0
  %1539 = vadd.xlane.f32.xlu0 %v1538
  %v1540 = vpop.xlane.xlu0 %1539
  %v1541 = vsel %vm371, %v1502, 0.0
  %1542 = vadd.xlane.f32.xlu0 %v1541
  %v1543 = vpop.xlane.xlu0 %1542
  %v1544 = vmul.f32 %v1537, %v381
  %v1545 = vmul.f32 %v1540, %v381
  %v1546 = vmul.f32 %v1543, %v381
  %v1547 = vsub.f32 %v1500, %v1544
  %v1548 = vsub.f32 %v1501, %v1545
  %v1549 = vsub.f32 %v1502, %v1546
  %v1550 = vmul.f32 %v1547, %v1547
  %v1551 = vmul.f32 %v1548, %v1548
  %v1552 = vmul.f32 %v1549, %v1549
  %v1553 = vsel %vm371, %v1550, 0.0
  %1554 = vadd.xlane.f32.xlu0 %v1553
  %v1555 = vpop.xlane.xlu0 %1554
  %v1556 = vsel %vm371, %v1551, 0.0
  %1557 = vadd.xlane.f32.xlu0 %v1556
  %v1558 = vpop.xlane.xlu0 %1557
  %v1559 = vsel %vm371, %v1552, 0.0
  %1560 = vadd.xlane.f32.xlu0 %v1559
  %v1561 = vpop.xlane.xlu0 %1560
  %v1562 = vmul.f32 %v1555, %v381
  %v1563 = vmul.f32 %v1558, %v381
  %v1564 = vmul.f32 %v1561, %v381
  %v1565 = vadd.f32 %v1562, 1e-05
  %v1566 = vadd.f32 %v1563, 1e-05
  %v1567 = vadd.f32 %v1564, 1e-05
  %v1568 = vrsqrt.pop %v1565
  %v1569 = vrsqrt.pop %v1566
  %v1570 = vrsqrt.pop %v1567
  %v1571 = vmul.f32 %v1547, %v1568
  %v1572 = vmul.f32 %v1548, %v1569
  %v1573 = vmul.f32 %v1549, %v1570
  %v1574 = vlaneseq
  %v1575 = vshrl.u32 %v1574, 7
  %v1576 = vsub.s32 0, %v1575
  %v1577 = vrot.slane %v1503, %v1576
  %v1578 = vmul.f32 %v1571, %v1577
  %v1579 = vmul.f32 %v1572, %v1577
  %v1580 = vmul.f32 %v1573, %v1577
  %1582 = vrot.lane.b32.xlu0 %v1577, 96
  %v1583 = vpop.permute.xlu0 %1582
  %v1585 = vadd.f32 %v1578, %v1583
  %v1586 = vadd.f32 %v1579, %v1583
  %v1587 = vadd.f32 %v1580, %v1583
  %v1588 = vlaneseq
  %v1589 = vshrl.u32 %v1588, 7
  %v1590 = vsub.s32 0, %v1589
  %v1591 = vrot.slane %v1508, %v1590
  %v1593 = vsel %vm371, %v1585, 0
  %v1596 = vsel %vm371, %v1586, 0
  %v1599 = vsel %vm371, %v1587, 0
  %1601 = vmatprep.subr.mxu0 0.0
  %1602 = vmatpush1.msra.mxu0 0.0
  %1603 = vmatprep.subr.mxu0 0.0
  %1604 = vmatpush1.msra.mxu0 0.0
  %1605 = vmatprep.subr.mxu0 0.0
  %1606 = vmatpush1.msra.mxu0 0.0
  %1607 = vmatprep.subr.mxu0 0.0
  %1608 = vmatpush1.msra.mxu0 0.0
  %1609 = vmatprep.subr.mxu0 0.0
  %1610 = vmatpush1.msra.mxu0 0.0
  %1611 = vmatprep.subr.mxu0 0.0
  %1612 = vmatpush1.msra.mxu0 0.0
  %1613 = vmatprep.subr.mxu0 0.0
  %1614 = vmatpush1.msra.mxu0 0.0
  %1615 = vmatprep.subr.mxu0 0.0
  %1616 = vmatpush1.msra.mxu0 0.0
  %1617 = vmatprep.subr.mxu0 0.0
  %1618 = vmatpush1.msra.mxu0 0.0
  %1619 = vmatprep.subr.mxu0 0.0
  %1620 = vmatpush1.msra.mxu0 0.0
  %1621 = vmatprep.subr.mxu0 0.0
  %1622 = vmatpush1.msra.mxu0 0.0
  %1623 = vmatprep.subr.mxu0 0.0
  %1624 = vmatpush1.msra.mxu0 0.0
  %1625 = vmatprep.subr.mxu0 0.0
  %1626 = vmatpush1.msra.mxu0 %v1507
  %1627 = vmatprep.subr.mxu0 0.0
  %1628 = vmatpush1.msra.mxu0 %v1506
  %1629 = vmatprep.subr.mxu0 0.0
  %1630 = vmatpush1.msra.mxu0 %v1505
  %1631 = vmatprep.subr.mxu0 0.0
  %1632 = vmatpush1.msra.mxu0 %v1504
  %1633 = vmatprep.subr.mxu0 0.0
  %1634 = vmatpush2.msra.mxu0 0.0
  %1635 = vmatprep.subr.mxu0 0.0
  %1636 = vmatpush2.msra.mxu0 0.0
  %1637 = vmatprep.subr.mxu0 0.0
  %1638 = vmatpush2.msra.mxu0 0.0
  %1639 = vmatprep.subr.mxu0 0.0
  %1640 = vmatpush2.msra.mxu0 0.0
  %1641 = vmatprep.subr.mxu0 0.0
  %1642 = vmatpush2.msra.mxu0 0.0
  %1643 = vmatprep.subr.mxu0 0.0
  %1644 = vmatpush2.msra.mxu0 0.0
  %1645 = vmatprep.subr.mxu0 0.0
  %1646 = vmatpush2.msra.mxu0 0.0
  %1647 = vmatprep.subr.mxu0 0.0
  %1648 = vmatpush2.msra.mxu0 0.0
  %1649 = vmatprep.subr.mxu0 0.0
  %1650 = vmatpush2.msra.mxu0 0.0
  %1651 = vmatprep.subr.mxu0 0.0
  %1652 = vmatpush2.msra.mxu0 0.0
  %1653 = vmatprep.subr.mxu0 0.0
  %1654 = vmatpush2.msra.mxu0 0.0
  %1655 = vmatprep.subr.mxu0 0.0
  %1656 = vmatpush2.msra.mxu0 0.0
  %1657 = vmatprep.subr.mxu0 0.0
  %1658 = vmatpush2.msra.mxu0 0.0
  %1659 = vmatprep.subr.mxu0 0.0
  %1660 = vmatpush2.msra.mxu0 0.0
  %1661 = vmatprep.subr.mxu0 0.0
  %1662 = vmatpush2.msra.mxu0 0.0
  %1663 = vmatprep.subr.mxu0 0.0
  %1664 = vmatpush2.msra.mxu0 0.0
  %1665 = vmatprep.mubr.f32.mxu0 0.0
  %1666 = vmatmul.mubr.f32.gmra.mxu0 %v1593
  %v1667 = vpop.f32.mrf.mxu0
  %v1668 = vadd.f32 %v1591, %v1667
  %v1669 = vpop.f32.mrf.mxu0
  %1670 = vmatprep.mubr.f32.mxu0 0.0
  %1671 = vmatmul.mubr.f32.gmra.mxu0 %v1596
  %v1672 = vpop.f32.mrf.mxu0
  %v1673 = vadd.f32 %v1591, %v1672
  %v1674 = vpop.f32.mrf.mxu0
  %1675 = vmatprep.mubr.f32.mxu0 0.0
  %1676 = vmatmul.mubr.f32.gmra.mxu0 %v1599
  %v1677 = vpop.f32.mrf.mxu0
  %v1678 = vadd.f32 %v1591, %v1677
  %v1679 = vpop.f32.mrf.mxu0
  %1680 = vdwg.mxu0
  %v1681 = vmul.f32 %v1668, 0.35355338
  %v1682 = vmul.f32 %v1673, 0.35355338
  %v1683 = vmul.f32 %v1678, 0.35355338
  %v1684 = vmul.f32 %v1681, %v203
  %v1685 = vmul.f32 %v1682, %v203
  %v1686 = vmul.f32 %v1683, %v203
  %v1687 = vmul.f32 %v1681, %v208
  %v1688 = vmul.f32 %v1682, %v208
  %v1689 = vmul.f32 %v1683, %v208
  %v1690 = vmul.f32 %v1681, %v213
  %v1691 = vmul.f32 %v1682, %v213
  %v1692 = vmul.f32 %v1683, %v213
  %v1693 = vmul.f32 %v1681, %v218
  %v1694 = vmul.f32 %v1682, %v218
  %v1695 = vmul.f32 %v1683, %v218
  %1699 = vrot.lane.b32.xlu0 %v1668, 96
  %v1700 = vpop.permute.xlu0 %1699
  %1701 = vrot.lane.b32.xlu0 %v1673, 96
  %v1702 = vpop.permute.xlu0 %1701
  %1703 = vrot.lane.b32.xlu0 %v1678, 96
  %v1704 = vpop.permute.xlu0 %1703
  %v1706 = vsel %vm371, %v1684, 0
  %v1709 = vsel %vm371, %v1685, 0
  %v1712 = vsel %vm371, %v1686, 0
  %v1715 = vsel %vm371, %v1687, 0
  %v1718 = vsel %vm371, %v1688, 0
  %v1721 = vsel %vm371, %v1689, 0
  %v1724 = vsel %vm371, %v1690, 0
  %v1727 = vsel %vm371, %v1691, 0
  %v1730 = vsel %vm371, %v1692, 0
  %v1733 = vsel %vm371, %v1693, 0
  %v1736 = vsel %vm371, %v1694, 0
  %v1739 = vsel %vm371, %v1695, 0
  %v1741 = vsel %vm371, %v1700, 0
  %v1743 = vsel %vm371, %v1702, 0
  %v1745 = vsel %vm371, %v1704, 0
  %1747 = vmatprep.subr.mxu0 0.0
  %1748 = vmatpush1.xpose.msra.mxu0 0.0
  %1749 = vmatprep.subr.mxu0 0.0
  %1750 = vmatpush1.xpose.msra.mxu0 0.0
  %1751 = vmatprep.subr.mxu0 0.0
  %1752 = vmatpush1.xpose.msra.mxu0 0.0
  %1753 = vmatprep.subr.mxu0 0.0
  %1754 = vmatpush1.xpose.msra.mxu0 0.0
  %1755 = vmatprep.subr.mxu0 0.0
  %1756 = vmatpush1.xpose.msra.mxu0 0.0
  %1757 = vmatprep.subr.mxu0 0.0
  %1758 = vmatpush1.xpose.msra.mxu0 0.0
  %1759 = vmatprep.subr.mxu0 0.0
  %1760 = vmatpush1.xpose.msra.mxu0 0.0
  %1761 = vmatprep.subr.mxu0 0.0
  %1762 = vmatpush1.xpose.msra.mxu0 0.0
  %1763 = vmatprep.subr.mxu0 0.0
  %1764 = vmatpush1.xpose.msra.mxu0 0.0
  %1765 = vmatprep.subr.mxu0 0.0
  %1766 = vmatpush1.xpose.msra.mxu0 0.0
  %1767 = vmatprep.subr.mxu0 0.0
  %1768 = vmatpush1.xpose.msra.mxu0 0.0
  %1769 = vmatprep.subr.mxu0 0.0
  %1770 = vmatpush1.xpose.msra.mxu0 0.0
  %1771 = vmatprep.subr.mxu0 0.0
  %1772 = vmatpush1.xpose.msra.mxu0 0.0
  %1773 = vmatprep.subr.mxu0 0.0
  %1774 = vmatpush1.xpose.msra.mxu0 %v1745
  %1775 = vmatprep.subr.mxu0 0.0
  %1776 = vmatpush1.xpose.msra.mxu0 %v1743
  %1777 = vmatprep.subr.mxu0 0.0
  %1778 = vmatpush1.xpose.msra.mxu0 %v1741
  %1779 = vmatprep.subr.mxu0 0.0
  %1780 = vmatpush2.xpose.msra.mxu0 0.0
  %1781 = vmatprep.subr.mxu0 0.0
  %1782 = vmatpush2.xpose.msra.mxu0 0.0
  %1783 = vmatprep.subr.mxu0 0.0
  %1784 = vmatpush2.xpose.msra.mxu0 0.0
  %1785 = vmatprep.subr.mxu0 0.0
  %1786 = vmatpush2.xpose.msra.mxu0 0.0
  %1787 = vmatprep.subr.mxu0 0.0
  %1788 = vmatpush2.xpose.msra.mxu0 0.0
  %1789 = vmatprep.subr.mxu0 0.0
  %1790 = vmatpush2.xpose.msra.mxu0 0.0
  %1791 = vmatprep.subr.mxu0 0.0
  %1792 = vmatpush2.xpose.msra.mxu0 0.0
  %1793 = vmatprep.subr.mxu0 0.0
  %1794 = vmatpush2.xpose.msra.mxu0 0.0
  %1795 = vmatprep.subr.mxu0 0.0
  %1796 = vmatpush2.xpose.msra.mxu0 0.0
  %1797 = vmatprep.subr.mxu0 0.0
  %1798 = vmatpush2.xpose.msra.mxu0 0.0
  %1799 = vmatprep.subr.mxu0 0.0
  %1800 = vmatpush2.xpose.msra.mxu0 0.0
  %1801 = vmatprep.subr.mxu0 0.0
  %1802 = vmatpush2.xpose.msra.mxu0 0.0
  %1803 = vmatprep.subr.mxu0 0.0
  %1804 = vmatpush2.xpose.msra.mxu0 0.0
  %1805 = vmatprep.subr.mxu0 0.0
  %1806 = vmatpush2.xpose.msra.mxu0 0.0
  %1807 = vmatprep.subr.mxu0 0.0
  %1808 = vmatpush2.xpose.msra.mxu0 0.0
  %1809 = vmatprep.subr.mxu0 0.0
  %1810 = vmatpush2.xpose.msra.mxu0 0.0
  %1811 = vmatprep.mubr.f32.mxu0 0.0
  %1812 = vmatmul.mubr.f32.gmra.mxu0 %v1706
  %v1813 = vpop.f32.mrf.mxu0
  %v1814 = vadd.f32 %v14, %v1813
  %v1815 = vpop.f32.mrf.mxu0
  %1816 = vmatprep.mubr.f32.mxu0 0.0
  %1817 = vmatmul.mubr.f32.gmra.mxu0 %v1709
  %v1818 = vpop.f32.mrf.mxu0
  %v1819 = vadd.f32 %v14, %v1818
  %v1820 = vpop.f32.mrf.mxu0
  %1821 = vmatprep.mubr.f32.mxu0 0.0
  %1822 = vmatmul.mubr.f32.gmra.mxu0 %v1712
  %v1823 = vpop.f32.mrf.mxu0
  %v1824 = vadd.f32 %v14, %v1823
  %v1825 = vpop.f32.mrf.mxu0
  %1826 = vmatprep.mubr.f32.mxu0 0.0
  %1827 = vmatmul.mubr.f32.gmra.mxu0 %v1715
  %v1828 = vpop.f32.mrf.mxu0
  %v1829 = vadd.f32 %v14, %v1828
  %v1830 = vpop.f32.mrf.mxu0
  %1831 = vmatprep.mubr.f32.mxu0 0.0
  %1832 = vmatmul.mubr.f32.gmra.mxu0 %v1718
  %v1833 = vpop.f32.mrf.mxu0
  %v1834 = vadd.f32 %v14, %v1833
  %v1835 = vpop.f32.mrf.mxu0
  %1836 = vmatprep.mubr.f32.mxu0 0.0
  %1837 = vmatmul.mubr.f32.gmra.mxu0 %v1721
  %v1838 = vpop.f32.mrf.mxu0
  %v1839 = vadd.f32 %v14, %v1838
  %v1840 = vpop.f32.mrf.mxu0
  %1841 = vmatprep.mubr.f32.mxu0 0.0
  %1842 = vmatmul.mubr.f32.gmra.mxu0 %v1724
  %v1843 = vpop.f32.mrf.mxu0
  %v1844 = vadd.f32 %v14, %v1843
  %v1845 = vpop.f32.mrf.mxu0
  %1846 = vmatprep.mubr.f32.mxu0 0.0
  %1847 = vmatmul.mubr.f32.gmra.mxu0 %v1727
  %v1848 = vpop.f32.mrf.mxu0
  %v1849 = vadd.f32 %v14, %v1848
  %v1850 = vpop.f32.mrf.mxu0
  %1851 = vmatprep.mubr.f32.mxu0 0.0
  %1852 = vmatmul.mubr.f32.gmra.mxu0 %v1730
  %v1853 = vpop.f32.mrf.mxu0
  %v1854 = vadd.f32 %v14, %v1853
  %v1855 = vpop.f32.mrf.mxu0
  %1856 = vmatprep.mubr.f32.mxu0 0.0
  %1857 = vmatmul.mubr.f32.gmra.mxu0 %v1733
  %v1858 = vpop.f32.mrf.mxu0
  %v1859 = vadd.f32 %v14, %v1858
  %v1860 = vpop.f32.mrf.mxu0
  %1861 = vmatprep.mubr.f32.mxu0 0.0
  %1862 = vmatmul.mubr.f32.gmra.mxu0 %v1736
  %v1863 = vpop.f32.mrf.mxu0
  %v1864 = vadd.f32 %v14, %v1863
  %v1865 = vpop.f32.mrf.mxu0
  %1866 = vmatprep.mubr.f32.mxu0 0.0
  %1867 = vmatmul.mubr.f32.gmra.mxu0 %v1739
  %v1868 = vpop.f32.mrf.mxu0
  %v1869 = vadd.f32 %v14, %v1868
  %v1870 = vpop.f32.mrf.mxu0
  %1871 = vdwg.mxu0
  %v1872 = vsel %vm795, %v1814, -inf
  %1873 = vmax.xlane.f32.xlu0 %v1872
  %v1874 = vpop.xlane.xlu0 %1873
  %v1875 = vsel %vm795, %v1819, -inf
  %1876 = vmax.xlane.f32.xlu0 %v1875
  %v1877 = vpop.xlane.xlu0 %1876
  %v1878 = vsel %vm795, %v1824, -inf
  %1879 = vmax.xlane.f32.xlu0 %v1878
  %v1880 = vpop.xlane.xlu0 %1879
  %v1881 = vsel %vm795, %v1829, -inf
  %1882 = vmax.xlane.f32.xlu0 %v1881
  %v1883 = vpop.xlane.xlu0 %1882
  %v1884 = vsel %vm795, %v1834, -inf
  %1885 = vmax.xlane.f32.xlu0 %v1884
  %v1886 = vpop.xlane.xlu0 %1885
  %v1887 = vsel %vm795, %v1839, -inf
  %1888 = vmax.xlane.f32.xlu0 %v1887
  %v1889 = vpop.xlane.xlu0 %1888
  %v1890 = vsel %vm795, %v1844, -inf
  %1891 = vmax.xlane.f32.xlu0 %v1890
  %v1892 = vpop.xlane.xlu0 %1891
  %v1893 = vsel %vm795, %v1849, -inf
  %1894 = vmax.xlane.f32.xlu0 %v1893
  %v1895 = vpop.xlane.xlu0 %1894
  %v1896 = vsel %vm795, %v1854, -inf
  %1897 = vmax.xlane.f32.xlu0 %v1896
  %v1898 = vpop.xlane.xlu0 %1897
  %v1899 = vsel %vm795, %v1859, -inf
  %1900 = vmax.xlane.f32.xlu0 %v1899
  %v1901 = vpop.xlane.xlu0 %1900
  %v1902 = vsel %vm795, %v1864, -inf
  %1903 = vmax.xlane.f32.xlu0 %v1902
  %v1904 = vpop.xlane.xlu0 %1903
  %v1905 = vsel %vm795, %v1869, -inf
  %1906 = vmax.xlane.f32.xlu0 %v1905
  %v1907 = vpop.xlane.xlu0 %1906
  %v1908 = vsub.f32 %v1814, %v1874
  %v1909 = vsub.f32 %v1819, %v1877
  %v1910 = vsub.f32 %v1824, %v1880
  %v1911 = vsub.f32 %v1829, %v1883
  %v1912 = vsub.f32 %v1834, %v1886
  %v1913 = vsub.f32 %v1839, %v1889
  %v1914 = vsub.f32 %v1844, %v1892
  %v1915 = vsub.f32 %v1849, %v1895
  %v1916 = vsub.f32 %v1854, %v1898
  %v1917 = vsub.f32 %v1859, %v1901
  %v1918 = vsub.f32 %v1864, %v1904
  %v1919 = vsub.f32 %v1869, %v1907
  %v1920 = vmul.f32 %v1908, 1.442695
  %v1921 = vpow.pop %v1920
  %v1922 = vmul.f32 %v1909, 1.442695
  %v1923 = vpow.pop %v1922
  %v1924 = vmul.f32 %v1910, 1.442695
  %v1925 = vpow.pop %v1924
  %v1926 = vmul.f32 %v1911, 1.442695
  %v1927 = vpow.pop %v1926
  %v1928 = vmul.f32 %v1912, 1.442695
  %v1929 = vpow.pop %v1928
  %v1930 = vmul.f32 %v1913, 1.442695
  %v1931 = vpow.pop %v1930
  %v1932 = vmul.f32 %v1914, 1.442695
  %v1933 = vpow.pop %v1932
  %v1934 = vmul.f32 %v1915, 1.442695
  %v1935 = vpow.pop %v1934
  %v1936 = vmul.f32 %v1916, 1.442695
  %v1937 = vpow.pop %v1936
  %v1938 = vmul.f32 %v1917, 1.442695
  %v1939 = vpow.pop %v1938
  %v1940 = vmul.f32 %v1918, 1.442695
  %v1941 = vpow.pop %v1940
  %v1942 = vmul.f32 %v1919, 1.442695
  %v1943 = vpow.pop %v1942
  %v1944 = vsel %vm795, %v1921, 0.0
  %1945 = vadd.xlane.f32.xlu0 %v1944
  %v1946 = vpop.xlane.xlu0 %1945
  %v1947 = vsel %vm795, %v1923, 0.0
  %1948 = vadd.xlane.f32.xlu0 %v1947
  %v1949 = vpop.xlane.xlu0 %1948
  %v1950 = vsel %vm795, %v1925, 0.0
  %1951 = vadd.xlane.f32.xlu0 %v1950
  %v1952 = vpop.xlane.xlu0 %1951
  %v1953 = vsel %vm795, %v1927, 0.0
  %1954 = vadd.xlane.f32.xlu0 %v1953
  %v1955 = vpop.xlane.xlu0 %1954
  %v1956 = vsel %vm795, %v1929, 0.0
  %1957 = vadd.xlane.f32.xlu0 %v1956
  %v1958 = vpop.xlane.xlu0 %1957
  %v1959 = vsel %vm795, %v1931, 0.0
  %1960 = vadd.xlane.f32.xlu0 %v1959
  %v1961 = vpop.xlane.xlu0 %1960
  %v1962 = vsel %vm795, %v1933, 0.0
  %1963 = vadd.xlane.f32.xlu0 %v1962
  %v1964 = vpop.xlane.xlu0 %1963
  %v1965 = vsel %vm795, %v1935, 0.0
  %1966 = vadd.xlane.f32.xlu0 %v1965
  %v1967 = vpop.xlane.xlu0 %1966
  %v1968 = vsel %vm795, %v1937, 0.0
  %1969 = vadd.xlane.f32.xlu0 %v1968
  %v1970 = vpop.xlane.xlu0 %1969
  %v1971 = vsel %vm795, %v1939, 0.0
  %1972 = vadd.xlane.f32.xlu0 %v1971
  %v1973 = vpop.xlane.xlu0 %1972
  %v1974 = vsel %vm795, %v1941, 0.0
  %1975 = vadd.xlane.f32.xlu0 %v1974
  %v1976 = vpop.xlane.xlu0 %1975
  %v1977 = vsel %vm795, %v1943, 0.0
  %1978 = vadd.xlane.f32.xlu0 %v1977
  %v1979 = vpop.xlane.xlu0 %1978
  %v1980 = vrcp.pop %v1946
  %v1981 = vrcp.pop %v1949
  %v1982 = vrcp.pop %v1952
  %v1983 = vrcp.pop %v1955
  %v1984 = vrcp.pop %v1958
  %v1985 = vrcp.pop %v1961
  %v1986 = vrcp.pop %v1964
  %v1987 = vrcp.pop %v1967
  %v1988 = vrcp.pop %v1970
  %v1989 = vrcp.pop %v1973
  %v1990 = vrcp.pop %v1976
  %v1991 = vrcp.pop %v1979
  %v1992 = vmul.f32 %v1921, %v1980
  %v1993 = vmul.f32 %v1923, %v1981
  %v1994 = vmul.f32 %v1925, %v1982
  %v1995 = vmul.f32 %v1927, %v1983
  %v1996 = vmul.f32 %v1929, %v1984
  %v1997 = vmul.f32 %v1931, %v1985
  %v1998 = vmul.f32 %v1933, %v1986
  %v1999 = vmul.f32 %v1935, %v1987
  %v2000 = vmul.f32 %v1937, %v1988
  %v2001 = vmul.f32 %v1939, %v1989
  %v2002 = vmul.f32 %v1941, %v1990
  %v2003 = vmul.f32 %v1943, %v1991
  %v2004 = vmul.f32 %v1992, %v187
  %v2005 = vmul.f32 %v1993, %v188
  %v2006 = vmul.f32 %v1994, %v189
  %v2007 = vmul.f32 %v1995, %v190
  %v2008 = vmul.f32 %v1996, %v191
  %v2009 = vmul.f32 %v1997, %v192
  %v2010 = vmul.f32 %v1998, %v193
  %v2011 = vmul.f32 %v1999, %v194
  %v2012 = vmul.f32 %v2000, %v195
  %v2013 = vmul.f32 %v2001, %v196
  %v2014 = vmul.f32 %v2002, %v197
  %v2015 = vmul.f32 %v2003, %v198
  %v2016 = vadd.f32 %v940, %v2004
  %v2017 = vadd.f32 %v941, %v2005
  %v2018 = vadd.f32 %v942, %v2006
  %v2019 = vadd.f32 %v943, %v2007
  %v2020 = vadd.f32 %v944, %v2008
  %v2021 = vadd.f32 %v945, %v2009
  %v2022 = vadd.f32 %v946, %v2010
  %v2023 = vadd.f32 %v947, %v2011
  %v2024 = vadd.f32 %v948, %v2012
  %v2025 = vadd.f32 %v949, %v2013
  %v2026 = vadd.f32 %v950, %v2014
  %v2027 = vadd.f32 %v951, %v2015
  %2028 = vrot.lane.b32.xlu0 %v1668, 64
  %v2029 = vpop.permute.xlu0 %2028
  %2030 = vrot.lane.b32.xlu0 %v1673, 64
  %v2031 = vpop.permute.xlu0 %2030
  %2032 = vrot.lane.b32.xlu0 %v1678, 64
  %v2033 = vpop.permute.xlu0 %2032
  %v2038 = vsel %vm795, %v2004, 0
  %v2041 = vsel %vm795, %v2005, 0
  %v2044 = vsel %vm795, %v2006, 0
  %v2047 = vsel %vm795, %v2007, 0
  %v2050 = vsel %vm795, %v2008, 0
  %v2053 = vsel %vm795, %v2009, 0
  %v2056 = vsel %vm795, %v2010, 0
  %v2059 = vsel %vm795, %v2011, 0
  %v2062 = vsel %vm795, %v2012, 0
  %v2065 = vsel %vm795, %v2013, 0
  %v2068 = vsel %vm795, %v2014, 0
  %v2071 = vsel %vm795, %v2015, 0
  %2073 = vmatprep.subr.mxu0 0.0
  %2074 = vmatpush1.msra.mxu0 0.0
  %2075 = vmatprep.subr.mxu0 0.0
  %2076 = vmatpush1.msra.mxu0 0.0
  %2077 = vmatprep.subr.mxu0 0.0
  %2078 = vmatpush1.msra.mxu0 0.0
  %2079 = vmatprep.subr.mxu0 0.0
  %2080 = vmatpush1.msra.mxu0 0.0
  %2081 = vmatprep.subr.mxu0 0.0
  %2082 = vmatpush1.msra.mxu0 0.0
  %2083 = vmatprep.subr.mxu0 0.0
  %2084 = vmatpush1.msra.mxu0 0.0
  %2085 = vmatprep.subr.mxu0 0.0
  %2086 = vmatpush1.msra.mxu0 0.0
  %2087 = vmatprep.subr.mxu0 0.0
  %2088 = vmatpush1.msra.mxu0 0.0
  %2089 = vmatprep.subr.mxu0 0.0
  %2090 = vmatpush1.msra.mxu0 0.0
  %2091 = vmatprep.subr.mxu0 0.0
  %2092 = vmatpush1.msra.mxu0 0.0
  %2093 = vmatprep.subr.mxu0 0.0
  %2094 = vmatpush1.msra.mxu0 0.0
  %2095 = vmatprep.subr.mxu0 0.0
  %2096 = vmatpush1.msra.mxu0 0.0
  %2097 = vmatprep.subr.mxu0 0.0
  %2098 = vmatpush1.msra.mxu0 0.0
  %2099 = vmatprep.subr.mxu0 0.0
  %2100 = vmatpush1.msra.mxu0 %v2033
  %2101 = vmatprep.subr.mxu0 0.0
  %2102 = vmatpush1.msra.mxu0 %v2031
  %2103 = vmatprep.subr.mxu0 0.0
  %2104 = vmatpush1.msra.mxu0 %v2029
  %2105 = vmatprep.subr.mxu0 0.0
  %2106 = vmatpush2.msra.mxu0 0.0
  %2107 = vmatprep.subr.mxu0 0.0
  %2108 = vmatpush2.msra.mxu0 0.0
  %2109 = vmatprep.subr.mxu0 0.0
  %2110 = vmatpush2.msra.mxu0 0.0
  %2111 = vmatprep.subr.mxu0 0.0
  %2112 = vmatpush2.msra.mxu0 0.0
  %2113 = vmatprep.subr.mxu0 0.0
  %2114 = vmatpush2.msra.mxu0 0.0
  %2115 = vmatprep.subr.mxu0 0.0
  %2116 = vmatpush2.msra.mxu0 0.0
  %2117 = vmatprep.subr.mxu0 0.0
  %2118 = vmatpush2.msra.mxu0 0.0
  %2119 = vmatprep.subr.mxu0 0.0
  %2120 = vmatpush2.msra.mxu0 0.0
  %2121 = vmatprep.subr.mxu0 0.0
  %2122 = vmatpush2.msra.mxu0 0.0
  %2123 = vmatprep.subr.mxu0 0.0
  %2124 = vmatpush2.msra.mxu0 0.0
  %2125 = vmatprep.subr.mxu0 0.0
  %2126 = vmatpush2.msra.mxu0 0.0
  %2127 = vmatprep.subr.mxu0 0.0
  %2128 = vmatpush2.msra.mxu0 0.0
  %2129 = vmatprep.subr.mxu0 0.0
  %2130 = vmatpush2.msra.mxu0 0.0
  %2131 = vmatprep.subr.mxu0 0.0
  %2132 = vmatpush2.msra.mxu0 0.0
  %2133 = vmatprep.subr.mxu0 0.0
  %2134 = vmatpush2.msra.mxu0 0.0
  %2135 = vmatprep.subr.mxu0 0.0
  %2136 = vmatpush2.msra.mxu0 0.0
  %2137 = vmatprep.mubr.f32.mxu0 0.0
  %2138 = vmatmul.mubr.f32.gmra.mxu0 %v2038
  %v2139 = vpop.f32.mrf.mxu0
  %v2140 = vadd.f32 0.0, %v2139
  %v2141 = vpop.f32.mrf.mxu0
  %2142 = vmatprep.mubr.f32.mxu0 0.0
  %2143 = vmatmul.mubr.f32.gmra.mxu0 %v2041
  %v2144 = vpop.f32.mrf.mxu0
  %v2145 = vadd.f32 0.0, %v2144
  %v2146 = vpop.f32.mrf.mxu0
  %2147 = vmatprep.mubr.f32.mxu0 0.0
  %2148 = vmatmul.mubr.f32.gmra.mxu0 %v2044
  %v2149 = vpop.f32.mrf.mxu0
  %v2150 = vadd.f32 0.0, %v2149
  %v2151 = vpop.f32.mrf.mxu0
  %2152 = vmatprep.mubr.f32.mxu0 0.0
  %2153 = vmatmul.mubr.f32.gmra.mxu0 %v2047
  %v2154 = vpop.f32.mrf.mxu0
  %v2155 = vadd.f32 0.0, %v2154
  %v2156 = vpop.f32.mrf.mxu0
  %2157 = vmatprep.mubr.f32.mxu0 0.0
  %2158 = vmatmul.mubr.f32.gmra.mxu0 %v2050
  %v2159 = vpop.f32.mrf.mxu0
  %v2160 = vadd.f32 0.0, %v2159
  %v2161 = vpop.f32.mrf.mxu0
  %2162 = vmatprep.mubr.f32.mxu0 0.0
  %2163 = vmatmul.mubr.f32.gmra.mxu0 %v2053
  %v2164 = vpop.f32.mrf.mxu0
  %v2165 = vadd.f32 0.0, %v2164
  %v2166 = vpop.f32.mrf.mxu0
  %2167 = vmatprep.mubr.f32.mxu0 0.0
  %2168 = vmatmul.mubr.f32.gmra.mxu0 %v2056
  %v2169 = vpop.f32.mrf.mxu0
  %v2170 = vadd.f32 0.0, %v2169
  %v2171 = vpop.f32.mrf.mxu0
  %2172 = vmatprep.mubr.f32.mxu0 0.0
  %2173 = vmatmul.mubr.f32.gmra.mxu0 %v2059
  %v2174 = vpop.f32.mrf.mxu0
  %v2175 = vadd.f32 0.0, %v2174
  %v2176 = vpop.f32.mrf.mxu0
  %2177 = vmatprep.mubr.f32.mxu0 0.0
  %2178 = vmatmul.mubr.f32.gmra.mxu0 %v2062
  %v2179 = vpop.f32.mrf.mxu0
  %v2180 = vadd.f32 0.0, %v2179
  %v2181 = vpop.f32.mrf.mxu0
  %2182 = vmatprep.mubr.f32.mxu0 0.0
  %2183 = vmatmul.mubr.f32.gmra.mxu0 %v2065
  %v2184 = vpop.f32.mrf.mxu0
  %v2185 = vadd.f32 0.0, %v2184
  %v2186 = vpop.f32.mrf.mxu0
  %2187 = vmatprep.mubr.f32.mxu0 0.0
  %2188 = vmatmul.mubr.f32.gmra.mxu0 %v2068
  %v2189 = vpop.f32.mrf.mxu0
  %v2190 = vadd.f32 0.0, %v2189
  %v2191 = vpop.f32.mrf.mxu0
  %2192 = vmatprep.mubr.f32.mxu0 0.0
  %2193 = vmatmul.mubr.f32.gmra.mxu0 %v2071
  %v2194 = vpop.f32.mrf.mxu0
  %v2195 = vadd.f32 0.0, %v2194
  %v2196 = vpop.f32.mrf.mxu0
  %2197 = vdwg.mxu0
  %v2198 = vmul.f32 %v2140, %v203
  %v2199 = vmul.f32 %v2145, %v203
  %v2200 = vmul.f32 %v2150, %v203
  %v2201 = vadd.f32 %v2198, 0.0
  %v2202 = vadd.f32 %v2199, 0.0
  %v2203 = vadd.f32 %v2200, 0.0
  %v2204 = vmul.f32 %v2155, %v208
  %v2205 = vmul.f32 %v2160, %v208
  %v2206 = vmul.f32 %v2165, %v208
  %v2207 = vadd.f32 %v2201, %v2204
  %v2208 = vadd.f32 %v2202, %v2205
  %v2209 = vadd.f32 %v2203, %v2206
  %v2210 = vmul.f32 %v2170, %v213
  %v2211 = vmul.f32 %v2175, %v213
  %v2212 = vmul.f32 %v2180, %v213
  %v2213 = vadd.f32 %v2207, %v2210
  %v2214 = vadd.f32 %v2208, %v2211
  %v2215 = vadd.f32 %v2209, %v2212
  %v2216 = vmul.f32 %v2185, %v218
  %v2217 = vmul.f32 %v2190, %v218
  %v2218 = vmul.f32 %v2195, %v218
  %v2219 = vadd.f32 %v2213, %v2216
  %v2220 = vadd.f32 %v2214, %v2217
  %v2221 = vadd.f32 %v2215, %v2218
  %v2223 = vsel %vm371, %v2219, 0
  %v2226 = vsel %vm371, %v2220, 0
  %v2229 = vsel %vm371, %v2221, 0
  %2231 = vmatprep.subr.mxu0 0.0
  %2232 = vmatpush1.msra.mxu0 0.0
  %2233 = vmatprep.subr.mxu0 0.0
  %2234 = vmatpush1.msra.mxu0 0.0
  %2235 = vmatprep.subr.mxu0 0.0
  %2236 = vmatpush1.msra.mxu0 0.0
  %2237 = vmatprep.subr.mxu0 0.0
  %2238 = vmatpush1.msra.mxu0 0.0
  %2239 = vmatprep.subr.mxu0 0.0
  %2240 = vmatpush1.msra.mxu0 0.0
  %2241 = vmatprep.subr.mxu0 0.0
  %2242 = vmatpush1.msra.mxu0 0.0
  %2243 = vmatprep.subr.mxu0 0.0
  %2244 = vmatpush1.msra.mxu0 0.0
  %2245 = vmatprep.subr.mxu0 0.0
  %2246 = vmatpush1.msra.mxu0 0.0
  %2247 = vmatprep.subr.mxu0 0.0
  %2248 = vmatpush1.msra.mxu0 0.0
  %2249 = vmatprep.subr.mxu0 0.0
  %2250 = vmatpush1.msra.mxu0 0.0
  %2251 = vmatprep.subr.mxu0 0.0
  %2252 = vmatpush1.msra.mxu0 0.0
  %2253 = vmatprep.subr.mxu0 0.0
  %2254 = vmatpush1.msra.mxu0 0.0
  %2255 = vmatprep.subr.mxu0 0.0
  %2256 = vmatpush1.msra.mxu0 %v1512
  %2257 = vmatprep.subr.mxu0 0.0
  %2258 = vmatpush1.msra.mxu0 %v1511
  %2259 = vmatprep.subr.mxu0 0.0
  %2260 = vmatpush1.msra.mxu0 %v1510
  %2261 = vmatprep.subr.mxu0 0.0
  %2262 = vmatpush1.msra.mxu0 %v1509
  %2263 = vmatprep.subr.mxu0 0.0
  %2264 = vmatpush2.msra.mxu0 0.0
  %2265 = vmatprep.subr.mxu0 0.0
  %2266 = vmatpush2.msra.mxu0 0.0
  %2267 = vmatprep.subr.mxu0 0.0
  %2268 = vmatpush2.msra.mxu0 0.0
  %2269 = vmatprep.subr.mxu0 0.0
  %2270 = vmatpush2.msra.mxu0 0.0
  %2271 = vmatprep.subr.mxu0 0.0
  %2272 = vmatpush2.msra.mxu0 0.0
  %2273 = vmatprep.subr.mxu0 0.0
  %2274 = vmatpush2.msra.mxu0 0.0
  %2275 = vmatprep.subr.mxu0 0.0
  %2276 = vmatpush2.msra.mxu0 0.0
  %2277 = vmatprep.subr.mxu0 0.0
  %2278 = vmatpush2.msra.mxu0 0.0
  %2279 = vmatprep.subr.mxu0 0.0
  %2280 = vmatpush2.msra.mxu0 0.0
  %2281 = vmatprep.subr.mxu0 0.0
  %2282 = vmatpush2.msra.mxu0 0.0
  %2283 = vmatprep.subr.mxu0 0.0
  %2284 = vmatpush2.msra.mxu0 0.0
  %2285 = vmatprep.subr.mxu0 0.0
  %2286 = vmatpush2.msra.mxu0 0.0
  %2287 = vmatprep.subr.mxu0 0.0
  %2288 = vmatpush2.msra.mxu0 0.0
  %2289 = vmatprep.subr.mxu0 0.0
  %2290 = vmatpush2.msra.mxu0 0.0
  %2291 = vmatprep.subr.mxu0 0.0
  %2292 = vmatpush2.msra.mxu0 0.0
  %2293 = vmatprep.subr.mxu0 0.0
  %2294 = vmatpush2.msra.mxu0 0.0
  %2295 = vmatprep.mubr.f32.mxu0 0.0
  %2296 = vmatmul.mubr.f32.gmra.mxu0 %v2223
  %v2297 = vpop.f32.mrf.mxu0
  %v2298 = vadd.f32 0.0, %v2297
  %v2299 = vpop.f32.mrf.mxu0
  %2300 = vmatprep.mubr.f32.mxu0 0.0
  %2301 = vmatmul.mubr.f32.gmra.mxu0 %v2226
  %v2302 = vpop.f32.mrf.mxu0
  %v2303 = vadd.f32 0.0, %v2302
  %v2304 = vpop.f32.mrf.mxu0
  %2305 = vmatprep.mubr.f32.mxu0 0.0
  %2306 = vmatmul.mubr.f32.gmra.mxu0 %v2229
  %v2307 = vpop.f32.mrf.mxu0
  %v2308 = vadd.f32 0.0, %v2307
  %v2309 = vpop.f32.mrf.mxu0
  %2310 = vdwg.mxu0
  %v2311 = vadd.f32 %v1500, %v2298
  %v2312 = vadd.f32 %v1501, %v2303
  %v2313 = vadd.f32 %v1502, %v2308
  %v2314 = vlaneseq
  %v2315 = vshrl.u32 %v2314, 7
  %v2316 = vsub.s32 0, %v2315
  %v2317 = vrot.slane %v1513, %v2316
  %v2318 = vadd.f32 %v2311, %v2317
  %v2319 = vadd.f32 %v2312, %v2317
  %v2320 = vadd.f32 %v2313, %v2317
  %v2321 = vsel %vm371, %v2318, 0.0
  %2322 = vadd.xlane.f32.xlu0 %v2321
  %v2323 = vpop.xlane.xlu0 %2322
  %v2324 = vsel %vm371, %v2319, 0.0
  %2325 = vadd.xlane.f32.xlu0 %v2324
  %v2326 = vpop.xlane.xlu0 %2325
  %v2327 = vsel %vm371, %v2320, 0.0
  %2328 = vadd.xlane.f32.xlu0 %v2327
  %v2329 = vpop.xlane.xlu0 %2328
  %v2330 = vmul.f32 %v2323, %v381
  %v2331 = vmul.f32 %v2326, %v381
  %v2332 = vmul.f32 %v2329, %v381
  %v2333 = vsub.f32 %v2318, %v2330
  %v2334 = vsub.f32 %v2319, %v2331
  %v2335 = vsub.f32 %v2320, %v2332
  %v2336 = vmul.f32 %v2333, %v2333
  %v2337 = vmul.f32 %v2334, %v2334
  %v2338 = vmul.f32 %v2335, %v2335
  %v2339 = vsel %vm371, %v2336, 0.0
  %2340 = vadd.xlane.f32.xlu0 %v2339
  %v2341 = vpop.xlane.xlu0 %2340
  %v2342 = vsel %vm371, %v2337, 0.0
  %2343 = vadd.xlane.f32.xlu0 %v2342
  %v2344 = vpop.xlane.xlu0 %2343
  %v2345 = vsel %vm371, %v2338, 0.0
  %2346 = vadd.xlane.f32.xlu0 %v2345
  %v2347 = vpop.xlane.xlu0 %2346
  %v2348 = vmul.f32 %v2341, %v381
  %v2349 = vmul.f32 %v2344, %v381
  %v2350 = vmul.f32 %v2347, %v381
  %v2351 = vadd.f32 %v2348, 1e-05
  %v2352 = vadd.f32 %v2349, 1e-05
  %v2353 = vadd.f32 %v2350, 1e-05
  %v2354 = vrsqrt.pop %v2351
  %v2355 = vrsqrt.pop %v2352
  %v2356 = vrsqrt.pop %v2353
  %v2357 = vmul.f32 %v2333, %v2354
  %v2358 = vmul.f32 %v2334, %v2355
  %v2359 = vmul.f32 %v2335, %v2356
  %2360 = vrot.lane.b32.xlu0 %v1577, 64
  %v2361 = vpop.permute.xlu0 %2360
  %v2363 = vmul.f32 %v2357, %v2361
  %v2364 = vmul.f32 %v2358, %v2361
  %v2365 = vmul.f32 %v2359, %v2361
  %2366 = vrot.lane.b32.xlu0 %v1577, 32
  %v2367 = vpop.permute.xlu0 %2366
  %v2369 = vadd.f32 %v2363, %v2367
  %v2370 = vadd.f32 %v2364, %v2367
  %v2371 = vadd.f32 %v2365, %v2367
  %v2372 = vlaneseq
  %v2373 = vshrl.u32 %v2372, 7
  %v2374 = vsub.s32 0, %v2373
  %v2375 = vrot.slane %v1518, %v2374
  %v2377 = vsel %vm371, %v2369, 0
  %v2380 = vsel %vm371, %v2370, 0
  %v2383 = vsel %vm371, %v2371, 0
  %2385 = vmatprep.subr.mxu0 0.0
  %2386 = vmatpush1.msra.mxu0 0.0
  %2387 = vmatprep.subr.mxu0 0.0
  %2388 = vmatpush1.msra.mxu0 0.0
  %2389 = vmatprep.subr.mxu0 0.0
  %2390 = vmatpush1.msra.mxu0 0.0
  %2391 = vmatprep.subr.mxu0 0.0
  %2392 = vmatpush1.msra.mxu0 0.0
  %2393 = vmatprep.subr.mxu0 0.0
  %2394 = vmatpush1.msra.mxu0 0.0
  %2395 = vmatprep.subr.mxu0 0.0
  %2396 = vmatpush1.msra.mxu0 0.0
  %2397 = vmatprep.subr.mxu0 0.0
  %2398 = vmatpush1.msra.mxu0 0.0
  %2399 = vmatprep.subr.mxu0 0.0
  %2400 = vmatpush1.msra.mxu0 0.0
  %2401 = vmatprep.subr.mxu0 0.0
  %2402 = vmatpush1.msra.mxu0 0.0
  %2403 = vmatprep.subr.mxu0 0.0
  %2404 = vmatpush1.msra.mxu0 0.0
  %2405 = vmatprep.subr.mxu0 0.0
  %2406 = vmatpush1.msra.mxu0 0.0
  %2407 = vmatprep.subr.mxu0 0.0
  %2408 = vmatpush1.msra.mxu0 0.0
  %2409 = vmatprep.subr.mxu0 0.0
  %2410 = vmatpush1.msra.mxu0 %v1517
  %2411 = vmatprep.subr.mxu0 0.0
  %2412 = vmatpush1.msra.mxu0 %v1516
  %2413 = vmatprep.subr.mxu0 0.0
  %2414 = vmatpush1.msra.mxu0 %v1515
  %2415 = vmatprep.subr.mxu0 0.0
  %2416 = vmatpush1.msra.mxu0 %v1514
  %2417 = vmatprep.subr.mxu0 0.0
  %2418 = vmatpush2.msra.mxu0 0.0
  %2419 = vmatprep.subr.mxu0 0.0
  %2420 = vmatpush2.msra.mxu0 0.0
  %2421 = vmatprep.subr.mxu0 0.0
  %2422 = vmatpush2.msra.mxu0 0.0
  %2423 = vmatprep.subr.mxu0 0.0
  %2424 = vmatpush2.msra.mxu0 0.0
  %2425 = vmatprep.subr.mxu0 0.0
  %2426 = vmatpush2.msra.mxu0 0.0
  %2427 = vmatprep.subr.mxu0 0.0
  %2428 = vmatpush2.msra.mxu0 0.0
  %2429 = vmatprep.subr.mxu0 0.0
  %2430 = vmatpush2.msra.mxu0 0.0
  %2431 = vmatprep.subr.mxu0 0.0
  %2432 = vmatpush2.msra.mxu0 0.0
  %2433 = vmatprep.subr.mxu0 0.0
  %2434 = vmatpush2.msra.mxu0 0.0
  %2435 = vmatprep.subr.mxu0 0.0
  %2436 = vmatpush2.msra.mxu0 0.0
  %2437 = vmatprep.subr.mxu0 0.0
  %2438 = vmatpush2.msra.mxu0 0.0
  %2439 = vmatprep.subr.mxu0 0.0
  %2440 = vmatpush2.msra.mxu0 0.0
  %2441 = vmatprep.subr.mxu0 0.0
  %2442 = vmatpush2.msra.mxu0 0.0
  %2443 = vmatprep.subr.mxu0 0.0
  %2444 = vmatpush2.msra.mxu0 0.0
  %2445 = vmatprep.subr.mxu0 0.0
  %2446 = vmatpush2.msra.mxu0 0.0
  %2447 = vmatprep.subr.mxu0 0.0
  %2448 = vmatpush2.msra.mxu0 0.0
  %2449 = vmatprep.mubr.f32.mxu0 0.0
  %2450 = vmatmul.mubr.f32.gmra.mxu0 %v2377
  %v2451 = vpop.f32.mrf.mxu0
  %v2452 = vadd.f32 %v2375, %v2451
  %v2453 = vpop.f32.mrf.mxu0
  %2454 = vmatprep.mubr.f32.mxu0 0.0
  %2455 = vmatmul.mubr.f32.gmra.mxu0 %v2380
  %v2456 = vpop.f32.mrf.mxu0
  %v2457 = vadd.f32 %v2375, %v2456
  %v2458 = vpop.f32.mrf.mxu0
  %2459 = vmatprep.mubr.f32.mxu0 0.0
  %2460 = vmatmul.mubr.f32.gmra.mxu0 %v2383
  %v2461 = vpop.f32.mrf.mxu0
  %v2462 = vadd.f32 %v2375, %v2461
  %v2463 = vpop.f32.mrf.mxu0
  %2464 = vdwg.mxu0
  %v2465 = vmul.f32 %v2452, 1.702
  %v2466 = vmul.f32 %v2457, 1.702
  %v2467 = vmul.f32 %v2462, 1.702
  %v2468 = vxor.u32 %v2465, 2147483648
  %v2469 = vxor.u32 %v2466, 2147483648
  %v2470 = vxor.u32 %v2467, 2147483648
  %v2471 = vmul.f32 %v2468, 1.442695
  %v2472 = vpow.pop %v2471
  %v2473 = vmul.f32 %v2469, 1.442695
  %v2474 = vpow.pop %v2473
  %v2475 = vmul.f32 %v2470, 1.442695
  %v2476 = vpow.pop %v2475
  %v2477 = vadd.f32 %v2472, 1.0
  %v2478 = vadd.f32 %v2474, 1.0
  %v2479 = vadd.f32 %v2476, 1.0
  %v2480 = vrcp.pop %v2477
  %v2481 = vmul.f32 1.0, %v2480
  %v2482 = vrcp.pop %v2478
  %v2483 = vmul.f32 1.0, %v2482
  %v2484 = vrcp.pop %v2479
  %v2485 = vmul.f32 1.0, %v2484
  %v2486 = vmul.f32 %v2452, %v2481
  %v2487 = vmul.f32 %v2457, %v2483
  %v2488 = vmul.f32 %v2462, %v2485
  %2489 = vmatprep.subr.mxu0 0.0
  %2490 = vmatpush1.msra.mxu0 %v1534
  %2491 = vmatprep.subr.mxu0 0.0
  %2492 = vmatpush1.msra.mxu0 %v1533
  %2493 = vmatprep.subr.mxu0 0.0
  %2494 = vmatpush1.msra.mxu0 %v1532
  %2495 = vmatprep.subr.mxu0 0.0
  %2496 = vmatpush1.msra.mxu0 %v1531
  %2497 = vmatprep.subr.mxu0 0.0
  %2498 = vmatpush1.msra.mxu0 %v1530
  %2499 = vmatprep.subr.mxu0 0.0
  %2500 = vmatpush1.msra.mxu0 %v1529
  %2501 = vmatprep.subr.mxu0 0.0
  %2502 = vmatpush1.msra.mxu0 %v1528
  %2503 = vmatprep.subr.mxu0 0.0
  %2504 = vmatpush1.msra.mxu0 %v1527
  %2505 = vmatprep.subr.mxu0 0.0
  %2506 = vmatpush1.msra.mxu0 %v1526
  %2507 = vmatprep.subr.mxu0 0.0
  %2508 = vmatpush1.msra.mxu0 %v1525
  %2509 = vmatprep.subr.mxu0 0.0
  %2510 = vmatpush1.msra.mxu0 %v1524
  %2511 = vmatprep.subr.mxu0 0.0
  %2512 = vmatpush1.msra.mxu0 %v1523
  %2513 = vmatprep.subr.mxu0 0.0
  %2514 = vmatpush1.msra.mxu0 %v1522
  %2515 = vmatprep.subr.mxu0 0.0
  %2516 = vmatpush1.msra.mxu0 %v1521
  %2517 = vmatprep.subr.mxu0 0.0
  %2518 = vmatpush1.msra.mxu0 %v1520
  %2519 = vmatprep.subr.mxu0 0.0
  %2520 = vmatpush1.msra.mxu0 %v1519
  %2521 = vmatprep.subr.mxu0 0.0
  %2522 = vmatpush2.msra.mxu0 0.0
  %2523 = vmatprep.subr.mxu0 0.0
  %2524 = vmatpush2.msra.mxu0 0.0
  %2525 = vmatprep.subr.mxu0 0.0
  %2526 = vmatpush2.msra.mxu0 0.0
  %2527 = vmatprep.subr.mxu0 0.0
  %2528 = vmatpush2.msra.mxu0 0.0
  %2529 = vmatprep.subr.mxu0 0.0
  %2530 = vmatpush2.msra.mxu0 0.0
  %2531 = vmatprep.subr.mxu0 0.0
  %2532 = vmatpush2.msra.mxu0 0.0
  %2533 = vmatprep.subr.mxu0 0.0
  %2534 = vmatpush2.msra.mxu0 0.0
  %2535 = vmatprep.subr.mxu0 0.0
  %2536 = vmatpush2.msra.mxu0 0.0
  %2537 = vmatprep.subr.mxu0 0.0
  %2538 = vmatpush2.msra.mxu0 0.0
  %2539 = vmatprep.subr.mxu0 0.0
  %2540 = vmatpush2.msra.mxu0 0.0
  %2541 = vmatprep.subr.mxu0 0.0
  %2542 = vmatpush2.msra.mxu0 0.0
  %2543 = vmatprep.subr.mxu0 0.0
  %2544 = vmatpush2.msra.mxu0 0.0
  %2545 = vmatprep.subr.mxu0 0.0
  %2546 = vmatpush2.msra.mxu0 0.0
  %2547 = vmatprep.subr.mxu0 0.0
  %2548 = vmatpush2.msra.mxu0 0.0
  %2549 = vmatprep.subr.mxu0 0.0
  %2550 = vmatpush2.msra.mxu0 0.0
  %2551 = vmatprep.subr.mxu0 0.0
  %2552 = vmatpush2.msra.mxu0 0.0
  %2553 = vmatprep.mubr.f32.mxu0 0.0
  %2554 = vmatmul.mubr.f32.gmra.mxu0 %v2486
  %v2555 = vpop.f32.mrf.mxu0
  %v2556 = vadd.f32 0.0, %v2555
  %v2557 = vpop.f32.mrf.mxu0
  %2558 = vmatprep.mubr.f32.mxu0 0.0
  %2559 = vmatmul.mubr.f32.gmra.mxu0 %v2487
  %v2560 = vpop.f32.mrf.mxu0
  %v2561 = vadd.f32 0.0, %v2560
  %v2562 = vpop.f32.mrf.mxu0
  %2563 = vmatprep.mubr.f32.mxu0 0.0
  %2564 = vmatmul.mubr.f32.gmra.mxu0 %v2488
  %v2565 = vpop.f32.mrf.mxu0
  %v2566 = vadd.f32 0.0, %v2565
  %v2567 = vpop.f32.mrf.mxu0
  %2568 = vdwg.mxu0
  %v2569 = vadd.f32 %v2318, %v2556
  %v2570 = vadd.f32 %v2319, %v2561
  %v2571 = vadd.f32 %v2320, %v2566
  %2573 = vrot.lane.b32.xlu0 %v2317, 96
  %v2574 = vpop.permute.xlu0 %2573
  %v2576 = vadd.f32 %v2569, %v2574
  %v2577 = vadd.f32 %v2570, %v2574
  %v2578 = vadd.f32 %v2571, %v2574
  %v2579 = vld [vmem:[%s1 + $0x308] sm:$0x1]
  %v2580 = vld [vmem:[%s1 + $0x228] sm:$0xff]
  %v2581 = vld [vmem:[%s1 + $0x230] sm:$0xff]
  %v2582 = vld [vmem:[%s1 + $0x238] sm:$0xff]
  %v2583 = vld [vmem:[%s1 + $0x240] sm:$0xff]
  %v2584 = vld [vmem:[%s1 + $0x309] sm:$0x1]
  %v2585 = vld [vmem:[%s1 + $0x248] sm:$0xff]
  %v2586 = vld [vmem:[%s1 + $0x250] sm:$0xff]
  %v2587 = vld [vmem:[%s1 + $0x258] sm:$0xff]
  %v2588 = vld [vmem:[%s1 + $0x260] sm:$0xff]
  %v2589 = vld [vmem:[%s1 + $0x30a] sm:$0x1]
  %v2590 = vld [vmem:[%s1 + $0x30] sm:$0xff]
  %v2591 = vld [vmem:[%s1 + $0x38] sm:$0xff]
  %v2592 = vld [vmem:[%s1 + $0x40] sm:$0xff]
  %v2593 = vld [vmem:[%s1 + $0x48] sm:$0xff]
  %v2594 = vld [vmem:[%s0] sm:$0x3f]
  %v2595 = vmul.f32 %v2594, %v2594
  %2597 = vrot.lane.b32.xlu0 %v2595, 48
  %v2598 = vpop.permute.xlu0 %2597
  %vm2600 = vcmask 128000
  %v2601 = vsel %vm2600, %v2598, 0.0
  %2602 = vadd.xlane.f32.xlu0 %v2601
  %v2603 = vpop.xlane.xlu0 %2602
  %v2604 = vrsqrt.pop %v2603
  %v2605 = vmul.f32 %v2594, %v2604
  %v2606 = vsel %vm371, %v508, 0.0
  %2607 = vadd.xlane.f32.xlu0 %v2606
  %v2608 = vpop.xlane.xlu0 %2607
  %v2609 = vsel %vm371, %v509, 0.0
  %2610 = vadd.xlane.f32.xlu0 %v2609
  %v2611 = vpop.xlane.xlu0 %2610
  %v2612 = vsel %vm371, %v510, 0.0
  %2613 = vadd.xlane.f32.xlu0 %v2612
  %v2614 = vpop.xlane.xlu0 %2613
  %v2615 = vmul.f32 %v2608, %v381
  %v2616 = vmul.f32 %v2611, %v381
  %v2617 = vmul.f32 %v2614, %v381
  %v2618 = vsub.f32 %v508, %v2615
  %v2619 = vsub.f32 %v509, %v2616
  %v2620 = vsub.f32 %v510, %v2617
  %v2621 = vmul.f32 %v2618, %v2618
  %v2622 = vmul.f32 %v2619, %v2619
  %v2623 = vmul.f32 %v2620, %v2620
  %v2624 = vsel %vm371, %v2621, 0.0
  %2625 = vadd.xlane.f32.xlu0 %v2624
  %v2626 = vpop.xlane.xlu0 %2625
  %v2627 = vsel %vm371, %v2622, 0.0
  %2628 = vadd.xlane.f32.xlu0 %v2627
  %v2629 = vpop.xlane.xlu0 %2628
  %v2630 = vsel %vm371, %v2623, 0.0
  %2631 = vadd.xlane.f32.xlu0 %v2630
  %v2632 = vpop.xlane.xlu0 %2631
  %v2633 = vmul.f32 %v2626, %v381
  %v2634 = vmul.f32 %v2629, %v381
  %v2635 = vmul.f32 %v2632, %v381
  %v2636 = vadd.f32 %v2633, 1e-05
  %v2637 = vadd.f32 %v2634, 1e-05
  %v2638 = vadd.f32 %v2635, 1e-05
  %v2639 = vrsqrt.pop %v2636
  %v2640 = vrsqrt.pop %v2637
  %v2641 = vrsqrt.pop %v2638
  %v2642 = vmul.f32 %v2618, %v2639
  %v2643 = vmul.f32 %v2619, %v2640
  %v2644 = vmul.f32 %v2620, %v2641
  %v2645 = vlaneseq
  %v2646 = vshrl.u32 %v2645, 7
  %v2647 = vsub.s32 0, %v2646
  %v2648 = vrot.slane %v2579, %v2647
  %v2649 = vmul.f32 %v2642, %v2648
  %v2650 = vmul.f32 %v2643, %v2648
  %v2651 = vmul.f32 %v2644, %v2648
  %2653 = vrot.lane.b32.xlu0 %v2648, 96
  %v2654 = vpop.permute.xlu0 %2653
  %v2656 = vadd.f32 %v2649, %v2654
  %v2657 = vadd.f32 %v2650, %v2654
  %v2658 = vadd.f32 %v2651, %v2654
  %v2659 = vlaneseq
  %v2660 = vshrl.u32 %v2659, 7
  %v2661 = vsub.s32 0, %v2660
  %v2662 = vrot.slane %v2584, %v2661
  %v2664 = vsel %vm371, %v2656, 0
  %v2667 = vsel %vm371, %v2657, 0
  %v2670 = vsel %vm371, %v2658, 0
  %2672 = vmatprep.subr.mxu0 0.0
  %2673 = vmatpush1.msra.mxu0 0.0
  %2674 = vmatprep.subr.mxu0 0.0
  %2675 = vmatpush1.msra.mxu0 0.0
  %2676 = vmatprep.subr.mxu0 0.0
  %2677 = vmatpush1.msra.mxu0 0.0
  %2678 = vmatprep.subr.mxu0 0.0
  %2679 = vmatpush1.msra.mxu0 0.0
  %2680 = vmatprep.subr.mxu0 0.0
  %2681 = vmatpush1.msra.mxu0 0.0
  %2682 = vmatprep.subr.mxu0 0.0
  %2683 = vmatpush1.msra.mxu0 0.0
  %2684 = vmatprep.subr.mxu0 0.0
  %2685 = vmatpush1.msra.mxu0 0.0
  %2686 = vmatprep.subr.mxu0 0.0
  %2687 = vmatpush1.msra.mxu0 0.0
  %2688 = vmatprep.subr.mxu0 0.0
  %2689 = vmatpush1.msra.mxu0 0.0
  %2690 = vmatprep.subr.mxu0 0.0
  %2691 = vmatpush1.msra.mxu0 0.0
  %2692 = vmatprep.subr.mxu0 0.0
  %2693 = vmatpush1.msra.mxu0 0.0
  %2694 = vmatprep.subr.mxu0 0.0
  %2695 = vmatpush1.msra.mxu0 0.0
  %2696 = vmatprep.subr.mxu0 0.0
  %2697 = vmatpush1.msra.mxu0 %v2583
  %2698 = vmatprep.subr.mxu0 0.0
  %2699 = vmatpush1.msra.mxu0 %v2582
  %2700 = vmatprep.subr.mxu0 0.0
  %2701 = vmatpush1.msra.mxu0 %v2581
  %2702 = vmatprep.subr.mxu0 0.0
  %2703 = vmatpush1.msra.mxu0 %v2580
  %2704 = vmatprep.subr.mxu0 0.0
  %2705 = vmatpush2.msra.mxu0 0.0
  %2706 = vmatprep.subr.mxu0 0.0
  %2707 = vmatpush2.msra.mxu0 0.0
  %2708 = vmatprep.subr.mxu0 0.0
  %2709 = vmatpush2.msra.mxu0 0.0
  %2710 = vmatprep.subr.mxu0 0.0
  %2711 = vmatpush2.msra.mxu0 0.0
  %2712 = vmatprep.subr.mxu0 0.0
  %2713 = vmatpush2.msra.mxu0 0.0
  %2714 = vmatprep.subr.mxu0 0.0
  %2715 = vmatpush2.msra.mxu0 0.0
  %2716 = vmatprep.subr.mxu0 0.0
  %2717 = vmatpush2.msra.mxu0 0.0
  %2718 = vmatprep.subr.mxu0 0.0
  %2719 = vmatpush2.msra.mxu0 0.0
  %2720 = vmatprep.subr.mxu0 0.0
  %2721 = vmatpush2.msra.mxu0 0.0
  %2722 = vmatprep.subr.mxu0 0.0
  %2723 = vmatpush2.msra.mxu0 0.0
  %2724 = vmatprep.subr.mxu0 0.0
  %2725 = vmatpush2.msra.mxu0 0.0
  %2726 = vmatprep.subr.mxu0 0.0
  %2727 = vmatpush2.msra.mxu0 0.0
  %2728 = vmatprep.subr.mxu0 0.0
  %2729 = vmatpush2.msra.mxu0 0.0
  %2730 = vmatprep.subr.mxu0 0.0
  %2731 = vmatpush2.msra.mxu0 0.0
  %2732 = vmatprep.subr.mxu0 0.0
  %2733 = vmatpush2.msra.mxu0 0.0
  %2734 = vmatprep.subr.mxu0 0.0
  %2735 = vmatpush2.msra.mxu0 0.0
  %2736 = vmatprep.mubr.f32.mxu0 0.0
  %2737 = vmatmul.mubr.f32.gmra.mxu0 %v2664
  %v2738 = vpop.f32.mrf.mxu0
  %v2739 = vadd.f32 %v2662, %v2738
  %v2740 = vpop.f32.mrf.mxu0
  %2741 = vmatprep.mubr.f32.mxu0 0.0
  %2742 = vmatmul.mubr.f32.gmra.mxu0 %v2667
  %v2743 = vpop.f32.mrf.mxu0
  %v2744 = vadd.f32 %v2662, %v2743
  %v2745 = vpop.f32.mrf.mxu0
  %2746 = vmatprep.mubr.f32.mxu0 0.0
  %2747 = vmatmul.mubr.f32.gmra.mxu0 %v2670
  %v2748 = vpop.f32.mrf.mxu0
  %v2749 = vadd.f32 %v2662, %v2748
  %v2750 = vpop.f32.mrf.mxu0
  %2751 = vdwg.mxu0
  %vm2752 = vcmask 785408
  %v2754 = vsel %vm2752, %v250, 0
  %v2757 = vsel %vm2752, %v251, 0
  %v2760 = vsel %vm2752, %v252, 0
  %v2763 = vsel %vm2752, %v253, 0
  %v2766 = vsel %vm2752, %v254, 0
  %v2769 = vsel %vm2752, %v255, 0
  %v2772 = vsel %vm2752, %v256, 0
  %v2775 = vsel %vm2752, %v257, 0
  %v2778 = vsel %vm2752, %v258, 0
  %v2781 = vsel %vm2752, %v259, 0
  %v2784 = vsel %vm2752, %v260, 0
  %v2787 = vsel %vm2752, %v261, 0
  %2789 = vmatprep.subr.mxu0 0.0
  %2790 = vmatpush1.msra.mxu0 0.0
  %2791 = vmatprep.subr.mxu0 0.0
  %2792 = vmatpush1.msra.mxu0 0.0
  %2793 = vmatprep.subr.mxu0 0.0
  %2794 = vmatpush1.msra.mxu0 0.0
  %2795 = vmatprep.subr.mxu0 0.0
  %2796 = vmatpush1.msra.mxu0 0.0
  %2797 = vmatprep.subr.mxu0 0.0
  %2798 = vmatpush1.msra.mxu0 %v2027
  %2799 = vmatprep.subr.mxu0 0.0
  %2800 = vmatpush1.msra.mxu0 %v2026
  %2801 = vmatprep.subr.mxu0 0.0
  %2802 = vmatpush1.msra.mxu0 %v2025
  %2803 = vmatprep.subr.mxu0 0.0
  %2804 = vmatpush1.msra.mxu0 %v2024
  %2805 = vmatprep.subr.mxu0 0.0
  %2806 = vmatpush1.msra.mxu0 %v2023
  %2807 = vmatprep.subr.mxu0 0.0
  %2808 = vmatpush1.msra.mxu0 %v2022
  %2809 = vmatprep.subr.mxu0 0.0
  %2810 = vmatpush1.msra.mxu0 %v2021
  %2811 = vmatprep.subr.mxu0 0.0
  %2812 = vmatpush1.msra.mxu0 %v2020
  %2813 = vmatprep.subr.mxu0 0.0
  %2814 = vmatpush1.msra.mxu0 %v2019
  %2815 = vmatprep.subr.mxu0 0.0
  %2816 = vmatpush1.msra.mxu0 %v2018
  %2817 = vmatprep.subr.mxu0 0.0
  %2818 = vmatpush1.msra.mxu0 %v2017
  %2819 = vmatprep.subr.mxu0 0.0
  %2820 = vmatpush1.msra.mxu0 %v2016
  %2821 = vmatprep.subr.mxu0 0.0
  %2822 = vmatpush2.msra.mxu0 0.0
  %2823 = vmatprep.subr.mxu0 0.0
  %2824 = vmatpush2.msra.mxu0 0.0
  %2825 = vmatprep.subr.mxu0 0.0
  %2826 = vmatpush2.msra.mxu0 0.0
  %2827 = vmatprep.subr.mxu0 0.0
  %2828 = vmatpush2.msra.mxu0 0.0
  %2829 = vmatprep.subr.mxu0 0.0
  %2830 = vmatpush2.msra.mxu0 0.0
  %2831 = vmatprep.subr.mxu0 0.0
  %2832 = vmatpush2.msra.mxu0 0.0
  %2833 = vmatprep.subr.mxu0 0.0
  %2834 = vmatpush2.msra.mxu0 0.0
  %2835 = vmatprep.subr.mxu0 0.0
  %2836 = vmatpush2.msra.mxu0 0.0
  %2837 = vmatprep.subr.mxu0 0.0
  %2838 = vmatpush2.msra.mxu0 0.0
  %2839 = vmatprep.subr.mxu0 0.0
  %2840 = vmatpush2.msra.mxu0 0.0
  %2841 = vmatprep.subr.mxu0 0.0
  %2842 = vmatpush2.msra.mxu0 0.0
  %2843 = vmatprep.subr.mxu0 0.0
  %2844 = vmatpush2.msra.mxu0 0.0
  %2845 = vmatprep.subr.mxu0 0.0
  %2846 = vmatpush2.msra.mxu0 0.0
  %2847 = vmatprep.subr.mxu0 0.0
  %2848 = vmatpush2.msra.mxu0 0.0
  %2849 = vmatprep.subr.mxu0 0.0
  %2850 = vmatpush2.msra.mxu0 0.0
  %2851 = vmatprep.subr.mxu0 0.0
  %2852 = vmatpush2.msra.mxu0 0.0
  %2853 = vmatprep.mubr.f32.mxu0 0.0
  %2854 = vmatmul.mubr.f32.gmra.mxu0 %v2754
  %v2855 = vpop.f32.mrf.mxu0
  %v2856 = vadd.f32 0.0, %v2855
  %v2857 = vpop.f32.mrf.mxu0
  %2858 = vmatprep.mubr.f32.mxu0 0.0
  %2859 = vmatmul.mubr.f32.gmra.mxu0 %v2757
  %v2860 = vpop.f32.mrf.mxu0
  %v2861 = vadd.f32 0.0, %v2860
  %v2862 = vpop.f32.mrf.mxu0
  %2863 = vmatprep.mubr.f32.mxu0 0.0
  %2864 = vmatmul.mubr.f32.gmra.mxu0 %v2760
  %v2865 = vpop.f32.mrf.mxu0
  %v2866 = vadd.f32 0.0, %v2865
  %v2867 = vpop.f32.mrf.mxu0
  %2868 = vmatprep.mubr.f32.mxu0 0.0
  %2869 = vmatmul.mubr.f32.gmra.mxu0 %v2763
  %v2870 = vpop.f32.mrf.mxu0
  %v2871 = vadd.f32 0.0, %v2870
  %v2872 = vpop.f32.mrf.mxu0
  %2873 = vmatprep.mubr.f32.mxu0 0.0
  %2874 = vmatmul.mubr.f32.gmra.mxu0 %v2766
  %v2875 = vpop.f32.mrf.mxu0
  %v2876 = vadd.f32 0.0, %v2875
  %v2877 = vpop.f32.mrf.mxu0
  %2878 = vmatprep.mubr.f32.mxu0 0.0
  %2879 = vmatmul.mubr.f32.gmra.mxu0 %v2769
  %v2880 = vpop.f32.mrf.mxu0
  %v2881 = vadd.f32 0.0, %v2880
  %v2882 = vpop.f32.mrf.mxu0
  %2883 = vmatprep.mubr.f32.mxu0 0.0
  %2884 = vmatmul.mubr.f32.gmra.mxu0 %v2772
  %v2885 = vpop.f32.mrf.mxu0
  %v2886 = vadd.f32 0.0, %v2885
  %v2887 = vpop.f32.mrf.mxu0
  %2888 = vmatprep.mubr.f32.mxu0 0.0
  %2889 = vmatmul.mubr.f32.gmra.mxu0 %v2775
  %v2890 = vpop.f32.mrf.mxu0
  %v2891 = vadd.f32 0.0, %v2890
  %v2892 = vpop.f32.mrf.mxu0
  %2893 = vmatprep.mubr.f32.mxu0 0.0
  %2894 = vmatmul.mubr.f32.gmra.mxu0 %v2778
  %v2895 = vpop.f32.mrf.mxu0
  %v2896 = vadd.f32 0.0, %v2895
  %v2897 = vpop.f32.mrf.mxu0
  %2898 = vmatprep.mubr.f32.mxu0 0.0
  %2899 = vmatmul.mubr.f32.gmra.mxu0 %v2781
  %v2900 = vpop.f32.mrf.mxu0
  %v2901 = vadd.f32 0.0, %v2900
  %v2902 = vpop.f32.mrf.mxu0
  %2903 = vmatprep.mubr.f32.mxu0 0.0
  %2904 = vmatmul.mubr.f32.gmra.mxu0 %v2784
  %v2905 = vpop.f32.mrf.mxu0
  %v2906 = vadd.f32 0.0, %v2905
  %v2907 = vpop.f32.mrf.mxu0
  %2908 = vmatprep.mubr.f32.mxu0 0.0
  %2909 = vmatmul.mubr.f32.gmra.mxu0 %v2787
  %v2910 = vpop.f32.mrf.mxu0
  %v2911 = vadd.f32 0.0, %v2910
  %v2912 = vpop.f32.mrf.mxu0
  %2913 = vdwg.mxu0
  %vm2914 = vcmp.eq.f32.partialorder %v2856, 0.0
  %vm2915 = vcmp.eq.f32.partialorder %v2861, 0.0
  %vm2916 = vcmp.eq.f32.partialorder %v2866, 0.0
  %vm2917 = vcmp.eq.f32.partialorder %v2871, 0.0
  %vm2918 = vcmp.eq.f32.partialorder %v2876, 0.0
  %vm2919 = vcmp.eq.f32.partialorder %v2881, 0.0
  %vm2920 = vcmp.eq.f32.partialorder %v2886, 0.0
  %vm2921 = vcmp.eq.f32.partialorder %v2891, 0.0
  %vm2922 = vcmp.eq.f32.partialorder %v2896, 0.0
  %vm2923 = vcmp.eq.f32.partialorder %v2901, 0.0
  %vm2924 = vcmp.eq.f32.partialorder %v2906, 0.0
  %vm2925 = vcmp.eq.f32.partialorder %v2911, 0.0
  %v2926 = vsel %vm2914, 1.0, %v2856
  %v2927 = vsel %vm2915, 1.0, %v2861
  %v2928 = vsel %vm2916, 1.0, %v2866
  %v2929 = vsel %vm2917, 1.0, %v2871
  %v2930 = vsel %vm2918, 1.0, %v2876
  %v2931 = vsel %vm2919, 1.0, %v2881
  %v2932 = vsel %vm2920, 1.0, %v2886
  %v2933 = vsel %vm2921, 1.0, %v2891
  %v2934 = vsel %vm2922, 1.0, %v2896
  %v2935 = vsel %vm2923, 1.0, %v2901
  %v2936 = vsel %vm2924, 1.0, %v2906
  %v2937 = vsel %vm2925, 1.0, %v2911
  %v2938 = vrcp.pop %v2926
  %v2939 = vmul.f32 %v2016, %v2938
  %v2940 = vrcp.pop %v2927
  %v2941 = vmul.f32 %v2017, %v2940
  %v2942 = vrcp.pop %v2928
  %v2943 = vmul.f32 %v2018, %v2942
  %v2944 = vrcp.pop %v2929
  %v2945 = vmul.f32 %v2019, %v2944
  %v2946 = vrcp.pop %v2930
  %v2947 = vmul.f32 %v2020, %v2946
  %v2948 = vrcp.pop %v2931
  %v2949 = vmul.f32 %v2021, %v2948
  %v2950 = vrcp.pop %v2932
  %v2951 = vmul.f32 %v2022, %v2950
  %v2952 = vrcp.pop %v2933
  %v2953 = vmul.f32 %v2023, %v2952
  %v2954 = vrcp.pop %v2934
  %v2955 = vmul.f32 %v2024, %v2954
  %v2956 = vrcp.pop %v2935
  %v2957 = vmul.f32 %v2025, %v2956
  %v2958 = vrcp.pop %v2936
  %v2959 = vmul.f32 %v2026, %v2958
  %v2960 = vrcp.pop %v2937
  %v2961 = vmul.f32 %v2027, %v2960
  %v2962 = vsel %vm795, %v2939, 0.0
  %2963 = vadd.xlane.f32.xlu0 %v2962
  %v2964 = vpop.xlane.xlu0 %2963
  %v2965 = vsel %vm795, %v2941, 0.0
  %2966 = vadd.xlane.f32.xlu0 %v2965
  %v2967 = vpop.xlane.xlu0 %2966
  %v2968 = vsel %vm795, %v2943, 0.0
  %2969 = vadd.xlane.f32.xlu0 %v2968
  %v2970 = vpop.xlane.xlu0 %2969
  %v2971 = vsel %vm795, %v2945, 0.0
  %2972 = vadd.xlane.f32.xlu0 %v2971
  %v2973 = vpop.xlane.xlu0 %2972
  %v2974 = vsel %vm795, %v2947, 0.0
  %2975 = vadd.xlane.f32.xlu0 %v2974
  %v2976 = vpop.xlane.xlu0 %2975
  %v2977 = vsel %vm795, %v2949, 0.0
  %2978 = vadd.xlane.f32.xlu0 %v2977
  %v2979 = vpop.xlane.xlu0 %2978
  %v2980 = vsel %vm795, %v2951, 0.0
  %2981 = vadd.xlane.f32.xlu0 %v2980
  %v2982 = vpop.xlane.xlu0 %2981
  %v2983 = vsel %vm795, %v2953, 0.0
  %2984 = vadd.xlane.f32.xlu0 %v2983
  %v2985 = vpop.xlane.xlu0 %2984
  %v2986 = vsel %vm795, %v2955, 0.0
  %2987 = vadd.xlane.f32.xlu0 %v2986
  %v2988 = vpop.xlane.xlu0 %2987
  %v2989 = vsel %vm795, %v2957, 0.0
  %2990 = vadd.xlane.f32.xlu0 %v2989
  %v2991 = vpop.xlane.xlu0 %2990
  %v2992 = vsel %vm795, %v2959, 0.0
  %2993 = vadd.xlane.f32.xlu0 %v2992
  %v2994 = vpop.xlane.xlu0 %2993
  %v2995 = vsel %vm795, %v2961, 0.0
  %2996 = vadd.xlane.f32.xlu0 %v2995
  %v2997 = vpop.xlane.xlu0 %2996
  %vm2998 = vcmp.eq.f32.partialorder %v2964, 0.0
  %vm2999 = vcmp.eq.f32.partialorder %v2967, 0.0
  %vm3000 = vcmp.eq.f32.partialorder %v2970, 0.0
  %vm3001 = vcmp.eq.f32.partialorder %v2973, 0.0
  %vm3002 = vcmp.eq.f32.partialorder %v2976, 0.0
  %vm3003 = vcmp.eq.f32.partialorder %v2979, 0.0
  %vm3004 = vcmp.eq.f32.partialorder %v2982, 0.0
  %vm3005 = vcmp.eq.f32.partialorder %v2985, 0.0
  %vm3006 = vcmp.eq.f32.partialorder %v2988, 0.0
  %vm3007 = vcmp.eq.f32.partialorder %v2991, 0.0
  %vm3008 = vcmp.eq.f32.partialorder %v2994, 0.0
  %vm3009 = vcmp.eq.f32.partialorder %v2997, 0.0
  %v3010 = vsel %vm2998, 1.0, %v2964
  %v3011 = vsel %vm2999, 1.0, %v2967
  %v3012 = vsel %vm3000, 1.0, %v2970
  %v3013 = vsel %vm3001, 1.0, %v2973
  %v3014 = vsel %vm3002, 1.0, %v2976
  %v3015 = vsel %vm3003, 1.0, %v2979
  %v3016 = vsel %vm3004, 1.0, %v2982
  %v3017 = vsel %vm3005, 1.0, %v2985
  %v3018 = vsel %vm3006, 1.0, %v2988
  %v3019 = vsel %vm3007, 1.0, %v2991
  %v3020 = vsel %vm3008, 1.0, %v2994
  %v3021 = vsel %vm3009, 1.0, %v2997
  %v3022 = vrcp.pop %v3010
  %v3023 = vmul.f32 %v2939, %v3022
  %v3024 = vrcp.pop %v3011
  %v3025 = vmul.f32 %v2941, %v3024
  %v3026 = vrcp.pop %v3012
  %v3027 = vmul.f32 %v2943, %v3026
  %v3028 = vrcp.pop %v3013
  %v3029 = vmul.f32 %v2945, %v3028
  %v3030 = vrcp.pop %v3014
  %v3031 = vmul.f32 %v2947, %v3030
  %v3032 = vrcp.pop %v3015
  %v3033 = vmul.f32 %v2949, %v3032
  %v3034 = vrcp.pop %v3016
  %v3035 = vmul.f32 %v2951, %v3034
  %v3036 = vrcp.pop %v3017
  %v3037 = vmul.f32 %v2953, %v3036
  %v3038 = vrcp.pop %v3018
  %v3039 = vmul.f32 %v2955, %v3038
  %v3040 = vrcp.pop %v3019
  %v3041 = vmul.f32 %v2957, %v3040
  %v3042 = vrcp.pop %v3020
  %v3043 = vmul.f32 %v2959, %v3042
  %v3044 = vrcp.pop %v3021
  %v3045 = vmul.f32 %v2961, %v3044
  %3046 = vxpose.xlu0.b32.start [1/16] %v3023, 128
  %3047 = vxpose.xlu0.b32.cont [2/16] %v3025, 128
  %3048 = vxpose.xlu0.b32.cont [3/16] %v3027, 128
  %3049 = vxpose.xlu0.b32.cont [4/16] 0.0, 128
  %3050 = vxpose.xlu0.b32.cont [5/16] 0.0, 128
  %3051 = vxpose.xlu0.b32.cont [6/16] 0.0, 128
  %3052 = vxpose.xlu0.b32.cont [7/16] 0.0, 128
  %3053 = vxpose.xlu0.b32.cont [8/16] 0.0, 128
  %3054 = vxpose.xlu0.b32.cont [9/16] 0.0, 128
  %3055 = vxpose.xlu0.b32.cont [10/16] 0.0, 128
  %3056 = vxpose.xlu0.b32.cont [11/16] 0.0, 128
  %3057 = vxpose.xlu0.b32.cont [12/16] 0.0, 128
  %3058 = vxpose.xlu0.b32.cont [13/16] 0.0, 128
  %3059 = vxpose.xlu0.b32.cont [14/16] 0.0, 128
  %3060 = vxpose.xlu0.b32.cont [15/16] 0.0, 128
  %3061 = vxpose.xlu0.b32.end [16/16] 0.0, 128
  %v3062 = vpop.trf.xlu0
  %v3063 = vpop.trf.xlu0
  %v3064 = vpop.trf.xlu0
  %v3065 = vpop.trf.xlu0
  %v3066 = vpop.trf.xlu0
  %v3067 = vpop.trf.xlu0
  %v3068 = vpop.trf.xlu0
  %v3069 = vpop.trf.xlu0
  %v3070 = vpop.trf.xlu0
  %v3071 = vpop.trf.xlu0
  %v3072 = vpop.trf.xlu0
  %v3073 = vpop.trf.xlu0
  %v3074 = vpop.trf.xlu0
  %v3075 = vpop.trf.xlu0
  %v3076 = vpop.trf.xlu0
  %v3077 = vpop.trf.xlu0
  %3078 = vxpose.xlu0.b32.start [1/16] %v3029, 128
  %3079 = vxpose.xlu0.b32.cont [2/16] %v3031, 128
  %3080 = vxpose.xlu0.b32.cont [3/16] %v3033, 128
  %3081 = vxpose.xlu0.b32.cont [4/16] 0.0, 128
  %3082 = vxpose.xlu0.b32.cont [5/16] 0.0, 128
  %3083 = vxpose.xlu0.b32.cont [6/16] 0.0, 128
  %3084 = vxpose.xlu0.b32.cont [7/16] 0.0, 128
  %3085 = vxpose.xlu0.b32.cont [8/16] 0.0, 128
  %3086 = vxpose.xlu0.b32.cont [9/16] 0.0, 128
  %3087 = vxpose.xlu0.b32.cont [10/16] 0.0, 128
  %3088 = vxpose.xlu0.b32.cont [11/16] 0.0, 128
  %3089 = vxpose.xlu0.b32.cont [12/16] 0.0, 128
  %3090 = vxpose.xlu0.b32.cont [13/16] 0.0, 128
  %3091 = vxpose.xlu0.b32.cont [14/16] 0.0, 128
  %3092 = vxpose.xlu0.b32.cont [15/16] 0.0, 128
  %3093 = vxpose.xlu0.b32.end [16/16] 0.0, 128
  %v3094 = vpop.trf.xlu0
  %v3095 = vpop.trf.xlu0
  %v3096 = vpop.trf.xlu0
  %v3097 = vpop.trf.xlu0
  %v3098 = vpop.trf.xlu0
  %v3099 = vpop.trf.xlu0
  %v3100 = vpop.trf.xlu0
  %v3101 = vpop.trf.xlu0
  %v3102 = vpop.trf.xlu0
  %v3103 = vpop.trf.xlu0
  %v3104 = vpop.trf.xlu0
  %v3105 = vpop.trf.xlu0
  %v3106 = vpop.trf.xlu0
  %v3107 = vpop.trf.xlu0
  %v3108 = vpop.trf.xlu0
  %v3109 = vpop.trf.xlu0
  %3110 = vxpose.xlu0.b32.start [1/16] %v3035, 128
  %3111 = vxpose.xlu0.b32.cont [2/16] %v3037, 128
  %3112 = vxpose.xlu0.b32.cont [3/16] %v3039, 128
  %3113 = vxpose.xlu0.b32.cont [4/16] 0.0, 128
  %3114 = vxpose.xlu0.b32.cont [5/16] 0.0, 128
  %3115 = vxpose.xlu0.b32.cont [6/16] 0.0, 128
  %3116 = vxpose.xlu0.b32.cont [7/16] 0.0, 128
  %3117 = vxpose.xlu0.b32.cont [8/16] 0.0, 128
  %3118 = vxpose.xlu0.b32.cont [9/16] 0.0, 128
  %3119 = vxpose.xlu0.b32.cont [10/16] 0.0, 128
  %3120 = vxpose.xlu0.b32.cont [11/16] 0.0, 128
  %3121 = vxpose.xlu0.b32.cont [12/16] 0.0, 128
  %3122 = vxpose.xlu0.b32.cont [13/16] 0.0, 128
  %3123 = vxpose.xlu0.b32.cont [14/16] 0.0, 128
  %3124 = vxpose.xlu0.b32.cont [15/16] 0.0, 128
  %3125 = vxpose.xlu0.b32.end [16/16] 0.0, 128
  %v3126 = vpop.trf.xlu0
  %v3127 = vpop.trf.xlu0
  %v3128 = vpop.trf.xlu0
  %v3129 = vpop.trf.xlu0
  %v3130 = vpop.trf.xlu0
  %v3131 = vpop.trf.xlu0
  %v3132 = vpop.trf.xlu0
  %v3133 = vpop.trf.xlu0
  %v3134 = vpop.trf.xlu0
  %v3135 = vpop.trf.xlu0
  %v3136 = vpop.trf.xlu0
  %v3137 = vpop.trf.xlu0
  %v3138 = vpop.trf.xlu0
  %v3139 = vpop.trf.xlu0
  %v3140 = vpop.trf.xlu0
  %v3141 = vpop.trf.xlu0
  %3142 = vxpose.xlu0.b32.start [1/16] %v3041, 128
  %3143 = vxpose.xlu0.b32.cont [2/16] %v3043, 128
  %3144 = vxpose.xlu0.b32.cont [3/16] %v3045, 128
  %3145 = vxpose.xlu0.b32.cont [4/16] 0.0, 128
  %3146 = vxpose.xlu0.b32.cont [5/16] 0.0, 128
  %3147 = vxpose.xlu0.b32.cont [6/16] 0.0, 128
  %3148 = vxpose.xlu0.b32.cont [7/16] 0.0, 128
  %3149 = vxpose.xlu0.b32.cont [8/16] 0.0, 128
  %3150 = vxpose.xlu0.b32.cont [9/16] 0.0, 128
  %3151 = vxpose.xlu0.b32.cont [10/16] 0.0, 128
  %3152 = vxpose.xlu0.b32.cont [11/16] 0.0, 128
  %3153 = vxpose.xlu0.b32.cont [12/16] 0.0, 128
  %3154 = vxpose.xlu0.b32.cont [13/16] 0.0, 128
  %3155 = vxpose.xlu0.b32.cont [14/16] 0.0, 128
  %3156 = vxpose.xlu0.b32.cont [15/16] 0.0, 128
  %3157 = vxpose.xlu0.b32.end [16/16] 0.0, 128
  %v3158 = vpop.trf.xlu0
  %v3159 = vpop.trf.xlu0
  %v3160 = vpop.trf.xlu0
  %v3161 = vpop.trf.xlu0
  %v3162 = vpop.trf.xlu0
  %v3163 = vpop.trf.xlu0
  %v3164 = vpop.trf.xlu0
  %v3165 = vpop.trf.xlu0
  %v3166 = vpop.trf.xlu0
  %v3167 = vpop.trf.xlu0
  %v3168 = vpop.trf.xlu0
  %v3169 = vpop.trf.xlu0
  %v3170 = vpop.trf.xlu0
  %v3171 = vpop.trf.xlu0
  %v3172 = vpop.trf.xlu0
  %v3173 = vpop.trf.xlu0
  %v3174 = vadd.f32 %v3023, %v3062
  %v3175 = vadd.f32 %v3025, %v3063
  %v3176 = vadd.f32 %v3027, %v3064
  %v3177 = vadd.f32 %v3029, %v3094
  %v3178 = vadd.f32 %v3031, %v3095
  %v3179 = vadd.f32 %v3033, %v3096
  %v3180 = vadd.f32 %v3035, %v3126
  %v3181 = vadd.f32 %v3037, %v3127
  %v3182 = vadd.f32 %v3039, %v3128
  %v3183 = vadd.f32 %v3041, %v3158
  %v3184 = vadd.f32 %v3043, %v3159
  %v3185 = vadd.f32 %v3045, %v3160
  %v3186 = vmul.f32 %v3174, 0.5
  %v3187 = vmul.f32 %v3175, 0.5
  %v3188 = vmul.f32 %v3176, 0.5
  %v3189 = vmul.f32 %v3177, 0.5
  %v3190 = vmul.f32 %v3178, 0.5
  %v3191 = vmul.f32 %v3179, 0.5
  %v3192 = vmul.f32 %v3180, 0.5
  %v3193 = vmul.f32 %v3181, 0.5
  %v3194 = vmul.f32 %v3182, 0.5
  %v3195 = vmul.f32 %v3183, 0.5
  %v3196 = vmul.f32 %v3184, 0.5
  %v3197 = vmul.f32 %v3185, 0.5
  %3198 = vmatprep.subr.mxu0 0.0
  %3199 = vmatpush1.msra.mxu0 0.0
  %3200 = vmatprep.subr.mxu0 0.0
  %3201 = vmatpush1.msra.mxu0 0.0
  %3202 = vmatprep.subr.mxu0 0.0
  %3203 = vmatpush1.msra.mxu0 0.0
  %3204 = vmatprep.subr.mxu0 0.0
  %3205 = vmatpush1.msra.mxu0 0.0
  %3206 = vmatprep.subr.mxu0 0.0
  %3207 = vmatpush1.msra.mxu0 %v3197
  %3208 = vmatprep.subr.mxu0 0.0
  %3209 = vmatpush1.msra.mxu0 %v3196
  %3210 = vmatprep.subr.mxu0 0.0
  %3211 = vmatpush1.msra.mxu0 %v3195
  %3212 = vmatprep.subr.mxu0 0.0
  %3213 = vmatpush1.msra.mxu0 %v3194
  %3214 = vmatprep.subr.mxu0 0.0
  %3215 = vmatpush1.msra.mxu0 %v3193
  %3216 = vmatprep.subr.mxu0 0.0
  %3217 = vmatpush1.msra.mxu0 %v3192
  %3218 = vmatprep.subr.mxu0 0.0
  %3219 = vmatpush1.msra.mxu0 %v3191
  %3220 = vmatprep.subr.mxu0 0.0
  %3221 = vmatpush1.msra.mxu0 %v3190
  %3222 = vmatprep.subr.mxu0 0.0
  %3223 = vmatpush1.msra.mxu0 %v3189
  %3224 = vmatprep.subr.mxu0 0.0
  %3225 = vmatpush1.msra.mxu0 %v3188
  %3226 = vmatprep.subr.mxu0 0.0
  %3227 = vmatpush1.msra.mxu0 %v3187
  %3228 = vmatprep.subr.mxu0 0.0
  %3229 = vmatpush1.msra.mxu0 %v3186
  %3230 = vmatprep.subr.mxu0 0.0
  %3231 = vmatpush2.msra.mxu0 0.0
  %3232 = vmatprep.subr.mxu0 0.0
  %3233 = vmatpush2.msra.mxu0 0.0
  %3234 = vmatprep.subr.mxu0 0.0
  %3235 = vmatpush2.msra.mxu0 0.0
  %3236 = vmatprep.subr.mxu0 0.0
  %3237 = vmatpush2.msra.mxu0 0.0
  %3238 = vmatprep.subr.mxu0 0.0
  %3239 = vmatpush2.msra.mxu0 0.0
  %3240 = vmatprep.subr.mxu0 0.0
  %3241 = vmatpush2.msra.mxu0 0.0
  %3242 = vmatprep.subr.mxu0 0.0
  %3243 = vmatpush2.msra.mxu0 0.0
  %3244 = vmatprep.subr.mxu0 0.0
  %3245 = vmatpush2.msra.mxu0 0.0
  %3246 = vmatprep.subr.mxu0 0.0
  %3247 = vmatpush2.msra.mxu0 0.0
  %3248 = vmatprep.subr.mxu0 0.0
  %3249 = vmatpush2.msra.mxu0 0.0
  %3250 = vmatprep.subr.mxu0 0.0
  %3251 = vmatpush2.msra.mxu0 0.0
  %3252 = vmatprep.subr.mxu0 0.0
  %3253 = vmatpush2.msra.mxu0 0.0
  %3254 = vmatprep.subr.mxu0 0.0
  %3255 = vmatpush2.msra.mxu0 0.0
  %3256 = vmatprep.subr.mxu0 0.0
  %3257 = vmatpush2.msra.mxu0 0.0
  %3258 = vmatprep.subr.mxu0 0.0
  %3259 = vmatpush2.msra.mxu0 0.0
  %3260 = vmatprep.subr.mxu0 0.0
  %3261 = vmatpush2.msra.mxu0 0.0
  %3262 = vmatprep.mubr.f32.mxu0 0.0
  %3263 = vmatmul.mubr.f32.gmra.mxu0 %v2754
  %v3264 = vpop.f32.mrf.mxu0
  %v3265 = vadd.f32 0.0, %v3264
  %v3266 = vpop.f32.mrf.mxu0
  %3267 = vmatprep.mubr.f32.mxu0 0.0
  %3268 = vmatmul.mubr.f32.gmra.mxu0 %v2757
  %v3269 = vpop.f32.mrf.mxu0
  %v3270 = vadd.f32 0.0, %v3269
  %v3271 = vpop.f32.mrf.mxu0
  %3272 = vmatprep.mubr.f32.mxu0 0.0
  %3273 = vmatmul.mubr.f32.gmra.mxu0 %v2760
  %v3274 = vpop.f32.mrf.mxu0
  %v3275 = vadd.f32 0.0, %v3274
  %v3276 = vpop.f32.mrf.mxu0
  %3277 = vmatprep.mubr.f32.mxu0 0.0
  %3278 = vmatmul.mubr.f32.gmra.mxu0 %v2763
  %v3279 = vpop.f32.mrf.mxu0
  %v3280 = vadd.f32 0.0, %v3279
  %v3281 = vpop.f32.mrf.mxu0
  %3282 = vmatprep.mubr.f32.mxu0 0.0
  %3283 = vmatmul.mubr.f32.gmra.mxu0 %v2766
  %v3284 = vpop.f32.mrf.mxu0
  %v3285 = vadd.f32 0.0, %v3284
  %v3286 = vpop.f32.mrf.mxu0
  %3287 = vmatprep.mubr.f32.mxu0 0.0
  %3288 = vmatmul.mubr.f32.gmra.mxu0 %v2769
  %v3289 = vpop.f32.mrf.mxu0
  %v3290 = vadd.f32 0.0, %v3289
  %v3291 = vpop.f32.mrf.mxu0
  %3292 = vmatprep.mubr.f32.mxu0 0.0
  %3293 = vmatmul.mubr.f32.gmra.mxu0 %v2772
  %v3294 = vpop.f32.mrf.mxu0
  %v3295 = vadd.f32 0.0, %v3294
  %v3296 = vpop.f32.mrf.mxu0
  %3297 = vmatprep.mubr.f32.mxu0 0.0
  %3298 = vmatmul.mubr.f32.gmra.mxu0 %v2775
  %v3299 = vpop.f32.mrf.mxu0
  %v3300 = vadd.f32 0.0, %v3299
  %v3301 = vpop.f32.mrf.mxu0
  %3302 = vmatprep.mubr.f32.mxu0 0.0
  %3303 = vmatmul.mubr.f32.gmra.mxu0 %v2778
  %v3304 = vpop.f32.mrf.mxu0
  %v3305 = vadd.f32 0.0, %v3304
  %v3306 = vpop.f32.mrf.mxu0
  %3307 = vmatprep.mubr.f32.mxu0 0.0
  %3308 = vmatmul.mubr.f32.gmra.mxu0 %v2781
  %v3309 = vpop.f32.mrf.mxu0
  %v3310 = vadd.f32 0.0, %v3309
  %v3311 = vpop.f32.mrf.mxu0
  %3312 = vmatprep.mubr.f32.mxu0 0.0
  %3313 = vmatmul.mubr.f32.gmra.mxu0 %v2784
  %v3314 = vpop.f32.mrf.mxu0
  %v3315 = vadd.f32 0.0, %v3314
  %v3316 = vpop.f32.mrf.mxu0
  %3317 = vmatprep.mubr.f32.mxu0 0.0
  %3318 = vmatmul.mubr.f32.gmra.mxu0 %v2787
  %v3319 = vpop.f32.mrf.mxu0
  %v3320 = vadd.f32 0.0, %v3319
  %v3321 = vpop.f32.mrf.mxu0
  %3322 = vdwg.mxu0
  %v3323 = vmul.f32 %v3265, 0.05882353
  %v3324 = vmul.f32 %v3270, 0.05882353
  %v3325 = vmul.f32 %v3275, 0.05882353
  %v3326 = vmul.f32 %v3280, 0.05882353
  %v3327 = vmul.f32 %v3285, 0.05882353
  %v3328 = vmul.f32 %v3290, 0.05882353
  %v3329 = vmul.f32 %v3295, 0.05882353
  %v3330 = vmul.f32 %v3300, 0.05882353
  %v3331 = vmul.f32 %v3305, 0.05882353
  %v3332 = vmul.f32 %v3310, 0.05882353
  %v3333 = vmul.f32 %v3315, 0.05882353
  %v3334 = vmul.f32 %v3320, 0.05882353
  %v3335 = vsub.f32 %v3186, %v3323
  %v3336 = vsub.f32 %v3187, %v3324
  %v3337 = vsub.f32 %v3188, %v3325
  %v3338 = vsub.f32 %v3189, %v3326
  %v3339 = vsub.f32 %v3190, %v3327
  %v3340 = vsub.f32 %v3191, %v3328
  %v3341 = vsub.f32 %v3192, %v3329
  %v3342 = vsub.f32 %v3193, %v3330
  %v3343 = vsub.f32 %v3194, %v3331
  %v3344 = vsub.f32 %v3195, %v3332
  %v3345 = vsub.f32 %v3196, %v3333
  %v3346 = vsub.f32 %v3197, %v3334
  %v3347 = vmax.f32 %v3335, 0.0
  %v3348 = vmax.f32 %v3336, 0.0
  %v3349 = vmax.f32 %v3337, 0.0
  %v3350 = vmax.f32 %v3338, 0.0
  %v3351 = vmax.f32 %v3339, 0.0
  %v3352 = vmax.f32 %v3340, 0.0
  %v3353 = vmax.f32 %v3341, 0.0
  %v3354 = vmax.f32 %v3342, 0.0
  %v3355 = vmax.f32 %v3343, 0.0
  %v3356 = vmax.f32 %v3344, 0.0
  %v3357 = vmax.f32 %v3345, 0.0
  %v3358 = vmax.f32 %v3346, 0.0
  %v3359 = vsel %vm795, %v3347, 0.0
  %3360 = vadd.xlane.f32.xlu0 %v3359
  %v3361 = vpop.xlane.xlu0 %3360
  %v3362 = vsel %vm795, %v3348, 0.0
  %3363 = vadd.xlane.f32.xlu0 %v3362
  %v3364 = vpop.xlane.xlu0 %3363
  %v3365 = vsel %vm795, %v3349, 0.0
  %3366 = vadd.xlane.f32.xlu0 %v3365
  %v3367 = vpop.xlane.xlu0 %3366
  %v3368 = vsel %vm795, %v3350, 0.0
  %3369 = vadd.xlane.f32.xlu0 %v3368
  %v3370 = vpop.xlane.xlu0 %3369
  %v3371 = vsel %vm795, %v3351, 0.0
  %3372 = vadd.xlane.f32.xlu0 %v3371
  %v3373 = vpop.xlane.xlu0 %3372
  %v3374 = vsel %vm795, %v3352, 0.0
  %3375 = vadd.xlane.f32.xlu0 %v3374
  %v3376 = vpop.xlane.xlu0 %3375
  %v3377 = vsel %vm795, %v3353, 0.0
  %3378 = vadd.xlane.f32.xlu0 %v3377
  %v3379 = vpop.xlane.xlu0 %3378
  %v3380 = vsel %vm795, %v3354, 0.0
  %3381 = vadd.xlane.f32.xlu0 %v3380
  %v3382 = vpop.xlane.xlu0 %3381
  %v3383 = vsel %vm795, %v3355, 0.0
  %3384 = vadd.xlane.f32.xlu0 %v3383
  %v3385 = vpop.xlane.xlu0 %3384
  %v3386 = vsel %vm795, %v3356, 0.0
  %3387 = vadd.xlane.f32.xlu0 %v3386
  %v3388 = vpop.xlane.xlu0 %3387
  %v3389 = vsel %vm795, %v3357, 0.0
  %3390 = vadd.xlane.f32.xlu0 %v3389
  %v3391 = vpop.xlane.xlu0 %3390
  %v3392 = vsel %vm795, %v3358, 0.0
  %3393 = vadd.xlane.f32.xlu0 %v3392
  %v3394 = vpop.xlane.xlu0 %3393
  %vm3395 = vcmp.eq.f32.partialorder %v3361, 0.0
  %vm3396 = vcmp.eq.f32.partialorder %v3364, 0.0
  %vm3397 = vcmp.eq.f32.partialorder %v3367, 0.0
  %vm3398 = vcmp.eq.f32.partialorder %v3370, 0.0
  %vm3399 = vcmp.eq.f32.partialorder %v3373, 0.0
  %vm3400 = vcmp.eq.f32.partialorder %v3376, 0.0
  %vm3401 = vcmp.eq.f32.partialorder %v3379, 0.0
  %vm3402 = vcmp.eq.f32.partialorder %v3382, 0.0
  %vm3403 = vcmp.eq.f32.partialorder %v3385, 0.0
  %vm3404 = vcmp.eq.f32.partialorder %v3388, 0.0
  %vm3405 = vcmp.eq.f32.partialorder %v3391, 0.0
  %vm3406 = vcmp.eq.f32.partialorder %v3394, 0.0
  %v3407 = vsel %vm3395, 1.0, %v3361
  %v3408 = vsel %vm3396, 1.0, %v3364
  %v3409 = vsel %vm3397, 1.0, %v3367
  %v3410 = vsel %vm3398, 1.0, %v3370
  %v3411 = vsel %vm3399, 1.0, %v3373
  %v3412 = vsel %vm3400, 1.0, %v3376
  %v3413 = vsel %vm3401, 1.0, %v3379
  %v3414 = vsel %vm3402, 1.0, %v3382
  %v3415 = vsel %vm3403, 1.0, %v3385
  %v3416 = vsel %vm3404, 1.0, %v3388
  %v3417 = vsel %vm3405, 1.0, %v3391
  %v3418 = vsel %vm3406, 1.0, %v3394
  %v3419 = vrcp.pop %v3407
  %v3420 = vmul.f32 %v3347, %v3419
  %v3421 = vrcp.pop %v3408
  %v3422 = vmul.f32 %v3348, %v3421
  %v3423 = vrcp.pop %v3409
  %v3424 = vmul.f32 %v3349, %v3423
  %v3425 = vrcp.pop %v3410
  %v3426 = vmul.f32 %v3350, %v3425
  %v3427 = vrcp.pop %v3411
  %v3428 = vmul.f32 %v3351, %v3427
  %v3429 = vrcp.pop %v3412
  %v3430 = vmul.f32 %v3352, %v3429
  %v3431 = vrcp.pop %v3413
  %v3432 = vmul.f32 %v3353, %v3431
  %v3433 = vrcp.pop %v3414
  %v3434 = vmul.f32 %v3354, %v3433
  %v3435 = vrcp.pop %v3415
  %v3436 = vmul.f32 %v3355, %v3435
  %v3437 = vrcp.pop %v3416
  %v3438 = vmul.f32 %v3356, %v3437
  %v3439 = vrcp.pop %v3417
  %v3440 = vmul.f32 %v3357, %v3439
  %v3441 = vrcp.pop %v3418
  %v3442 = vmul.f32 %v3358, %v3441
  %3446 = vrot.lane.b32.xlu0 %v2739, 64
  %v3447 = vpop.permute.xlu0 %3446
  %3448 = vrot.lane.b32.xlu0 %v2744, 64
  %v3449 = vpop.permute.xlu0 %3448
  %3450 = vrot.lane.b32.xlu0 %v2749, 64
  %v3451 = vpop.permute.xlu0 %3450
  %v3456 = vsel %vm795, %v3420, 0
  %v3459 = vsel %vm795, %v3422, 0
  %v3462 = vsel %vm795, %v3424, 0
  %v3465 = vsel %vm795, %v3426, 0
  %v3468 = vsel %vm795, %v3428, 0
  %v3471 = vsel %vm795, %v3430, 0
  %v3474 = vsel %vm795, %v3432, 0
  %v3477 = vsel %vm795, %v3434, 0
  %v3480 = vsel %vm795, %v3436, 0
  %v3483 = vsel %vm795, %v3438, 0
  %v3486 = vsel %vm795, %v3440, 0
  %v3489 = vsel %vm795, %v3442, 0
  %3491 = vmatprep.subr.mxu0 0.0
  %3492 = vmatpush1.msra.mxu0 0.0
  %3493 = vmatprep.subr.mxu0 0.0
  %3494 = vmatpush1.msra.mxu0 0.0
  %3495 = vmatprep.subr.mxu0 0.0
  %3496 = vmatpush1.msra.mxu0 0.0
  %3497 = vmatprep.subr.mxu0 0.0
  %3498 = vmatpush1.msra.mxu0 0.0
  %3499 = vmatprep.subr.mxu0 0.0
  %3500 = vmatpush1.msra.mxu0 0.0
  %3501 = vmatprep.subr.mxu0 0.0
  %3502 = vmatpush1.msra.mxu0 0.0
  %3503 = vmatprep.subr.mxu0 0.0
  %3504 = vmatpush1.msra.mxu0 0.0
  %3505 = vmatprep.subr.mxu0 0.0
  %3506 = vmatpush1.msra.mxu0 0.0
  %3507 = vmatprep.subr.mxu0 0.0
  %3508 = vmatpush1.msra.mxu0 0.0
  %3509 = vmatprep.subr.mxu0 0.0
  %3510 = vmatpush1.msra.mxu0 0.0
  %3511 = vmatprep.subr.mxu0 0.0
  %3512 = vmatpush1.msra.mxu0 0.0
  %3513 = vmatprep.subr.mxu0 0.0
  %3514 = vmatpush1.msra.mxu0 0.0
  %3515 = vmatprep.subr.mxu0 0.0
  %3516 = vmatpush1.msra.mxu0 0.0
  %3517 = vmatprep.subr.mxu0 0.0
  %3518 = vmatpush1.msra.mxu0 %v3451
  %3519 = vmatprep.subr.mxu0 0.0
  %3520 = vmatpush1.msra.mxu0 %v3449
  %3521 = vmatprep.subr.mxu0 0.0
  %3522 = vmatpush1.msra.mxu0 %v3447
  %3523 = vmatprep.subr.mxu0 0.0
  %3524 = vmatpush2.msra.mxu0 0.0
  %3525 = vmatprep.subr.mxu0 0.0
  %3526 = vmatpush2.msra.mxu0 0.0
  %3527 = vmatprep.subr.mxu0 0.0
  %3528 = vmatpush2.msra.mxu0 0.0
  %3529 = vmatprep.subr.mxu0 0.0
  %3530 = vmatpush2.msra.mxu0 0.0
  %3531 = vmatprep.subr.mxu0 0.0
  %3532 = vmatpush2.msra.mxu0 0.0
  %3533 = vmatprep.subr.mxu0 0.0
  %3534 = vmatpush2.msra.mxu0 0.0
  %3535 = vmatprep.subr.mxu0 0.0
  %3536 = vmatpush2.msra.mxu0 0.0
  %3537 = vmatprep.subr.mxu0 0.0
  %3538 = vmatpush2.msra.mxu0 0.0
  %3539 = vmatprep.subr.mxu0 0.0
  %3540 = vmatpush2.msra.mxu0 0.0
  %3541 = vmatprep.subr.mxu0 0.0
  %3542 = vmatpush2.msra.mxu0 0.0
  %3543 = vmatprep.subr.mxu0 0.0
  %3544 = vmatpush2.msra.mxu0 0.0
  %3545 = vmatprep.subr.mxu0 0.0
  %3546 = vmatpush2.msra.mxu0 0.0
  %3547 = vmatprep.subr.mxu0 0.0
  %3548 = vmatpush2.msra.mxu0 0.0
  %3549 = vmatprep.subr.mxu0 0.0
  %3550 = vmatpush2.msra.mxu0 0.0
  %3551 = vmatprep.subr.mxu0 0.0
  %3552 = vmatpush2.msra.mxu0 0.0
  %3553 = vmatprep.subr.mxu0 0.0
  %3554 = vmatpush2.msra.mxu0 0.0
  %3555 = vmatprep.mubr.f32.mxu0 0.0
  %3556 = vmatmul.mubr.f32.gmra.mxu0 %v3456
  %v3557 = vpop.f32.mrf.mxu0
  %v3558 = vadd.f32 0.0, %v3557
  %v3559 = vpop.f32.mrf.mxu0
  %3560 = vmatprep.mubr.f32.mxu0 0.0
  %3561 = vmatmul.mubr.f32.gmra.mxu0 %v3459
  %v3562 = vpop.f32.mrf.mxu0
  %v3563 = vadd.f32 0.0, %v3562
  %v3564 = vpop.f32.mrf.mxu0
  %3565 = vmatprep.mubr.f32.mxu0 0.0
  %3566 = vmatmul.mubr.f32.gmra.mxu0 %v3462
  %v3567 = vpop.f32.mrf.mxu0
  %v3568 = vadd.f32 0.0, %v3567
  %v3569 = vpop.f32.mrf.mxu0
  %3570 = vmatprep.mubr.f32.mxu0 0.0
  %3571 = vmatmul.mubr.f32.gmra.mxu0 %v3465
  %v3572 = vpop.f32.mrf.mxu0
  %v3573 = vadd.f32 0.0, %v3572
  %v3574 = vpop.f32.mrf.mxu0
  %3575 = vmatprep.mubr.f32.mxu0 0.0
  %3576 = vmatmul.mubr.f32.gmra.mxu0 %v3468
  %v3577 = vpop.f32.mrf.mxu0
  %v3578 = vadd.f32 0.0, %v3577
  %v3579 = vpop.f32.mrf.mxu0
  %3580 = vmatprep.mubr.f32.mxu0 0.0
  %3581 = vmatmul.mubr.f32.gmra.mxu0 %v3471
  %v3582 = vpop.f32.mrf.mxu0
  %v3583 = vadd.f32 0.0, %v3582
  %v3584 = vpop.f32.mrf.mxu0
  %3585 = vmatprep.mubr.f32.mxu0 0.0
  %3586 = vmatmul.mubr.f32.gmra.mxu0 %v3474
  %v3587 = vpop.f32.mrf.mxu0
  %v3588 = vadd.f32 0.0, %v3587
  %v3589 = vpop.f32.mrf.mxu0
  %3590 = vmatprep.mubr.f32.mxu0 0.0
  %3591 = vmatmul.mubr.f32.gmra.mxu0 %v3477
  %v3592 = vpop.f32.mrf.mxu0
  %v3593 = vadd.f32 0.0, %v3592
  %v3594 = vpop.f32.mrf.mxu0
  %3595 = vmatprep.mubr.f32.mxu0 0.0
  %3596 = vmatmul.mubr.f32.gmra.mxu0 %v3480
  %v3597 = vpop.f32.mrf.mxu0
  %v3598 = vadd.f32 0.0, %v3597
  %v3599 = vpop.f32.mrf.mxu0
  %3600 = vmatprep.mubr.f32.mxu0 0.0
  %3601 = vmatmul.mubr.f32.gmra.mxu0 %v3483
  %v3602 = vpop.f32.mrf.mxu0
  %v3603 = vadd.f32 0.0, %v3602
  %v3604 = vpop.f32.mrf.mxu0
  %3605 = vmatprep.mubr.f32.mxu0 0.0
  %3606 = vmatmul.mubr.f32.gmra.mxu0 %v3486
  %v3607 = vpop.f32.mrf.mxu0
  %v3608 = vadd.f32 0.0, %v3607
  %v3609 = vpop.f32.mrf.mxu0
  %3610 = vmatprep.mubr.f32.mxu0 0.0
  %3611 = vmatmul.mubr.f32.gmra.mxu0 %v3489
  %v3612 = vpop.f32.mrf.mxu0
  %v3613 = vadd.f32 0.0, %v3612
  %v3614 = vpop.f32.mrf.mxu0
  %3615 = vdwg.mxu0
  %v3616 = vmul.f32 %v3558, %v203
  %v3617 = vmul.f32 %v3563, %v203
  %v3618 = vmul.f32 %v3568, %v203
  %v3619 = vadd.f32 %v3616, 0.0
  %v3620 = vadd.f32 %v3617, 0.0
  %v3621 = vadd.f32 %v3618, 0.0
  %v3622 = vmul.f32 %v3573, %v208
  %v3623 = vmul.f32 %v3578, %v208
  %v3624 = vmul.f32 %v3583, %v208
  %v3625 = vadd.f32 %v3619, %v3622
  %v3626 = vadd.f32 %v3620, %v3623
  %v3627 = vadd.f32 %v3621, %v3624
  %v3628 = vmul.f32 %v3588, %v213
  %v3629 = vmul.f32 %v3593, %v213
  %v3630 = vmul.f32 %v3598, %v213
  %v3631 = vadd.f32 %v3625, %v3628
  %v3632 = vadd.f32 %v3626, %v3629
  %v3633 = vadd.f32 %v3627, %v3630
  %v3634 = vmul.f32 %v3603, %v218
  %v3635 = vmul.f32 %v3608, %v218
  %v3636 = vmul.f32 %v3613, %v218
  %v3637 = vadd.f32 %v3631, %v3634
  %v3638 = vadd.f32 %v3632, %v3635
  %v3639 = vadd.f32 %v3633, %v3636
  %v3640 = vlaneseq
  %v3641 = vshrl.u32 %v3640, 7
  %v3642 = vsub.s32 0, %v3641
  %v3643 = vrot.slane %v2589, %v3642
  %v3645 = vsel %vm371, %v3637, 0
  %v3648 = vsel %vm371, %v3638, 0
  %v3651 = vsel %vm371, %v3639, 0
  %3653 = vmatprep.subr.mxu0 0.0
  %3654 = vmatpush1.msra.mxu0 0.0
  %3655 = vmatprep.subr.mxu0 0.0
  %3656 = vmatpush1.msra.mxu0 0.0
  %3657 = vmatprep.subr.mxu0 0.0
  %3658 = vmatpush1.msra.mxu0 0.0
  %3659 = vmatprep.subr.mxu0 0.0
  %3660 = vmatpush1.msra.mxu0 0.0
  %3661 = vmatprep.subr.mxu0 0.0
  %3662 = vmatpush1.msra.mxu0 0.0
  %3663 = vmatprep.subr.mxu0 0.0
  %3664 = vmatpush1.msra.mxu0 0.0
  %3665 = vmatprep.subr.mxu0 0.0
  %3666 = vmatpush1.msra.mxu0 0.0
  %3667 = vmatprep.subr.mxu0 0.0
  %3668 = vmatpush1.msra.mxu0 0.0
  %3669 = vmatprep.subr.mxu0 0.0
  %3670 = vmatpush1.msra.mxu0 0.0
  %3671 = vmatprep.subr.mxu0 0.0
  %3672 = vmatpush1.msra.mxu0 0.0
  %3673 = vmatprep.subr.mxu0 0.0
  %3674 = vmatpush1.msra.mxu0 0.0
  %3675 = vmatprep.subr.mxu0 0.0
  %3676 = vmatpush1.msra.mxu0 0.0
  %3677 = vmatprep.subr.mxu0 0.0
  %3678 = vmatpush1.msra.mxu0 %v2588
  %3679 = vmatprep.subr.mxu0 0.0
  %3680 = vmatpush1.msra.mxu0 %v2587
  %3681 = vmatprep.subr.mxu0 0.0
  %3682 = vmatpush1.msra.mxu0 %v2586
  %3683 = vmatprep.subr.mxu0 0.0
  %3684 = vmatpush1.msra.mxu0 %v2585
  %3685 = vmatprep.subr.mxu0 0.0
  %3686 = vmatpush2.msra.mxu0 0.0
  %3687 = vmatprep.subr.mxu0 0.0
  %3688 = vmatpush2.msra.mxu0 0.0
  %3689 = vmatprep.subr.mxu0 0.0
  %3690 = vmatpush2.msra.mxu0 0.0
  %3691 = vmatprep.subr.mxu0 0.0
  %3692 = vmatpush2.msra.mxu0 0.0
  %3693 = vmatprep.subr.mxu0 0.0
  %3694 = vmatpush2.msra.mxu0 0.0
  %3695 = vmatprep.subr.mxu0 0.0
  %3696 = vmatpush2.msra.mxu0 0.0
  %3697 = vmatprep.subr.mxu0 0.0
  %3698 = vmatpush2.msra.mxu0 0.0
  %3699 = vmatprep.subr.mxu0 0.0
  %3700 = vmatpush2.msra.mxu0 0.0
  %3701 = vmatprep.subr.mxu0 0.0
  %3702 = vmatpush2.msra.mxu0 0.0
  %3703 = vmatprep.subr.mxu0 0.0
  %3704 = vmatpush2.msra.mxu0 0.0
  %3705 = vmatprep.subr.mxu0 0.0
  %3706 = vmatpush2.msra.mxu0 0.0
  %3707 = vmatprep.subr.mxu0 0.0
  %3708 = vmatpush2.msra.mxu0 0.0
  %3709 = vmatprep.subr.mxu0 0.0
  %3710 = vmatpush2.msra.mxu0 0.0
  %3711 = vmatprep.subr.mxu0 0.0
  %3712 = vmatpush2.msra.mxu0 0.0
  %3713 = vmatprep.subr.mxu0 0.0
  %3714 = vmatpush2.msra.mxu0 0.0
  %3715 = vmatprep.subr.mxu0 0.0
  %3716 = vmatpush2.msra.mxu0 0.0
  %3717 = vmatprep.mubr.f32.mxu0 0.0
  %3718 = vmatmul.mubr.f32.gmra.mxu0 %v3645
  %v3719 = vpop.f32.mrf.mxu0
  %v3720 = vadd.f32 %v3643, %v3719
  %v3721 = vpop.f32.mrf.mxu0
  %3722 = vmatprep.mubr.f32.mxu0 0.0
  %3723 = vmatmul.mubr.f32.gmra.mxu0 %v3648
  %v3724 = vpop.f32.mrf.mxu0
  %v3725 = vadd.f32 %v3643, %v3724
  %v3726 = vpop.f32.mrf.mxu0
  %3727 = vmatprep.mubr.f32.mxu0 0.0
  %3728 = vmatmul.mubr.f32.gmra.mxu0 %v3651
  %v3729 = vpop.f32.mrf.mxu0
  %v3730 = vadd.f32 %v3643, %v3729
  %v3731 = vpop.f32.mrf.mxu0
  %3732 = vdwg.mxu0
  %v3733 = vsel %vm371, %v3720, 0.0
  %3734 = vadd.xlane.f32.xlu0 %v3733
  %v3735 = vpop.xlane.xlu0 %3734
  %v3736 = vsel %vm371, %v3725, 0.0
  %3737 = vadd.xlane.f32.xlu0 %v3736
  %v3738 = vpop.xlane.xlu0 %3737
  %v3739 = vsel %vm371, %v3730, 0.0
  %3740 = vadd.xlane.f32.xlu0 %v3739
  %v3741 = vpop.xlane.xlu0 %3740
  %v3742 = vmul.f32 %v3735, %v381
  %v3743 = vmul.f32 %v3738, %v381
  %v3744 = vmul.f32 %v3741, %v381
  %v3745 = vsub.f32 %v3720, %v3742
  %v3746 = vsub.f32 %v3725, %v3743
  %v3747 = vsub.f32 %v3730, %v3744
  %v3748 = vmul.f32 %v3745, %v3745
  %v3749 = vmul.f32 %v3746, %v3746
  %v3750 = vmul.f32 %v3747, %v3747
  %v3751 = vsel %vm371, %v3748, 0.0
  %3752 = vadd.xlane.f32.xlu0 %v3751
  %v3753 = vpop.xlane.xlu0 %3752
  %v3754 = vsel %vm371, %v3749, 0.0
  %3755 = vadd.xlane.f32.xlu0 %v3754
  %v3756 = vpop.xlane.xlu0 %3755
  %v3757 = vsel %vm371, %v3750, 0.0
  %3758 = vadd.xlane.f32.xlu0 %v3757
  %v3759 = vpop.xlane.xlu0 %3758
  %v3760 = vmul.f32 %v3753, %v381
  %v3761 = vmul.f32 %v3756, %v381
  %v3762 = vmul.f32 %v3759, %v381
  %v3763 = vadd.f32 %v3760, 1e-05
  %v3764 = vadd.f32 %v3761, 1e-05
  %v3765 = vadd.f32 %v3762, 1e-05
  %v3766 = vrsqrt.pop %v3763
  %v3767 = vrsqrt.pop %v3764
  %v3768 = vrsqrt.pop %v3765
  %v3769 = vmul.f32 %v3745, %v3766
  %v3770 = vmul.f32 %v3746, %v3767
  %v3771 = vmul.f32 %v3747, %v3768
  %3772 = vrot.lane.b32.xlu0 %v415, 64
  %v3773 = vpop.permute.xlu0 %3772
  %v3775 = vmul.f32 %v3769, %v3773
  %v3776 = vmul.f32 %v3770, %v3773
  %v3777 = vmul.f32 %v3771, %v3773
  %3778 = vrot.lane.b32.xlu0 %v415, 32
  %v3779 = vpop.permute.xlu0 %3778
  %v3781 = vadd.f32 %v3775, %v3779
  %v3782 = vadd.f32 %v3776, %v3779
  %v3783 = vadd.f32 %v3777, %v3779
  %v3785 = vsel %vm371, %v3781, 0
  %v3788 = vsel %vm371, %v3782, 0
  %v3791 = vsel %vm371, %v3783, 0
  %3793 = vmatprep.subr.mxu0 0.0
  %3794 = vmatpush1.msra.mxu0 0.0
  %3795 = vmatprep.subr.mxu0 0.0
  %3796 = vmatpush1.msra.mxu0 0.0
  %3797 = vmatprep.subr.mxu0 0.0
  %3798 = vmatpush1.msra.mxu0 0.0
  %3799 = vmatprep.subr.mxu0 0.0
  %3800 = vmatpush1.msra.mxu0 0.0
  %3801 = vmatprep.subr.mxu0 0.0
  %3802 = vmatpush1.msra.mxu0 0.0
  %3803 = vmatprep.subr.mxu0 0.0
  %3804 = vmatpush1.msra.mxu0 0.0
  %3805 = vmatprep.subr.mxu0 0.0
  %3806 = vmatpush1.msra.mxu0 0.0
  %3807 = vmatprep.subr.mxu0 0.0
  %3808 = vmatpush1.msra.mxu0 0.0
  %3809 = vmatprep.subr.mxu0 0.0
  %3810 = vmatpush1.msra.mxu0 0.0
  %3811 = vmatprep.subr.mxu0 0.0
  %3812 = vmatpush1.msra.mxu0 0.0
  %3813 = vmatprep.subr.mxu0 0.0
  %3814 = vmatpush1.msra.mxu0 0.0
  %3815 = vmatprep.subr.mxu0 0.0
  %3816 = vmatpush1.msra.mxu0 0.0
  %3817 = vmatprep.subr.mxu0 0.0
  %3818 = vmatpush1.msra.mxu0 %v2593
  %3819 = vmatprep.subr.mxu0 0.0
  %3820 = vmatpush1.msra.mxu0 %v2592
  %3821 = vmatprep.subr.mxu0 0.0
  %3822 = vmatpush1.msra.mxu0 %v2591
  %3823 = vmatprep.subr.mxu0 0.0
  %3824 = vmatpush1.msra.mxu0 %v2590
  %3825 = vmatprep.subr.mxu0 0.0
  %3826 = vmatpush2.msra.mxu0 0.0
  %3827 = vmatprep.subr.mxu0 0.0
  %3828 = vmatpush2.msra.mxu0 0.0
  %3829 = vmatprep.subr.mxu0 0.0
  %3830 = vmatpush2.msra.mxu0 0.0
  %3831 = vmatprep.subr.mxu0 0.0
  %3832 = vmatpush2.msra.mxu0 0.0
  %3833 = vmatprep.subr.mxu0 0.0
  %3834 = vmatpush2.msra.mxu0 0.0
  %3835 = vmatprep.subr.mxu0 0.0
  %3836 = vmatpush2.msra.mxu0 0.0
  %3837 = vmatprep.subr.mxu0 0.0
  %3838 = vmatpush2.msra.mxu0 0.0
  %3839 = vmatprep.subr.mxu0 0.0
  %3840 = vmatpush2.msra.mxu0 0.0
  %3841 = vmatprep.subr.mxu0 0.0
  %3842 = vmatpush2.msra.mxu0 0.0
  %3843 = vmatprep.subr.mxu0 0.0
  %3844 = vmatpush2.msra.mxu0 0.0
  %3845 = vmatprep.subr.mxu0 0.0
  %3846 = vmatpush2.msra.mxu0 0.0
  %3847 = vmatprep.subr.mxu0 0.0
  %3848 = vmatpush2.msra.mxu0 0.0
  %3849 = vmatprep.subr.mxu0 0.0
  %3850 = vmatpush2.msra.mxu0 0.0
  %3851 = vmatprep.subr.mxu0 0.0
  %3852 = vmatpush2.msra.mxu0 0.0
  %3853 = vmatprep.subr.mxu0 0.0
  %3854 = vmatpush2.msra.mxu0 0.0
  %3855 = vmatprep.subr.mxu0 0.0
  %3856 = vmatpush2.msra.mxu0 0.0
  %3857 = vmatprep.mubr.f32.mxu0 0.0
  %3858 = vmatmul.mubr.f32.gmra.mxu0 %v3785
  %v3859 = vpop.f32.mrf.mxu0
  %v3860 = vadd.f32 0.0, %v3859
  %v3861 = vpop.f32.mrf.mxu0
  %3862 = vmatprep.mubr.f32.mxu0 0.0
  %3863 = vmatmul.mubr.f32.gmra.mxu0 %v3788
  %v3864 = vpop.f32.mrf.mxu0
  %v3865 = vadd.f32 0.0, %v3864
  %v3866 = vpop.f32.mrf.mxu0
  %3867 = vmatprep.mubr.f32.mxu0 0.0
  %3868 = vmatmul.mubr.f32.gmra.mxu0 %v3791
  %v3869 = vpop.f32.mrf.mxu0
  %v3870 = vadd.f32 0.0, %v3869
  %v3871 = vpop.f32.mrf.mxu0
  %3872 = vdwg.mxu0
  %v3873 = vmul.f32 %v3860, %v3860
  %v3874 = vmul.f32 %v3865, %v3865
  %v3875 = vmul.f32 %v3870, %v3870
  %vm3876 = vcmask 130048
  %v3877 = vsel %vm3876, %v3873, 0.0
  %3878 = vadd.xlane.f32.xlu0 %v3877
  %v3879 = vpop.xlane.xlu0 %3878
  %v3880 = vsel %vm3876, %v3874, 0.0
  %3881 = vadd.xlane.f32.xlu0 %v3880
  %v3882 = vpop.xlane.xlu0 %3881
  %v3883 = vsel %vm3876, %v3875, 0.0
  %3884 = vadd.xlane.f32.xlu0 %v3883
  %v3885 = vpop.xlane.xlu0 %3884
  %v3886 = vrsqrt.pop %v3879
  %v3887 = vrsqrt.pop %v3882
  %v3888 = vrsqrt.pop %v3885
  %v3889 = vmul.f32 %v3860, %v3886
  %v3890 = vmul.f32 %v3865, %v3887
  %v3891 = vmul.f32 %v3870, %v3888
  %3893 = vrot.lane.b32.xlu0 %v2605, 48
  %v3894 = vpop.permute.xlu0 %3893
  %v3896 = vsel %vm3876, %v3889, 0
  %v3899 = vsel %vm3876, %v3890, 0
  %v3902 = vsel %vm3876, %v3891, 0
  %v3904 = vsel %vm3876, %v3894, 0
  %3906 = vmatprep.subr.mxu0 0.0
  %3907 = vmatpush1.xpose.msra.mxu0 0.0
  %3908 = vmatprep.subr.mxu0 0.0
  %3909 = vmatpush1.xpose.msra.mxu0 0.0
  %3910 = vmatprep.subr.mxu0 0.0
  %3911 = vmatpush1.xpose.msra.mxu0 0.0
  %3912 = vmatprep.subr.mxu0 0.0
  %3913 = vmatpush1.xpose.msra.mxu0 0.0
  %3914 = vmatprep.subr.mxu0 0.0
  %3915 = vmatpush1.xpose.msra.mxu0 0.0
  %3916 = vmatprep.subr.mxu0 0.0
  %3917 = vmatpush1.xpose.msra.mxu0 0.0
  %3918 = vmatprep.subr.mxu0 0.0
  %3919 = vmatpush1.xpose.msra.mxu0 0.0
  %3920 = vmatprep.subr.mxu0 0.0
  %3921 = vmatpush1.xpose.msra.mxu0 0.0
  %3922 = vmatprep.subr.mxu0 0.0
  %3923 = vmatpush1.xpose.msra.mxu0 0.0
  %3924 = vmatprep.subr.mxu0 0.0
  %3925 = vmatpush1.xpose.msra.mxu0 0.0
  %3926 = vmatprep.subr.mxu0 0.0
  %3927 = vmatpush1.xpose.msra.mxu0 0.0
  %3928 = vmatprep.subr.mxu0 0.0
  %3929 = vmatpush1.xpose.msra.mxu0 0.0
  %3930 = vmatprep.subr.mxu0 0.0
  %3931 = vmatpush1.xpose.msra.mxu0 0.0
  %3932 = vmatprep.subr.mxu0 0.0
  %3933 = vmatpush1.xpose.msra.mxu0 0.0
  %3934 = vmatprep.subr.mxu0 0.0
  %3935 = vmatpush1.xpose.msra.mxu0 0.0
  %3936 = vmatprep.subr.mxu0 0.0
  %3937 = vmatpush1.xpose.msra.mxu0 %v3904
  %3938 = vmatprep.subr.mxu0 0.0
  %3939 = vmatpush2.xpose.msra.mxu0 0.0
  %3940 = vmatprep.subr.mxu0 0.0
  %3941 = vmatpush2.xpose.msra.mxu0 0.0
  %3942 = vmatprep.subr.mxu0 0.0
  %3943 = vmatpush2.xpose.msra.mxu0 0.0
  %3944 = vmatprep.subr.mxu0 0.0
  %3945 = vmatpush2.xpose.msra.mxu0 0.0
  %3946 = vmatprep.subr.mxu0 0.0
  %3947 = vmatpush2.xpose.msra.mxu0 0.0
  %3948 = vmatprep.subr.mxu0 0.0
  %3949 = vmatpush2.xpose.msra.mxu0 0.0
  %3950 = vmatprep.subr.mxu0 0.0
  %3951 = vmatpush2.xpose.msra.mxu0 0.0
  %3952 = vmatprep.subr.mxu0 0.0
  %3953 = vmatpush2.xpose.msra.mxu0 0.0
  %3954 = vmatprep.subr.mxu0 0.0
  %3955 = vmatpush2.xpose.msra.mxu0 0.0
  %3956 = vmatprep.subr.mxu0 0.0
  %3957 = vmatpush2.xpose.msra.mxu0 0.0
  %3958 = vmatprep.subr.mxu0 0.0
  %3959 = vmatpush2.xpose.msra.mxu0 0.0
  %3960 = vmatprep.subr.mxu0 0.0
  %3961 = vmatpush2.xpose.msra.mxu0 0.0
  %3962 = vmatprep.subr.mxu0 0.0
  %3963 = vmatpush2.xpose.msra.mxu0 0.0
  %3964 = vmatprep.subr.mxu0 0.0
  %3965 = vmatpush2.xpose.msra.mxu0 0.0
  %3966 = vmatprep.subr.mxu0 0.0
  %3967 = vmatpush2.xpose.msra.mxu0 0.0
  %3968 = vmatprep.subr.mxu0 0.0
  %3969 = vmatpush2.xpose.msra.mxu0 0.0
  %3970 = vmatprep.mubr.f32.mxu0 0.0
  %3971 = vmatmul.mubr.f32.gmra.mxu0 %v3896
  %v3972 = vpop.f32.mrf.mxu0
  %v3973 = vadd.f32 0.0, %v3972
  %v3974 = vpop.f32.mrf.mxu0
  %3975 = vmatprep.mubr.f32.mxu0 0.0
  %3976 = vmatmul.mubr.f32.gmra.mxu0 %v3899
  %v3977 = vpop.f32.mrf.mxu0
  %v3978 = vadd.f32 0.0, %v3977
  %v3979 = vpop.f32.mrf.mxu0
  %3980 = vmatprep.mubr.f32.mxu0 0.0
  %3981 = vmatmul.mubr.f32.gmra.mxu0 %v3902
  %v3982 = vpop.f32.mrf.mxu0
  %v3983 = vadd.f32 0.0, %v3982
  %v3984 = vpop.f32.mrf.mxu0
  %3985 = vdwg.mxu0
  %v3986 = vmul.f32 %v3973, 100.0
  %v3987 = vmul.f32 %v3978, 100.0
  %v3988 = vmul.f32 %v3983, 100.0
  %vm3989 = vcmask 48128
  %v3990 = vsel %vm3989, %v3986, -inf
  %3991 = vmax.xlane.f32.xlu0 %v3990
  %v3992 = vpop.xlane.xlu0 %3991
  %v3993 = vsel %vm3989, %v3987, -inf
  %3994 = vmax.xlane.f32.xlu0 %v3993
  %v3995 = vpop.xlane.xlu0 %3994
  %v3996 = vsel %vm3989, %v3988, -inf
  %3997 = vmax.xlane.f32.xlu0 %v3996
  %v3998 = vpop.xlane.xlu0 %3997
  %v3999 = vsub.f32 %v3986, %v3992
  %v4000 = vsub.f32 %v3987, %v3995
  %v4001 = vsub.f32 %v3988, %v3998
  %v4002 = vmul.f32 %v3999, 1.442695
  %v4003 = vpow.pop %v4002
  %v4004 = vmul.f32 %v4000, 1.442695
  %v4005 = vpow.pop %v4004
  %v4006 = vmul.f32 %v4001, 1.442695
  %v4007 = vpow.pop %v4006
  %v4008 = vsel %vm3989, %v4003, 0.0
  %4009 = vadd.xlane.f32.xlu0 %v4008
  %v4010 = vpop.xlane.xlu0 %4009
  %v4011 = vsel %vm3989, %v4005, 0.0
  %4012 = vadd.xlane.f32.xlu0 %v4011
  %v4013 = vpop.xlane.xlu0 %4012
  %v4014 = vsel %vm3989, %v4007, 0.0
  %4015 = vadd.xlane.f32.xlu0 %v4014
  %v4016 = vpop.xlane.xlu0 %4015
  %v4017 = vrcp.pop %v4010
  %v4018 = vrcp.pop %v4013
  %v4019 = vrcp.pop %v4016
  %v4020 = vmul.f32 %v4003, %v4017
  %v4021 = vmul.f32 %v4005, %v4018
  %v4022 = vmul.f32 %v4007, %v4019
  %v4023 = vsel %vm371, %v1585, 0.0
  %4024 = vadd.xlane.f32.xlu0 %v4023
  %v4025 = vpop.xlane.xlu0 %4024
  %v4026 = vsel %vm371, %v1586, 0.0
  %4027 = vadd.xlane.f32.xlu0 %v4026
  %v4028 = vpop.xlane.xlu0 %4027
  %v4029 = vsel %vm371, %v1587, 0.0
  %4030 = vadd.xlane.f32.xlu0 %v4029
  %v4031 = vpop.xlane.xlu0 %4030
  %v4032 = vmul.f32 %v4025, %v381
  %v4033 = vmul.f32 %v4028, %v381
  %v4034 = vmul.f32 %v4031, %v381
  %v4035 = vsub.f32 %v1585, %v4032
  %v4036 = vsub.f32 %v1586, %v4033
  %v4037 = vsub.f32 %v1587, %v4034
  %v4038 = vmul.f32 %v4035, %v4035
  %v4039 = vmul.f32 %v4036, %v4036
  %v4040 = vmul.f32 %v4037, %v4037
  %v4041 = vsel %vm371, %v4038, 0.0
  %4042 = vadd.xlane.f32.xlu0 %v4041
  %v4043 = vpop.xlane.xlu0 %4042
  %v4044 = vsel %vm371, %v4039, 0.0
  %4045 = vadd.xlane.f32.xlu0 %v4044
  %v4046 = vpop.xlane.xlu0 %4045
  %v4047 = vsel %vm371, %v4040, 0.0
  %4048 = vadd.xlane.f32.xlu0 %v4047
  %v4049 = vpop.xlane.xlu0 %4048
  %v4050 = vmul.f32 %v4043, %v381
  %v4051 = vmul.f32 %v4046, %v381
  %v4052 = vmul.f32 %v4049, %v381
  %v4053 = vadd.f32 %v4050, 1e-05
  %v4054 = vadd.f32 %v4051, 1e-05
  %v4055 = vadd.f32 %v4052, 1e-05
  %v4056 = vrsqrt.pop %v4053
  %v4057 = vrsqrt.pop %v4054
  %v4058 = vrsqrt.pop %v4055
  %v4059 = vmul.f32 %v4035, %v4056
  %v4060 = vmul.f32 %v4036, %v4057
  %v4061 = vmul.f32 %v4037, %v4058
  %v4062 = vmul.f32 %v4059, %v2648
  %v4063 = vmul.f32 %v4060, %v2648
  %v4064 = vmul.f32 %v4061, %v2648
  %v4065 = vadd.f32 %v4062, %v2654
  %v4066 = vadd.f32 %v4063, %v2654
  %v4067 = vadd.f32 %v4064, %v2654
  %v4069 = vsel %vm371, %v4065, 0
  %v4072 = vsel %vm371, %v4066, 0
  %v4075 = vsel %vm371, %v4067, 0
  %4077 = vmatprep.subr.mxu0 0.0
  %4078 = vmatpush1.msra.mxu0 0.0
  %4079 = vmatprep.subr.mxu0 0.0
  %4080 = vmatpush1.msra.mxu0 0.0
  %4081 = vmatprep.subr.mxu0 0.0
  %4082 = vmatpush1.msra.mxu0 0.0
  %4083 = vmatprep.subr.mxu0 0.0
  %4084 = vmatpush1.msra.mxu0 0.0
  %4085 = vmatprep.subr.mxu0 0.0
  %4086 = vmatpush1.msra.mxu0 0.0
  %4087 = vmatprep.subr.mxu0 0.0
  %4088 = vmatpush1.msra.mxu0 0.0
  %4089 = vmatprep.subr.mxu0 0.0
  %4090 = vmatpush1.msra.mxu0 0.0
  %4091 = vmatprep.subr.mxu0 0.0
  %4092 = vmatpush1.msra.mxu0 0.0
  %4093 = vmatprep.subr.mxu0 0.0
  %4094 = vmatpush1.msra.mxu0 0.0
  %4095 = vmatprep.subr.mxu0 0.0
  %4096 = vmatpush1.msra.mxu0 0.0
  %4097 = vmatprep.subr.mxu0 0.0
  %4098 = vmatpush1.msra.mxu0 0.0
  %4099 = vmatprep.subr.mxu0 0.0
  %4100 = vmatpush1.msra.mxu0 0.0
  %4101 = vmatprep.subr.mxu0 0.0
  %4102 = vmatpush1.msra.mxu0 %v2583
  %4103 = vmatprep.subr.mxu0 0.0
  %4104 = vmatpush1.msra.mxu0 %v2582
  %4105 = vmatprep.subr.mxu0 0.0
  %4106 = vmatpush1.msra.mxu0 %v2581
  %4107 = vmatprep.subr.mxu0 0.0
  %4108 = vmatpush1.msra.mxu0 %v2580
  %4109 = vmatprep.subr.mxu0 0.0
  %4110 = vmatpush2.msra.mxu0 0.0
  %4111 = vmatprep.subr.mxu0 0.0
  %4112 = vmatpush2.msra.mxu0 0.0
  %4113 = vmatprep.subr.mxu0 0.0
  %4114 = vmatpush2.msra.mxu0 0.0
  %4115 = vmatprep.subr.mxu0 0.0
  %4116 = vmatpush2.msra.mxu0 0.0
  %4117 = vmatprep.subr.mxu0 0.0
  %4118 = vmatpush2.msra.mxu0 0.0
  %4119 = vmatprep.subr.mxu0 0.0
  %4120 = vmatpush2.msra.mxu0 0.0
  %4121 = vmatprep.subr.mxu0 0.0
  %4122 = vmatpush2.msra.mxu0 0.0
  %4123 = vmatprep.subr.mxu0 0.0
  %4124 = vmatpush2.msra.mxu0 0.0
  %4125 = vmatprep.subr.mxu0 0.0
  %4126 = vmatpush2.msra.mxu0 0.0
  %4127 = vmatprep.subr.mxu0 0.0
  %4128 = vmatpush2.msra.mxu0 0.0
  %4129 = vmatprep.subr.mxu0 0.0
  %4130 = vmatpush2.msra.mxu0 0.0
  %4131 = vmatprep.subr.mxu0 0.0
  %4132 = vmatpush2.msra.mxu0 0.0
  %4133 = vmatprep.subr.mxu0 0.0
  %4134 = vmatpush2.msra.mxu0 0.0
  %4135 = vmatprep.subr.mxu0 0.0
  %4136 = vmatpush2.msra.mxu0 0.0
  %4137 = vmatprep.subr.mxu0 0.0
  %4138 = vmatpush2.msra.mxu0 0.0
  %4139 = vmatprep.subr.mxu0 0.0
  %4140 = vmatpush2.msra.mxu0 0.0
  %4141 = vmatprep.mubr.f32.mxu0 0.0
  %4142 = vmatmul.mubr.f32.gmra.mxu0 %v4069
  %v4143 = vpop.f32.mrf.mxu0
  %v4144 = vadd.f32 %v2662, %v4143
  %v4145 = vpop.f32.mrf.mxu0
  %4146 = vmatprep.mubr.f32.mxu0 0.0
  %4147 = vmatmul.mubr.f32.gmra.mxu0 %v4072
  %v4148 = vpop.f32.mrf.mxu0
  %v4149 = vadd.f32 %v2662, %v4148
  %v4150 = vpop.f32.mrf.mxu0
  %4151 = vmatprep.mubr.f32.mxu0 0.0
  %4152 = vmatmul.mubr.f32.gmra.mxu0 %v4075
  %v4153 = vpop.f32.mrf.mxu0
  %v4154 = vadd.f32 %v2662, %v4153
  %v4155 = vpop.f32.mrf.mxu0
  %4156 = vdwg.mxu0
  %4157 = vmatprep.subr.mxu0 0.0
  %4158 = vmatpush1.msra.mxu0 0.0
  %4159 = vmatprep.subr.mxu0 0.0
  %4160 = vmatpush1.msra.mxu0 0.0
  %4161 = vmatprep.subr.mxu0 0.0
  %4162 = vmatpush1.msra.mxu0 0.0
  %4163 = vmatprep.subr.mxu0 0.0
  %4164 = vmatpush1.msra.mxu0 0.0
  %4165 = vmatprep.subr.mxu0 0.0
  %4166 = vmatpush1.msra.mxu0 %v3045
  %4167 = vmatprep.subr.mxu0 0.0
  %4168 = vmatpush1.msra.mxu0 %v3043
  %4169 = vmatprep.subr.mxu0 0.0
  %4170 = vmatpush1.msra.mxu0 %v3041
  %4171 = vmatprep.subr.mxu0 0.0
  %4172 = vmatpush1.msra.mxu0 %v3039
  %4173 = vmatprep.subr.mxu0 0.0
  %4174 = vmatpush1.msra.mxu0 %v3037
  %4175 = vmatprep.subr.mxu0 0.0
  %4176 = vmatpush1.msra.mxu0 %v3035
  %4177 = vmatprep.subr.mxu0 0.0
  %4178 = vmatpush1.msra.mxu0 %v3033
  %4179 = vmatprep.subr.mxu0 0.0
  %4180 = vmatpush1.msra.mxu0 %v3031
  %4181 = vmatprep.subr.mxu0 0.0
  %4182 = vmatpush1.msra.mxu0 %v3029
  %4183 = vmatprep.subr.mxu0 0.0
  %4184 = vmatpush1.msra.mxu0 %v3027
  %4185 = vmatprep.subr.mxu0 0.0
  %4186 = vmatpush1.msra.mxu0 %v3025
  %4187 = vmatprep.subr.mxu0 0.0
  %4188 = vmatpush1.msra.mxu0 %v3023
  %4189 = vmatprep.subr.mxu0 0.0
  %4190 = vmatpush2.msra.mxu0 0.0
  %4191 = vmatprep.subr.mxu0 0.0
  %4192 = vmatpush2.msra.mxu0 0.0
  %4193 = vmatprep.subr.mxu0 0.0
  %4194 = vmatpush2.msra.mxu0 0.0
  %4195 = vmatprep.subr.mxu0 0.0
  %4196 = vmatpush2.msra.mxu0 0.0
  %4197 = vmatprep.subr.mxu0 0.0
  %4198 = vmatpush2.msra.mxu0 0.0
  %4199 = vmatprep.subr.mxu0 0.0
  %4200 = vmatpush2.msra.mxu0 0.0
  %4201 = vmatprep.subr.mxu0 0.0
  %4202 = vmatpush2.msra.mxu0 0.0
  %4203 = vmatprep.subr.mxu0 0.0
  %4204 = vmatpush2.msra.mxu0 0.0
  %4205 = vmatprep.subr.mxu0 0.0
  %4206 = vmatpush2.msra.mxu0 0.0
  %4207 = vmatprep.subr.mxu0 0.0
  %4208 = vmatpush2.msra.mxu0 0.0
  %4209 = vmatprep.subr.mxu0 0.0
  %4210 = vmatpush2.msra.mxu0 0.0
  %4211 = vmatprep.subr.mxu0 0.0
  %4212 = vmatpush2.msra.mxu0 0.0
  %4213 = vmatprep.subr.mxu0 0.0
  %4214 = vmatpush2.msra.mxu0 0.0
  %4215 = vmatprep.subr.mxu0 0.0
  %4216 = vmatpush2.msra.mxu0 0.0
  %4217 = vmatprep.subr.mxu0 0.0
  %4218 = vmatpush2.msra.mxu0 0.0
  %4219 = vmatprep.subr.mxu0 0.0
  %4220 = vmatpush2.msra.mxu0 0.0
  %4221 = vmatprep.mubr.f32.mxu0 0.0
  %4222 = vmatmul.mubr.f32.gmra.mxu0 %v2754
  %v4223 = vpop.f32.mrf.mxu0
  %v4224 = vadd.f32 0.0, %v4223
  %v4225 = vpop.f32.mrf.mxu0
  %4226 = vmatprep.mubr.f32.mxu0 0.0
  %4227 = vmatmul.mubr.f32.gmra.mxu0 %v2757
  %v4228 = vpop.f32.mrf.mxu0
  %v4229 = vadd.f32 0.0, %v4228
  %v4230 = vpop.f32.mrf.mxu0
  %4231 = vmatprep.mubr.f32.mxu0 0.0
  %4232 = vmatmul.mubr.f32.gmra.mxu0 %v2760
  %v4233 = vpop.f32.mrf.mxu0
  %v4234 = vadd.f32 0.0, %v4233
  %v4235 = vpop.f32.mrf.mxu0
  %4236 = vmatprep.mubr.f32.mxu0 0.0
  %4237 = vmatmul.mubr.f32.gmra.mxu0 %v2763
  %v4238 = vpop.f32.mrf.mxu0
  %v4239 = vadd.f32 0.0, %v4238
  %v4240 = vpop.f32.mrf.mxu0
  %4241 = vmatprep.mubr.f32.mxu0 0.0
  %4242 = vmatmul.mubr.f32.gmra.mxu0 %v2766
  %v4243 = vpop.f32.mrf.mxu0
  %v4244 = vadd.f32 0.0, %v4243
  %v4245 = vpop.f32.mrf.mxu0
  %4246 = vmatprep.mubr.f32.mxu0 0.0
  %4247 = vmatmul.mubr.f32.gmra.mxu0 %v2769
  %v4248 = vpop.f32.mrf.mxu0
  %v4249 = vadd.f32 0.0, %v4248
  %v4250 = vpop.f32.mrf.mxu0
  %4251 = vmatprep.mubr.f32.mxu0 0.0
  %4252 = vmatmul.mubr.f32.gmra.mxu0 %v2772
  %v4253 = vpop.f32.mrf.mxu0
  %v4254 = vadd.f32 0.0, %v4253
  %v4255 = vpop.f32.mrf.mxu0
  %4256 = vmatprep.mubr.f32.mxu0 0.0
  %4257 = vmatmul.mubr.f32.gmra.mxu0 %v2775
  %v4258 = vpop.f32.mrf.mxu0
  %v4259 = vadd.f32 0.0, %v4258
  %v4260 = vpop.f32.mrf.mxu0
  %4261 = vmatprep.mubr.f32.mxu0 0.0
  %4262 = vmatmul.mubr.f32.gmra.mxu0 %v2778
  %v4263 = vpop.f32.mrf.mxu0
  %v4264 = vadd.f32 0.0, %v4263
  %v4265 = vpop.f32.mrf.mxu0
  %4266 = vmatprep.mubr.f32.mxu0 0.0
  %4267 = vmatmul.mubr.f32.gmra.mxu0 %v2781
  %v4268 = vpop.f32.mrf.mxu0
  %v4269 = vadd.f32 0.0, %v4268
  %v4270 = vpop.f32.mrf.mxu0
  %4271 = vmatprep.mubr.f32.mxu0 0.0
  %4272 = vmatmul.mubr.f32.gmra.mxu0 %v2784
  %v4273 = vpop.f32.mrf.mxu0
  %v4274 = vadd.f32 0.0, %v4273
  %v4275 = vpop.f32.mrf.mxu0
  %4276 = vmatprep.mubr.f32.mxu0 0.0
  %4277 = vmatmul.mubr.f32.gmra.mxu0 %v2787
  %v4278 = vpop.f32.mrf.mxu0
  %v4279 = vadd.f32 0.0, %v4278
  %v4280 = vpop.f32.mrf.mxu0
  %4281 = vdwg.mxu0
  %vm4282 = vcmp.eq.f32.partialorder %v4224, 0.0
  %vm4283 = vcmp.eq.f32.partialorder %v4229, 0.0
  %vm4284 = vcmp.eq.f32.partialorder %v4234, 0.0
  %vm4285 = vcmp.eq.f32.partialorder %v4239, 0.0
  %vm4286 = vcmp.eq.f32.partialorder %v4244, 0.0
  %vm4287 = vcmp.eq.f32.partialorder %v4249, 0.0
  %vm4288 = vcmp.eq.f32.partialorder %v4254, 0.0
  %vm4289 = vcmp.eq.f32.partialorder %v4259, 0.0
  %vm4290 = vcmp.eq.f32.partialorder %v4264, 0.0
  %vm4291 = vcmp.eq.f32.partialorder %v4269, 0.0
  %vm4292 = vcmp.eq.f32.partialorder %v4274, 0.0
  %vm4293 = vcmp.eq.f32.partialorder %v4279, 0.0
  %v4294 = vsel %vm4282, 1.0, %v4224
  %v4295 = vsel %vm4283, 1.0, %v4229
  %v4296 = vsel %vm4284, 1.0, %v4234
  %v4297 = vsel %vm4285, 1.0, %v4239
  %v4298 = vsel %vm4286, 1.0, %v4244
  %v4299 = vsel %vm4287, 1.0, %v4249
  %v4300 = vsel %vm4288, 1.0, %v4254
  %v4301 = vsel %vm4289, 1.0, %v4259
  %v4302 = vsel %vm4290, 1.0, %v4264
  %v4303 = vsel %vm4291, 1.0, %v4269
  %v4304 = vsel %vm4292, 1.0, %v4274
  %v4305 = vsel %vm4293, 1.0, %v4279
  %v4306 = vrcp.pop %v4294
  %v4307 = vmul.f32 %v3023, %v4306
  %v4308 = vrcp.pop %v4295
  %v4309 = vmul.f32 %v3025, %v4308
  %v4310 = vrcp.pop %v4296
  %v4311 = vmul.f32 %v3027, %v4310
  %v4312 = vrcp.pop %v4297
  %v4313 = vmul.f32 %v3029, %v4312
  %v4314 = vrcp.pop %v4298
  %v4315 = vmul.f32 %v3031, %v4314
  %v4316 = vrcp.pop %v4299
  %v4317 = vmul.f32 %v3033, %v4316
  %v4318 = vrcp.pop %v4300
  %v4319 = vmul.f32 %v3035, %v4318
  %v4320 = vrcp.pop %v4301
  %v4321 = vmul.f32 %v3037, %v4320
  %v4322 = vrcp.pop %v4302
  %v4323 = vmul.f32 %v3039, %v4322
  %v4324 = vrcp.pop %v4303
  %v4325 = vmul.f32 %v3041, %v4324
  %v4326 = vrcp.pop %v4304
  %v4327 = vmul.f32 %v3043, %v4326
  %v4328 = vrcp.pop %v4305
  %v4329 = vmul.f32 %v3045, %v4328
  %v4330 = vsel %vm795, %v4307, 0.0
  %4331 = vadd.xlane.f32.xlu0 %v4330
  %v4332 = vpop.xlane.xlu0 %4331
  %v4333 = vsel %vm795, %v4309, 0.0
  %4334 = vadd.xlane.f32.xlu0 %v4333
  %v4335 = vpop.xlane.xlu0 %4334
  %v4336 = vsel %vm795, %v4311, 0.0
  %4337 = vadd.xlane.f32.xlu0 %v4336
  %v4338 = vpop.xlane.xlu0 %4337
  %v4339 = vsel %vm795, %v4313, 0.0
  %4340 = vadd.xlane.f32.xlu0 %v4339
  %v4341 = vpop.xlane.xlu0 %4340
  %v4342 = vsel %vm795, %v4315, 0.0
  %4343 = vadd.xlane.f32.xlu0 %v4342
  %v4344 = vpop.xlane.xlu0 %4343
  %v4345 = vsel %vm795, %v4317, 0.0
  %4346 = vadd.xlane.f32.xlu0 %v4345
  %v4347 = vpop.xlane.xlu0 %4346
  %v4348 = vsel %vm795, %v4319, 0.0
  %4349 = vadd.xlane.f32.xlu0 %v4348
  %v4350 = vpop.xlane.xlu0 %4349
  %v4351 = vsel %vm795, %v4321, 0.0
  %4352 = vadd.xlane.f32.xlu0 %v4351
  %v4353 = vpop.xlane.xlu0 %4352
  %v4354 = vsel %vm795, %v4323, 0.0
  %4355 = vadd.xlane.f32.xlu0 %v4354
  %v4356 = vpop.xlane.xlu0 %4355
  %v4357 = vsel %vm795, %v4325, 0.0
  %4358 = vadd.xlane.f32.xlu0 %v4357
  %v4359 = vpop.xlane.xlu0 %4358
  %v4360 = vsel %vm795, %v4327, 0.0
  %4361 = vadd.xlane.f32.xlu0 %v4360
  %v4362 = vpop.xlane.xlu0 %4361
  %v4363 = vsel %vm795, %v4329, 0.0
  %4364 = vadd.xlane.f32.xlu0 %v4363
  %v4365 = vpop.xlane.xlu0 %4364
  %vm4366 = vcmp.eq.f32.partialorder %v4332, 0.0
  %vm4367 = vcmp.eq.f32.partialorder %v4335, 0.0
  %vm4368 = vcmp.eq.f32.partialorder %v4338, 0.0
  %vm4369 = vcmp.eq.f32.partialorder %v4341, 0.0
  %vm4370 = vcmp.eq.f32.partialorder %v4344, 0.0
  %vm4371 = vcmp.eq.f32.partialorder %v4347, 0.0
  %vm4372 = vcmp.eq.f32.partialorder %v4350, 0.0
  %vm4373 = vcmp.eq.f32.partialorder %v4353, 0.0
  %vm4374 = vcmp.eq.f32.partialorder %v4356, 0.0
  %vm4375 = vcmp.eq.f32.partialorder %v4359, 0.0
  %vm4376 = vcmp.eq.f32.partialorder %v4362, 0.0
  %vm4377 = vcmp.eq.f32.partialorder %v4365, 0.0
  %v4378 = vsel %vm4366, 1.0, %v4332
  %v4379 = vsel %vm4367, 1.0, %v4335
  %v4380 = vsel %vm4368, 1.0, %v4338
  %v4381 = vsel %vm4369, 1.0, %v4341
  %v4382 = vsel %vm4370, 1.0, %v4344
  %v4383 = vsel %vm4371, 1.0, %v4347
  %v4384 = vsel %vm4372, 1.0, %v4350
  %v4385 = vsel %vm4373, 1.0, %v4353
  %v4386 = vsel %vm4374, 1.0, %v4356
  %v4387 = vsel %vm4375, 1.0, %v4359
  %v4388 = vsel %vm4376, 1.0, %v4362
  %v4389 = vsel %vm4377, 1.0, %v4365
  %v4390 = vrcp.pop %v4378
  %v4391 = vmul.f32 %v4307, %v4390
  %v4392 = vrcp.pop %v4379
  %v4393 = vmul.f32 %v4309, %v4392
  %v4394 = vrcp.pop %v4380
  %v4395 = vmul.f32 %v4311, %v4394
  %v4396 = vrcp.pop %v4381
  %v4397 = vmul.f32 %v4313, %v4396
  %v4398 = vrcp.pop %v4382
  %v4399 = vmul.f32 %v4315, %v4398
  %v4400 = vrcp.pop %v4383
  %v4401 = vmul.f32 %v4317, %v4400
  %v4402 = vrcp.pop %v4384
  %v4403 = vmul.f32 %v4319, %v4402
  %v4404 = vrcp.pop %v4385
  %v4405 = vmul.f32 %v4321, %v4404
  %v4406 = vrcp.pop %v4386
  %v4407 = vmul.f32 %v4323, %v4406
  %v4408 = vrcp.pop %v4387
  %v4409 = vmul.f32 %v4325, %v4408
  %v4410 = vrcp.pop %v4388
  %v4411 = vmul.f32 %v4327, %v4410
  %v4412 = vrcp.pop %v4389
  %v4413 = vmul.f32 %v4329, %v4412
  %4414 = vxpose.xlu0.b32.start [1/16] %v4391, 128
  %4415 = vxpose.xlu0.b32.cont [2/16] %v4393, 128
  %4416 = vxpose.xlu0.b32.cont [3/16] %v4395, 128
  %4417 = vxpose.xlu0.b32.cont [4/16] 0.0, 128
  %4418 = vxpose.xlu0.b32.cont [5/16] 0.0, 128
  %4419 = vxpose.xlu0.b32.cont [6/16] 0.0, 128
  %4420 = vxpose.xlu0.b32.cont [7/16] 0.0, 128
  %4421 = vxpose.xlu0.b32.cont [8/16] 0.0, 128
  %4422 = vxpose.xlu0.b32.cont [9/16] 0.0, 128
  %4423 = vxpose.xlu0.b32.cont [10/16] 0.0, 128
  %4424 = vxpose.xlu0.b32.cont [11/16] 0.0, 128
  %4425 = vxpose.xlu0.b32.cont [12/16] 0.0, 128
  %4426 = vxpose.xlu0.b32.cont [13/16] 0.0, 128
  %4427 = vxpose.xlu0.b32.cont [14/16] 0.0, 128
  %4428 = vxpose.xlu0.b32.cont [15/16] 0.0, 128
  %4429 = vxpose.xlu0.b32.end [16/16] 0.0, 128
  %v4430 = vpop.trf.xlu0
  %v4431 = vpop.trf.xlu0
  %v4432 = vpop.trf.xlu0
  %v4433 = vpop.trf.xlu0
  %v4434 = vpop.trf.xlu0
  %v4435 = vpop.trf.xlu0
  %v4436 = vpop.trf.xlu0
  %v4437 = vpop.trf.xlu0
  %v4438 = vpop.trf.xlu0
  %v4439 = vpop.trf.xlu0
  %v4440 = vpop.trf.xlu0
  %v4441 = vpop.trf.xlu0
  %v4442 = vpop.trf.xlu0
  %v4443 = vpop.trf.xlu0
  %v4444 = vpop.trf.xlu0
  %v4445 = vpop.trf.xlu0
  %4446 = vxpose.xlu0.b32.start [1/16] %v4397, 128
  %4447 = vxpose.xlu0.b32.cont [2/16] %v4399, 128
  %4448 = vxpose.xlu0.b32.cont [3/16] %v4401, 128
  %4449 = vxpose.xlu0.b32.cont [4/16] 0.0, 128
  %4450 = vxpose.xlu0.b32.cont [5/16] 0.0, 128
  %4451 = vxpose.xlu0.b32.cont [6/16] 0.0, 128
  %4452 = vxpose.xlu0.b32.cont [7/16] 0.0, 128
  %4453 = vxpose.xlu0.b32.cont [8/16] 0.0, 128
  %4454 = vxpose.xlu0.b32.cont [9/16] 0.0, 128
  %4455 = vxpose.xlu0.b32.cont [10/16] 0.0, 128
  %4456 = vxpose.xlu0.b32.cont [11/16] 0.0, 128
  %4457 = vxpose.xlu0.b32.cont [12/16] 0.0, 128
  %4458 = vxpose.xlu0.b32.cont [13/16] 0.0, 128
  %4459 = vxpose.xlu0.b32.cont [14/16] 0.0, 128
  %4460 = vxpose.xlu0.b32.cont [15/16] 0.0, 128
  %4461 = vxpose.xlu0.b32.end [16/16] 0.0, 128
  %v4462 = vpop.trf.xlu0
  %v4463 = vpop.trf.xlu0
  %v4464 = vpop.trf.xlu0
  %v4465 = vpop.trf.xlu0
  %v4466 = vpop.trf.xlu0
  %v4467 = vpop.trf.xlu0
  %v4468 = vpop.trf.xlu0
  %v4469 = vpop.trf.xlu0
  %v4470 = vpop.trf.xlu0
  %v4471 = vpop.trf.xlu0
  %v4472 = vpop.trf.xlu0
  %v4473 = vpop.trf.xlu0
  %v4474 = vpop.trf.xlu0
  %v4475 = vpop.trf.xlu0
  %v4476 = vpop.trf.xlu0
  %v4477 = vpop.trf.xlu0
  %4478 = vxpose.xlu0.b32.start [1/16] %v4403, 128
  %4479 = vxpose.xlu0.b32.cont [2/16] %v4405, 128
  %4480 = vxpose.xlu0.b32.cont [3/16] %v4407, 128
  %4481 = vxpose.xlu0.b32.cont [4/16] 0.0, 128
  %4482 = vxpose.xlu0.b32.cont [5/16] 0.0, 128
  %4483 = vxpose.xlu0.b32.cont [6/16] 0.0, 128
  %4484 = vxpose.xlu0.b32.cont [7/16] 0.0, 128
  %4485 = vxpose.xlu0.b32.cont [8/16] 0.0, 128
  %4486 = vxpose.xlu0.b32.cont [9/16] 0.0, 128
  %4487 = vxpose.xlu0.b32.cont [10/16] 0.0, 128
  %4488 = vxpose.xlu0.b32.cont [11/16] 0.0, 128
  %4489 = vxpose.xlu0.b32.cont [12/16] 0.0, 128
  %4490 = vxpose.xlu0.b32.cont [13/16] 0.0, 128
  %4491 = vxpose.xlu0.b32.cont [14/16] 0.0, 128
  %4492 = vxpose.xlu0.b32.cont [15/16] 0.0, 128
  %4493 = vxpose.xlu0.b32.end [16/16] 0.0, 128
  %v4494 = vpop.trf.xlu0
  %v4495 = vpop.trf.xlu0
  %v4496 = vpop.trf.xlu0
  %v4497 = vpop.trf.xlu0
  %v4498 = vpop.trf.xlu0
  %v4499 = vpop.trf.xlu0
  %v4500 = vpop.trf.xlu0
  %v4501 = vpop.trf.xlu0
  %v4502 = vpop.trf.xlu0
  %v4503 = vpop.trf.xlu0
  %v4504 = vpop.trf.xlu0
  %v4505 = vpop.trf.xlu0
  %v4506 = vpop.trf.xlu0
  %v4507 = vpop.trf.xlu0
  %v4508 = vpop.trf.xlu0
  %v4509 = vpop.trf.xlu0
  %4510 = vxpose.xlu0.b32.start [1/16] %v4409, 128
  %4511 = vxpose.xlu0.b32.cont [2/16] %v4411, 128
  %4512 = vxpose.xlu0.b32.cont [3/16] %v4413, 128
  %4513 = vxpose.xlu0.b32.cont [4/16] 0.0, 128
  %4514 = vxpose.xlu0.b32.cont [5/16] 0.0, 128
  %4515 = vxpose.xlu0.b32.cont [6/16] 0.0, 128
  %4516 = vxpose.xlu0.b32.cont [7/16] 0.0, 128
  %4517 = vxpose.xlu0.b32.cont [8/16] 0.0, 128
  %4518 = vxpose.xlu0.b32.cont [9/16] 0.0, 128
  %4519 = vxpose.xlu0.b32.cont [10/16] 0.0, 128
  %4520 = vxpose.xlu0.b32.cont [11/16] 0.0, 128
  %4521 = vxpose.xlu0.b32.cont [12/16] 0.0, 128
  %4522 = vxpose.xlu0.b32.cont [13/16] 0.0, 128
  %4523 = vxpose.xlu0.b32.cont [14/16] 0.0, 128
  %4524 = vxpose.xlu0.b32.cont [15/16] 0.0, 128
  %4525 = vxpose.xlu0.b32.end [16/16] 0.0, 128
  %v4526 = vpop.trf.xlu0
  %v4527 = vpop.trf.xlu0
  %v4528 = vpop.trf.xlu0
  %v4529 = vpop.trf.xlu0
  %v4530 = vpop.trf.xlu0
  %v4531 = vpop.trf.xlu0
  %v4532 = vpop.trf.xlu0
  %v4533 = vpop.trf.xlu0
  %v4534 = vpop.trf.xlu0
  %v4535 = vpop.trf.xlu0
  %v4536 = vpop.trf.xlu0
  %v4537 = vpop.trf.xlu0
  %v4538 = vpop.trf.xlu0
  %v4539 = vpop.trf.xlu0
  %v4540 = vpop.trf.xlu0
  %v4541 = vpop.trf.xlu0
  %v4542 = vadd.f32 %v4391, %v4430
  %v4543 = vadd.f32 %v4393, %v4431
  %v4544 = vadd.f32 %v4395, %v4432
  %v4545 = vadd.f32 %v4397, %v4462
  %v4546 = vadd.f32 %v4399, %v4463
  %v4547 = vadd.f32 %v4401, %v4464
  %v4548 = vadd.f32 %v4403, %v4494
  %v4549 = vadd.f32 %v4405, %v4495
  %v4550 = vadd.f32 %v4407, %v4496
  %v4551 = vadd.f32 %v4409, %v4526
  %v4552 = vadd.f32 %v4411, %v4527
  %v4553 = vadd.f32 %v4413, %v4528
  %v4554 = vmul.f32 %v4542, 0.5
  %v4555 = vmul.f32 %v4543, 0.5
  %v4556 = vmul.f32 %v4544, 0.5
  %v4557 = vmul.f32 %v4545, 0.5
  %v4558 = vmul.f32 %v4546, 0.5
  %v4559 = vmul.f32 %v4547, 0.5
  %v4560 = vmul.f32 %v4548, 0.5
  %v4561 = vmul.f32 %v4549, 0.5
  %v4562 = vmul.f32 %v4550, 0.5
  %v4563 = vmul.f32 %v4551, 0.5
  %v4564 = vmul.f32 %v4552, 0.5
  %v4565 = vmul.f32 %v4553, 0.5
  %4566 = vmatprep.subr.mxu0 0.0
  %4567 = vmatpush1.msra.mxu0 0.0
  %4568 = vmatprep.subr.mxu0 0.0
  %4569 = vmatpush1.msra.mxu0 0.0
  %4570 = vmatprep.subr.mxu0 0.0
  %4571 = vmatpush1.msra.mxu0 0.0
  %4572 = vmatprep.subr.mxu0 0.0
  %4573 = vmatpush1.msra.mxu0 0.0
  %4574 = vmatprep.subr.mxu0 0.0
  %4575 = vmatpush1.msra.mxu0 %v4565
  %4576 = vmatprep.subr.mxu0 0.0
  %4577 = vmatpush1.msra.mxu0 %v4564
  %4578 = vmatprep.subr.mxu0 0.0
  %4579 = vmatpush1.msra.mxu0 %v4563
  %4580 = vmatprep.subr.mxu0 0.0
  %4581 = vmatpush1.msra.mxu0 %v4562
  %4582 = vmatprep.subr.mxu0 0.0
  %4583 = vmatpush1.msra.mxu0 %v4561
  %4584 = vmatprep.subr.mxu0 0.0
  %4585 = vmatpush1.msra.mxu0 %v4560
  %4586 = vmatprep.subr.mxu0 0.0
  %4587 = vmatpush1.msra.mxu0 %v4559
  %4588 = vmatprep.subr.mxu0 0.0
  %4589 = vmatpush1.msra.mxu0 %v4558
  %4590 = vmatprep.subr.mxu0 0.0
  %4591 = vmatpush1.msra.mxu0 %v4557
  %4592 = vmatprep.subr.mxu0 0.0
  %4593 = vmatpush1.msra.mxu0 %v4556
  %4594 = vmatprep.subr.mxu0 0.0
  %4595 = vmatpush1.msra.mxu0 %v4555
  %4596 = vmatprep.subr.mxu0 0.0
  %4597 = vmatpush1.msra.mxu0 %v4554
  %4598 = vmatprep.subr.mxu0 0.0
  %4599 = vmatpush2.msra.mxu0 0.0
  %4600 = vmatprep.subr.mxu0 0.0
  %4601 = vmatpush2.msra.mxu0 0.0
  %4602 = vmatprep.subr.mxu0 0.0
  %4603 = vmatpush2.msra.mxu0 0.0
  %4604 = vmatprep.subr.mxu0 0.0
  %4605 = vmatpush2.msra.mxu0 0.0
  %4606 = vmatprep.subr.mxu0 0.0
  %4607 = vmatpush2.msra.mxu0 0.0
  %4608 = vmatprep.subr.mxu0 0.0
  %4609 = vmatpush2.msra.mxu0 0.0
  %4610 = vmatprep.subr.mxu0 0.0
  %4611 = vmatpush2.msra.mxu0 0.0
  %4612 = vmatprep.subr.mxu0 0.0
  %4613 = vmatpush2.msra.mxu0 0.0
  %4614 = vmatprep.subr.mxu0 0.0
  %4615 = vmatpush2.msra.mxu0 0.0
  %4616 = vmatprep.subr.mxu0 0.0
  %4617 = vmatpush2.msra.mxu0 0.0
  %4618 = vmatprep.subr.mxu0 0.0
  %4619 = vmatpush2.msra.mxu0 0.0
  %4620 = vmatprep.subr.mxu0 0.0
  %4621 = vmatpush2.msra.mxu0 0.0
  %4622 = vmatprep.subr.mxu0 0.0
  %4623 = vmatpush2.msra.mxu0 0.0
  %4624 = vmatprep.subr.mxu0 0.0
  %4625 = vmatpush2.msra.mxu0 0.0
  %4626 = vmatprep.subr.mxu0 0.0
  %4627 = vmatpush2.msra.mxu0 0.0
  %4628 = vmatprep.subr.mxu0 0.0
  %4629 = vmatpush2.msra.mxu0 0.0
  %4630 = vmatprep.mubr.f32.mxu0 0.0
  %4631 = vmatmul.mubr.f32.gmra.mxu0 %v2754
  %v4632 = vpop.f32.mrf.mxu0
  %v4633 = vadd.f32 0.0, %v4632
  %v4634 = vpop.f32.mrf.mxu0
  %4635 = vmatprep.mubr.f32.mxu0 0.0
  %4636 = vmatmul.mubr.f32.gmra.mxu0 %v2757
  %v4637 = vpop.f32.mrf.mxu0
  %v4638 = vadd.f32 0.0, %v4637
  %v4639 = vpop.f32.mrf.mxu0
  %4640 = vmatprep.mubr.f32.mxu0 0.0
  %4641 = vmatmul.mubr.f32.gmra.mxu0 %v2760
  %v4642 = vpop.f32.mrf.mxu0
  %v4643 = vadd.f32 0.0, %v4642
  %v4644 = vpop.f32.mrf.mxu0
  %4645 = vmatprep.mubr.f32.mxu0 0.0
  %4646 = vmatmul.mubr.f32.gmra.mxu0 %v2763
  %v4647 = vpop.f32.mrf.mxu0
  %v4648 = vadd.f32 0.0, %v4647
  %v4649 = vpop.f32.mrf.mxu0
  %4650 = vmatprep.mubr.f32.mxu0 0.0
  %4651 = vmatmul.mubr.f32.gmra.mxu0 %v2766
  %v4652 = vpop.f32.mrf.mxu0
  %v4653 = vadd.f32 0.0, %v4652
  %v4654 = vpop.f32.mrf.mxu0
  %4655 = vmatprep.mubr.f32.mxu0 0.0
  %4656 = vmatmul.mubr.f32.gmra.mxu0 %v2769
  %v4657 = vpop.f32.mrf.mxu0
  %v4658 = vadd.f32 0.0, %v4657
  %v4659 = vpop.f32.mrf.mxu0
  %4660 = vmatprep.mubr.f32.mxu0 0.0
  %4661 = vmatmul.mubr.f32.gmra.mxu0 %v2772
  %v4662 = vpop.f32.mrf.mxu0
  %v4663 = vadd.f32 0.0, %v4662
  %v4664 = vpop.f32.mrf.mxu0
  %4665 = vmatprep.mubr.f32.mxu0 0.0
  %4666 = vmatmul.mubr.f32.gmra.mxu0 %v2775
  %v4667 = vpop.f32.mrf.mxu0
  %v4668 = vadd.f32 0.0, %v4667
  %v4669 = vpop.f32.mrf.mxu0
  %4670 = vmatprep.mubr.f32.mxu0 0.0
  %4671 = vmatmul.mubr.f32.gmra.mxu0 %v2778
  %v4672 = vpop.f32.mrf.mxu0
  %v4673 = vadd.f32 0.0, %v4672
  %v4674 = vpop.f32.mrf.mxu0
  %4675 = vmatprep.mubr.f32.mxu0 0.0
  %4676 = vmatmul.mubr.f32.gmra.mxu0 %v2781
  %v4677 = vpop.f32.mrf.mxu0
  %v4678 = vadd.f32 0.0, %v4677
  %v4679 = vpop.f32.mrf.mxu0
  %4680 = vmatprep.mubr.f32.mxu0 0.0
  %4681 = vmatmul.mubr.f32.gmra.mxu0 %v2784
  %v4682 = vpop.f32.mrf.mxu0
  %v4683 = vadd.f32 0.0, %v4682
  %v4684 = vpop.f32.mrf.mxu0
  %4685 = vmatprep.mubr.f32.mxu0 0.0
  %4686 = vmatmul.mubr.f32.gmra.mxu0 %v2787
  %v4687 = vpop.f32.mrf.mxu0
  %v4688 = vadd.f32 0.0, %v4687
  %v4689 = vpop.f32.mrf.mxu0
  %4690 = vdwg.mxu0
  %v4691 = vmul.f32 %v4633, 0.05882353
  %v4692 = vmul.f32 %v4638, 0.05882353
  %v4693 = vmul.f32 %v4643, 0.05882353
  %v4694 = vmul.f32 %v4648, 0.05882353
  %v4695 = vmul.f32 %v4653, 0.05882353
  %v4696 = vmul.f32 %v4658, 0.05882353
  %v4697 = vmul.f32 %v4663, 0.05882353
  %v4698 = vmul.f32 %v4668, 0.05882353
  %v4699 = vmul.f32 %v4673, 0.05882353
  %v4700 = vmul.f32 %v4678, 0.05882353
  %v4701 = vmul.f32 %v4683, 0.05882353
  %v4702 = vmul.f32 %v4688, 0.05882353
  %v4703 = vsub.f32 %v4554, %v4691
  %v4704 = vsub.f32 %v4555, %v4692
  %v4705 = vsub.f32 %v4556, %v4693
  %v4706 = vsub.f32 %v4557, %v4694
  %v4707 = vsub.f32 %v4558, %v4695
  %v4708 = vsub.f32 %v4559, %v4696
  %v4709 = vsub.f32 %v4560, %v4697
  %v4710 = vsub.f32 %v4561, %v4698
  %v4711 = vsub.f32 %v4562, %v4699
  %v4712 = vsub.f32 %v4563, %v4700
  %v4713 = vsub.f32 %v4564, %v4701
  %v4714 = vsub.f32 %v4565, %v4702
  %v4715 = vmax.f32 %v4703, 0.0
  %v4716 = vmax.f32 %v4704, 0.0
  %v4717 = vmax.f32 %v4705, 0.0
  %v4718 = vmax.f32 %v4706, 0.0
  %v4719 = vmax.f32 %v4707, 0.0
  %v4720 = vmax.f32 %v4708, 0.0
  %v4721 = vmax.f32 %v4709, 0.0
  %v4722 = vmax.f32 %v4710, 0.0
  %v4723 = vmax.f32 %v4711, 0.0
  %v4724 = vmax.f32 %v4712, 0.0
  %v4725 = vmax.f32 %v4713, 0.0
  %v4726 = vmax.f32 %v4714, 0.0
  %v4727 = vsel %vm795, %v4715, 0.0
  %4728 = vadd.xlane.f32.xlu0 %v4727
  %v4729 = vpop.xlane.xlu0 %4728
  %v4730 = vsel %vm795, %v4716, 0.0
  %4731 = vadd.xlane.f32.xlu0 %v4730
  %v4732 = vpop.xlane.xlu0 %4731
  %v4733 = vsel %vm795, %v4717, 0.0
  %4734 = vadd.xlane.f32.xlu0 %v4733
  %v4735 = vpop.xlane.xlu0 %4734
  %v4736 = vsel %vm795, %v4718, 0.0
  %4737 = vadd.xlane.f32.xlu0 %v4736
  %v4738 = vpop.xlane.xlu0 %4737
  %v4739 = vsel %vm795, %v4719, 0.0
  %4740 = vadd.xlane.f32.xlu0 %v4739
  %v4741 = vpop.xlane.xlu0 %4740
  %v4742 = vsel %vm795, %v4720, 0.0
  %4743 = vadd.xlane.f32.xlu0 %v4742
  %v4744 = vpop.xlane.xlu0 %4743
  %v4745 = vsel %vm795, %v4721, 0.0
  %4746 = vadd.xlane.f32.xlu0 %v4745
  %v4747 = vpop.xlane.xlu0 %4746
  %v4748 = vsel %vm795, %v4722, 0.0
  %4749 = vadd.xlane.f32.xlu0 %v4748
  %v4750 = vpop.xlane.xlu0 %4749
  %v4751 = vsel %vm795, %v4723, 0.0
  %4752 = vadd.xlane.f32.xlu0 %v4751
  %v4753 = vpop.xlane.xlu0 %4752
  %v4754 = vsel %vm795, %v4724, 0.0
  %4755 = vadd.xlane.f32.xlu0 %v4754
  %v4756 = vpop.xlane.xlu0 %4755
  %v4757 = vsel %vm795, %v4725, 0.0
  %4758 = vadd.xlane.f32.xlu0 %v4757
  %v4759 = vpop.xlane.xlu0 %4758
  %v4760 = vsel %vm795, %v4726, 0.0
  %4761 = vadd.xlane.f32.xlu0 %v4760
  %v4762 = vpop.xlane.xlu0 %4761
  %vm4763 = vcmp.eq.f32.partialorder %v4729, 0.0
  %vm4764 = vcmp.eq.f32.partialorder %v4732, 0.0
  %vm4765 = vcmp.eq.f32.partialorder %v4735, 0.0
  %vm4766 = vcmp.eq.f32.partialorder %v4738, 0.0
  %vm4767 = vcmp.eq.f32.partialorder %v4741, 0.0
  %vm4768 = vcmp.eq.f32.partialorder %v4744, 0.0
  %vm4769 = vcmp.eq.f32.partialorder %v4747, 0.0
  %vm4770 = vcmp.eq.f32.partialorder %v4750, 0.0
  %vm4771 = vcmp.eq.f32.partialorder %v4753, 0.0
  %vm4772 = vcmp.eq.f32.partialorder %v4756, 0.0
  %vm4773 = vcmp.eq.f32.partialorder %v4759, 0.0
  %vm4774 = vcmp.eq.f32.partialorder %v4762, 0.0
  %v4775 = vsel %vm4763, 1.0, %v4729
  %v4776 = vsel %vm4764, 1.0, %v4732
  %v4777 = vsel %vm4765, 1.0, %v4735
  %v4778 = vsel %vm4766, 1.0, %v4738
  %v4779 = vsel %vm4767, 1.0, %v4741
  %v4780 = vsel %vm4768, 1.0, %v4744
  %v4781 = vsel %vm4769, 1.0, %v4747
  %v4782 = vsel %vm4770, 1.0, %v4750
  %v4783 = vsel %vm4771, 1.0, %v4753
  %v4784 = vsel %vm4772, 1.0, %v4756
  %v4785 = vsel %vm4773, 1.0, %v4759
  %v4786 = vsel %vm4774, 1.0, %v4762
  %v4787 = vrcp.pop %v4775
  %v4788 = vmul.f32 %v4715, %v4787
  %v4789 = vrcp.pop %v4776
  %v4790 = vmul.f32 %v4716, %v4789
  %v4791 = vrcp.pop %v4777
  %v4792 = vmul.f32 %v4717, %v4791
  %v4793 = vrcp.pop %v4778
  %v4794 = vmul.f32 %v4718, %v4793
  %v4795 = vrcp.pop %v4779
  %v4796 = vmul.f32 %v4719, %v4795
  %v4797 = vrcp.pop %v4780
  %v4798 = vmul.f32 %v4720, %v4797
  %v4799 = vrcp.pop %v4781
  %v4800 = vmul.f32 %v4721, %v4799
  %v4801 = vrcp.pop %v4782
  %v4802 = vmul.f32 %v4722, %v4801
  %v4803 = vrcp.pop %v4783
  %v4804 = vmul.f32 %v4723, %v4803
  %v4805 = vrcp.pop %v4784
  %v4806 = vmul.f32 %v4724, %v4805
  %v4807 = vrcp.pop %v4785
  %v4808 = vmul.f32 %v4725, %v4807
  %v4809 = vrcp.pop %v4786
  %v4810 = vmul.f32 %v4726, %v4809
  %4814 = vrot.lane.b32.xlu0 %v4144, 64
  %v4815 = vpop.permute.xlu0 %4814
  %4816 = vrot.lane.b32.xlu0 %v4149, 64
  %v4817 = vpop.permute.xlu0 %4816
  %4818 = vrot.lane.b32.xlu0 %v4154, 64
  %v4819 = vpop.permute.xlu0 %4818
  %v4824 = vsel %vm795, %v4788, 0
  %v4827 = vsel %vm795, %v4790, 0
  %v4830 = vsel %vm795, %v4792, 0
  %v4833 = vsel %vm795, %v4794, 0
  %v4836 = vsel %vm795, %v4796, 0
  %v4839 = vsel %vm795, %v4798, 0
  %v4842 = vsel %vm795, %v4800, 0
  %v4845 = vsel %vm795, %v4802, 0
  %v4848 = vsel %vm795, %v4804, 0
  %v4851 = vsel %vm795, %v4806, 0
  %v4854 = vsel %vm795, %v4808, 0
  %v4857 = vsel %vm795, %v4810, 0
  %4859 = vmatprep.subr.mxu0 0.0
  %4860 = vmatpush1.msra.mxu0 0.0
  %4861 = vmatprep.subr.mxu0 0.0
  %4862 = vmatpush1.msra.mxu0 0.0
  %4863 = vmatprep.subr.mxu0 0.0
  %4864 = vmatpush1.msra.mxu0 0.0
  %4865 = vmatprep.subr.mxu0 0.0
  %4866 = vmatpush1.msra.mxu0 0.0
  %4867 = vmatprep.subr.mxu0 0.0
  %4868 = vmatpush1.msra.mxu0 0.0
  %4869 = vmatprep.subr.mxu0 0.0
  %4870 = vmatpush1.msra.mxu0 0.0
  %4871 = vmatprep.subr.mxu0 0.0
  %4872 = vmatpush1.msra.mxu0 0.0
  %4873 = vmatprep.subr.mxu0 0.0
  %4874 = vmatpush1.msra.mxu0 0.0
  %4875 = vmatprep.subr.mxu0 0.0
  %4876 = vmatpush1.msra.mxu0 0.0
  %4877 = vmatprep.subr.mxu0 0.0
  %4878 = vmatpush1.msra.mxu0 0.0
  %4879 = vmatprep.subr.mxu0 0.0
  %4880 = vmatpush1.msra.mxu0 0.0
  %4881 = vmatprep.subr.mxu0 0.0
  %4882 = vmatpush1.msra.mxu0 0.0
  %4883 = vmatprep.subr.mxu0 0.0
  %4884 = vmatpush1.msra.mxu0 0.0
  %4885 = vmatprep.subr.mxu0 0.0
  %4886 = vmatpush1.msra.mxu0 %v4819
  %4887 = vmatprep.subr.mxu0 0.0
  %4888 = vmatpush1.msra.mxu0 %v4817
  %4889 = vmatprep.subr.mxu0 0.0
  %4890 = vmatpush1.msra.mxu0 %v4815
  %4891 = vmatprep.subr.mxu0 0.0
  %4892 = vmatpush2.msra.mxu0 0.0
  %4893 = vmatprep.subr.mxu0 0.0
  %4894 = vmatpush2.msra.mxu0 0.0
  %4895 = vmatprep.subr.mxu0 0.0
  %4896 = vmatpush2.msra.mxu0 0.0
  %4897 = vmatprep.subr.mxu0 0.0
  %4898 = vmatpush2.msra.mxu0 0.0
  %4899 = vmatprep.subr.mxu0 0.0
  %4900 = vmatpush2.msra.mxu0 0.0
  %4901 = vmatprep.subr.mxu0 0.0
  %4902 = vmatpush2.msra.mxu0 0.0
  %4903 = vmatprep.subr.mxu0 0.0
  %4904 = vmatpush2.msra.mxu0 0.0
  %4905 = vmatprep.subr.mxu0 0.0
  %4906 = vmatpush2.msra.mxu0 0.0
  %4907 = vmatprep.subr.mxu0 0.0
  %4908 = vmatpush2.msra.mxu0 0.0
  %4909 = vmatprep.subr.mxu0 0.0
  %4910 = vmatpush2.msra.mxu0 0.0
  %4911 = vmatprep.subr.mxu0 0.0
  %4912 = vmatpush2.msra.mxu0 0.0
  %4913 = vmatprep.subr.mxu0 0.0
  %4914 = vmatpush2.msra.mxu0 0.0
  %4915 = vmatprep.subr.mxu0 0.0
  %4916 = vmatpush2.msra.mxu0 0.0
  %4917 = vmatprep.subr.mxu0 0.0
  %4918 = vmatpush2.msra.mxu0 0.0
  %4919 = vmatprep.subr.mxu0 0.0
  %4920 = vmatpush2.msra.mxu0 0.0
  %4921 = vmatprep.subr.mxu0 0.0
  %4922 = vmatpush2.msra.mxu0 0.0
  %4923 = vmatprep.mubr.f32.mxu0 0.0
  %4924 = vmatmul.mubr.f32.gmra.mxu0 %v4824
  %v4925 = vpop.f32.mrf.mxu0
  %v4926 = vadd.f32 0.0, %v4925
  %v4927 = vpop.f32.mrf.mxu0
  %4928 = vmatprep.mubr.f32.mxu0 0.0
  %4929 = vmatmul.mubr.f32.gmra.mxu0 %v4827
  %v4930 = vpop.f32.mrf.mxu0
  %v4931 = vadd.f32 0.0, %v4930
  %v4932 = vpop.f32.mrf.mxu0
  %4933 = vmatprep.mubr.f32.mxu0 0.0
  %4934 = vmatmul.mubr.f32.gmra.mxu0 %v4830
  %v4935 = vpop.f32.mrf.mxu0
  %v4936 = vadd.f32 0.0, %v4935
  %v4937 = vpop.f32.mrf.mxu0
  %4938 = vmatprep.mubr.f32.mxu0 0.0
  %4939 = vmatmul.mubr.f32.gmra.mxu0 %v4833
  %v4940 = vpop.f32.mrf.mxu0
  %v4941 = vadd.f32 0.0, %v4940
  %v4942 = vpop.f32.mrf.mxu0
  %4943 = vmatprep.mubr.f32.mxu0 0.0
  %4944 = vmatmul.mubr.f32.gmra.mxu0 %v4836
  %v4945 = vpop.f32.mrf.mxu0
  %v4946 = vadd.f32 0.0, %v4945
  %v4947 = vpop.f32.mrf.mxu0
  %4948 = vmatprep.mubr.f32.mxu0 0.0
  %4949 = vmatmul.mubr.f32.gmra.mxu0 %v4839
  %v4950 = vpop.f32.mrf.mxu0
  %v4951 = vadd.f32 0.0, %v4950
  %v4952 = vpop.f32.mrf.mxu0
  %4953 = vmatprep.mubr.f32.mxu0 0.0
  %4954 = vmatmul.mubr.f32.gmra.mxu0 %v4842
  %v4955 = vpop.f32.mrf.mxu0
  %v4956 = vadd.f32 0.0, %v4955
  %v4957 = vpop.f32.mrf.mxu0
  %4958 = vmatprep.mubr.f32.mxu0 0.0
  %4959 = vmatmul.mubr.f32.gmra.mxu0 %v4845
  %v4960 = vpop.f32.mrf.mxu0
  %v4961 = vadd.f32 0.0, %v4960
  %v4962 = vpop.f32.mrf.mxu0
  %4963 = vmatprep.mubr.f32.mxu0 0.0
  %4964 = vmatmul.mubr.f32.gmra.mxu0 %v4848
  %v4965 = vpop.f32.mrf.mxu0
  %v4966 = vadd.f32 0.0, %v4965
  %v4967 = vpop.f32.mrf.mxu0
  %4968 = vmatprep.mubr.f32.mxu0 0.0
  %4969 = vmatmul.mubr.f32.gmra.mxu0 %v4851
  %v4970 = vpop.f32.mrf.mxu0
  %v4971 = vadd.f32 0.0, %v4970
  %v4972 = vpop.f32.mrf.mxu0
  %4973 = vmatprep.mubr.f32.mxu0 0.0
  %4974 = vmatmul.mubr.f32.gmra.mxu0 %v4854
  %v4975 = vpop.f32.mrf.mxu0
  %v4976 = vadd.f32 0.0, %v4975
  %v4977 = vpop.f32.mrf.mxu0
  %4978 = vmatprep.mubr.f32.mxu0 0.0
  %4979 = vmatmul.mubr.f32.gmra.mxu0 %v4857
  %v4980 = vpop.f32.mrf.mxu0
  %v4981 = vadd.f32 0.0, %v4980
  %v4982 = vpop.f32.mrf.mxu0
  %4983 = vdwg.mxu0
  %v4984 = vmul.f32 %v4926, %v203
  %v4985 = vmul.f32 %v4931, %v203
  %v4986 = vmul.f32 %v4936, %v203
  %v4987 = vadd.f32 %v4984, 0.0
  %v4988 = vadd.f32 %v4985, 0.0
  %v4989 = vadd.f32 %v4986, 0.0
  %v4990 = vmul.f32 %v4941, %v208
  %v4991 = vmul.f32 %v4946, %v208
  %v4992 = vmul.f32 %v4951, %v208
  %v4993 = vadd.f32 %v4987, %v4990
  %v4994 = vadd.f32 %v4988, %v4991
  %v4995 = vadd.f32 %v4989, %v4992
  %v4996 = vmul.f32 %v4956, %v213
  %v4997 = vmul.f32 %v4961, %v213
  %v4998 = vmul.f32 %v4966, %v213
  %v4999 = vadd.f32 %v4993, %v4996
  %v5000 = vadd.f32 %v4994, %v4997
  %v5001 = vadd.f32 %v4995, %v4998
  %v5002 = vmul.f32 %v4971, %v218
  %v5003 = vmul.f32 %v4976, %v218
  %v5004 = vmul.f32 %v4981, %v218
  %v5005 = vadd.f32 %v4999, %v5002
  %v5006 = vadd.f32 %v5000, %v5003
  %v5007 = vadd.f32 %v5001, %v5004
  %v5009 = vsel %vm371, %v5005, 0
  %v5012 = vsel %vm371, %v5006, 0
  %v5015 = vsel %vm371, %v5007, 0
  %5017 = vmatprep.subr.mxu0 0.0
  %5018 = vmatpush1.msra.mxu0 0.0
  %5019 = vmatprep.subr.mxu0 0.0
  %5020 = vmatpush1.msra.mxu0 0.0
  %5021 = vmatprep.subr.mxu0 0.0
  %5022 = vmatpush1.msra.mxu0 0.0
  %5023 = vmatprep.subr.mxu0 0.0
  %5024 = vmatpush1.msra.mxu0 0.0
  %5025 = vmatprep.subr.mxu0 0.0
  %5026 = vmatpush1.msra.mxu0 0.0
  %5027 = vmatprep.subr.mxu0 0.0
  %5028 = vmatpush1.msra.mxu0 0.0
  %5029 = vmatprep.subr.mxu0 0.0
  %5030 = vmatpush1.msra.mxu0 0.0
  %5031 = vmatprep.subr.mxu0 0.0
  %5032 = vmatpush1.msra.mxu0 0.0
  %5033 = vmatprep.subr.mxu0 0.0
  %5034 = vmatpush1.msra.mxu0 0.0
  %5035 = vmatprep.subr.mxu0 0.0
  %5036 = vmatpush1.msra.mxu0 0.0
  %5037 = vmatprep.subr.mxu0 0.0
  %5038 = vmatpush1.msra.mxu0 0.0
  %5039 = vmatprep.subr.mxu0 0.0
  %5040 = vmatpush1.msra.mxu0 0.0
  %5041 = vmatprep.subr.mxu0 0.0
  %5042 = vmatpush1.msra.mxu0 %v2588
  %5043 = vmatprep.subr.mxu0 0.0
  %5044 = vmatpush1.msra.mxu0 %v2587
  %5045 = vmatprep.subr.mxu0 0.0
  %5046 = vmatpush1.msra.mxu0 %v2586
  %5047 = vmatprep.subr.mxu0 0.0
  %5048 = vmatpush1.msra.mxu0 %v2585
  %5049 = vmatprep.subr.mxu0 0.0
  %5050 = vmatpush2.msra.mxu0 0.0
  %5051 = vmatprep.subr.mxu0 0.0
  %5052 = vmatpush2.msra.mxu0 0.0
  %5053 = vmatprep.subr.mxu0 0.0
  %5054 = vmatpush2.msra.mxu0 0.0
  %5055 = vmatprep.subr.mxu0 0.0
  %5056 = vmatpush2.msra.mxu0 0.0
  %5057 = vmatprep.subr.mxu0 0.0
  %5058 = vmatpush2.msra.mxu0 0.0
  %5059 = vmatprep.subr.mxu0 0.0
  %5060 = vmatpush2.msra.mxu0 0.0
  %5061 = vmatprep.subr.mxu0 0.0
  %5062 = vmatpush2.msra.mxu0 0.0
  %5063 = vmatprep.subr.mxu0 0.0
  %5064 = vmatpush2.msra.mxu0 0.0
  %5065 = vmatprep.subr.mxu0 0.0
  %5066 = vmatpush2.msra.mxu0 0.0
  %5067 = vmatprep.subr.mxu0 0.0
  %5068 = vmatpush2.msra.mxu0 0.0
  %5069 = vmatprep.subr.mxu0 0.0
  %5070 = vmatpush2.msra.mxu0 0.0
  %5071 = vmatprep.subr.mxu0 0.0
  %5072 = vmatpush2.msra.mxu0 0.0
  %5073 = vmatprep.subr.mxu0 0.0
  %5074 = vmatpush2.msra.mxu0 0.0
  %5075 = vmatprep.subr.mxu0 0.0
  %5076 = vmatpush2.msra.mxu0 0.0
  %5077 = vmatprep.subr.mxu0 0.0
  %5078 = vmatpush2.msra.mxu0 0.0
  %5079 = vmatprep.subr.mxu0 0.0
  %5080 = vmatpush2.msra.mxu0 0.0
  %5081 = vmatprep.mubr.f32.mxu0 0.0
  %5082 = vmatmul.mubr.f32.gmra.mxu0 %v5009
  %v5083 = vpop.f32.mrf.mxu0
  %v5084 = vadd.f32 %v3643, %v5083
  %v5085 = vpop.f32.mrf.mxu0
  %5086 = vmatprep.mubr.f32.mxu0 0.0
  %5087 = vmatmul.mubr.f32.gmra.mxu0 %v5012
  %v5088 = vpop.f32.mrf.mxu0
  %v5089 = vadd.f32 %v3643, %v5088
  %v5090 = vpop.f32.mrf.mxu0
  %5091 = vmatprep.mubr.f32.mxu0 0.0
  %5092 = vmatmul.mubr.f32.gmra.mxu0 %v5015
  %v5093 = vpop.f32.mrf.mxu0
  %v5094 = vadd.f32 %v3643, %v5093
  %v5095 = vpop.f32.mrf.mxu0
  %5096 = vdwg.mxu0
  %v5097 = vsel %vm371, %v5084, 0.0
  %5098 = vadd.xlane.f32.xlu0 %v5097
  %v5099 = vpop.xlane.xlu0 %5098
  %v5100 = vsel %vm371, %v5089, 0.0
  %5101 = vadd.xlane.f32.xlu0 %v5100
  %v5102 = vpop.xlane.xlu0 %5101
  %v5103 = vsel %vm371, %v5094, 0.0
  %5104 = vadd.xlane.f32.xlu0 %v5103
  %v5105 = vpop.xlane.xlu0 %5104
  %v5106 = vmul.f32 %v5099, %v381
  %v5107 = vmul.f32 %v5102, %v381
  %v5108 = vmul.f32 %v5105, %v381
  %v5109 = vsub.f32 %v5084, %v5106
  %v5110 = vsub.f32 %v5089, %v5107
  %v5111 = vsub.f32 %v5094, %v5108
  %v5112 = vmul.f32 %v5109, %v5109
  %v5113 = vmul.f32 %v5110, %v5110
  %v5114 = vmul.f32 %v5111, %v5111
  %v5115 = vsel %vm371, %v5112, 0.0
  %5116 = vadd.xlane.f32.xlu0 %v5115
  %v5117 = vpop.xlane.xlu0 %5116
  %v5118 = vsel %vm371, %v5113, 0.0
  %5119 = vadd.xlane.f32.xlu0 %v5118
  %v5120 = vpop.xlane.xlu0 %5119
  %v5121 = vsel %vm371, %v5114, 0.0
  %5122 = vadd.xlane.f32.xlu0 %v5121
  %v5123 = vpop.xlane.xlu0 %5122
  %v5124 = vmul.f32 %v5117, %v381
  %v5125 = vmul.f32 %v5120, %v381
  %v5126 = vmul.f32 %v5123, %v381
  %v5127 = vadd.f32 %v5124, 1e-05
  %v5128 = vadd.f32 %v5125, 1e-05
  %v5129 = vadd.f32 %v5126, 1e-05
  %v5130 = vrsqrt.pop %v5127
  %v5131 = vrsqrt.pop %v5128
  %v5132 = vrsqrt.pop %v5129
  %v5133 = vmul.f32 %v5109, %v5130
  %v5134 = vmul.f32 %v5110, %v5131
  %v5135 = vmul.f32 %v5111, %v5132
  %v5136 = vmul.f32 %v5133, %v3773
  %v5137 = vmul.f32 %v5134, %v3773
  %v5138 = vmul.f32 %v5135, %v3773
  %v5139 = vadd.f32 %v5136, %v3779
  %v5140 = vadd.f32 %v5137, %v3779
  %v5141 = vadd.f32 %v5138, %v3779
  %v5143 = vsel %vm371, %v5139, 0
  %v5146 = vsel %vm371, %v5140, 0
  %v5149 = vsel %vm371, %v5141, 0
  %5151 = vmatprep.subr.mxu0 0.0
  %5152 = vmatpush1.msra.mxu0 0.0
  %5153 = vmatprep.subr.mxu0 0.0
  %5154 = vmatpush1.msra.mxu0 0.0
  %5155 = vmatprep.subr.mxu0 0.0
  %5156 = vmatpush1.msra.mxu0 0.0
  %5157 = vmatprep.subr.mxu0 0.0
  %5158 = vmatpush1.msra.mxu0 0.0
  %5159 = vmatprep.subr.mxu0 0.0
  %5160 = vmatpush1.msra.mxu0 0.0
  %5161 = vmatprep.subr.mxu0 0.0
  %5162 = vmatpush1.msra.mxu0 0.0
  %5163 = vmatprep.subr.mxu0 0.0
  %5164 = vmatpush1.msra.mxu0 0.0
  %5165 = vmatprep.subr.mxu0 0.0
  %5166 = vmatpush1.msra.mxu0 0.0
  %5167 = vmatprep.subr.mxu0 0.0
  %5168 = vmatpush1.msra.mxu0 0.0
  %5169 = vmatprep.subr.mxu0 0.0
  %5170 = vmatpush1.msra.mxu0 0.0
  %5171 = vmatprep.subr.mxu0 0.0
  %5172 = vmatpush1.msra.mxu0 0.0
  %5173 = vmatprep.subr.mxu0 0.0
  %5174 = vmatpush1.msra.mxu0 0.0
  %5175 = vmatprep.subr.mxu0 0.0
  %5176 = vmatpush1.msra.mxu0 %v2593
  %5177 = vmatprep.subr.mxu0 0.0
  %5178 = vmatpush1.msra.mxu0 %v2592
  %5179 = vmatprep.subr.mxu0 0.0
  %5180 = vmatpush1.msra.mxu0 %v2591
  %5181 = vmatprep.subr.mxu0 0.0
  %5182 = vmatpush1.msra.mxu0 %v2590
  %5183 = vmatprep.subr.mxu0 0.0
  %5184 = vmatpush2.msra.mxu0 0.0
  %5185 = vmatprep.subr.mxu0 0.0
  %5186 = vmatpush2.msra.mxu0 0.0
  %5187 = vmatprep.subr.mxu0 0.0
  %5188 = vmatpush2.msra.mxu0 0.0
  %5189 = vmatprep.subr.mxu0 0.0
  %5190 = vmatpush2.msra.mxu0 0.0
  %5191 = vmatprep.subr.mxu0 0.0
  %5192 = vmatpush2.msra.mxu0 0.0
  %5193 = vmatprep.subr.mxu0 0.0
  %5194 = vmatpush2.msra.mxu0 0.0
  %5195 = vmatprep.subr.mxu0 0.0
  %5196 = vmatpush2.msra.mxu0 0.0
  %5197 = vmatprep.subr.mxu0 0.0
  %5198 = vmatpush2.msra.mxu0 0.0
  %5199 = vmatprep.subr.mxu0 0.0
  %5200 = vmatpush2.msra.mxu0 0.0
  %5201 = vmatprep.subr.mxu0 0.0
  %5202 = vmatpush2.msra.mxu0 0.0
  %5203 = vmatprep.subr.mxu0 0.0
  %5204 = vmatpush2.msra.mxu0 0.0
  %5205 = vmatprep.subr.mxu0 0.0
  %5206 = vmatpush2.msra.mxu0 0.0
  %5207 = vmatprep.subr.mxu0 0.0
  %5208 = vmatpush2.msra.mxu0 0.0
  %5209 = vmatprep.subr.mxu0 0.0
  %5210 = vmatpush2.msra.mxu0 0.0
  %5211 = vmatprep.subr.mxu0 0.0
  %5212 = vmatpush2.msra.mxu0 0.0
  %5213 = vmatprep.subr.mxu0 0.0
  %5214 = vmatpush2.msra.mxu0 0.0
  %5215 = vmatprep.mubr.f32.mxu0 0.0
  %5216 = vmatmul.mubr.f32.gmra.mxu0 %v5143
  %v5217 = vpop.f32.mrf.mxu0
  %v5218 = vadd.f32 0.0, %v5217
  %v5219 = vpop.f32.mrf.mxu0
  %5220 = vmatprep.mubr.f32.mxu0 0.0
  %5221 = vmatmul.mubr.f32.gmra.mxu0 %v5146
  %v5222 = vpop.f32.mrf.mxu0
  %v5223 = vadd.f32 0.0, %v5222
  %v5224 = vpop.f32.mrf.mxu0
  %5225 = vmatprep.mubr.f32.mxu0 0.0
  %5226 = vmatmul.mubr.f32.gmra.mxu0 %v5149
  %v5227 = vpop.f32.mrf.mxu0
  %v5228 = vadd.f32 0.0, %v5227
  %v5229 = vpop.f32.mrf.mxu0
  %5230 = vdwg.mxu0
  %v5231 = vmul.f32 %v5218, %v5218
  %v5232 = vmul.f32 %v5223, %v5223
  %v5233 = vmul.f32 %v5228, %v5228
  %v5234 = vsel %vm3876, %v5231, 0.0
  %5235 = vadd.xlane.f32.xlu0 %v5234
  %v5236 = vpop.xlane.xlu0 %5235
  %v5237 = vsel %vm3876, %v5232, 0.0
  %5238 = vadd.xlane.f32.xlu0 %v5237
  %v5239 = vpop.xlane.xlu0 %5238
  %v5240 = vsel %vm3876, %v5233, 0.0
  %5241 = vadd.xlane.f32.xlu0 %v5240
  %v5242 = vpop.xlane.xlu0 %5241
  %v5243 = vrsqrt.pop %v5236
  %v5244 = vrsqrt.pop %v5239
  %v5245 = vrsqrt.pop %v5242
  %v5246 = vmul.f32 %v5218, %v5243
  %v5247 = vmul.f32 %v5223, %v5244
  %v5248 = vmul.f32 %v5228, %v5245
  %v5250 = vsel %vm3876, %v5246, 0
  %v5253 = vsel %vm3876, %v5247, 0
  %v5256 = vsel %vm3876, %v5248, 0
  %5258 = vmatprep.subr.mxu0 0.0
  %5259 = vmatpush1.xpose.msra.mxu0 0.0
  %5260 = vmatprep.subr.mxu0 0.0
  %5261 = vmatpush1.xpose.msra.mxu0 0.0
  %5262 = vmatprep.subr.mxu0 0.0
  %5263 = vmatpush1.xpose.msra.mxu0 0.0
  %5264 = vmatprep.subr.mxu0 0.0
  %5265 = vmatpush1.xpose.msra.mxu0 0.0
  %5266 = vmatprep.subr.mxu0 0.0
  %5267 = vmatpush1.xpose.msra.mxu0 0.0
  %5268 = vmatprep.subr.mxu0 0.0
  %5269 = vmatpush1.xpose.msra.mxu0 0.0
  %5270 = vmatprep.subr.mxu0 0.0
  %5271 = vmatpush1.xpose.msra.mxu0 0.0
  %5272 = vmatprep.subr.mxu0 0.0
  %5273 = vmatpush1.xpose.msra.mxu0 0.0
  %5274 = vmatprep.subr.mxu0 0.0
  %5275 = vmatpush1.xpose.msra.mxu0 0.0
  %5276 = vmatprep.subr.mxu0 0.0
  %5277 = vmatpush1.xpose.msra.mxu0 0.0
  %5278 = vmatprep.subr.mxu0 0.0
  %5279 = vmatpush1.xpose.msra.mxu0 0.0
  %5280 = vmatprep.subr.mxu0 0.0
  %5281 = vmatpush1.xpose.msra.mxu0 0.0
  %5282 = vmatprep.subr.mxu0 0.0
  %5283 = vmatpush1.xpose.msra.mxu0 0.0
  %5284 = vmatprep.subr.mxu0 0.0
  %5285 = vmatpush1.xpose.msra.mxu0 0.0
  %5286 = vmatprep.subr.mxu0 0.0
  %5287 = vmatpush1.xpose.msra.mxu0 0.0
  %5288 = vmatprep.subr.mxu0 0.0
  %5289 = vmatpush1.xpose.msra.mxu0 %v3904
  %5290 = vmatprep.subr.mxu0 0.0
  %5291 = vmatpush2.xpose.msra.mxu0 0.0
  %5292 = vmatprep.subr.mxu0 0.0
  %5293 = vmatpush2.xpose.msra.mxu0 0.0
  %5294 = vmatprep.subr.mxu0 0.0
  %5295 = vmatpush2.xpose.msra.mxu0 0.0
  %5296 = vmatprep.subr.mxu0 0.0
  %5297 = vmatpush2.xpose.msra.mxu0 0.0
  %5298 = vmatprep.subr.mxu0 0.0
  %5299 = vmatpush2.xpose.msra.mxu0 0.0
  %5300 = vmatprep.subr.mxu0 0.0
  %5301 = vmatpush2.xpose.msra.mxu0 0.0
  %5302 = vmatprep.subr.mxu0 0.0
  %5303 = vmatpush2.xpose.msra.mxu0 0.0
  %5304 = vmatprep.subr.mxu0 0.0
  %5305 = vmatpush2.xpose.msra.mxu0 0.0
  %5306 = vmatprep.subr.mxu0 0.0
  %5307 = vmatpush2.xpose.msra.mxu0 0.0
  %5308 = vmatprep.subr.mxu0 0.0
  %5309 = vmatpush2.xpose.msra.mxu0 0.0
  %5310 = vmatprep.subr.mxu0 0.0
  %5311 = vmatpush2.xpose.msra.mxu0 0.0
  %5312 = vmatprep.subr.mxu0 0.0
  %5313 = vmatpush2.xpose.msra.mxu0 0.0
  %5314 = vmatprep.subr.mxu0 0.0
  %5315 = vmatpush2.xpose.msra.mxu0 0.0
  %5316 = vmatprep.subr.mxu0 0.0
  %5317 = vmatpush2.xpose.msra.mxu0 0.0
  %5318 = vmatprep.subr.mxu0 0.0
  %5319 = vmatpush2.xpose.msra.mxu0 0.0
  %5320 = vmatprep.subr.mxu0 0.0
  %5321 = vmatpush2.xpose.msra.mxu0 0.0
  %5322 = vmatprep.mubr.f32.mxu0 0.0
  %5323 = vmatmul.mubr.f32.gmra.mxu0 %v5250
  %v5324 = vpop.f32.mrf.mxu0
  %v5325 = vadd.f32 0.0, %v5324
  %v5326 = vpop.f32.mrf.mxu0
  %5327 = vmatprep.mubr.f32.mxu0 0.0
  %5328 = vmatmul.mubr.f32.gmra.mxu0 %v5253
  %v5329 = vpop.f32.mrf.mxu0
  %v5330 = vadd.f32 0.0, %v5329
  %v5331 = vpop.f32.mrf.mxu0
  %5332 = vmatprep.mubr.f32.mxu0 0.0
  %5333 = vmatmul.mubr.f32.gmra.mxu0 %v5256
  %v5334 = vpop.f32.mrf.mxu0
  %v5335 = vadd.f32 0.0, %v5334
  %v5336 = vpop.f32.mrf.mxu0
  %5337 = vdwg.mxu0
  %v5338 = vmul.f32 %v5325, 100.0
  %v5339 = vmul.f32 %v5330, 100.0
  %v5340 = vmul.f32 %v5335, 100.0
  %v5341 = vsel %vm3989, %v5338, -inf
  %5342 = vmax.xlane.f32.xlu0 %v5341
  %v5343 = vpop.xlane.xlu0 %5342
  %v5344 = vsel %vm3989, %v5339, -inf
  %5345 = vmax.xlane.f32.xlu0 %v5344
  %v5346 = vpop.xlane.xlu0 %5345
  %v5347 = vsel %vm3989, %v5340, -inf
  %5348 = vmax.xlane.f32.xlu0 %v5347
  %v5349 = vpop.xlane.xlu0 %5348
  %v5350 = vsub.f32 %v5338, %v5343
  %v5351 = vsub.f32 %v5339, %v5346
  %v5352 = vsub.f32 %v5340, %v5349
  %v5353 = vmul.f32 %v5350, 1.442695
  %v5354 = vpow.pop %v5353
  %v5355 = vmul.f32 %v5351, 1.442695
  %v5356 = vpow.pop %v5355
  %v5357 = vmul.f32 %v5352, 1.442695
  %v5358 = vpow.pop %v5357
  %v5359 = vsel %vm3989, %v5354, 0.0
  %5360 = vadd.xlane.f32.xlu0 %v5359
  %v5361 = vpop.xlane.xlu0 %5360
  %v5362 = vsel %vm3989, %v5356, 0.0
  %5363 = vadd.xlane.f32.xlu0 %v5362
  %v5364 = vpop.xlane.xlu0 %5363
  %v5365 = vsel %vm3989, %v5358, 0.0
  %5366 = vadd.xlane.f32.xlu0 %v5365
  %v5367 = vpop.xlane.xlu0 %5366
  %v5368 = vrcp.pop %v5361
  %v5369 = vrcp.pop %v5364
  %v5370 = vrcp.pop %v5367
  %v5371 = vmul.f32 %v5354, %v5368
  %v5372 = vmul.f32 %v5356, %v5369
  %v5373 = vmul.f32 %v5358, %v5370
  %v5374 = vsel %vm371, %v2576, 0.0
  %5375 = vadd.xlane.f32.xlu0 %v5374
  %v5376 = vpop.xlane.xlu0 %5375
  %v5377 = vsel %vm371, %v2577, 0.0
  %5378 = vadd.xlane.f32.xlu0 %v5377
  %v5379 = vpop.xlane.xlu0 %5378
  %v5380 = vsel %vm371, %v2578, 0.0
  %5381 = vadd.xlane.f32.xlu0 %v5380
  %v5382 = vpop.xlane.xlu0 %5381
  %v5383 = vmul.f32 %v5376, %v381
  %v5384 = vmul.f32 %v5379, %v381
  %v5385 = vmul.f32 %v5382, %v381
  %v5386 = vsub.f32 %v2576, %v5383
  %v5387 = vsub.f32 %v2577, %v5384
  %v5388 = vsub.f32 %v2578, %v5385
  %v5389 = vmul.f32 %v5386, %v5386
  %v5390 = vmul.f32 %v5387, %v5387
  %v5391 = vmul.f32 %v5388, %v5388
  %v5392 = vsel %vm371, %v5389, 0.0
  %5393 = vadd.xlane.f32.xlu0 %v5392
  %v5394 = vpop.xlane.xlu0 %5393
  %v5395 = vsel %vm371, %v5390, 0.0
  %5396 = vadd.xlane.f32.xlu0 %v5395
  %v5397 = vpop.xlane.xlu0 %5396
  %v5398 = vsel %vm371, %v5391, 0.0
  %5399 = vadd.xlane.f32.xlu0 %v5398
  %v5400 = vpop.xlane.xlu0 %5399
  %v5401 = vmul.f32 %v5394, %v381
  %v5402 = vmul.f32 %v5397, %v381
  %v5403 = vmul.f32 %v5400, %v381
  %v5404 = vadd.f32 %v5401, 1e-05
  %v5405 = vadd.f32 %v5402, 1e-05
  %v5406 = vadd.f32 %v5403, 1e-05
  %v5407 = vrsqrt.pop %v5404
  %v5408 = vrsqrt.pop %v5405
  %v5409 = vrsqrt.pop %v5406
  %v5410 = vmul.f32 %v5386, %v5407
  %v5411 = vmul.f32 %v5387, %v5408
  %v5412 = vmul.f32 %v5388, %v5409
  %v5413 = vmul.f32 %v5410, %v2648
  %v5414 = vmul.f32 %v5411, %v2648
  %v5415 = vmul.f32 %v5412, %v2648
  %v5416 = vadd.f32 %v5413, %v2654
  %v5417 = vadd.f32 %v5414, %v2654
  %v5418 = vadd.f32 %v5415, %v2654
  %v5420 = vsel %vm371, %v5416, 0
  %v5423 = vsel %vm371, %v5417, 0
  %v5426 = vsel %vm371, %v5418, 0
  %5428 = vmatprep.subr.mxu0 0.0
  %5429 = vmatpush1.msra.mxu0 0.0
  %5430 = vmatprep.subr.mxu0 0.0
  %5431 = vmatpush1.msra.mxu0 0.0
  %5432 = vmatprep.subr.mxu0 0.0
  %5433 = vmatpush1.msra.mxu0 0.0
  %5434 = vmatprep.subr.mxu0 0.0
  %5435 = vmatpush1.msra.mxu0 0.0
  %5436 = vmatprep.subr.mxu0 0.0
  %5437 = vmatpush1.msra.mxu0 0.0
  %5438 = vmatprep.subr.mxu0 0.0
  %5439 = vmatpush1.msra.mxu0 0.0
  %5440 = vmatprep.subr.mxu0 0.0
  %5441 = vmatpush1.msra.mxu0 0.0
  %5442 = vmatprep.subr.mxu0 0.0
  %5443 = vmatpush1.msra.mxu0 0.0
  %5444 = vmatprep.subr.mxu0 0.0
  %5445 = vmatpush1.msra.mxu0 0.0
  %5446 = vmatprep.subr.mxu0 0.0
  %5447 = vmatpush1.msra.mxu0 0.0
  %5448 = vmatprep.subr.mxu0 0.0
  %5449 = vmatpush1.msra.mxu0 0.0
  %5450 = vmatprep.subr.mxu0 0.0
  %5451 = vmatpush1.msra.mxu0 0.0
  %5452 = vmatprep.subr.mxu0 0.0
  %5453 = vmatpush1.msra.mxu0 %v2583
  %5454 = vmatprep.subr.mxu0 0.0
  %5455 = vmatpush1.msra.mxu0 %v2582
  %5456 = vmatprep.subr.mxu0 0.0
  %5457 = vmatpush1.msra.mxu0 %v2581
  %5458 = vmatprep.subr.mxu0 0.0
  %5459 = vmatpush1.msra.mxu0 %v2580
  %5460 = vmatprep.subr.mxu0 0.0
  %5461 = vmatpush2.msra.mxu0 0.0
  %5462 = vmatprep.subr.mxu0 0.0
  %5463 = vmatpush2.msra.mxu0 0.0
  %5464 = vmatprep.subr.mxu0 0.0
  %5465 = vmatpush2.msra.mxu0 0.0
  %5466 = vmatprep.subr.mxu0 0.0
  %5467 = vmatpush2.msra.mxu0 0.0
  %5468 = vmatprep.subr.mxu0 0.0
  %5469 = vmatpush2.msra.mxu0 0.0
  %5470 = vmatprep.subr.mxu0 0.0
  %5471 = vmatpush2.msra.mxu0 0.0
  %5472 = vmatprep.subr.mxu0 0.0
  %5473 = vmatpush2.msra.mxu0 0.0
  %5474 = vmatprep.subr.mxu0 0.0
  %5475 = vmatpush2.msra.mxu0 0.0
  %5476 = vmatprep.subr.mxu0 0.0
  %5477 = vmatpush2.msra.mxu0 0.0
  %5478 = vmatprep.subr.mxu0 0.0
  %5479 = vmatpush2.msra.mxu0 0.0
  %5480 = vmatprep.subr.mxu0 0.0
  %5481 = vmatpush2.msra.mxu0 0.0
  %5482 = vmatprep.subr.mxu0 0.0
  %5483 = vmatpush2.msra.mxu0 0.0
  %5484 = vmatprep.subr.mxu0 0.0
  %5485 = vmatpush2.msra.mxu0 0.0
  %5486 = vmatprep.subr.mxu0 0.0
  %5487 = vmatpush2.msra.mxu0 0.0
  %5488 = vmatprep.subr.mxu0 0.0
  %5489 = vmatpush2.msra.mxu0 0.0
  %5490 = vmatprep.subr.mxu0 0.0
  %5491 = vmatpush2.msra.mxu0 0.0
  %5492 = vmatprep.mubr.f32.mxu0 0.0
  %5493 = vmatmul.mubr.f32.gmra.mxu0 %v5420
  %v5494 = vpop.f32.mrf.mxu0
  %v5495 = vadd.f32 %v2662, %v5494
  %v5496 = vpop.f32.mrf.mxu0
  %5497 = vmatprep.mubr.f32.mxu0 0.0
  %5498 = vmatmul.mubr.f32.gmra.mxu0 %v5423
  %v5499 = vpop.f32.mrf.mxu0
  %v5500 = vadd.f32 %v2662, %v5499
  %v5501 = vpop.f32.mrf.mxu0
  %5502 = vmatprep.mubr.f32.mxu0 0.0
  %5503 = vmatmul.mubr.f32.gmra.mxu0 %v5426
  %v5504 = vpop.f32.mrf.mxu0
  %v5505 = vadd.f32 %v2662, %v5504
  %v5506 = vpop.f32.mrf.mxu0
  %5507 = vdwg.mxu0
  %5508 = vmatprep.subr.mxu0 0.0
  %5509 = vmatpush1.msra.mxu0 0.0
  %5510 = vmatprep.subr.mxu0 0.0
  %5511 = vmatpush1.msra.mxu0 0.0
  %5512 = vmatprep.subr.mxu0 0.0
  %5513 = vmatpush1.msra.mxu0 0.0
  %5514 = vmatprep.subr.mxu0 0.0
  %5515 = vmatpush1.msra.mxu0 0.0
  %5516 = vmatprep.subr.mxu0 0.0
  %5517 = vmatpush1.msra.mxu0 %v4413
  %5518 = vmatprep.subr.mxu0 0.0
  %5519 = vmatpush1.msra.mxu0 %v4411
  %5520 = vmatprep.subr.mxu0 0.0
  %5521 = vmatpush1.msra.mxu0 %v4409
  %5522 = vmatprep.subr.mxu0 0.0
  %5523 = vmatpush1.msra.mxu0 %v4407
  %5524 = vmatprep.subr.mxu0 0.0
  %5525 = vmatpush1.msra.mxu0 %v4405
  %5526 = vmatprep.subr.mxu0 0.0
  %5527 = vmatpush1.msra.mxu0 %v4403
  %5528 = vmatprep.subr.mxu0 0.0
  %5529 = vmatpush1.msra.mxu0 %v4401
  %5530 = vmatprep.subr.mxu0 0.0
  %5531 = vmatpush1.msra.mxu0 %v4399
  %5532 = vmatprep.subr.mxu0 0.0
  %5533 = vmatpush1.msra.mxu0 %v4397
  %5534 = vmatprep.subr.mxu0 0.0
  %5535 = vmatpush1.msra.mxu0 %v4395
  %5536 = vmatprep.subr.mxu0 0.0
  %5537 = vmatpush1.msra.mxu0 %v4393
  %5538 = vmatprep.subr.mxu0 0.0
  %5539 = vmatpush1.msra.mxu0 %v4391
  %5540 = vmatprep.subr.mxu0 0.0
  %5541 = vmatpush2.msra.mxu0 0.0
  %5542 = vmatprep.subr.mxu0 0.0
  %5543 = vmatpush2.msra.mxu0 0.0
  %5544 = vmatprep.subr.mxu0 0.0
  %5545 = vmatpush2.msra.mxu0 0.0
  %5546 = vmatprep.subr.mxu0 0.0
  %5547 = vmatpush2.msra.mxu0 0.0
  %5548 = vmatprep.subr.mxu0 0.0
  %5549 = vmatpush2.msra.mxu0 0.0
  %5550 = vmatprep.subr.mxu0 0.0
  %5551 = vmatpush2.msra.mxu0 0.0
  %5552 = vmatprep.subr.mxu0 0.0
  %5553 = vmatpush2.msra.mxu0 0.0
  %5554 = vmatprep.subr.mxu0 0.0
  %5555 = vmatpush2.msra.mxu0 0.0
  %5556 = vmatprep.subr.mxu0 0.0
  %5557 = vmatpush2.msra.mxu0 0.0
  %5558 = vmatprep.subr.mxu0 0.0
  %5559 = vmatpush2.msra.mxu0 0.0
  %5560 = vmatprep.subr.mxu0 0.0
  %5561 = vmatpush2.msra.mxu0 0.0
  %5562 = vmatprep.subr.mxu0 0.0
  %5563 = vmatpush2.msra.mxu0 0.0
  %5564 = vmatprep.subr.mxu0 0.0
  %5565 = vmatpush2.msra.mxu0 0.0
  %5566 = vmatprep.subr.mxu0 0.0
  %5567 = vmatpush2.msra.mxu0 0.0
  %5568 = vmatprep.subr.mxu0 0.0
  %5569 = vmatpush2.msra.mxu0 0.0
  %5570 = vmatprep.subr.mxu0 0.0
  %5571 = vmatpush2.msra.mxu0 0.0
  %5572 = vmatprep.mubr.f32.mxu0 0.0
  %5573 = vmatmul.mubr.f32.gmra.mxu0 %v2754
  %v5574 = vpop.f32.mrf.mxu0
  %v5575 = vadd.f32 0.0, %v5574
  %v5576 = vpop.f32.mrf.mxu0
  %5577 = vmatprep.mubr.f32.mxu0 0.0
  %5578 = vmatmul.mubr.f32.gmra.mxu0 %v2757
  %v5579 = vpop.f32.mrf.mxu0
  %v5580 = vadd.f32 0.0, %v5579
  %v5581 = vpop.f32.mrf.mxu0
  %5582 = vmatprep.mubr.f32.mxu0 0.0
  %5583 = vmatmul.mubr.f32.gmra.mxu0 %v2760
  %v5584 = vpop.f32.mrf.mxu0
  %v5585 = vadd.f32 0.0, %v5584
  %v5586 = vpop.f32.mrf.mxu0
  %5587 = vmatprep.mubr.f32.mxu0 0.0
  %5588 = vmatmul.mubr.f32.gmra.mxu0 %v2763
  %v5589 = vpop.f32.mrf.mxu0
  %v5590 = vadd.f32 0.0, %v5589
  %v5591 = vpop.f32.mrf.mxu0
  %5592 = vmatprep.mubr.f32.mxu0 0.0
  %5593 = vmatmul.mubr.f32.gmra.mxu0 %v2766
  %v5594 = vpop.f32.mrf.mxu0
  %v5595 = vadd.f32 0.0, %v5594
  %v5596 = vpop.f32.mrf.mxu0
  %5597 = vmatprep.mubr.f32.mxu0 0.0
  %5598 = vmatmul.mubr.f32.gmra.mxu0 %v2769
  %v5599 = vpop.f32.mrf.mxu0
  %v5600 = vadd.f32 0.0, %v5599
  %v5601 = vpop.f32.mrf.mxu0
  %5602 = vmatprep.mubr.f32.mxu0 0.0
  %5603 = vmatmul.mubr.f32.gmra.mxu0 %v2772
  %v5604 = vpop.f32.mrf.mxu0
  %v5605 = vadd.f32 0.0, %v5604
  %v5606 = vpop.f32.mrf.mxu0
  %5607 = vmatprep.mubr.f32.mxu0 0.0
  %5608 = vmatmul.mubr.f32.gmra.mxu0 %v2775
  %v5609 = vpop.f32.mrf.mxu0
  %v5610 = vadd.f32 0.0, %v5609
  %v5611 = vpop.f32.mrf.mxu0
  %5612 = vmatprep.mubr.f32.mxu0 0.0
  %5613 = vmatmul.mubr.f32.gmra.mxu0 %v2778
  %v5614 = vpop.f32.mrf.mxu0
  %v5615 = vadd.f32 0.0, %v5614
  %v5616 = vpop.f32.mrf.mxu0
  %5617 = vmatprep.mubr.f32.mxu0 0.0
  %5618 = vmatmul.mubr.f32.gmra.mxu0 %v2781
  %v5619 = vpop.f32.mrf.mxu0
  %v5620 = vadd.f32 0.0, %v5619
  %v5621 = vpop.f32.mrf.mxu0
  %5622 = vmatprep.mubr.f32.mxu0 0.0
  %5623 = vmatmul.mubr.f32.gmra.mxu0 %v2784
  %v5624 = vpop.f32.mrf.mxu0
  %v5625 = vadd.f32 0.0, %v5624
  %v5626 = vpop.f32.mrf.mxu0
  %5627 = vmatprep.mubr.f32.mxu0 0.0
  %5628 = vmatmul.mubr.f32.gmra.mxu0 %v2787
  %v5629 = vpop.f32.mrf.mxu0
  %v5630 = vadd.f32 0.0, %v5629
  %v5631 = vpop.f32.mrf.mxu0
  %5632 = vdwg.mxu0
  %vm5633 = vcmp.eq.f32.partialorder %v5575, 0.0
  %vm5634 = vcmp.eq.f32.partialorder %v5580, 0.0
  %vm5635 = vcmp.eq.f32.partialorder %v5585, 0.0
  %vm5636 = vcmp.eq.f32.partialorder %v5590, 0.0
  %vm5637 = vcmp.eq.f32.partialorder %v5595, 0.0
  %vm5638 = vcmp.eq.f32.partialorder %v5600, 0.0
  %vm5639 = vcmp.eq.f32.partialorder %v5605, 0.0
  %vm5640 = vcmp.eq.f32.partialorder %v5610, 0.0
  %vm5641 = vcmp.eq.f32.partialorder %v5615, 0.0
  %vm5642 = vcmp.eq.f32.partialorder %v5620, 0.0
  %vm5643 = vcmp.eq.f32.partialorder %v5625, 0.0
  %vm5644 = vcmp.eq.f32.partialorder %v5630, 0.0
  %v5645 = vsel %vm5633, 1.0, %v5575
  %v5646 = vsel %vm5634, 1.0, %v5580
  %v5647 = vsel %vm5635, 1.0, %v5585
  %v5648 = vsel %vm5636, 1.0, %v5590
  %v5649 = vsel %vm5637, 1.0, %v5595
  %v5650 = vsel %vm5638, 1.0, %v5600
  %v5651 = vsel %vm5639, 1.0, %v5605
  %v5652 = vsel %vm5640, 1.0, %v5610
  %v5653 = vsel %vm5641, 1.0, %v5615
  %v5654 = vsel %vm5642, 1.0, %v5620
  %v5655 = vsel %vm5643, 1.0, %v5625
  %v5656 = vsel %vm5644, 1.0, %v5630
  %v5657 = vrcp.pop %v5645
  %v5658 = vmul.f32 %v4391, %v5657
  %v5659 = vrcp.pop %v5646
  %v5660 = vmul.f32 %v4393, %v5659
  %v5661 = vrcp.pop %v5647
  %v5662 = vmul.f32 %v4395, %v5661
  %v5663 = vrcp.pop %v5648
  %v5664 = vmul.f32 %v4397, %v5663
  %v5665 = vrcp.pop %v5649
  %v5666 = vmul.f32 %v4399, %v5665
  %v5667 = vrcp.pop %v5650
  %v5668 = vmul.f32 %v4401, %v5667
  %v5669 = vrcp.pop %v5651
  %v5670 = vmul.f32 %v4403, %v5669
  %v5671 = vrcp.pop %v5652
  %v5672 = vmul.f32 %v4405, %v5671
  %v5673 = vrcp.pop %v5653
  %v5674 = vmul.f32 %v4407, %v5673
  %v5675 = vrcp.pop %v5654
  %v5676 = vmul.f32 %v4409, %v5675
  %v5677 = vrcp.pop %v5655
  %v5678 = vmul.f32 %v4411, %v5677
  %v5679 = vrcp.pop %v5656
  %v5680 = vmul.f32 %v4413, %v5679
  %v5681 = vsel %vm795, %v5658, 0.0
  %5682 = vadd.xlane.f32.xlu0 %v5681
  %v5683 = vpop.xlane.xlu0 %5682
  %v5684 = vsel %vm795, %v5660, 0.0
  %5685 = vadd.xlane.f32.xlu0 %v5684
  %v5686 = vpop.xlane.xlu0 %5685
  %v5687 = vsel %vm795, %v5662, 0.0
  %5688 = vadd.xlane.f32.xlu0 %v5687
  %v5689 = vpop.xlane.xlu0 %5688
  %v5690 = vsel %vm795, %v5664, 0.0
  %5691 = vadd.xlane.f32.xlu0 %v5690
  %v5692 = vpop.xlane.xlu0 %5691
  %v5693 = vsel %vm795, %v5666, 0.0
  %5694 = vadd.xlane.f32.xlu0 %v5693
  %v5695 = vpop.xlane.xlu0 %5694
  %v5696 = vsel %vm795, %v5668, 0.0
  %5697 = vadd.xlane.f32.xlu0 %v5696
  %v5698 = vpop.xlane.xlu0 %5697
  %v5699 = vsel %vm795, %v5670, 0.0
  %5700 = vadd.xlane.f32.xlu0 %v5699
  %v5701 = vpop.xlane.xlu0 %5700
  %v5702 = vsel %vm795, %v5672, 0.0
  %5703 = vadd.xlane.f32.xlu0 %v5702
  %v5704 = vpop.xlane.xlu0 %5703
  %v5705 = vsel %vm795, %v5674, 0.0
  %5706 = vadd.xlane.f32.xlu0 %v5705
  %v5707 = vpop.xlane.xlu0 %5706
  %v5708 = vsel %vm795, %v5676, 0.0
  %5709 = vadd.xlane.f32.xlu0 %v5708
  %v5710 = vpop.xlane.xlu0 %5709
  %v5711 = vsel %vm795, %v5678, 0.0
  %5712 = vadd.xlane.f32.xlu0 %v5711
  %v5713 = vpop.xlane.xlu0 %5712
  %v5714 = vsel %vm795, %v5680, 0.0
  %5715 = vadd.xlane.f32.xlu0 %v5714
  %v5716 = vpop.xlane.xlu0 %5715
  %vm5717 = vcmp.eq.f32.partialorder %v5683, 0.0
  %vm5718 = vcmp.eq.f32.partialorder %v5686, 0.0
  %vm5719 = vcmp.eq.f32.partialorder %v5689, 0.0
  %vm5720 = vcmp.eq.f32.partialorder %v5692, 0.0
  %vm5721 = vcmp.eq.f32.partialorder %v5695, 0.0
  %vm5722 = vcmp.eq.f32.partialorder %v5698, 0.0
  %vm5723 = vcmp.eq.f32.partialorder %v5701, 0.0
  %vm5724 = vcmp.eq.f32.partialorder %v5704, 0.0
  %vm5725 = vcmp.eq.f32.partialorder %v5707, 0.0
  %vm5726 = vcmp.eq.f32.partialorder %v5710, 0.0
  %vm5727 = vcmp.eq.f32.partialorder %v5713, 0.0
  %vm5728 = vcmp.eq.f32.partialorder %v5716, 0.0
  %v5729 = vsel %vm5717, 1.0, %v5683
  %v5730 = vsel %vm5718, 1.0, %v5686
  %v5731 = vsel %vm5719, 1.0, %v5689
  %v5732 = vsel %vm5720, 1.0, %v5692
  %v5733 = vsel %vm5721, 1.0, %v5695
  %v5734 = vsel %vm5722, 1.0, %v5698
  %v5735 = vsel %vm5723, 1.0, %v5701
  %v5736 = vsel %vm5724, 1.0, %v5704
  %v5737 = vsel %vm5725, 1.0, %v5707
  %v5738 = vsel %vm5726, 1.0, %v5710
  %v5739 = vsel %vm5727, 1.0, %v5713
  %v5740 = vsel %vm5728, 1.0, %v5716
  %v5741 = vrcp.pop %v5729
  %v5742 = vmul.f32 %v5658, %v5741
  %v5743 = vrcp.pop %v5730
  %v5744 = vmul.f32 %v5660, %v5743
  %v5745 = vrcp.pop %v5731
  %v5746 = vmul.f32 %v5662, %v5745
  %v5747 = vrcp.pop %v5732
  %v5748 = vmul.f32 %v5664, %v5747
  %v5749 = vrcp.pop %v5733
  %v5750 = vmul.f32 %v5666, %v5749
  %v5751 = vrcp.pop %v5734
  %v5752 = vmul.f32 %v5668, %v5751
  %v5753 = vrcp.pop %v5735
  %v5754 = vmul.f32 %v5670, %v5753
  %v5755 = vrcp.pop %v5736
  %v5756 = vmul.f32 %v5672, %v5755
  %v5757 = vrcp.pop %v5737
  %v5758 = vmul.f32 %v5674, %v5757
  %v5759 = vrcp.pop %v5738
  %v5760 = vmul.f32 %v5676, %v5759
  %v5761 = vrcp.pop %v5739
  %v5762 = vmul.f32 %v5678, %v5761
  %v5763 = vrcp.pop %v5740
  %v5764 = vmul.f32 %v5680, %v5763
  %5765 = vxpose.xlu0.b32.start [1/16] %v5742, 128
  %5766 = vxpose.xlu0.b32.cont [2/16] %v5744, 128
  %5767 = vxpose.xlu0.b32.cont [3/16] %v5746, 128
  %5768 = vxpose.xlu0.b32.cont [4/16] 0.0, 128
  %5769 = vxpose.xlu0.b32.cont [5/16] 0.0, 128
  %5770 = vxpose.xlu0.b32.cont [6/16] 0.0, 128
  %5771 = vxpose.xlu0.b32.cont [7/16] 0.0, 128
  %5772 = vxpose.xlu0.b32.cont [8/16] 0.0, 128
  %5773 = vxpose.xlu0.b32.cont [9/16] 0.0, 128
  %5774 = vxpose.xlu0.b32.cont [10/16] 0.0, 128
  %5775 = vxpose.xlu0.b32.cont [11/16] 0.0, 128
  %5776 = vxpose.xlu0.b32.cont [12/16] 0.0, 128
  %5777 = vxpose.xlu0.b32.cont [13/16] 0.0, 128
  %5778 = vxpose.xlu0.b32.cont [14/16] 0.0, 128
  %5779 = vxpose.xlu0.b32.cont [15/16] 0.0, 128
  %5780 = vxpose.xlu0.b32.end [16/16] 0.0, 128
  %v5781 = vpop.trf.xlu0
  %v5782 = vpop.trf.xlu0
  %v5783 = vpop.trf.xlu0
  %v5784 = vpop.trf.xlu0
  %v5785 = vpop.trf.xlu0
  %v5786 = vpop.trf.xlu0
  %v5787 = vpop.trf.xlu0
  %v5788 = vpop.trf.xlu0
  %v5789 = vpop.trf.xlu0
  %v5790 = vpop.trf.xlu0
  %v5791 = vpop.trf.xlu0
  %v5792 = vpop.trf.xlu0
  %v5793 = vpop.trf.xlu0
  %v5794 = vpop.trf.xlu0
  %v5795 = vpop.trf.xlu0
  %v5796 = vpop.trf.xlu0
  %5797 = vxpose.xlu0.b32.start [1/16] %v5748, 128
  %5798 = vxpose.xlu0.b32.cont [2/16] %v5750, 128
  %5799 = vxpose.xlu0.b32.cont [3/16] %v5752, 128
  %5800 = vxpose.xlu0.b32.cont [4/16] 0.0, 128
  %5801 = vxpose.xlu0.b32.cont [5/16] 0.0, 128
  %5802 = vxpose.xlu0.b32.cont [6/16] 0.0, 128
  %5803 = vxpose.xlu0.b32.cont [7/16] 0.0, 128
  %5804 = vxpose.xlu0.b32.cont [8/16] 0.0, 128
  %5805 = vxpose.xlu0.b32.cont [9/16] 0.0, 128
  %5806 = vxpose.xlu0.b32.cont [10/16] 0.0, 128
  %5807 = vxpose.xlu0.b32.cont [11/16] 0.0, 128
  %5808 = vxpose.xlu0.b32.cont [12/16] 0.0, 128
  %5809 = vxpose.xlu0.b32.cont [13/16] 0.0, 128
  %5810 = vxpose.xlu0.b32.cont [14/16] 0.0, 128
  %5811 = vxpose.xlu0.b32.cont [15/16] 0.0, 128
  %5812 = vxpose.xlu0.b32.end [16/16] 0.0, 128
  %v5813 = vpop.trf.xlu0
  %v5814 = vpop.trf.xlu0
  %v5815 = vpop.trf.xlu0
  %v5816 = vpop.trf.xlu0
  %v5817 = vpop.trf.xlu0
  %v5818 = vpop.trf.xlu0
  %v5819 = vpop.trf.xlu0
  %v5820 = vpop.trf.xlu0
  %v5821 = vpop.trf.xlu0
  %v5822 = vpop.trf.xlu0
  %v5823 = vpop.trf.xlu0
  %v5824 = vpop.trf.xlu0
  %v5825 = vpop.trf.xlu0
  %v5826 = vpop.trf.xlu0
  %v5827 = vpop.trf.xlu0
  %v5828 = vpop.trf.xlu0
  %5829 = vxpose.xlu0.b32.start [1/16] %v5754, 128
  %5830 = vxpose.xlu0.b32.cont [2/16] %v5756, 128
  %5831 = vxpose.xlu0.b32.cont [3/16] %v5758, 128
  %5832 = vxpose.xlu0.b32.cont [4/16] 0.0, 128
  %5833 = vxpose.xlu0.b32.cont [5/16] 0.0, 128
  %5834 = vxpose.xlu0.b32.cont [6/16] 0.0, 128
  %5835 = vxpose.xlu0.b32.cont [7/16] 0.0, 128
  %5836 = vxpose.xlu0.b32.cont [8/16] 0.0, 128
  %5837 = vxpose.xlu0.b32.cont [9/16] 0.0, 128
  %5838 = vxpose.xlu0.b32.cont [10/16] 0.0, 128
  %5839 = vxpose.xlu0.b32.cont [11/16] 0.0, 128
  %5840 = vxpose.xlu0.b32.cont [12/16] 0.0, 128
  %5841 = vxpose.xlu0.b32.cont [13/16] 0.0, 128
  %5842 = vxpose.xlu0.b32.cont [14/16] 0.0, 128
  %5843 = vxpose.xlu0.b32.cont [15/16] 0.0, 128
  %5844 = vxpose.xlu0.b32.end [16/16] 0.0, 128
  %v5845 = vpop.trf.xlu0
  %v5846 = vpop.trf.xlu0
  %v5847 = vpop.trf.xlu0
  %v5848 = vpop.trf.xlu0
  %v5849 = vpop.trf.xlu0
  %v5850 = vpop.trf.xlu0
  %v5851 = vpop.trf.xlu0
  %v5852 = vpop.trf.xlu0
  %v5853 = vpop.trf.xlu0
  %v5854 = vpop.trf.xlu0
  %v5855 = vpop.trf.xlu0
  %v5856 = vpop.trf.xlu0
  %v5857 = vpop.trf.xlu0
  %v5858 = vpop.trf.xlu0
  %v5859 = vpop.trf.xlu0
  %v5860 = vpop.trf.xlu0
  %5861 = vxpose.xlu0.b32.start [1/16] %v5760, 128
  %5862 = vxpose.xlu0.b32.cont [2/16] %v5762, 128
  %5863 = vxpose.xlu0.b32.cont [3/16] %v5764, 128
  %5864 = vxpose.xlu0.b32.cont [4/16] 0.0, 128
  %5865 = vxpose.xlu0.b32.cont [5/16] 0.0, 128
  %5866 = vxpose.xlu0.b32.cont [6/16] 0.0, 128
  %5867 = vxpose.xlu0.b32.cont [7/16] 0.0, 128
  %5868 = vxpose.xlu0.b32.cont [8/16] 0.0, 128
  %5869 = vxpose.xlu0.b32.cont [9/16] 0.0, 128
  %5870 = vxpose.xlu0.b32.cont [10/16] 0.0, 128
  %5871 = vxpose.xlu0.b32.cont [11/16] 0.0, 128
  %5872 = vxpose.xlu0.b32.cont [12/16] 0.0, 128
  %5873 = vxpose.xlu0.b32.cont [13/16] 0.0, 128
  %5874 = vxpose.xlu0.b32.cont [14/16] 0.0, 128
  %5875 = vxpose.xlu0.b32.cont [15/16] 0.0, 128
  %5876 = vxpose.xlu0.b32.end [16/16] 0.0, 128
  %v5877 = vpop.trf.xlu0
  %v5878 = vpop.trf.xlu0
  %v5879 = vpop.trf.xlu0
  %v5880 = vpop.trf.xlu0
  %v5881 = vpop.trf.xlu0
  %v5882 = vpop.trf.xlu0
  %v5883 = vpop.trf.xlu0
  %v5884 = vpop.trf.xlu0
  %v5885 = vpop.trf.xlu0
  %v5886 = vpop.trf.xlu0
  %v5887 = vpop.trf.xlu0
  %v5888 = vpop.trf.xlu0
  %v5889 = vpop.trf.xlu0
  %v5890 = vpop.trf.xlu0
  %v5891 = vpop.trf.xlu0
  %v5892 = vpop.trf.xlu0
  %v5893 = vadd.f32 %v5742, %v5781
  %v5894 = vadd.f32 %v5744, %v5782
  %v5895 = vadd.f32 %v5746, %v5783
  %v5896 = vadd.f32 %v5748, %v5813
  %v5897 = vadd.f32 %v5750, %v5814
  %v5898 = vadd.f32 %v5752, %v5815
  %v5899 = vadd.f32 %v5754, %v5845
  %v5900 = vadd.f32 %v5756, %v5846
  %v5901 = vadd.f32 %v5758, %v5847
  %v5902 = vadd.f32 %v5760, %v5877
  %v5903 = vadd.f32 %v5762, %v5878
  %v5904 = vadd.f32 %v5764, %v5879
  %v5905 = vmul.f32 %v5893, 0.5
  %v5906 = vmul.f32 %v5894, 0.5
  %v5907 = vmul.f32 %v5895, 0.5
  %v5908 = vmul.f32 %v5896, 0.5
  %v5909 = vmul.f32 %v5897, 0.5
  %v5910 = vmul.f32 %v5898, 0.5
  %v5911 = vmul.f32 %v5899, 0.5
  %v5912 = vmul.f32 %v5900, 0.5
  %v5913 = vmul.f32 %v5901, 0.5
  %v5914 = vmul.f32 %v5902, 0.5
  %v5915 = vmul.f32 %v5903, 0.5
  %v5916 = vmul.f32 %v5904, 0.5
  %5917 = vmatprep.subr.mxu0 0.0
  %5918 = vmatpush1.msra.mxu0 0.0
  %5919 = vmatprep.subr.mxu0 0.0
  %5920 = vmatpush1.msra.mxu0 0.0
  %5921 = vmatprep.subr.mxu0 0.0
  %5922 = vmatpush1.msra.mxu0 0.0
  %5923 = vmatprep.subr.mxu0 0.0
  %5924 = vmatpush1.msra.mxu0 0.0
  %5925 = vmatprep.subr.mxu0 0.0
  %5926 = vmatpush1.msra.mxu0 %v5916
  %5927 = vmatprep.subr.mxu0 0.0
  %5928 = vmatpush1.msra.mxu0 %v5915
  %5929 = vmatprep.subr.mxu0 0.0
  %5930 = vmatpush1.msra.mxu0 %v5914
  %5931 = vmatprep.subr.mxu0 0.0
  %5932 = vmatpush1.msra.mxu0 %v5913
  %5933 = vmatprep.subr.mxu0 0.0
  %5934 = vmatpush1.msra.mxu0 %v5912
  %5935 = vmatprep.subr.mxu0 0.0
  %5936 = vmatpush1.msra.mxu0 %v5911
  %5937 = vmatprep.subr.mxu0 0.0
  %5938 = vmatpush1.msra.mxu0 %v5910
  %5939 = vmatprep.subr.mxu0 0.0
  %5940 = vmatpush1.msra.mxu0 %v5909
  %5941 = vmatprep.subr.mxu0 0.0
  %5942 = vmatpush1.msra.mxu0 %v5908
  %5943 = vmatprep.subr.mxu0 0.0
  %5944 = vmatpush1.msra.mxu0 %v5907
  %5945 = vmatprep.subr.mxu0 0.0
  %5946 = vmatpush1.msra.mxu0 %v5906
  %5947 = vmatprep.subr.mxu0 0.0
  %5948 = vmatpush1.msra.mxu0 %v5905
  %5949 = vmatprep.subr.mxu0 0.0
  %5950 = vmatpush2.msra.mxu0 0.0
  %5951 = vmatprep.subr.mxu0 0.0
  %5952 = vmatpush2.msra.mxu0 0.0
  %5953 = vmatprep.subr.mxu0 0.0
  %5954 = vmatpush2.msra.mxu0 0.0
  %5955 = vmatprep.subr.mxu0 0.0
  %5956 = vmatpush2.msra.mxu0 0.0
  %5957 = vmatprep.subr.mxu0 0.0
  %5958 = vmatpush2.msra.mxu0 0.0
  %5959 = vmatprep.subr.mxu0 0.0
  %5960 = vmatpush2.msra.mxu0 0.0
  %5961 = vmatprep.subr.mxu0 0.0
  %5962 = vmatpush2.msra.mxu0 0.0
  %5963 = vmatprep.subr.mxu0 0.0
  %5964 = vmatpush2.msra.mxu0 0.0
  %5965 = vmatprep.subr.mxu0 0.0
  %5966 = vmatpush2.msra.mxu0 0.0
  %5967 = vmatprep.subr.mxu0 0.0
  %5968 = vmatpush2.msra.mxu0 0.0
  %5969 = vmatprep.subr.mxu0 0.0
  %5970 = vmatpush2.msra.mxu0 0.0
  %5971 = vmatprep.subr.mxu0 0.0
  %5972 = vmatpush2.msra.mxu0 0.0
  %5973 = vmatprep.subr.mxu0 0.0
  %5974 = vmatpush2.msra.mxu0 0.0
  %5975 = vmatprep.subr.mxu0 0.0
  %5976 = vmatpush2.msra.mxu0 0.0
  %5977 = vmatprep.subr.mxu0 0.0
  %5978 = vmatpush2.msra.mxu0 0.0
  %5979 = vmatprep.subr.mxu0 0.0
  %5980 = vmatpush2.msra.mxu0 0.0
  %5981 = vmatprep.mubr.f32.mxu0 0.0
  %5982 = vmatmul.mubr.f32.gmra.mxu0 %v2754
  %v5983 = vpop.f32.mrf.mxu0
  %v5984 = vadd.f32 0.0, %v5983
  %v5985 = vpop.f32.mrf.mxu0
  %5986 = vmatprep.mubr.f32.mxu0 0.0
  %5987 = vmatmul.mubr.f32.gmra.mxu0 %v2757
  %v5988 = vpop.f32.mrf.mxu0
  %v5989 = vadd.f32 0.0, %v5988
  %v5990 = vpop.f32.mrf.mxu0
  %5991 = vmatprep.mubr.f32.mxu0 0.0
  %5992 = vmatmul.mubr.f32.gmra.mxu0 %v2760
  %v5993 = vpop.f32.mrf.mxu0
  %v5994 = vadd.f32 0.0, %v5993
  %v5995 = vpop.f32.mrf.mxu0
  %5996 = vmatprep.mubr.f32.mxu0 0.0
  %5997 = vmatmul.mubr.f32.gmra.mxu0 %v2763
  %v5998 = vpop.f32.mrf.mxu0
  %v5999 = vadd.f32 0.0, %v5998
  %v6000 = vpop.f32.mrf.mxu0
  %6001 = vmatprep.mubr.f32.mxu0 0.0
  %6002 = vmatmul.mubr.f32.gmra.mxu0 %v2766
  %v6003 = vpop.f32.mrf.mxu0
  %v6004 = vadd.f32 0.0, %v6003
  %v6005 = vpop.f32.mrf.mxu0
  %6006 = vmatprep.mubr.f32.mxu0 0.0
  %6007 = vmatmul.mubr.f32.gmra.mxu0 %v2769
  %v6008 = vpop.f32.mrf.mxu0
  %v6009 = vadd.f32 0.0, %v6008
  %v6010 = vpop.f32.mrf.mxu0
  %6011 = vmatprep.mubr.f32.mxu0 0.0
  %6012 = vmatmul.mubr.f32.gmra.mxu0 %v2772
  %v6013 = vpop.f32.mrf.mxu0
  %v6014 = vadd.f32 0.0, %v6013
  %v6015 = vpop.f32.mrf.mxu0
  %6016 = vmatprep.mubr.f32.mxu0 0.0
  %6017 = vmatmul.mubr.f32.gmra.mxu0 %v2775
  %v6018 = vpop.f32.mrf.mxu0
  %v6019 = vadd.f32 0.0, %v6018
  %v6020 = vpop.f32.mrf.mxu0
  %6021 = vmatprep.mubr.f32.mxu0 0.0
  %6022 = vmatmul.mubr.f32.gmra.mxu0 %v2778
  %v6023 = vpop.f32.mrf.mxu0
  %v6024 = vadd.f32 0.0, %v6023
  %v6025 = vpop.f32.mrf.mxu0
  %6026 = vmatprep.mubr.f32.mxu0 0.0
  %6027 = vmatmul.mubr.f32.gmra.mxu0 %v2781
  %v6028 = vpop.f32.mrf.mxu0
  %v6029 = vadd.f32 0.0, %v6028
  %v6030 = vpop.f32.mrf.mxu0
  %6031 = vmatprep.mubr.f32.mxu0 0.0
  %6032 = vmatmul.mubr.f32.gmra.mxu0 %v2784
  %v6033 = vpop.f32.mrf.mxu0
  %v6034 = vadd.f32 0.0, %v6033
  %v6035 = vpop.f32.mrf.mxu0
  %6036 = vmatprep.mubr.f32.mxu0 0.0
  %6037 = vmatmul.mubr.f32.gmra.mxu0 %v2787
  %v6038 = vpop.f32.mrf.mxu0
  %v6039 = vadd.f32 0.0, %v6038
  %v6040 = vpop.f32.mrf.mxu0
  %6041 = vdwg.mxu0
  %v6042 = vmul.f32 %v5984, 0.05882353
  %v6043 = vmul.f32 %v5989, 0.05882353
  %v6044 = vmul.f32 %v5994, 0.05882353
  %v6045 = vmul.f32 %v5999, 0.05882353
  %v6046 = vmul.f32 %v6004, 0.05882353
  %v6047 = vmul.f32 %v6009, 0.05882353
  %v6048 = vmul.f32 %v6014, 0.05882353
  %v6049 = vmul.f32 %v6019, 0.05882353
  %v6050 = vmul.f32 %v6024, 0.05882353
  %v6051 = vmul.f32 %v6029, 0.05882353
  %v6052 = vmul.f32 %v6034, 0.05882353
  %v6053 = vmul.f32 %v6039, 0.05882353
  %v6054 = vsub.f32 %v5905, %v6042
  %v6055 = vsub.f32 %v5906, %v6043
  %v6056 = vsub.f32 %v5907, %v6044
  %v6057 = vsub.f32 %v5908, %v6045
  %v6058 = vsub.f32 %v5909, %v6046
  %v6059 = vsub.f32 %v5910, %v6047
  %v6060 = vsub.f32 %v5911, %v6048
  %v6061 = vsub.f32 %v5912, %v6049
  %v6062 = vsub.f32 %v5913, %v6050
  %v6063 = vsub.f32 %v5914, %v6051
  %v6064 = vsub.f32 %v5915, %v6052
  %v6065 = vsub.f32 %v5916, %v6053
  %v6066 = vmax.f32 %v6054, 0.0
  %v6067 = vmax.f32 %v6055, 0.0
  %v6068 = vmax.f32 %v6056, 0.0
  %v6069 = vmax.f32 %v6057, 0.0
  %v6070 = vmax.f32 %v6058, 0.0
  %v6071 = vmax.f32 %v6059, 0.0
  %v6072 = vmax.f32 %v6060, 0.0
  %v6073 = vmax.f32 %v6061, 0.0
  %v6074 = vmax.f32 %v6062, 0.0
  %v6075 = vmax.f32 %v6063, 0.0
  %v6076 = vmax.f32 %v6064, 0.0
  %v6077 = vmax.f32 %v6065, 0.0
  %v6078 = vsel %vm795, %v6066, 0.0
  %6079 = vadd.xlane.f32.xlu0 %v6078
  %v6080 = vpop.xlane.xlu0 %6079
  %v6081 = vsel %vm795, %v6067, 0.0
  %6082 = vadd.xlane.f32.xlu0 %v6081
  %v6083 = vpop.xlane.xlu0 %6082
  %v6084 = vsel %vm795, %v6068, 0.0
  %6085 = vadd.xlane.f32.xlu0 %v6084
  %v6086 = vpop.xlane.xlu0 %6085
  %v6087 = vsel %vm795, %v6069, 0.0
  %6088 = vadd.xlane.f32.xlu0 %v6087
  %v6089 = vpop.xlane.xlu0 %6088
  %v6090 = vsel %vm795, %v6070, 0.0
  %6091 = vadd.xlane.f32.xlu0 %v6090
  %v6092 = vpop.xlane.xlu0 %6091
  %v6093 = vsel %vm795, %v6071, 0.0
  %6094 = vadd.xlane.f32.xlu0 %v6093
  %v6095 = vpop.xlane.xlu0 %6094
  %v6096 = vsel %vm795, %v6072, 0.0
  %6097 = vadd.xlane.f32.xlu0 %v6096
  %v6098 = vpop.xlane.xlu0 %6097
  %v6099 = vsel %vm795, %v6073, 0.0
  %6100 = vadd.xlane.f32.xlu0 %v6099
  %v6101 = vpop.xlane.xlu0 %6100
  %v6102 = vsel %vm795, %v6074, 0.0
  %6103 = vadd.xlane.f32.xlu0 %v6102
  %v6104 = vpop.xlane.xlu0 %6103
  %v6105 = vsel %vm795, %v6075, 0.0
  %6106 = vadd.xlane.f32.xlu0 %v6105
  %v6107 = vpop.xlane.xlu0 %6106
  %v6108 = vsel %vm795, %v6076, 0.0
  %6109 = vadd.xlane.f32.xlu0 %v6108
  %v6110 = vpop.xlane.xlu0 %6109
  %v6111 = vsel %vm795, %v6077, 0.0
  %6112 = vadd.xlane.f32.xlu0 %v6111
  %v6113 = vpop.xlane.xlu0 %6112
  %vm6114 = vcmp.eq.f32.partialorder %v6080, 0.0
  %vm6115 = vcmp.eq.f32.partialorder %v6083, 0.0
  %vm6116 = vcmp.eq.f32.partialorder %v6086, 0.0
  %vm6117 = vcmp.eq.f32.partialorder %v6089, 0.0
  %vm6118 = vcmp.eq.f32.partialorder %v6092, 0.0
  %vm6119 = vcmp.eq.f32.partialorder %v6095, 0.0
  %vm6120 = vcmp.eq.f32.partialorder %v6098, 0.0
  %vm6121 = vcmp.eq.f32.partialorder %v6101, 0.0
  %vm6122 = vcmp.eq.f32.partialorder %v6104, 0.0
  %vm6123 = vcmp.eq.f32.partialorder %v6107, 0.0
  %vm6124 = vcmp.eq.f32.partialorder %v6110, 0.0
  %vm6125 = vcmp.eq.f32.partialorder %v6113, 0.0
  %v6126 = vsel %vm6114, 1.0, %v6080
  %v6127 = vsel %vm6115, 1.0, %v6083
  %v6128 = vsel %vm6116, 1.0, %v6086
  %v6129 = vsel %vm6117, 1.0, %v6089
  %v6130 = vsel %vm6118, 1.0, %v6092
  %v6131 = vsel %vm6119, 1.0, %v6095
  %v6132 = vsel %vm6120, 1.0, %v6098
  %v6133 = vsel %vm6121, 1.0, %v6101
  %v6134 = vsel %vm6122, 1.0, %v6104
  %v6135 = vsel %vm6123, 1.0, %v6107
  %v6136 = vsel %vm6124, 1.0, %v6110
  %v6137 = vsel %vm6125, 1.0, %v6113
  %v6138 = vrcp.pop %v6126
  %v6139 = vmul.f32 %v6066, %v6138
  %v6140 = vrcp.pop %v6127
  %v6141 = vmul.f32 %v6067, %v6140
  %v6142 = vrcp.pop %v6128
  %v6143 = vmul.f32 %v6068, %v6142
  %v6144 = vrcp.pop %v6129
  %v6145 = vmul.f32 %v6069, %v6144
  %v6146 = vrcp.pop %v6130
  %v6147 = vmul.f32 %v6070, %v6146
  %v6148 = vrcp.pop %v6131
  %v6149 = vmul.f32 %v6071, %v6148
  %v6150 = vrcp.pop %v6132
  %v6151 = vmul.f32 %v6072, %v6150
  %v6152 = vrcp.pop %v6133
  %v6153 = vmul.f32 %v6073, %v6152
  %v6154 = vrcp.pop %v6134
  %v6155 = vmul.f32 %v6074, %v6154
  %v6156 = vrcp.pop %v6135
  %v6157 = vmul.f32 %v6075, %v6156
  %v6158 = vrcp.pop %v6136
  %v6159 = vmul.f32 %v6076, %v6158
  %v6160 = vrcp.pop %v6137
  %v6161 = vmul.f32 %v6077, %v6160
  %6165 = vrot.lane.b32.xlu0 %v5495, 64
  %v6166 = vpop.permute.xlu0 %6165
  %6167 = vrot.lane.b32.xlu0 %v5500, 64
  %v6168 = vpop.permute.xlu0 %6167
  %6169 = vrot.lane.b32.xlu0 %v5505, 64
  %v6170 = vpop.permute.xlu0 %6169
  %v6175 = vsel %vm795, %v6139, 0
  %v6178 = vsel %vm795, %v6141, 0
  %v6181 = vsel %vm795, %v6143, 0
  %v6184 = vsel %vm795, %v6145, 0
  %v6187 = vsel %vm795, %v6147, 0
  %v6190 = vsel %vm795, %v6149, 0
  %v6193 = vsel %vm795, %v6151, 0
  %v6196 = vsel %vm795, %v6153, 0
  %v6199 = vsel %vm795, %v6155, 0
  %v6202 = vsel %vm795, %v6157, 0
  %v6205 = vsel %vm795, %v6159, 0
  %v6208 = vsel %vm795, %v6161, 0
  %6210 = vmatprep.subr.mxu0 0.0
  %6211 = vmatpush1.msra.mxu0 0.0
  %6212 = vmatprep.subr.mxu0 0.0
  %6213 = vmatpush1.msra.mxu0 0.0
  %6214 = vmatprep.subr.mxu0 0.0
  %6215 = vmatpush1.msra.mxu0 0.0
  %6216 = vmatprep.subr.mxu0 0.0
  %6217 = vmatpush1.msra.mxu0 0.0
  %6218 = vmatprep.subr.mxu0 0.0
  %6219 = vmatpush1.msra.mxu0 0.0
  %6220 = vmatprep.subr.mxu0 0.0
  %6221 = vmatpush1.msra.mxu0 0.0
  %6222 = vmatprep.subr.mxu0 0.0
  %6223 = vmatpush1.msra.mxu0 0.0
  %6224 = vmatprep.subr.mxu0 0.0
  %6225 = vmatpush1.msra.mxu0 0.0
  %6226 = vmatprep.subr.mxu0 0.0
  %6227 = vmatpush1.msra.mxu0 0.0
  %6228 = vmatprep.subr.mxu0 0.0
  %6229 = vmatpush1.msra.mxu0 0.0
  %6230 = vmatprep.subr.mxu0 0.0
  %6231 = vmatpush1.msra.mxu0 0.0
  %6232 = vmatprep.subr.mxu0 0.0
  %6233 = vmatpush1.msra.mxu0 0.0
  %6234 = vmatprep.subr.mxu0 0.0
  %6235 = vmatpush1.msra.mxu0 0.0
  %6236 = vmatprep.subr.mxu0 0.0
  %6237 = vmatpush1.msra.mxu0 %v6170
  %6238 = vmatprep.subr.mxu0 0.0
  %6239 = vmatpush1.msra.mxu0 %v6168
  %6240 = vmatprep.subr.mxu0 0.0
  %6241 = vmatpush1.msra.mxu0 %v6166
  %6242 = vmatprep.subr.mxu0 0.0
  %6243 = vmatpush2.msra.mxu0 0.0
  %6244 = vmatprep.subr.mxu0 0.0
  %6245 = vmatpush2.msra.mxu0 0.0
  %6246 = vmatprep.subr.mxu0 0.0
  %6247 = vmatpush2.msra.mxu0 0.0
  %6248 = vmatprep.subr.mxu0 0.0
  %6249 = vmatpush2.msra.mxu0 0.0
  %6250 = vmatprep.subr.mxu0 0.0
  %6251 = vmatpush2.msra.mxu0 0.0
  %6252 = vmatprep.subr.mxu0 0.0
  %6253 = vmatpush2.msra.mxu0 0.0
  %6254 = vmatprep.subr.mxu0 0.0
  %6255 = vmatpush2.msra.mxu0 0.0
  %6256 = vmatprep.subr.mxu0 0.0
  %6257 = vmatpush2.msra.mxu0 0.0
  %6258 = vmatprep.subr.mxu0 0.0
  %6259 = vmatpush2.msra.mxu0 0.0
  %6260 = vmatprep.subr.mxu0 0.0
  %6261 = vmatpush2.msra.mxu0 0.0
  %6262 = vmatprep.subr.mxu0 0.0
  %6263 = vmatpush2.msra.mxu0 0.0
  %6264 = vmatprep.subr.mxu0 0.0
  %6265 = vmatpush2.msra.mxu0 0.0
  %6266 = vmatprep.subr.mxu0 0.0
  %6267 = vmatpush2.msra.mxu0 0.0
  %6268 = vmatprep.subr.mxu0 0.0
  %6269 = vmatpush2.msra.mxu0 0.0
  %6270 = vmatprep.subr.mxu0 0.0
  %6271 = vmatpush2.msra.mxu0 0.0
  %6272 = vmatprep.subr.mxu0 0.0
  %6273 = vmatpush2.msra.mxu0 0.0
  %6274 = vmatprep.mubr.f32.mxu0 0.0
  %6275 = vmatmul.mubr.f32.gmra.mxu0 %v6175
  %v6276 = vpop.f32.mrf.mxu0
  %v6277 = vadd.f32 0.0, %v6276
  %v6278 = vpop.f32.mrf.mxu0
  %6279 = vmatprep.mubr.f32.mxu0 0.0
  %6280 = vmatmul.mubr.f32.gmra.mxu0 %v6178
  %v6281 = vpop.f32.mrf.mxu0
  %v6282 = vadd.f32 0.0, %v6281
  %v6283 = vpop.f32.mrf.mxu0
  %6284 = vmatprep.mubr.f32.mxu0 0.0
  %6285 = vmatmul.mubr.f32.gmra.mxu0 %v6181
  %v6286 = vpop.f32.mrf.mxu0
  %v6287 = vadd.f32 0.0, %v6286
  %v6288 = vpop.f32.mrf.mxu0
  %6289 = vmatprep.mubr.f32.mxu0 0.0
  %6290 = vmatmul.mubr.f32.gmra.mxu0 %v6184
  %v6291 = vpop.f32.mrf.mxu0
  %v6292 = vadd.f32 0.0, %v6291
  %v6293 = vpop.f32.mrf.mxu0
  %6294 = vmatprep.mubr.f32.mxu0 0.0
  %6295 = vmatmul.mubr.f32.gmra.mxu0 %v6187
  %v6296 = vpop.f32.mrf.mxu0
  %v6297 = vadd.f32 0.0, %v6296
  %v6298 = vpop.f32.mrf.mxu0
  %6299 = vmatprep.mubr.f32.mxu0 0.0
  %6300 = vmatmul.mubr.f32.gmra.mxu0 %v6190
  %v6301 = vpop.f32.mrf.mxu0
  %v6302 = vadd.f32 0.0, %v6301
  %v6303 = vpop.f32.mrf.mxu0
  %6304 = vmatprep.mubr.f32.mxu0 0.0
  %6305 = vmatmul.mubr.f32.gmra.mxu0 %v6193
  %v6306 = vpop.f32.mrf.mxu0
  %v6307 = vadd.f32 0.0, %v6306
  %v6308 = vpop.f32.mrf.mxu0
  %6309 = vmatprep.mubr.f32.mxu0 0.0
  %6310 = vmatmul.mubr.f32.gmra.mxu0 %v6196
  %v6311 = vpop.f32.mrf.mxu0
  %v6312 = vadd.f32 0.0, %v6311
  %v6313 = vpop.f32.mrf.mxu0
  %6314 = vmatprep.mubr.f32.mxu0 0.0
  %6315 = vmatmul.mubr.f32.gmra.mxu0 %v6199
  %v6316 = vpop.f32.mrf.mxu0
  %v6317 = vadd.f32 0.0, %v6316
  %v6318 = vpop.f32.mrf.mxu0
  %6319 = vmatprep.mubr.f32.mxu0 0.0
  %6320 = vmatmul.mubr.f32.gmra.mxu0 %v6202
  %v6321 = vpop.f32.mrf.mxu0
  %v6322 = vadd.f32 0.0, %v6321
  %v6323 = vpop.f32.mrf.mxu0
  %6324 = vmatprep.mubr.f32.mxu0 0.0
  %6325 = vmatmul.mubr.f32.gmra.mxu0 %v6205
  %v6326 = vpop.f32.mrf.mxu0
  %v6327 = vadd.f32 0.0, %v6326
  %v6328 = vpop.f32.mrf.mxu0
  %6329 = vmatprep.mubr.f32.mxu0 0.0
  %6330 = vmatmul.mubr.f32.gmra.mxu0 %v6208
  %v6331 = vpop.f32.mrf.mxu0
  %v6332 = vadd.f32 0.0, %v6331
  %v6333 = vpop.f32.mrf.mxu0
  %6334 = vdwg.mxu0
  %v6335 = vmul.f32 %v6277, %v203
  %v6336 = vmul.f32 %v6282, %v203
  %v6337 = vmul.f32 %v6287, %v203
  %v6338 = vadd.f32 %v6335, 0.0
  %v6339 = vadd.f32 %v6336, 0.0
  %v6340 = vadd.f32 %v6337, 0.0
  %v6341 = vmul.f32 %v6292, %v208
  %v6342 = vmul.f32 %v6297, %v208
  %v6343 = vmul.f32 %v6302, %v208
  %v6344 = vadd.f32 %v6338, %v6341
  %v6345 = vadd.f32 %v6339, %v6342
  %v6346 = vadd.f32 %v6340, %v6343
  %v6347 = vmul.f32 %v6307, %v213
  %v6348 = vmul.f32 %v6312, %v213
  %v6349 = vmul.f32 %v6317, %v213
  %v6350 = vadd.f32 %v6344, %v6347
  %v6351 = vadd.f32 %v6345, %v6348
  %v6352 = vadd.f32 %v6346, %v6349
  %v6353 = vmul.f32 %v6322, %v218
  %v6354 = vmul.f32 %v6327, %v218
  %v6355 = vmul.f32 %v6332, %v218
  %v6356 = vadd.f32 %v6350, %v6353
  %v6357 = vadd.f32 %v6351, %v6354
  %v6358 = vadd.f32 %v6352, %v6355
  %v6360 = vsel %vm371, %v6356, 0
  %v6363 = vsel %vm371, %v6357, 0
  %v6366 = vsel %vm371, %v6358, 0
  %6368 = vmatprep.subr.mxu0 0.0
  %6369 = vmatpush1.msra.mxu0 0.0
  %6370 = vmatprep.subr.mxu0 0.0
  %6371 = vmatpush1.msra.mxu0 0.0
  %6372 = vmatprep.subr.mxu0 0.0
  %6373 = vmatpush1.msra.mxu0 0.0
  %6374 = vmatprep.subr.mxu0 0.0
  %6375 = vmatpush1.msra.mxu0 0.0
  %6376 = vmatprep.subr.mxu0 0.0
  %6377 = vmatpush1.msra.mxu0 0.0
  %6378 = vmatprep.subr.mxu0 0.0
  %6379 = vmatpush1.msra.mxu0 0.0
  %6380 = vmatprep.subr.mxu0 0.0
  %6381 = vmatpush1.msra.mxu0 0.0
  %6382 = vmatprep.subr.mxu0 0.0
  %6383 = vmatpush1.msra.mxu0 0.0
  %6384 = vmatprep.subr.mxu0 0.0
  %6385 = vmatpush1.msra.mxu0 0.0
  %6386 = vmatprep.subr.mxu0 0.0
  %6387 = vmatpush1.msra.mxu0 0.0
  %6388 = vmatprep.subr.mxu0 0.0
  %6389 = vmatpush1.msra.mxu0 0.0
  %6390 = vmatprep.subr.mxu0 0.0
  %6391 = vmatpush1.msra.mxu0 0.0
  %6392 = vmatprep.subr.mxu0 0.0
  %6393 = vmatpush1.msra.mxu0 %v2588
  %6394 = vmatprep.subr.mxu0 0.0
  %6395 = vmatpush1.msra.mxu0 %v2587
  %6396 = vmatprep.subr.mxu0 0.0
  %6397 = vmatpush1.msra.mxu0 %v2586
  %6398 = vmatprep.subr.mxu0 0.0
  %6399 = vmatpush1.msra.mxu0 %v2585
  %6400 = vmatprep.subr.mxu0 0.0
  %6401 = vmatpush2.msra.mxu0 0.0
  %6402 = vmatprep.subr.mxu0 0.0
  %6403 = vmatpush2.msra.mxu0 0.0
  %6404 = vmatprep.subr.mxu0 0.0
  %6405 = vmatpush2.msra.mxu0 0.0
  %6406 = vmatprep.subr.mxu0 0.0
  %6407 = vmatpush2.msra.mxu0 0.0
  %6408 = vmatprep.subr.mxu0 0.0
  %6409 = vmatpush2.msra.mxu0 0.0
  %6410 = vmatprep.subr.mxu0 0.0
  %6411 = vmatpush2.msra.mxu0 0.0
  %6412 = vmatprep.subr.mxu0 0.0
  %6413 = vmatpush2.msra.mxu0 0.0
  %6414 = vmatprep.subr.mxu0 0.0
  %6415 = vmatpush2.msra.mxu0 0.0
  %6416 = vmatprep.subr.mxu0 0.0
  %6417 = vmatpush2.msra.mxu0 0.0
  %6418 = vmatprep.subr.mxu0 0.0
  %6419 = vmatpush2.msra.mxu0 0.0
  %6420 = vmatprep.subr.mxu0 0.0
  %6421 = vmatpush2.msra.mxu0 0.0
  %6422 = vmatprep.subr.mxu0 0.0
  %6423 = vmatpush2.msra.mxu0 0.0
  %6424 = vmatprep.subr.mxu0 0.0
  %6425 = vmatpush2.msra.mxu0 0.0
  %6426 = vmatprep.subr.mxu0 0.0
  %6427 = vmatpush2.msra.mxu0 0.0
  %6428 = vmatprep.subr.mxu0 0.0
  %6429 = vmatpush2.msra.mxu0 0.0
  %6430 = vmatprep.subr.mxu0 0.0
  %6431 = vmatpush2.msra.mxu0 0.0
  %6432 = vmatprep.mubr.f32.mxu0 0.0
  %6433 = vmatmul.mubr.f32.gmra.mxu0 %v6360
  %v6434 = vpop.f32.mrf.mxu0
  %v6435 = vadd.f32 %v3643, %v6434
  %v6436 = vpop.f32.mrf.mxu0
  %6437 = vmatprep.mubr.f32.mxu0 0.0
  %6438 = vmatmul.mubr.f32.gmra.mxu0 %v6363
  %v6439 = vpop.f32.mrf.mxu0
  %v6440 = vadd.f32 %v3643, %v6439
  %v6441 = vpop.f32.mrf.mxu0
  %6442 = vmatprep.mubr.f32.mxu0 0.0
  %6443 = vmatmul.mubr.f32.gmra.mxu0 %v6366
  %v6444 = vpop.f32.mrf.mxu0
  %v6445 = vadd.f32 %v3643, %v6444
  %v6446 = vpop.f32.mrf.mxu0
  %6447 = vdwg.mxu0
  %v6448 = vsel %vm371, %v6435, 0.0
  %6449 = vadd.xlane.f32.xlu0 %v6448
  %v6450 = vpop.xlane.xlu0 %6449
  %v6451 = vsel %vm371, %v6440, 0.0
  %6452 = vadd.xlane.f32.xlu0 %v6451
  %v6453 = vpop.xlane.xlu0 %6452
  %v6454 = vsel %vm371, %v6445, 0.0
  %6455 = vadd.xlane.f32.xlu0 %v6454
  %v6456 = vpop.xlane.xlu0 %6455
  %v6457 = vmul.f32 %v6450, %v381
  %v6458 = vmul.f32 %v6453, %v381
  %v6459 = vmul.f32 %v6456, %v381
  %v6460 = vsub.f32 %v6435, %v6457
  %v6461 = vsub.f32 %v6440, %v6458
  %v6462 = vsub.f32 %v6445, %v6459
  %v6463 = vmul.f32 %v6460, %v6460
  %v6464 = vmul.f32 %v6461, %v6461
  %v6465 = vmul.f32 %v6462, %v6462
  %v6466 = vsel %vm371, %v6463, 0.0
  %6467 = vadd.xlane.f32.xlu0 %v6466
  %v6468 = vpop.xlane.xlu0 %6467
  %v6469 = vsel %vm371, %v6464, 0.0
  %6470 = vadd.xlane.f32.xlu0 %v6469
  %v6471 = vpop.xlane.xlu0 %6470
  %v6472 = vsel %vm371, %v6465, 0.0
  %6473 = vadd.xlane.f32.xlu0 %v6472
  %v6474 = vpop.xlane.xlu0 %6473
  %v6475 = vmul.f32 %v6468, %v381
  %v6476 = vmul.f32 %v6471, %v381
  %v6477 = vmul.f32 %v6474, %v381
  %v6478 = vadd.f32 %v6475, 1e-05
  %v6479 = vadd.f32 %v6476, 1e-05
  %v6480 = vadd.f32 %v6477, 1e-05
  %v6481 = vrsqrt.pop %v6478
  %v6482 = vrsqrt.pop %v6479
  %v6483 = vrsqrt.pop %v6480
  %v6484 = vmul.f32 %v6460, %v6481
  %v6485 = vmul.f32 %v6461, %v6482
  %v6486 = vmul.f32 %v6462, %v6483
  %v6487 = vmul.f32 %v6484, %v3773
  %v6488 = vmul.f32 %v6485, %v3773
  %v6489 = vmul.f32 %v6486, %v3773
  %v6490 = vadd.f32 %v6487, %v3779
  %v6491 = vadd.f32 %v6488, %v3779
  %v6492 = vadd.f32 %v6489, %v3779
  %v6494 = vsel %vm371, %v6490, 0
  %v6497 = vsel %vm371, %v6491, 0
  %v6500 = vsel %vm371, %v6492, 0
  %6502 = vmatprep.subr.mxu0 0.0
  %6503 = vmatpush1.msra.mxu0 0.0
  %6504 = vmatprep.subr.mxu0 0.0
  %6505 = vmatpush1.msra.mxu0 0.0
  %6506 = vmatprep.subr.mxu0 0.0
  %6507 = vmatpush1.msra.mxu0 0.0
  %6508 = vmatprep.subr.mxu0 0.0
  %6509 = vmatpush1.msra.mxu0 0.0
  %6510 = vmatprep.subr.mxu0 0.0
  %6511 = vmatpush1.msra.mxu0 0.0
  %6512 = vmatprep.subr.mxu0 0.0
  %6513 = vmatpush1.msra.mxu0 0.0
  %6514 = vmatprep.subr.mxu0 0.0
  %6515 = vmatpush1.msra.mxu0 0.0
  %6516 = vmatprep.subr.mxu0 0.0
  %6517 = vmatpush1.msra.mxu0 0.0
  %6518 = vmatprep.subr.mxu0 0.0
  %6519 = vmatpush1.msra.mxu0 0.0
  %6520 = vmatprep.subr.mxu0 0.0
  %6521 = vmatpush1.msra.mxu0 0.0
  %6522 = vmatprep.subr.mxu0 0.0
  %6523 = vmatpush1.msra.mxu0 0.0
  %6524 = vmatprep.subr.mxu0 0.0
  %6525 = vmatpush1.msra.mxu0 0.0
  %6526 = vmatprep.subr.mxu0 0.0
  %6527 = vmatpush1.msra.mxu0 %v2593
  %6528 = vmatprep.subr.mxu0 0.0
  %6529 = vmatpush1.msra.mxu0 %v2592
  %6530 = vmatprep.subr.mxu0 0.0
  %6531 = vmatpush1.msra.mxu0 %v2591
  %6532 = vmatprep.subr.mxu0 0.0
  %6533 = vmatpush1.msra.mxu0 %v2590
  %6534 = vmatprep.subr.mxu0 0.0
  %6535 = vmatpush2.msra.mxu0 0.0
  %6536 = vmatprep.subr.mxu0 0.0
  %6537 = vmatpush2.msra.mxu0 0.0
  %6538 = vmatprep.subr.mxu0 0.0
  %6539 = vmatpush2.msra.mxu0 0.0
  %6540 = vmatprep.subr.mxu0 0.0
  %6541 = vmatpush2.msra.mxu0 0.0
  %6542 = vmatprep.subr.mxu0 0.0
  %6543 = vmatpush2.msra.mxu0 0.0
  %6544 = vmatprep.subr.mxu0 0.0
  %6545 = vmatpush2.msra.mxu0 0.0
  %6546 = vmatprep.subr.mxu0 0.0
  %6547 = vmatpush2.msra.mxu0 0.0
  %6548 = vmatprep.subr.mxu0 0.0
  %6549 = vmatpush2.msra.mxu0 0.0
  %6550 = vmatprep.subr.mxu0 0.0
  %6551 = vmatpush2.msra.mxu0 0.0
  %6552 = vmatprep.subr.mxu0 0.0
  %6553 = vmatpush2.msra.mxu0 0.0
  %6554 = vmatprep.subr.mxu0 0.0
  %6555 = vmatpush2.msra.mxu0 0.0
  %6556 = vmatprep.subr.mxu0 0.0
  %6557 = vmatpush2.msra.mxu0 0.0
  %6558 = vmatprep.subr.mxu0 0.0
  %6559 = vmatpush2.msra.mxu0 0.0
  %6560 = vmatprep.subr.mxu0 0.0
  %6561 = vmatpush2.msra.mxu0 0.0
  %6562 = vmatprep.subr.mxu0 0.0
  %6563 = vmatpush2.msra.mxu0 0.0
  %6564 = vmatprep.subr.mxu0 0.0
  %6565 = vmatpush2.msra.mxu0 0.0
  %6566 = vmatprep.mubr.f32.mxu0 0.0
  %6567 = vmatmul.mubr.f32.gmra.mxu0 %v6494
  %v6568 = vpop.f32.mrf.mxu0
  %v6569 = vadd.f32 0.0, %v6568
  %v6570 = vpop.f32.mrf.mxu0
  %6571 = vmatprep.mubr.f32.mxu0 0.0
  %6572 = vmatmul.mubr.f32.gmra.mxu0 %v6497
  %v6573 = vpop.f32.mrf.mxu0
  %v6574 = vadd.f32 0.0, %v6573
  %v6575 = vpop.f32.mrf.mxu0
  %6576 = vmatprep.mubr.f32.mxu0 0.0
  %6577 = vmatmul.mubr.f32.gmra.mxu0 %v6500
  %v6578 = vpop.f32.mrf.mxu0
  %v6579 = vadd.f32 0.0, %v6578
  %v6580 = vpop.f32.mrf.mxu0
  %6581 = vdwg.mxu0
  %v6582 = vmul.f32 %v6569, %v6569
  %v6583 = vmul.f32 %v6574, %v6574
  %v6584 = vmul.f32 %v6579, %v6579
  %v6585 = vsel %vm3876, %v6582, 0.0
  %6586 = vadd.xlane.f32.xlu0 %v6585
  %v6587 = vpop.xlane.xlu0 %6586
  %v6588 = vsel %vm3876, %v6583, 0.0
  %6589 = vadd.xlane.f32.xlu0 %v6588
  %v6590 = vpop.xlane.xlu0 %6589
  %v6591 = vsel %vm3876, %v6584, 0.0
  %6592 = vadd.xlane.f32.xlu0 %v6591
  %v6593 = vpop.xlane.xlu0 %6592
  %v6594 = vrsqrt.pop %v6587
  %v6595 = vrsqrt.pop %v6590
  %v6596 = vrsqrt.pop %v6593
  %v6597 = vmul.f32 %v6569, %v6594
  %v6598 = vmul.f32 %v6574, %v6595
  %v6599 = vmul.f32 %v6579, %v6596
  %v6601 = vsel %vm3876, %v6597, 0
  %v6604 = vsel %vm3876, %v6598, 0
  %v6607 = vsel %vm3876, %v6599, 0
  %6609 = vmatprep.subr.mxu0 0.0
  %6610 = vmatpush1.xpose.msra.mxu0 0.0
  %6611 = vmatprep.subr.mxu0 0.0
  %6612 = vmatpush1.xpose.msra.mxu0 0.0
  %6613 = vmatprep.subr.mxu0 0.0
  %6614 = vmatpush1.xpose.msra.mxu0 0.0
  %6615 = vmatprep.subr.mxu0 0.0
  %6616 = vmatpush1.xpose.msra.mxu0 0.0
  %6617 = vmatprep.subr.mxu0 0.0
  %6618 = vmatpush1.xpose.msra.mxu0 0.0
  %6619 = vmatprep.subr.mxu0 0.0
  %6620 = vmatpush1.xpose.msra.mxu0 0.0
  %6621 = vmatprep.subr.mxu0 0.0
  %6622 = vmatpush1.xpose.msra.mxu0 0.0
  %6623 = vmatprep.subr.mxu0 0.0
  %6624 = vmatpush1.xpose.msra.mxu0 0.0
  %6625 = vmatprep.subr.mxu0 0.0
  %6626 = vmatpush1.xpose.msra.mxu0 0.0
  %6627 = vmatprep.subr.mxu0 0.0
  %6628 = vmatpush1.xpose.msra.mxu0 0.0
  %6629 = vmatprep.subr.mxu0 0.0
  %6630 = vmatpush1.xpose.msra.mxu0 0.0
  %6631 = vmatprep.subr.mxu0 0.0
  %6632 = vmatpush1.xpose.msra.mxu0 0.0
  %6633 = vmatprep.subr.mxu0 0.0
  %6634 = vmatpush1.xpose.msra.mxu0 0.0
  %6635 = vmatprep.subr.mxu0 0.0
  %6636 = vmatpush1.xpose.msra.mxu0 0.0
  %6637 = vmatprep.subr.mxu0 0.0
  %6638 = vmatpush1.xpose.msra.mxu0 0.0
  %6639 = vmatprep.subr.mxu0 0.0
  %6640 = vmatpush1.xpose.msra.mxu0 %v3904
  %6641 = vmatprep.subr.mxu0 0.0
  %6642 = vmatpush2.xpose.msra.mxu0 0.0
  %6643 = vmatprep.subr.mxu0 0.0
  %6644 = vmatpush2.xpose.msra.mxu0 0.0
  %6645 = vmatprep.subr.mxu0 0.0
  %6646 = vmatpush2.xpose.msra.mxu0 0.0
  %6647 = vmatprep.subr.mxu0 0.0
  %6648 = vmatpush2.xpose.msra.mxu0 0.0
  %6649 = vmatprep.subr.mxu0 0.0
  %6650 = vmatpush2.xpose.msra.mxu0 0.0
  %6651 = vmatprep.subr.mxu0 0.0
  %6652 = vmatpush2.xpose.msra.mxu0 0.0
  %6653 = vmatprep.subr.mxu0 0.0
  %6654 = vmatpush2.xpose.msra.mxu0 0.0
  %6655 = vmatprep.subr.mxu0 0.0
  %6656 = vmatpush2.xpose.msra.mxu0 0.0
  %6657 = vmatprep.subr.mxu0 0.0
  %6658 = vmatpush2.xpose.msra.mxu0 0.0
  %6659 = vmatprep.subr.mxu0 0.0
  %6660 = vmatpush2.xpose.msra.mxu0 0.0
  %6661 = vmatprep.subr.mxu0 0.0
  %6662 = vmatpush2.xpose.msra.mxu0 0.0
  %6663 = vmatprep.subr.mxu0 0.0
  %6664 = vmatpush2.xpose.msra.mxu0 0.0
  %6665 = vmatprep.subr.mxu0 0.0
  %6666 = vmatpush2.xpose.msra.mxu0 0.0
  %6667 = vmatprep.subr.mxu0 0.0
  %6668 = vmatpush2.xpose.msra.mxu0 0.0
  %6669 = vmatprep.subr.mxu0 0.0
  %6670 = vmatpush2.xpose.msra.mxu0 0.0
  %6671 = vmatprep.subr.mxu0 0.0
  %6672 = vmatpush2.xpose.msra.mxu0 0.0
  %6673 = vmatprep.mubr.f32.mxu0 0.0
  %6674 = vmatmul.mubr.f32.gmra.mxu0 %v6601
  %v6675 = vpop.f32.mrf.mxu0
  %v6676 = vadd.f32 0.0, %v6675
  %v6677 = vpop.f32.mrf.mxu0
  %6678 = vmatprep.mubr.f32.mxu0 0.0
  %6679 = vmatmul.mubr.f32.gmra.mxu0 %v6604
  %v6680 = vpop.f32.mrf.mxu0
  %v6681 = vadd.f32 0.0, %v6680
  %v6682 = vpop.f32.mrf.mxu0
  %6683 = vmatprep.mubr.f32.mxu0 0.0
  %6684 = vmatmul.mubr.f32.gmra.mxu0 %v6607
  %v6685 = vpop.f32.mrf.mxu0
  %v6686 = vadd.f32 0.0, %v6685
  %v6687 = vpop.f32.mrf.mxu0
  %6688 = vdwg.mxu0
  %v6689 = vmul.f32 %v6676, 100.0
  %v6690 = vmul.f32 %v6681, 100.0
  %v6691 = vmul.f32 %v6686, 100.0
  %v6692 = vsel %vm3989, %v6689, -inf
  %6693 = vmax.xlane.f32.xlu0 %v6692
  %v6694 = vpop.xlane.xlu0 %6693
  %v6695 = vsel %vm3989, %v6690, -inf
  %6696 = vmax.xlane.f32.xlu0 %v6695
  %v6697 = vpop.xlane.xlu0 %6696
  %v6698 = vsel %vm3989, %v6691, -inf
  %6699 = vmax.xlane.f32.xlu0 %v6698
  %v6700 = vpop.xlane.xlu0 %6699
  %v6701 = vsub.f32 %v6689, %v6694
  %v6702 = vsub.f32 %v6690, %v6697
  %v6703 = vsub.f32 %v6691, %v6700
  %v6704 = vmul.f32 %v6701, 1.442695
  %v6705 = vpow.pop %v6704
  %v6706 = vmul.f32 %v6702, 1.442695
  %v6707 = vpow.pop %v6706
  %v6708 = vmul.f32 %v6703, 1.442695
  %v6709 = vpow.pop %v6708
  %v6710 = vsel %vm3989, %v6705, 0.0
  %6711 = vadd.xlane.f32.xlu0 %v6710
  %v6712 = vpop.xlane.xlu0 %6711
  %v6713 = vsel %vm3989, %v6707, 0.0
  %6714 = vadd.xlane.f32.xlu0 %v6713
  %v6715 = vpop.xlane.xlu0 %6714
  %v6716 = vsel %vm3989, %v6709, 0.0
  %6717 = vadd.xlane.f32.xlu0 %v6716
  %v6718 = vpop.xlane.xlu0 %6717
  %v6719 = vrcp.pop %v6712
  %v6720 = vrcp.pop %v6715
  %v6721 = vrcp.pop %v6718
  %v6722 = vmul.f32 %v6705, %v6719
  %v6723 = vmul.f32 %v6707, %v6720
  %v6724 = vmul.f32 %v6709, %v6721
  %v6725 = vadd.f32 %v6139, 0.0
  %v6726 = vadd.f32 %v6141, 0.0
  %v6727 = vadd.f32 %v6143, 0.0
  %v6728 = vadd.f32 %v6725, %v6145
  %v6729 = vadd.f32 %v6726, %v6147
  %v6730 = vadd.f32 %v6727, %v6149
  %v6731 = vadd.f32 %v6728, %v6151
  %v6732 = vadd.f32 %v6729, %v6153
  %v6733 = vadd.f32 %v6730, %v6155
  %v6734 = vadd.f32 %v6731, %v6157
  %v6735 = vadd.f32 %v6732, %v6159
  %v6736 = vadd.f32 %v6733, %v6161
  %v6737 = vmul.f32 %v6734, 0.25
  %v6738 = vmul.f32 %v6735, 0.25
  %v6739 = vmul.f32 %v6736, 0.25
  %v6740 = vmul.f32 %v6722, %v31
  %v6741 = vmul.f32 %v6723, %v32
  %v6742 = vmul.f32 %v6724, %v33
  %v6743 = vsel %vm3989, %v6740, -inf
  %v6744 = vsel %vm3989, %v6741, -inf
  %v6745 = vsel %vm3989, %v6742, -inf
  %v6746 = vmax.f32 %v6743, %v6744
  %v6747 = vmax.f32 %v6746, %v6745
  %v6748 = vrot.slane %v6747, 4
  %v6749 = vmax.f32 %v6747, %v6748
  %v6750 = vrot.slane %v6749, 2
  %v6751 = vmax.f32 %v6749, %v6750
  %v6752 = vrot.slane %v6751, 1
  %v6753 = vmax.f32 %v6751, %v6752
  %v6754 = vmul.f32 %v6753, 0.2
  %vm6755 = vcmp.lt.f32.partialorder %v6722, %v6754
  %vm6756 = vcmp.lt.f32.partialorder %v6723, %v6754
  %vm6757 = vcmp.lt.f32.partialorder %v6724, %v6754
  %v6758 = vsel %vm6755, 0.0, %v6722
  %v6759 = vsel %vm6756, 0.0, %v6723
  %v6760 = vsel %vm6757, 0.0, %v6724
  %v6761 = vmul.f32 %v6758, %v31
  %v6762 = vmul.f32 %v6759, %v32
  %v6763 = vmul.f32 %v6760, %v33
  %v6764 = vadd.f32 %v4020, 0.0
  %v6765 = vadd.f32 %v4021, 0.0
  %v6766 = vadd.f32 %v4022, 0.0
  %v6767 = vadd.f32 %v6764, %v5371
  %v6768 = vadd.f32 %v6765, %v5372
  %v6769 = vadd.f32 %v6766, %v5373
  %v6770 = vmul.f32 %v6767, 0.5
  %v6771 = vmul.f32 %v6768, 0.5
  %v6772 = vmul.f32 %v6769, 0.5
  %v6774 = vsel %vm795, %v6737, 0
  %v6777 = vsel %vm795, %v6738, 0
  %v6780 = vsel %vm795, %v6739, 0
  %6782 = vmatprep.subr.mxu0 0.0
  %6783 = vmatpush1.msra.mxu0 0.0
  %6784 = vmatprep.subr.mxu0 0.0
  %6785 = vmatpush1.msra.mxu0 0.0
  %6786 = vmatprep.subr.mxu0 0.0
  %6787 = vmatpush1.msra.mxu0 0.0
  %6788 = vmatprep.subr.mxu0 0.0
  %6789 = vmatpush1.msra.mxu0 0.0
  %6790 = vmatprep.subr.mxu0 0.0
  %6791 = vmatpush1.msra.mxu0 0.0
  %6792 = vmatprep.subr.mxu0 0.0
  %6793 = vmatpush1.msra.mxu0 0.0
  %6794 = vmatprep.subr.mxu0 0.0
  %6795 = vmatpush1.msra.mxu0 0.0
  %6796 = vmatprep.subr.mxu0 0.0
  %6797 = vmatpush1.msra.mxu0 0.0
  %6798 = vmatprep.subr.mxu0 0.0
  %6799 = vmatpush1.msra.mxu0 0.0
  %6800 = vmatprep.subr.mxu0 0.0
  %6801 = vmatpush1.msra.mxu0 0.0
  %6802 = vmatprep.subr.mxu0 0.0
  %6803 = vmatpush1.msra.mxu0 0.0
  %6804 = vmatprep.subr.mxu0 0.0
  %6805 = vmatpush1.msra.mxu0 0.0
  %6806 = vmatprep.subr.mxu0 0.0
  %6807 = vmatpush1.msra.mxu0 0.0
  %6808 = vmatprep.subr.mxu0 0.0
  %6809 = vmatpush1.msra.mxu0 %v6763
  %6810 = vmatprep.subr.mxu0 0.0
  %6811 = vmatpush1.msra.mxu0 %v6762
  %6812 = vmatprep.subr.mxu0 0.0
  %6813 = vmatpush1.msra.mxu0 %v6761
  %6814 = vmatprep.subr.mxu0 0.0
  %6815 = vmatpush2.msra.mxu0 0.0
  %6816 = vmatprep.subr.mxu0 0.0
  %6817 = vmatpush2.msra.mxu0 0.0
  %6818 = vmatprep.subr.mxu0 0.0
  %6819 = vmatpush2.msra.mxu0 0.0
  %6820 = vmatprep.subr.mxu0 0.0
  %6821 = vmatpush2.msra.mxu0 0.0
  %6822 = vmatprep.subr.mxu0 0.0
  %6823 = vmatpush2.msra.mxu0 0.0
  %6824 = vmatprep.subr.mxu0 0.0
  %6825 = vmatpush2.msra.mxu0 0.0
  %6826 = vmatprep.subr.mxu0 0.0
  %6827 = vmatpush2.msra.mxu0 0.0
  %6828 = vmatprep.subr.mxu0 0.0
  %6829 = vmatpush2.msra.mxu0 0.0
  %6830 = vmatprep.subr.mxu0 0.0
  %6831 = vmatpush2.msra.mxu0 0.0
  %6832 = vmatprep.subr.mxu0 0.0
  %6833 = vmatpush2.msra.mxu0 0.0
  %6834 = vmatprep.subr.mxu0 0.0
  %6835 = vmatpush2.msra.mxu0 0.0
  %6836 = vmatprep.subr.mxu0 0.0
  %6837 = vmatpush2.msra.mxu0 0.0
  %6838 = vmatprep.subr.mxu0 0.0
  %6839 = vmatpush2.msra.mxu0 0.0
  %6840 = vmatprep.subr.mxu0 0.0
  %6841 = vmatpush2.msra.mxu0 0.0
  %6842 = vmatprep.subr.mxu0 0.0
  %6843 = vmatpush2.msra.mxu0 0.0
  %6844 = vmatprep.subr.mxu0 0.0
  %6845 = vmatpush2.msra.mxu0 0.0
  %6846 = vmatprep.mubr.f32.mxu0 0.0
  %6847 = vmatmul.mubr.f32.gmra.mxu0 %v6774
  %v6848 = vpop.f32.mrf.mxu0
  %v6849 = vadd.f32 %v6770, %v6848
  %v6850 = vpop.f32.mrf.mxu0
  %6851 = vmatprep.mubr.f32.mxu0 0.0
  %6852 = vmatmul.mubr.f32.gmra.mxu0 %v6777
  %v6853 = vpop.f32.mrf.mxu0
  %v6854 = vadd.f32 %v6771, %v6853
  %v6855 = vpop.f32.mrf.mxu0
  %6856 = vmatprep.mubr.f32.mxu0 0.0
  %6857 = vmatmul.mubr.f32.gmra.mxu0 %v6780
  %v6858 = vpop.f32.mrf.mxu0
  %v6859 = vadd.f32 %v6772, %v6858
  %v6860 = vpop.f32.mrf.mxu0
  %6861 = vdwg.mxu0
  %6862 = vst.msk [vmem:[%s2] sm:$0xff] %vm3876, %v3860
  %6863 = vst.msk [vmem:[%s2 + $0x8] sm:$0xff] %vm3876, %v3865
  %6864 = vst.msk [vmem:[%s2 + $0x10] sm:$0xff] %vm3876, %v3870
  %6868 = vrot.lane.b32.xlu0 %v5218, 16
  %v6869 = vpop.permute.xlu0 %6868
  %6870 = vrot.lane.b32.xlu0 %v5223, 16
  %v6871 = vpop.permute.xlu0 %6870
  %6872 = vrot.lane.b32.xlu0 %v5228, 16
  %v6873 = vpop.permute.xlu0 %6872
  %vm6877 = vcmask 261248
  %6878 = vst.msk [vmem:[%s2] sm:$0xff] %vm6877, %v6869
  %6879 = vst.msk [vmem:[%s2 + $0x8] sm:$0xff] %vm6877, %v6871
  %6880 = vst.msk [vmem:[%s2 + $0x10] sm:$0xff] %vm6877, %v6873
  %6884 = vrot.lane.b32.xlu0 %v6569, 32
  %v6885 = vpop.permute.xlu0 %6884
  %6886 = vrot.lane.b32.xlu0 %v6574, 32
  %v6887 = vpop.permute.xlu0 %6886
  %6888 = vrot.lane.b32.xlu0 %v6579, 32
  %v6889 = vpop.permute.xlu0 %6888
  %vm6893 = vcmask 392448
  %6894 = vst.msk [vmem:[%s2] sm:$0xff] %vm6893, %v6885
  %6895 = vst.msk [vmem:[%s2 + $0x8] sm:$0xff] %vm6893, %v6887
  %6896 = vst.msk [vmem:[%s2 + $0x10] sm:$0xff] %vm6893, %v6889
  %6897 = vrot.lane.b32.xlu0 %v6737, 48
  %v6898 = vpop.permute.xlu0 %6897
  %6899 = vrot.lane.b32.xlu0 %v6738, 48
  %v6900 = vpop.permute.xlu0 %6899
  %6901 = vrot.lane.b32.xlu0 %v6739, 48
  %v6902 = vpop.permute.xlu0 %6901
  %vm6906 = vcmask 589184
  %6907 = vst.msk [vmem:[%s2] sm:$0xff] %vm6906, %v6898
  %6908 = vst.msk [vmem:[%s2 + $0x8] sm:$0xff] %vm6906, %v6900
  %6909 = vst.msk [vmem:[%s2 + $0x10] sm:$0xff] %vm6906, %v6902
  %6913 = vrot.lane.b32.xlu0 %v6849, 72
  %v6914 = vpop.permute.xlu0 %6913
  %6915 = vrot.lane.b32.xlu0 %v6854, 72
  %v6916 = vpop.permute.xlu0 %6915
  %6917 = vrot.lane.b32.xlu0 %v6859, 72
  %v6918 = vpop.permute.xlu0 %6917
  %vm6922 = vcmask 638528
  %6923 = vst.msk [vmem:[%s2] sm:$0xff] %vm6922, %v6914
  %6924 = vst.msk [vmem:[%s2 + $0x8] sm:$0xff] %vm6922, %v6916
  %6925 = vst.msk [vmem:[%s2 + $0x10] sm:$0xff] %vm6922, %v6918
  %vm6926 = vcmask 1048176
  %6927 = vst.msk [vmem:[%s2] sm:$0xff] %vm6926, 0.0
  %6928 = vst.msk [vmem:[%s2 + $0x8] sm:$0xff] %vm6926, 0.0
  %6929 = vst.msk [vmem:[%s2 + $0x10] sm:$0xff] %vm6926, 0.0
  // Predicated region
  $region10: #{cliper_forward.1} parent=0 // pred_check
    _
  $region11: #{cliper_forward.1} parent=0 // pred_check_branch
    %6931 = sbr.rel (0) target = $region13
  $region12: #{cliper_forward.1} parent=0 // pred_region
    _
  $region13: #{cliper_forward.1} parent=0 // pred_fallthru
    _
  // Predicated region
  $region14: #{cliper_forward.1} parent=0 // pred_check
    _
  $region15: #{cliper_forward.1} parent=0 // pred_check_branch
    %6933 = sbr.rel (0) target = $region17
  $region16: #{cliper_forward.1} parent=0 // pred_region
    _
  $region17: #{cliper_forward.1} parent=0 // pred_fallthru
    _

</llo_original>
